<compile_context>
chip_gen: v7x
topology: tpu7x:2x2x1
jax: 0.10.0
libtpu: 0.0.40
codegen_flags: <defaults>
</compile_context>

<pallas_src>
import functools

import jax
import jax.numpy as jnp
from jax import lax
from jax.experimental import pallas as pl
from jax.experimental.pallas import tpu as pltpu


_TM = 512                       # max M-tile rows (keep <=1024 on v7x; can grow on v5e/v6e)
_VMEM_LIMIT = 48 * 1024 * 1024  # scoped-VMEM budget (75% of v7x's 64 MiB physical)
_BN_EPS = 1e-3                  # matches nn.BatchNorm2d(eps=0.001)


def _round_up(x, m):
    return (x + m - 1) // m * m


# ---------------------------------------------------------------------------
# Pallas kernels
# ---------------------------------------------------------------------------
def _conv_stats_kernel(p_ref, w_ref, y_ref, s_ref):
    # Pass 1 (multi-tile layers): bf16 matmul, f32 accumulation.  y is stored in
    # bf16 (halves the round-trip HBM bytes); per-tile channel [sum, sum_sq]
    # partials come from the un-rounded f32 accumulator.
    y = jnp.dot(p_ref[...], w_ref[...], preferred_element_type=jnp.float32)
    y_ref[...] = y.astype(y_ref.dtype)
    s_ref[:, 0:1, :] = jnp.sum(y, axis=0, keepdims=True)[:, None, :]
    s_ref[:, 1:2, :] = jnp.sum(y * y, axis=0, keepdims=True)[:, None, :]


def _bn_relu_kernel(y_ref, a_ref, c_ref, o_ref):
    # Pass 2: folded BN affine + ReLU, out = max(y*a + c, 0).
    # bf16 in / bf16 out, in place via input_output_aliases.
    y = y_ref[...].astype(jnp.float32)
    o_ref[...] = jnp.maximum(y * a_ref[...] + c_ref[...], 0.0).astype(o_ref.dtype)


def _conv_bn_relu_fused_kernel(p_ref, w_ref, g_ref, b_ref, o_ref, *, m_true, eps):
    # Single-pass path (layer fits one M tile): conv matmul, batch statistics,
    # folded BN affine and ReLU all fused — the f32 (M, Cp) intermediate and the
    # stats never leave VMEM, and the output hits HBM exactly once (bf16).
    y = jnp.dot(p_ref[...], w_ref[...], preferred_element_type=jnp.float32)
    inv_m = jnp.float32(1.0 / m_true)
    mean = jnp.sum(y, axis=0, keepdims=True) * inv_m                 # (1, Cp)
    ex2 = jnp.sum(y * y, axis=0, keepdims=True) * inv_m
    var = jnp.maximum(ex2 - mean * mean, 0.0)                        # clamp >= 0
    a = g_ref[...] * lax.rsqrt(var + eps)
    c = b_ref[...] - mean * a
    o_ref[...] = jnp.maximum(y * a + c, 0.0).astype(o_ref.dtype)


def _maxpool_kernel(ee_ref, eo_ref, oe_ref, oo_ref, o_ref, *, oh, ow):
    # 3x3 / stride-2 max pool expressed as a 9-way max of contiguous slices of
    # the even/odd row/column planes (ee/eo/oe/oo). All slices are unit-stride.
    m = oo_ref[0, :oh, :ow, :]                            # (di,dj) = (1,1)
    m = jnp.maximum(m, ee_ref[0, :oh, :ow, :])            # (0,0)
    m = jnp.maximum(m, ee_ref[0, :oh, 1:ow + 1, :])       # (0,2)
    m = jnp.maximum(m, ee_ref[0, 1:oh + 1, :ow, :])       # (2,0)
    m = jnp.maximum(m, ee_ref[0, 1:oh + 1, 1:ow + 1, :])  # (2,2)
    m = jnp.maximum(m, eo_ref[0, :oh, :ow, :])            # (0,1)
    m = jnp.maximum(m, eo_ref[0, 1:oh + 1, :ow, :])       # (2,1)
    m = jnp.maximum(m, oe_ref[0, :oh, :ow, :])            # (1,0)
    m = jnp.maximum(m, oe_ref[0, :oh, 1:ow + 1, :])       # (1,2)
    o_ref[0] = m


# ---------------------------------------------------------------------------
# JAX glue: im2col, tiling, pallas_call wrappers
# ---------------------------------------------------------------------------
def _extract_patches(x, k, stride, padding):
    # x: (N, H, W, C) -> (N, OH, OW, k*k*C), ordering (kh, kw, Cin)-major.
    if padding:
        x = jnp.pad(x, ((0, 0), (padding, padding), (padding, padding), (0, 0)))
    N, H, W, C = x.shape
    OH = (H - k) // stride + 1
    OW = (W - k) // stride + 1
    cols = []
    for di in range(k):
        for dj in range(k):
            cols.append(
                x[:, di:di + stride * (OH - 1) + 1:stride,
                     dj:dj + stride * (OW - 1) + 1:stride, :])
    return jnp.concatenate(cols, axis=-1), OH, OW


def conv_bn_relu(x, cin, w, gamma, beta, stride, padding=0, eps=_BN_EPS):
    """Conv2d(bias=False) + train-mode BatchNorm2d + ReLU.

    x: (N, H, W, Cs) bf16 NHWC with Cs >= cin; channels >= cin are exact zeros.
    w: (Cout, cin, kh, kw) f32 (PyTorch layout).
    Returns (N, OH, OW, Cp) bf16, Cp = round_up(Cout, 128); channels >= Cout are
    exact zeros (gamma_pad=1 / beta_pad=0 fold to a zero affine offset).
    """
    cout, _, kh, kw = w.shape
    n = x.shape[0]
    cs = x.shape[-1]
    cp = _round_up(cout, 128)
    x = x.astype(jnp.bfloat16)

    if kh == 1 and kw == 1 and stride == 1 and padding == 0:
        # 1x1 conv: no im2col — consume the channel-padded activation directly
        # and zero-pad the weight's K rows to match (padded channels are zero).
        oh, ow = x.shape[1], x.shape[2]
        k = cs
        pm = x.reshape(n * oh * ow, cs)
        wm = jnp.transpose(w, (2, 3, 1, 0)).reshape(cin, cout)
        wm = jnp.pad(wm, ((0, cs - cin), (0, cp - cout))).astype(jnp.bfloat16)
    else:
        # Slice off the zero channel padding first (keeps the 9x im2col patch
        # expansion at the true Cin), then build the (M, kh*kw*Cin) patches.
        if cs > cin:
            x = x[..., :cin]
        patches, oh, ow = _extract_patches(x, kh, stride, padding)
        k = kh * kw * cin
        pm = patches.reshape(n * oh * ow, k)
        wm = jnp.transpose(w, (2, 3, 1, 0)).reshape(k, cout)
        wm = jnp.pad(wm, ((0, 0), (0, cp - cout))).astype(jnp.bfloat16)

    m = n * oh * ow
    # Balanced M-tiling: mp barely exceeds m (and multi-tile layers keep >= 2
    # parallel grid steps so v7x megacore can shard them).
    n_tiles = max(1, pl.cdiv(m, _TM))
    tm = _round_up(pl.cdiv(m, n_tiles), 8)
    mp = tm * n_tiles
    if mp > m:
        pm = jnp.pad(pm, ((0, mp - m), (0, 0)))            # no K padding

    g_vec = jnp.pad(gamma.astype(jnp.float32), (0, cp - cout),
                    constant_values=1.0).reshape(1, cp)
    b_vec = jnp.pad(beta.astype(jnp.float32), (0, cp - cout)).reshape(1, cp)

    if n_tiles == 1:
        # ---- Fully fused single-pass conv + BN + ReLU -------------------------
        out = pl.pallas_call(
            functools.partial(_conv_bn_relu_fused_kernel, m_true=m, eps=eps),
            out_shape=jax.ShapeDtypeStruct((mp, cp), jnp.bfloat16),
            grid=(1,),
            in_specs=[
                pl.BlockSpec((tm, k), lambda i: (0, 0)),
                pl.BlockSpec((k, cp), lambda i: (0, 0)),
                pl.BlockSpec((1, cp), lambda i: (0, 0)),
                pl.BlockSpec((1, cp), lambda i: (0, 0)),
            ],
            out_specs=pl.BlockSpec((tm, cp), lambda i: (0, 0)),
            compiler_params=pltpu.CompilerParams(
                dimension_semantics=("arbitrary",),
                vmem_limit_bytes=_VMEM_LIMIT),
        )(pm, wm, g_vec, b_vec)
        return out[:m].reshape(n, oh, ow, cp)

    # ---- Pass 1: tiled matmul + partial per-channel stats (parallel over M) ----
    y, stats = pl.pallas_call(
        _conv_stats_kernel,
        out_shape=(
            jax.ShapeDtypeStruct((mp, cp), jnp.bfloat16),
            jax.ShapeDtypeStruct((n_tiles, 2, cp), jnp.float32),
        ),
        grid=(n_tiles,),
        in_specs=[
            pl.BlockSpec((tm, k), lambda i: (i, 0)),
            pl.BlockSpec((k, cp), lambda i: (0, 0)),
        ],
        out_specs=(
            pl.BlockSpec((tm, cp), lambda i: (i, 0)),
            pl.BlockSpec((1, 2, cp), lambda i: (i, 0, 0)),
        ),
        compiler_params=pltpu.CompilerParams(
            dimension_semantics=("parallel",),
            vmem_limit_bytes=_VMEM_LIMIT),
    )(pm, wm)

    # ---- Per-channel stat reduction + BN affine fold (tiny, stays in XLA/f32) --
    # Padded M rows are exact zeros (contribute nothing); divide by the true m.
    # Train-mode BatchNorm (biased variance), eps=1e-3.
    ssum = jnp.sum(stats[:, 0, :], axis=0)
    ssq = jnp.sum(stats[:, 1, :], axis=0)
    mean = ssum / m
    var = jnp.maximum(ssq / m - mean * mean, 0.0)
    a_vec = (g_vec * lax.rsqrt(var + eps).reshape(1, cp))
    c_vec = (b_vec - mean.reshape(1, cp) * a_vec)

    # ---- Pass 2: in-place folded affine + ReLU over M tiles (bf16) ------------
    out = pl.pallas_call(
        _bn_relu_kernel,
        out_shape=jax.ShapeDtypeStruct((mp, cp), jnp.bfloat16),
        grid=(n_tiles,),
        in_specs=[
            pl.BlockSpec((tm, cp), lambda i: (i, 0)),
            pl.BlockSpec((1, cp), lambda i: (0, 0)),
            pl.BlockSpec((1, cp), lambda i: (0, 0)),
        ],
        out_specs=pl.BlockSpec((tm, cp), lambda i: (i, 0)),
        input_output_aliases={0: 0},
        compiler_params=pltpu.CompilerParams(
            dimension_semantics=("parallel",),
            vmem_limit_bytes=_VMEM_LIMIT),
    )(y, a_vec, c_vec)

    return out[:m].reshape(n, oh, ow, cp)


def maxpool3x3_s2(x):
    # x: (N, H, W, C) bf16 NHWC; kernel 3, stride 2, no padding (floor mode).
    # Consumes channel-padded activations directly (padded zeros stay zero).
    n, h, w, c = x.shape
    oh = (h - 3) // 2 + 1
    ow = (w - 3) // 2 + 1
    cp = _round_up(c, 128)
    xp = x if cp == c else jnp.pad(x, ((0, 0), (0, 0), (0, 0), (0, cp - c)))

    # Even/odd row & column planes: x[2i+di, 2j+dj] becomes a contiguous index
    # into one of four planes, so the kernel needs no strided reads.
    xee = xp[:, 0::2, 0::2, :]
    xeo = xp[:, 0::2, 1::2, :]
    xoe = xp[:, 1::2, 0::2, :]
    xoo = xp[:, 1::2, 1::2, :]
    he, we = xee.shape[1], xee.shape[2]
    ho, wo = xoo.shape[1], xoo.shape[2]

    kernel = functools.partial(_maxpool_kernel, oh=oh, ow=ow)
    out = pl.pallas_call(
        kernel,
        out_shape=jax.ShapeDtypeStruct((n, oh, ow, cp), x.dtype),
        grid=(n,),
        in_specs=[
            pl.BlockSpec((1, he, we, cp), lambda i: (i, 0, 0, 0)),
            pl.BlockSpec((1, he, wo, cp), lambda i: (i, 0, 0, 0)),
            pl.BlockSpec((1, ho, we, cp), lambda i: (i, 0, 0, 0)),
            pl.BlockSpec((1, ho, wo, cp), lambda i: (i, 0, 0, 0)),
        ],
        out_specs=pl.BlockSpec((1, oh, ow, cp), lambda i: (i, 0, 0, 0)),
        compiler_params=pltpu.CompilerParams(
            dimension_semantics=("parallel",),
            vmem_limit_bytes=_VMEM_LIMIT),
    )(xee, xeo, xoe, xoo)
    return out


# ---------------------------------------------------------------------------
# Stem module (Inception-ResNet-V1) — deterministic synthetic parameters
# ---------------------------------------------------------------------------
_LAYER_CFGS = [
    # (in_ch, out_ch, kernel, stride, padding)
    (3, 32, 3, 2, 0),     # conv2d_1
    (32, 32, 3, 1, 0),    # conv2d_2
    (32, 64, 3, 1, 1),    # conv2d_3
    (64, 80, 1, 1, 0),    # conv2d_4
    (80, 192, 3, 1, 0),   # conv2d_5
    (192, 256, 3, 2, 0),  # conv2d_6
]


def init_params(key):
    params = []
    for cin, cout, k, _, _ in _LAYER_CFGS:
        key, kw_, kg, kb = jax.random.split(key, 4)
        fan_in = cin * k * k
        w = jax.random.normal(kw_, (cout, cin, k, k), jnp.float32) / jnp.sqrt(
            jnp.float32(fan_in))
        gamma = 1.0 + 0.1 * jax.random.normal(kg, (cout,), jnp.float32)
        beta = 0.1 * jax.random.normal(kb, (cout,), jnp.float32)
        params.append((w, gamma, beta))
    return params


def stem_forward(x_nchw, params):
    # NCHW -> bf16 NHWC for the kernels; activations stay channel-padded bf16
    # across the stem; slice/cast back to f32 NCHW once at the end.
    x = jnp.transpose(x_nchw, (0, 2, 3, 1)).astype(jnp.bfloat16)

    # conv2d_1 .. conv2d_3
    for idx in range(3):
        cin, _, _, stride, pad = _LAYER_CFGS[idx]
        w, g, b = params[idx]
        x = conv_bn_relu(x, cin, w, g, b, stride=stride, padding=pad)

    # maxpool 3x3 stride 2 (consumes conv3's padded output directly)
    x = maxpool3x3_s2(x)

    # conv2d_4 .. conv2d_6
    for idx in range(3, 6):
        cin, _, _, stride, pad = _LAYER_CFGS[idx]
        w, g, b = params[idx]
        x = conv_bn_relu(x, cin, w, g, b, stride=stride, padding=pad)

    cout_final = _LAYER_CFGS[-1][1]
    x = x[..., :cout_final].astype(jnp.float32)
    return jnp.transpose(x, (0, 3, 1, 2))  # back to NCHW


if __name__ == "__main__":
    key = jax.random.PRNGKey(0)
    key, kx = jax.random.split(key)
    # Smallest comfortable spatial size for this stem: 39 -> output 2x2.
    x = jax.random.normal(kx, (2, 3, 39, 39), jnp.float32)
    params = init_params(key)

    stem = jax.jit(stem_forward)
    out = stem(x, params)
    out = jax.block_until_ready(out)

    assert out.shape == (2, 256, 2, 2), out.shape
    assert out.dtype == jnp.float32
    assert bool(jnp.all(jnp.isfinite(out)))
    print("KERNEL_OK")
</pallas_src>

<mosaic_0001>
module attributes {stable_mosaic.version = 11 : i64} {
  func.func @_conv_stats_kernel(%arg0: i32, %arg1: memref<368x27xbf16, #tpu.memory_space<vmem>>, %arg2: memref<27x128xbf16, #tpu.memory_space<vmem>>, %arg3: memref<368x128xbf16, #tpu.memory_space<vmem>>, %arg4: memref<1x2x128xf32, #tpu.memory_space<vmem>>) attributes {dimension_semantics = [#tpu.dimension_semantics<parallel>], iteration_bounds = array<i64: 2>, scalar_prefetch = 0 : i64, scratch_operands = 0 : i64, tpu.core_type = #tpu.core_type<tc>, window_params = [{transform_indices = @transform_0, window_bounds = array<i64: 368, 27>}, {pipeline_mode = #tpu.pipeline_mode<synchronous>, transform_indices = @transform_1, window_bounds = array<i64: 27, 128>}, {transform_indices = @transform_2, window_bounds = array<i64: 368, 128>}, {transform_indices = @transform_3, window_bounds = array<i64: 1, 2, 128>}]} {
    %c0 = arith.constant 0 : index
    %c0_0 = arith.constant 0 : index
    %0 = vector.load %arg1[%c0, %c0_0] : memref<368x27xbf16, #tpu.memory_space<vmem>>, vector<368x27xbf16>
    %c0_1 = arith.constant 0 : index
    %c0_2 = arith.constant 0 : index
    %1 = vector.load %arg2[%c0_1, %c0_2] : memref<27x128xbf16, #tpu.memory_space<vmem>>, vector<27x128xbf16>
    %cst = arith.constant dense<0.000000e+00> : vector<368x128xf32>
    %2 = tpu.matmul %0, %1, %cst {dimension_numbers = #tpu.dot_dimension_numbers<[1], [0], [0], [1], [0, 0, 1, 1], [], []>} : vector<368x27xbf16>, vector<27x128xbf16>, vector<368x128xf32> -> vector<368x128xf32>
    %3 = arith.truncf %2 : vector<368x128xf32> to vector<368x128xbf16>
    %c0_3 = arith.constant 0 : index
    %c0_4 = arith.constant 0 : index
    %4 = vector.load %arg3[%c0_3, %c0_4] : memref<368x128xbf16, #tpu.memory_space<vmem>>, vector<368x128xbf16>
    tpu.vector_store %arg3[%c0_3, %c0_4], %3 {strides = array<i32>} : memref<368x128xbf16, #tpu.memory_space<vmem>>, vector<368x128xbf16>,
    %cst_5 = arith.constant dense<0.000000e+00> : vector<128xf32>
    %5 = vector.multi_reduction <add>, %2, %cst_5 [0] : vector<368x128xf32> to vector<128xf32>
    %6 = vector.shape_cast %5 : vector<128xf32> to vector<1x128xf32>
    %7 = vector.shape_cast %6 : vector<1x128xf32> to vector<1x1x128xf32>
    %c0_6 = arith.constant 0 : index
    %c0_7 = arith.constant 0 : index
    %c0_8 = arith.constant 0 : index
    %8 = vector.load %arg4[%c0_6, %c0_7, %c0_8] : memref<1x2x128xf32, #tpu.memory_space<vmem>>, vector<1x1x128xf32>
    tpu.vector_store %arg4[%c0_6, %c0_7, %c0_8], %7 {strides = array<i32>} : memref<1x2x128xf32, #tpu.memory_space<vmem>>, vector<1x1x128xf32>,
    %9 = arith.mulf %2, %2 : vector<368x128xf32>
    %cst_9 = arith.constant dense<0.000000e+00> : vector<128xf32>
    %10 = vector.multi_reduction <add>, %9, %cst_9 [0] : vector<368x128xf32> to vector<128xf32>
    %11 = vector.shape_cast %10 : vector<128xf32> to vector<1x128xf32>
    %12 = vector.shape_cast %11 : vector<1x128xf32> to vector<1x1x128xf32>
    %c0_10 = arith.constant 0 : index
    %c1 = arith.constant 1 : index
    %c0_11 = arith.constant 0 : index
    %13 = vector.load %arg4[%c0_10, %c1, %c0_11] : memref<1x2x128xf32, #tpu.memory_space<vmem>>, vector<1x1x128xf32>
    tpu.vector_store %arg4[%c0_10, %c1, %c0_11], %12 {strides = array<i32>} : memref<1x2x128xf32, #tpu.memory_space<vmem>>, vector<1x1x128xf32>,
    return
  }
  func.func @transform_0(%arg0: i32) -> (i32, i32) {
    %c0_i32 = arith.constant 0 : i32
    %c0_i32_0 = arith.constant 0 : i32
    return %arg0, %c0_i32 : i32, i32
  }
  func.func @transform_1(%arg0: i32) -> (i32, i32) {
    %c0_i32 = arith.constant 0 : i32
    %c0_i32_0 = arith.constant 0 : i32
    %c0_i32_1 = arith.constant 0 : i32
    return %c0_i32, %c0_i32_0 : i32, i32
  }
  func.func @transform_2(%arg0: i32) -> (i32, i32) {
    %c0_i32 = arith.constant 0 : i32
    %c0_i32_0 = arith.constant 0 : i32
    return %arg0, %c0_i32 : i32, i32
  }
  func.func @transform_3(%arg0: i32) -> (i32, i32, i32) {
    %c0_i32 = arith.constant 0 : i32
    %c0_i32_0 = arith.constant 0 : i32
    %c0_i32_1 = arith.constant 0 : i32
    return %arg0, %c0_i32, %c0_i32_0 : i32, i32, i32
  }
}

module attributes {stable_mosaic.version = 11 : i64} {
  func.func @_bn_relu_kernel(%arg0: i32, %arg1: memref<368x128xbf16, #tpu.memory_space<vmem>>, %arg2: memref<1x128xf32, #tpu.memory_space<vmem>>, %arg3: memref<1x128xf32, #tpu.memory_space<vmem>>, %arg4: memref<368x128xbf16, #tpu.memory_space<vmem>>) attributes {dimension_semantics = [#tpu.dimension_semantics<parallel>], iteration_bounds = array<i64: 2>, scalar_prefetch = 0 : i64, scratch_operands = 0 : i64, tpu.core_type = #tpu.core_type<tc>, window_params = [{transform_indices = @transform_0, window_bounds = array<i64: 368, 128>}, {pipeline_mode = #tpu.pipeline_mode<synchronous>, transform_indices = @transform_1, window_bounds = array<i64: 1, 128>}, {pipeline_mode = #tpu.pipeline_mode<synchronous>, transform_indices = @transform_2, window_bounds = array<i64: 1, 128>}, {transform_indices = @transform_3, window_bounds = array<i64: 368, 128>}]} {
    %c0 = arith.constant 0 : index
    %c0_0 = arith.constant 0 : index
    %0 = vector.load %arg1[%c0, %c0_0] : memref<368x128xbf16, #tpu.memory_space<vmem>>, vector<368x128xbf16>
    %1 = arith.extf %0 : vector<368x128xbf16> to vector<368x128xf32>
    %c0_1 = arith.constant 0 : index
    %c0_2 = arith.constant 0 : index
    %2 = vector.load %arg2[%c0_1, %c0_2] : memref<1x128xf32, #tpu.memory_space<vmem>>, vector<1x128xf32>
    %3 = vector.broadcast %2 : vector<1x128xf32> to vector<368x128xf32>
    %4 = arith.mulf %1, %3 : vector<368x128xf32>
    %c0_3 = arith.constant 0 : index
    %c0_4 = arith.constant 0 : index
    %5 = vector.load %arg3[%c0_3, %c0_4] : memref<1x128xf32, #tpu.memory_space<vmem>>, vector<1x128xf32>
    %6 = vector.broadcast %5 : vector<1x128xf32> to vector<368x128xf32>
    %7 = arith.addf %4, %6 : vector<368x128xf32>
    %cst = arith.constant 0.000000e+00 : f32
    %8 = vector.broadcast %cst : f32 to vector<368x128xf32>
    %9 = arith.maximumf %7, %8 : vector<368x128xf32>
    %10 = arith.truncf %9 : vector<368x128xf32> to vector<368x128xbf16>
    %c0_5 = arith.constant 0 : index
    %c0_6 = arith.constant 0 : index
    %11 = vector.load %arg4[%c0_5, %c0_6] : memref<368x128xbf16, #tpu.memory_space<vmem>>, vector<368x128xbf16>
    tpu.vector_store %arg4[%c0_5, %c0_6], %10 {strides = array<i32>} : memref<368x128xbf16, #tpu.memory_space<vmem>>, vector<368x128xbf16>,
    return
  }
  func.func @transform_0(%arg0: i32) -> (i32, i32) {
    %c0_i32 = arith.constant 0 : i32
    %c0_i32_0 = arith.constant 0 : i32
    return %arg0, %c0_i32 : i32, i32
  }
  func.func @transform_1(%arg0: i32) -> (i32, i32) {
    %c0_i32 = arith.constant 0 : i32
    %c0_i32_0 = arith.constant 0 : i32
    %c0_i32_1 = arith.constant 0 : i32
    return %c0_i32, %c0_i32_0 : i32, i32
  }
  func.func @transform_2(%arg0: i32) -> (i32, i32) {
    %c0_i32 = arith.constant 0 : i32
    %c0_i32_0 = arith.constant 0 : i32
    %c0_i32_1 = arith.constant 0 : i32
    return %c0_i32, %c0_i32_0 : i32, i32
  }
  func.func @transform_3(%arg0: i32) -> (i32, i32) {
    %c0_i32 = arith.constant 0 : i32
    %c0_i32_0 = arith.constant 0 : i32
    return %arg0, %c0_i32 : i32, i32
  }
}

module attributes {stable_mosaic.version = 11 : i64} {
  func.func @_conv_stats_kernel(%arg0: i32, %arg1: memref<296x288xbf16, #tpu.memory_space<vmem>>, %arg2: memref<288x128xbf16, #tpu.memory_space<vmem>>, %arg3: memref<296x128xbf16, #tpu.memory_space<vmem>>, %arg4: memref<1x2x128xf32, #tpu.memory_space<vmem>>) attributes {dimension_semantics = [#tpu.dimension_semantics<parallel>], iteration_bounds = array<i64: 2>, scalar_prefetch = 0 : i64, scratch_operands = 0 : i64, tpu.core_type = #tpu.core_type<tc>, window_params = [{transform_indices = @transform_0, window_bounds = array<i64: 296, 288>}, {pipeline_mode = #tpu.pipeline_mode<synchronous>, transform_indices = @transform_1, window_bounds = array<i64: 288, 128>}, {transform_indices = @transform_2, window_bounds = array<i64: 296, 128>}, {transform_indices = @transform_3, window_bounds = array<i64: 1, 2, 128>}]} {
    %c0 = arith.constant 0 : index
    %c0_0 = arith.constant 0 : index
    %0 = vector.load %arg1[%c0, %c0_0] : memref<296x288xbf16, #tpu.memory_space<vmem>>, vector<296x288xbf16>
    %c0_1 = arith.constant 0 : index
    %c0_2 = arith.constant 0 : index
    %1 = vector.load %arg2[%c0_1, %c0_2] : memref<288x128xbf16, #tpu.memory_space<vmem>>, vector<288x128xbf16>
    %cst = arith.constant dense<0.000000e+00> : vector<296x128xf32>
    %2 = tpu.matmul %0, %1, %cst {dimension_numbers = #tpu.dot_dimension_numbers<[1], [0], [0], [1], [0, 0, 1, 1], [], []>} : vector<296x288xbf16>, vector<288x128xbf16>, vector<296x128xf32> -> vector<296x128xf32>
    %3 = arith.truncf %2 : vector<296x128xf32> to vector<296x128xbf16>
    %c0_3 = arith.constant 0 : index
    %c0_4 = arith.constant 0 : index
    %4 = vector.load %arg3[%c0_3, %c0_4] : memref<296x128xbf16, #tpu.memory_space<vmem>>, vector<296x128xbf16>
    tpu.vector_store %arg3[%c0_3, %c0_4], %3 {strides = array<i32>} : memref<296x128xbf16, #tpu.memory_space<vmem>>, vector<296x128xbf16>,
    %cst_5 = arith.constant dense<0.000000e+00> : vector<128xf32>
    %5 = vector.multi_reduction <add>, %2, %cst_5 [0] : vector<296x128xf32> to vector<128xf32>
    %6 = vector.shape_cast %5 : vector<128xf32> to vector<1x128xf32>
    %7 = vector.shape_cast %6 : vector<1x128xf32> to vector<1x1x128xf32>
    %c0_6 = arith.constant 0 : index
    %c0_7 = arith.constant 0 : index
    %c0_8 = arith.constant 0 : index
    %8 = vector.load %arg4[%c0_6, %c0_7, %c0_8] : memref<1x2x128xf32, #tpu.memory_space<vmem>>, vector<1x1x128xf32>
    tpu.vector_store %arg4[%c0_6, %c0_7, %c0_8], %7 {strides = array<i32>} : memref<1x2x128xf32, #tpu.memory_space<vmem>>, vector<1x1x128xf32>,
    %9 = arith.mulf %2, %2 : vector<296x128xf32>
    %cst_9 = arith.constant dense<0.000000e+00> : vector<128xf32>
    %10 = vector.multi_reduction <add>, %9, %cst_9 [0] : vector<296x128xf32> to vector<128xf32>
    %11 = vector.shape_cast %10 : vector<128xf32> to vector<1x128xf32>
    %12 = vector.shape_cast %11 : vector<1x128xf32> to vector<1x1x128xf32>
    %c0_10 = arith.constant 0 : index
    %c1 = arith.constant 1 : index
    %c0_11 = arith.constant 0 : index
    %13 = vector.load %arg4[%c0_10, %c1, %c0_11] : memref<1x2x128xf32, #tpu.memory_space<vmem>>, vector<1x1x128xf32>
    tpu.vector_store %arg4[%c0_10, %c1, %c0_11], %12 {strides = array<i32>} : memref<1x2x128xf32, #tpu.memory_space<vmem>>, vector<1x1x128xf32>,
    return
  }
  func.func @transform_0(%arg0: i32) -> (i32, i32) {
    %c0_i32 = arith.constant 0 : i32
    %c0_i32_0 = arith.constant 0 : i32
    return %arg0, %c0_i32 : i32, i32
  }
  func.func @transform_1(%arg0: i32) -> (i32, i32) {
    %c0_i32 = arith.constant 0 : i32
    %c0_i32_0 = arith.constant 0 : i32
    %c0_i32_1 = arith.constant 0 : i32
    return %c0_i32, %c0_i32_0 : i32, i32
  }
  func.func @transform_2(%arg0: i32) -> (i32, i32) {
    %c0_i32 = arith.constant 0 : i32
    %c0_i32_0 = arith.constant 0 : i32
    return %arg0, %c0_i32 : i32, i32
  }
  func.func @transform_3(%arg0: i32) -> (i32, i32, i32) {
    %c0_i32 = arith.constant 0 : i32
    %c0_i32_0 = arith.constant 0 : i32
    %c0_i32_1 = arith.constant 0 : i32
    return %arg0, %c0_i32, %c0_i32_0 : i32, i32, i32
  }
}

module attributes {stable_mosaic.version = 11 : i64} {
  func.func @_bn_relu_kernel(%arg0: i32, %arg1: memref<296x128xbf16, #tpu.memory_space<vmem>>, %arg2: memref<1x128xf32, #tpu.memory_space<vmem>>, %arg3: memref<1x128xf32, #tpu.memory_space<vmem>>, %arg4: memref<296x128xbf16, #tpu.memory_space<vmem>>) attributes {dimension_semantics = [#tpu.dimension_semantics<parallel>], iteration_bounds = array<i64: 2>, scalar_prefetch = 0 : i64, scratch_operands = 0 : i64, tpu.core_type = #tpu.core_type<tc>, window_params = [{transform_indices = @transform_0, window_bounds = array<i64: 296, 128>}, {pipeline_mode = #tpu.pipeline_mode<synchronous>, transform_indices = @transform_1, window_bounds = array<i64: 1, 128>}, {pipeline_mode = #tpu.pipeline_mode<synchronous>, transform_indices = @transform_2, window_bounds = array<i64: 1, 128>}, {transform_indices = @transform_3, window_bounds = array<i64: 296, 128>}]} {
    %c0 = arith.constant 0 : index
    %c0_0 = arith.constant 0 : index
    %0 = vector.load %arg1[%c0, %c0_0] : memref<296x128xbf16, #tpu.memory_space<vmem>>, vector<296x128xbf16>
    %1 = arith.extf %0 : vector<296x128xbf16> to vector<296x128xf32>
    %c0_1 = arith.constant 0 : index
    %c0_2 = arith.constant 0 : index
    %2 = vector.load %arg2[%c0_1, %c0_2] : memref<1x128xf32, #tpu.memory_space<vmem>>, vector<1x128xf32>
    %3 = vector.broadcast %2 : vector<1x128xf32> to vector<296x128xf32>
    %4 = arith.mulf %1, %3 : vector<296x128xf32>
    %c0_3 = arith.constant 0 : index
    %c0_4 = arith.constant 0 : index
    %5 = vector.load %arg3[%c0_3, %c0_4] : memref<1x128xf32, #tpu.memory_space<vmem>>, vector<1x128xf32>
    %6 = vector.broadcast %5 : vector<1x128xf32> to vector<296x128xf32>
    %7 = arith.addf %4, %6 : vector<296x128xf32>
    %cst = arith.constant 0.000000e+00 : f32
    %8 = vector.broadcast %cst : f32 to vector<296x128xf32>
    %9 = arith.maximumf %7, %8 : vector<296x128xf32>
    %10 = arith.truncf %9 : vector<296x128xf32> to vector<296x128xbf16>
    %c0_5 = arith.constant 0 : index
    %c0_6 = arith.constant 0 : index
    %11 = vector.load %arg4[%c0_5, %c0_6] : memref<296x128xbf16, #tpu.memory_space<vmem>>, vector<296x128xbf16>
    tpu.vector_store %arg4[%c0_5, %c0_6], %10 {strides = array<i32>} : memref<296x128xbf16, #tpu.memory_space<vmem>>, vector<296x128xbf16>,
    return
  }
  func.func @transform_0(%arg0: i32) -> (i32, i32) {
    %c0_i32 = arith.constant 0 : i32
    %c0_i32_0 = arith.constant 0 : i32
    return %arg0, %c0_i32 : i32, i32
  }
  func.func @transform_1(%arg0: i32) -> (i32, i32) {
    %c0_i32 = arith.constant 0 : i32
    %c0_i32_0 = arith.constant 0 : i32
    %c0_i32_1 = arith.constant 0 : i32
    return %c0_i32, %c0_i32_0 : i32, i32
  }
  func.func @transform_2(%arg0: i32) -> (i32, i32) {
    %c0_i32 = arith.constant 0 : i32
    %c0_i32_0 = arith.constant 0 : i32
    %c0_i32_1 = arith.constant 0 : i32
    return %c0_i32, %c0_i32_0 : i32, i32
  }
  func.func @transform_3(%arg0: i32) -> (i32, i32) {
    %c0_i32 = arith.constant 0 : i32
    %c0_i32_0 = arith.constant 0 : i32
    return %arg0, %c0_i32 : i32, i32
  }
}

module attributes {stable_mosaic.version = 11 : i64} {
  func.func @_maxpool_kernel(%arg0: i32, %arg1: memref<1x9x9x128xbf16, #tpu.memory_space<vmem>>, %arg2: memref<1x9x8x128xbf16, #tpu.memory_space<vmem>>, %arg3: memref<1x8x9x128xbf16, #tpu.memory_space<vmem>>, %arg4: memref<1x8x8x128xbf16, #tpu.memory_space<vmem>>, %arg5: memref<1x8x8x128xbf16, #tpu.memory_space<vmem>>) attributes {dimension_semantics = [#tpu.dimension_semantics<parallel>], iteration_bounds = array<i64: 2>, scalar_prefetch = 0 : i64, scratch_operands = 0 : i64, tpu.core_type = #tpu.core_type<tc>, window_params = [{transform_indices = @transform_0, window_bounds = array<i64: 1, 9, 9, 128>}, {transform_indices = @transform_1, window_bounds = array<i64: 1, 9, 8, 128>}, {transform_indices = @transform_2, window_bounds = array<i64: 1, 8, 9, 128>}, {transform_indices = @transform_3, window_bounds = array<i64: 1, 8, 8, 128>}, {transform_indices = @transform_4, window_bounds = array<i64: 1, 8, 8, 128>}]} {
    %c0 = arith.constant 0 : index
    %c0_0 = arith.constant 0 : index
    %c0_1 = arith.constant 0 : index
    %c0_2 = arith.constant 0 : index
    %0 = vector.load %arg4[%c0, %c0_0, %c0_1, %c0_2] : memref<1x8x8x128xbf16, #tpu.memory_space<vmem>>, vector<1x8x8x128xbf16>
    %1 = vector.shape_cast %0 : vector<1x8x8x128xbf16> to vector<8x8x128xbf16>
    %c0_3 = arith.constant 0 : index
    %c0_4 = arith.constant 0 : index
    %c0_5 = arith.constant 0 : index
    %c0_6 = arith.constant 0 : index
    %2 = vector.load %arg1[%c0_3, %c0_4, %c0_5, %c0_6] : memref<1x9x9x128xbf16, #tpu.memory_space<vmem>>, vector<1x8x8x128xbf16>
    %3 = vector.shape_cast %2 : vector<1x8x8x128xbf16> to vector<8x8x128xbf16>
    %4 = arith.maximumf %1, %3 : vector<8x8x128xbf16>
    %c0_7 = arith.constant 0 : index
    %c0_8 = arith.constant 0 : index
    %c1 = arith.constant 1 : index
    %c0_9 = arith.constant 0 : index
    %5 = vector.load %arg1[%c0_7, %c0_8, %c1, %c0_9] : memref<1x9x9x128xbf16, #tpu.memory_space<vmem>>, vector<1x8x8x128xbf16>
    %6 = vector.shape_cast %5 : vector<1x8x8x128xbf16> to vector<8x8x128xbf16>
    %7 = arith.maximumf %4, %6 : vector<8x8x128xbf16>
    %c0_10 = arith.constant 0 : index
    %c1_11 = arith.constant 1 : index
    %c0_12 = arith.constant 0 : index
    %c0_13 = arith.constant 0 : index
    %8 = vector.load %arg1[%c0_10, %c1_11, %c0_12, %c0_13] : memref<1x9x9x128xbf16, #tpu.memory_space<vmem>>, vector<1x8x8x128xbf16>
    %9 = vector.shape_cast %8 : vector<1x8x8x128xbf16> to vector<8x8x128xbf16>
    %10 = arith.maximumf %7, %9 : vector<8x8x128xbf16>
    %c0_14 = arith.constant 0 : index
    %c1_15 = arith.constant 1 : index
    %c1_16 = arith.constant 1 : index
    %c0_17 = arith.constant 0 : index
    %11 = vector.load %arg1[%c0_14, %c1_15, %c1_16, %c0_17] : memref<1x9x9x128xbf16, #tpu.memory_space<vmem>>, vector<1x8x8x128xbf16>
    %12 = vector.shape_cast %11 : vector<1x8x8x128xbf16> to vector<8x8x128xbf16>
    %13 = arith.maximumf %10, %12 : vector<8x8x128xbf16>
    %c0_18 = arith.constant 0 : index
    %c0_19 = arith.constant 0 : index
    %c0_20 = arith.constant 0 : index
    %c0_21 = arith.constant 0 : index
    %14 = vector.load %arg2[%c0_18, %c0_19, %c0_20, %c0_21] : memref<1x9x8x128xbf16, #tpu.memory_space<vmem>>, vector<1x8x8x128xbf16>
    %15 = vector.shape_cast %14 : vector<1x8x8x128xbf16> to vector<8x8x128xbf16>
    %16 = arith.maximumf %13, %15 : vector<8x8x128xbf16>
    %c0_22 = arith.constant 0 : index
    %c1_23 = arith.constant 1 : index
    %c0_24 = arith.constant 0 : index
    %c0_25 = arith.constant 0 : index
    %17 = vector.load %arg2[%c0_22, %c1_23, %c0_24, %c0_25] : memref<1x9x8x128xbf16, #tpu.memory_space<vmem>>, vector<1x8x8x128xbf16>
    %18 = vector.shape_cast %17 : vector<1x8x8x128xbf16> to vector<8x8x128xbf16>
    %19 = arith.maximumf %16, %18 : vector<8x8x128xbf16>
    %c0_26 = arith.constant 0 : index
    %c0_27 = arith.constant 0 : index
    %c0_28 = arith.constant 0 : index
    %c0_29 = arith.constant 0 : index
    %20 = vector.load %arg3[%c0_26, %c0_27, %c0_28, %c0_29] : memref<1x8x9x128xbf16, #tpu.memory_space<vmem>>, vector<1x8x8x128xbf16>
    %21 = vector.shape_cast %20 : vector<1x8x8x128xbf16> to vector<8x8x128xbf16>
    %22 = arith.maximumf %19, %21 : vector<8x8x128xbf16>
    %c0_30 = arith.constant 0 : index
    %c0_31 = arith.constant 0 : index
    %c1_32 = arith.constant 1 : index
    %c0_33 = arith.constant 0 : index
    %23 = vector.load %arg3[%c0_30, %c0_31, %c1_32, %c0_33] : memref<1x8x9x128xbf16, #tpu.memory_space<vmem>>, vector<1x8x8x128xbf16>
    %24 = vector.shape_cast %23 : vector<1x8x8x128xbf16> to vector<8x8x128xbf16>
    %25 = arith.maximumf %22, %24 : vector<8x8x128xbf16>
    %c0_34 = arith.constant 0 : index
    %c0_35 = arith.constant 0 : index
    %c0_36 = arith.constant 0 : index
    %c0_37 = arith.constant 0 : index
    %26 = vector.load %arg5[%c0_34, %c0_35, %c0_36, %c0_37] : memref<1x8x8x128xbf16, #tpu.memory_space<vmem>>, vector<1x8x8x128xbf16>
    %27 = vector.shape_cast %26 : vector<1x8x8x128xbf16> to vector<8x8x128xbf16>
    %28 = vector.shape_cast %25 : vector<8x8x128xbf16> to vector<1x8x8x128xbf16>
    tpu.vector_store %arg5[%c0_34, %c0_35, %c0_36, %c0_37], %28 {strides = array<i32>} : memref<1x8x8x128xbf16, #tpu.memory_space<vmem>>, vector<1x8x8x128xbf16>,
    return
  }
  func.func @transform_0(%arg0: i32) -> (i32, i32, i32, i32) {
    %c0_i32 = arith.constant 0 : i32
    %c0_i32_0 = arith.constant 0 : i32
    %c0_i32_1 = arith.constant 0 : i32
    %c0_i32_2 = arith.constant 0 : i32
    return %arg0, %c0_i32, %c0_i32_0, %c0_i32_1 : i32, i32, i32, i32
  }
  func.func @transform_1(%arg0: i32) -> (i32, i32, i32, i32) {
    %c0_i32 = arith.constant 0 : i32
    %c0_i32_0 = arith.constant 0 : i32
    %c0_i32_1 = arith.constant 0 : i32
    %c0_i32_2 = arith.constant 0 : i32
    return %arg0, %c0_i32, %c0_i32_0, %c0_i32_1 : i32, i32, i32, i32
  }
  func.func @transform_2(%arg0: i32) -> (i32, i32, i32, i32) {
    %c0_i32 = arith.constant 0 : i32
    %c0_i32_0 = arith.constant 0 : i32
    %c0_i32_1 = arith.constant 0 : i32
    %c0_i32_2 = arith.constant 0 : i32
    return %arg0, %c0_i32, %c0_i32_0, %c0_i32_1 : i32, i32, i32, i32
  }
  func.func @transform_3(%arg0: i32) -> (i32, i32, i32, i32) {
    %c0_i32 = arith.constant 0 : i32
    %c0_i32_0 = arith.constant 0 : i32
    %c0_i32_1 = arith.constant 0 : i32
    %c0_i32_2 = arith.constant 0 : i32
    return %arg0, %c0_i32, %c0_i32_0, %c0_i32_1 : i32, i32, i32, i32
  }
  func.func @transform_4(%arg0: i32) -> (i32, i32, i32, i32) {
    %c0_i32 = arith.constant 0 : i32
    %c0_i32_0 = arith.constant 0 : i32
    %c0_i32_1 = arith.constant 0 : i32
    %c0_i32_2 = arith.constant 0 : i32
    return %arg0, %c0_i32, %c0_i32_0, %c0_i32_1 : i32, i32, i32, i32
  }
}

module attributes {stable_mosaic.version = 11 : i64} {
  func.func @_conv_bn_relu_fused_kernel(%arg0: i32, %arg1: memref<128x128xbf16, #tpu.memory_space<vmem>>, %arg2: memref<128x128xbf16, #tpu.memory_space<vmem>>, %arg3: memref<1x128xf32, #tpu.memory_space<vmem>>, %arg4: memref<1x128xf32, #tpu.memory_space<vmem>>, %arg5: memref<128x128xbf16, #tpu.memory_space<vmem>>) attributes {dimension_semantics = [#tpu.dimension_semantics<arbitrary>], iteration_bounds = array<i64: 1>, scalar_prefetch = 0 : i64, scratch_operands = 0 : i64, tpu.core_type = #tpu.core_type<tc>, window_params = [{pipeline_mode = #tpu.pipeline_mode<synchronous>, transform_indices = @transform_0, window_bounds = array<i64: 128, 128>}, {pipeline_mode = #tpu.pipeline_mode<synchronous>, transform_indices = @transform_1, window_bounds = array<i64: 128, 128>}, {pipeline_mode = #tpu.pipeline_mode<synchronous>, transform_indices = @transform_2, window_bounds = array<i64: 1, 128>}, {pipeline_mode = #tpu.pipeline_mode<synchronous>, transform_indices = @transform_3, window_bounds = array<i64: 1, 128>}, {pipeline_mode = #tpu.pipeline_mode<synchronous>, transform_indices = @transform_4, window_bounds = array<i64: 128, 128>}]} {
    %c0 = arith.constant 0 : index
    %c0_0 = arith.constant 0 : index
    %0 = vector.load %arg1[%c0, %c0_0] : memref<128x128xbf16, #tpu.memory_space<vmem>>, vector<128x128xbf16>
    %c0_1 = arith.constant 0 : index
    %c0_2 = arith.constant 0 : index
    %1 = vector.load %arg2[%c0_1, %c0_2] : memref<128x128xbf16, #tpu.memory_space<vmem>>, vector<128x128xbf16>
    %cst = arith.constant dense<0.000000e+00> : vector<128x128xf32>
    %2 = tpu.matmul %0, %1, %cst {dimension_numbers = #tpu.dot_dimension_numbers<[1], [0], [0], [1], [0, 0, 1, 1], [], []>} : vector<128x128xbf16>, vector<128x128xbf16>, vector<128x128xf32> -> vector<128x128xf32>
    %cst_3 = arith.constant dense<0.000000e+00> : vector<128xf32>
    %3 = vector.multi_reduction <add>, %2, %cst_3 [0] : vector<128x128xf32> to vector<128xf32>
    %4 = vector.shape_cast %3 : vector<128xf32> to vector<1x128xf32>
    %cst_4 = arith.constant 7.812500e-03 : f32
    %5 = vector.broadcast %cst_4 : f32 to vector<1x128xf32>
    %6 = arith.mulf %4, %5 : vector<1x128xf32>
    %7 = arith.mulf %2, %2 : vector<128x128xf32>
    %cst_5 = arith.constant dense<0.000000e+00> : vector<128xf32>
    %8 = vector.multi_reduction <add>, %7, %cst_5 [0] : vector<128x128xf32> to vector<128xf32>
    %9 = vector.shape_cast %8 : vector<128xf32> to vector<1x128xf32>
    %cst_6 = arith.constant 7.812500e-03 : f32
    %10 = vector.broadcast %cst_6 : f32 to vector<1x128xf32>
    %11 = arith.mulf %9, %10 : vector<1x128xf32>
    %12 = arith.mulf %6, %6 : vector<1x128xf32>
    %13 = arith.subf %11, %12 : vector<1x128xf32>
    %cst_7 = arith.constant 0.000000e+00 : f32
    %14 = vector.broadcast %cst_7 : f32 to vector<1x128xf32>
    %15 = arith.maximumf %13, %14 : vector<1x128xf32>
    %c0_8 = arith.constant 0 : index
    %c0_9 = arith.constant 0 : index
    %16 = vector.load %arg3[%c0_8, %c0_9] : memref<1x128xf32, #tpu.memory_space<vmem>>, vector<1x128xf32>
    %cst_10 = arith.constant 1.000000e-03 : f32
    %17 = vector.broadcast %cst_10 : f32 to vector<1x128xf32>
    %18 = arith.addf %15, %17 : vector<1x128xf32>
    %19 = math.rsqrt %18 : vector<1x128xf32>
    %20 = arith.mulf %16, %19 : vector<1x128xf32>
    %c0_11 = arith.constant 0 : index
    %c0_12 = arith.constant 0 : index
    %21 = vector.load %arg4[%c0_11, %c0_12] : memref<1x128xf32, #tpu.memory_space<vmem>>, vector<1x128xf32>
    %22 = arith.mulf %6, %20 : vector<1x128xf32>
    %23 = arith.subf %21, %22 : vector<1x128xf32>
    %24 = vector.broadcast %20 : vector<1x128xf32> to vector<128x128xf32>
    %25 = arith.mulf %2, %24 : vector<128x128xf32>
    %26 = vector.broadcast %23 : vector<1x128xf32> to vector<128x128xf32>
    %27 = arith.addf %25, %26 : vector<128x128xf32>
    %cst_13 = arith.constant 0.000000e+00 : f32
    %28 = vector.broadcast %cst_13 : f32 to vector<128x128xf32>
    %29 = arith.maximumf %27, %28 : vector<128x128xf32>
    %30 = arith.truncf %29 : vector<128x128xf32> to vector<128x128xbf16>
    %c0_14 = arith.constant 0 : index
    %c0_15 = arith.constant 0 : index
    %31 = vector.load %arg5[%c0_14, %c0_15] : memref<128x128xbf16, #tpu.memory_space<vmem>>, vector<128x128xbf16>
    tpu.vector_store %arg5[%c0_14, %c0_15], %30 {strides = array<i32>} : memref<128x128xbf16, #tpu.memory_space<vmem>>, vector<128x128xbf16>,
    return
  }
  func.func @transform_0(%arg0: i32) -> (i32, i32) {
    %c0_i32 = arith.constant 0 : i32
    %c0_i32_0 = arith.constant 0 : i32
    %c0_i32_1 = arith.constant 0 : i32
    return %c0_i32, %c0_i32_0 : i32, i32
  }
  func.func @transform_1(%arg0: i32) -> (i32, i32) {
    %c0_i32 = arith.constant 0 : i32
    %c0_i32_0 = arith.constant 0 : i32
    %c0_i32_1 = arith.constant 0 : i32
    return %c0_i32, %c0_i32_0 : i32, i32
  }
  func.func @transform_2(%arg0: i32) -> (i32, i32) {
    %c0_i32 = arith.constant 0 : i32
    %c0_i32_0 = arith.constant 0 : i32
    %c0_i32_1 = arith.constant 0 : i32
    return %c0_i32, %c0_i32_0 : i32, i32
  }
  func.func @transform_3(%arg0: i32) -> (i32, i32) {
    %c0_i32 = arith.constant 0 : i32
    %c0_i32_0 = arith.constant 0 : i32
    %c0_i32_1 = arith.constant 0 : i32
    return %c0_i32, %c0_i32_0 : i32, i32
  }
  func.func @transform_4(%arg0: i32) -> (i32, i32) {
    %c0_i32 = arith.constant 0 : i32
    %c0_i32_0 = arith.constant 0 : i32
    %c0_i32_1 = arith.constant 0 : i32
    return %c0_i32, %c0_i32_0 : i32, i32
  }
}

module attributes {stable_mosaic.version = 11 : i64} {
  func.func @_conv_bn_relu_fused_kernel(%arg0: i32, %arg1: memref<72x720xbf16, #tpu.memory_space<vmem>>, %arg2: memref<720x256xbf16, #tpu.memory_space<vmem>>, %arg3: memref<1x256xf32, #tpu.memory_space<vmem>>, %arg4: memref<1x256xf32, #tpu.memory_space<vmem>>, %arg5: memref<72x256xbf16, #tpu.memory_space<vmem>>) attributes {dimension_semantics = [#tpu.dimension_semantics<arbitrary>], iteration_bounds = array<i64: 1>, scalar_prefetch = 0 : i64, scratch_operands = 0 : i64, tpu.core_type = #tpu.core_type<tc>, window_params = [{pipeline_mode = #tpu.pipeline_mode<synchronous>, transform_indices = @transform_0, window_bounds = array<i64: 72, 720>}, {pipeline_mode = #tpu.pipeline_mode<synchronous>, transform_indices = @transform_1, window_bounds = array<i64: 720, 256>}, {pipeline_mode = #tpu.pipeline_mode<synchronous>, transform_indices = @transform_2, window_bounds = array<i64: 1, 256>}, {pipeline_mode = #tpu.pipeline_mode<synchronous>, transform_indices = @transform_3, window_bounds = array<i64: 1, 256>}, {pipeline_mode = #tpu.pipeline_mode<synchronous>, transform_indices = @transform_4, window_bounds = array<i64: 72, 256>}]} {
    %c0 = arith.constant 0 : index
    %c0_0 = arith.constant 0 : index
    %0 = vector.load %arg1[%c0, %c0_0] : memref<72x720xbf16, #tpu.memory_space<vmem>>, vector<72x720xbf16>
    %c0_1 = arith.constant 0 : index
    %c0_2 = arith.constant 0 : index
    %1 = vector.load %arg2[%c0_1, %c0_2] : memref<720x256xbf16, #tpu.memory_space<vmem>>, vector<720x256xbf16>
    %cst = arith.constant dense<0.000000e+00> : vector<72x256xf32>
    %2 = tpu.matmul %0, %1, %cst {dimension_numbers = #tpu.dot_dimension_numbers<[1], [0], [0], [1], [0, 0, 1, 1], [], []>} : vector<72x720xbf16>, vector<720x256xbf16>, vector<72x256xf32> -> vector<72x256xf32>
    %cst_3 = arith.constant dense<0.000000e+00> : vector<256xf32>
    %3 = vector.multi_reduction <add>, %2, %cst_3 [0] : vector<72x256xf32> to vector<256xf32>
    %4 = vector.shape_cast %3 : vector<256xf32> to vector<1x256xf32>
    %cst_4 = arith.constant 0.013888889 : f32
    %5 = vector.broadcast %cst_4 : f32 to vector<1x256xf32>
    %6 = arith.mulf %4, %5 : vector<1x256xf32>
    %7 = arith.mulf %2, %2 : vector<72x256xf32>
    %cst_5 = arith.constant dense<0.000000e+00> : vector<256xf32>
    %8 = vector.multi_reduction <add>, %7, %cst_5 [0] : vector<72x256xf32> to vector<256xf32>
    %9 = vector.shape_cast %8 : vector<256xf32> to vector<1x256xf32>
    %cst_6 = arith.constant 0.013888889 : f32
    %10 = vector.broadcast %cst_6 : f32 to vector<1x256xf32>
    %11 = arith.mulf %9, %10 : vector<1x256xf32>
    %12 = arith.mulf %6, %6 : vector<1x256xf32>
    %13 = arith.subf %11, %12 : vector<1x256xf32>
    %cst_7 = arith.constant 0.000000e+00 : f32
    %14 = vector.broadcast %cst_7 : f32 to vector<1x256xf32>
    %15 = arith.maximumf %13, %14 : vector<1x256xf32>
    %c0_8 = arith.constant 0 : index
    %c0_9 = arith.constant 0 : index
    %16 = vector.load %arg3[%c0_8, %c0_9] : memref<1x256xf32, #tpu.memory_space<vmem>>, vector<1x256xf32>
    %cst_10 = arith.constant 1.000000e-03 : f32
    %17 = vector.broadcast %cst_10 : f32 to vector<1x256xf32>
    %18 = arith.addf %15, %17 : vector<1x256xf32>
    %19 = math.rsqrt %18 : vector<1x256xf32>
    %20 = arith.mulf %16, %19 : vector<1x256xf32>
    %c0_11 = arith.constant 0 : index
    %c0_12 = arith.constant 0 : index
    %21 = vector.load %arg4[%c0_11, %c0_12] : memref<1x256xf32, #tpu.memory_space<vmem>>, vector<1x256xf32>
    %22 = arith.mulf %6, %20 : vector<1x256xf32>
    %23 = arith.subf %21, %22 : vector<1x256xf32>
    %24 = vector.broadcast %20 : vector<1x256xf32> to vector<72x256xf32>
    %25 = arith.mulf %2, %24 : vector<72x256xf32>
    %26 = vector.broadcast %23 : vector<1x256xf32> to vector<72x256xf32>
    %27 = arith.addf %25, %26 : vector<72x256xf32>
    %cst_13 = arith.constant 0.000000e+00 : f32
    %28 = vector.broadcast %cst_13 : f32 to vector<72x256xf32>
    %29 = arith.maximumf %27, %28 : vector<72x256xf32>
    %30 = arith.truncf %29 : vector<72x256xf32> to vector<72x256xbf16>
    %c0_14 = arith.constant 0 : index
    %c0_15 = arith.constant 0 : index
    %31 = vector.load %arg5[%c0_14, %c0_15] : memref<72x256xbf16, #tpu.memory_space<vmem>>, vector<72x256xbf16>
    tpu.vector_store %arg5[%c0_14, %c0_15], %30 {strides = array<i32>} : memref<72x256xbf16, #tpu.memory_space<vmem>>, vector<72x256xbf16>,
    return
  }
  func.func @transform_0(%arg0: i32) -> (i32, i32) {
    %c0_i32 = arith.constant 0 : i32
    %c0_i32_0 = arith.constant 0 : i32
    %c0_i32_1 = arith.constant 0 : i32
    return %c0_i32, %c0_i32_0 : i32, i32
  }
  func.func @transform_1(%arg0: i32) -> (i32, i32) {
    %c0_i32 = arith.constant 0 : i32
    %c0_i32_0 = arith.constant 0 : i32
    %c0_i32_1 = arith.constant 0 : i32
    return %c0_i32, %c0_i32_0 : i32, i32
  }
  func.func @transform_2(%arg0: i32) -> (i32, i32) {
    %c0_i32 = arith.constant 0 : i32
    %c0_i32_0 = arith.constant 0 : i32
    %c0_i32_1 = arith.constant 0 : i32
    return %c0_i32, %c0_i32_0 : i32, i32
  }
  func.func @transform_3(%arg0: i32) -> (i32, i32) {
    %c0_i32 = arith.constant 0 : i32
    %c0_i32_0 = arith.constant 0 : i32
    %c0_i32_1 = arith.constant 0 : i32
    return %c0_i32, %c0_i32_0 : i32, i32
  }
  func.func @transform_4(%arg0: i32) -> (i32, i32) {
    %c0_i32 = arith.constant 0 : i32
    %c0_i32_0 = arith.constant 0 : i32
    %c0_i32_1 = arith.constant 0 : i32
    return %c0_i32, %c0_i32_0 : i32, i32
  }
}

module attributes {stable_mosaic.version = 11 : i64} {
  func.func @_conv_bn_relu_fused_kernel(%arg0: i32, %arg1: memref<8x1728xbf16, #tpu.memory_space<vmem>>, %arg2: memref<1728x256xbf16, #tpu.memory_space<vmem>>, %arg3: memref<1x256xf32, #tpu.memory_space<vmem>>, %arg4: memref<1x256xf32, #tpu.memory_space<vmem>>, %arg5: memref<8x256xbf16, #tpu.memory_space<vmem>>) attributes {dimension_semantics = [#tpu.dimension_semantics<arbitrary>], iteration_bounds = array<i64: 1>, scalar_prefetch = 0 : i64, scratch_operands = 0 : i64, tpu.core_type = #tpu.core_type<tc>, window_params = [{pipeline_mode = #tpu.pipeline_mode<synchronous>, transform_indices = @transform_0, window_bounds = array<i64: 8, 1728>}, {pipeline_mode = #tpu.pipeline_mode<synchronous>, transform_indices = @transform_1, window_bounds = array<i64: 1728, 256>}, {pipeline_mode = #tpu.pipeline_mode<synchronous>, transform_indices = @transform_2, window_bounds = array<i64: 1, 256>}, {pipeline_mode = #tpu.pipeline_mode<synchronous>, transform_indices = @transform_3, window_bounds = array<i64: 1, 256>}, {pipeline_mode = #tpu.pipeline_mode<synchronous>, transform_indices = @transform_4, window_bounds = array<i64: 8, 256>}]} {
    %c0 = arith.constant 0 : index
    %c0_0 = arith.constant 0 : index
    %0 = vector.load %arg1[%c0, %c0_0] : memref<8x1728xbf16, #tpu.memory_space<vmem>>, vector<8x1728xbf16>
    %c0_1 = arith.constant 0 : index
    %c0_2 = arith.constant 0 : index
    %1 = vector.load %arg2[%c0_1, %c0_2] : memref<1728x256xbf16, #tpu.memory_space<vmem>>, vector<1728x256xbf16>
    %cst = arith.constant dense<0.000000e+00> : vector<8x256xf32>
    %2 = tpu.matmul %0, %1, %cst {dimension_numbers = #tpu.dot_dimension_numbers<[1], [0], [0], [1], [0, 0, 1, 1], [], []>} : vector<8x1728xbf16>, vector<1728x256xbf16>, vector<8x256xf32> -> vector<8x256xf32>
    %cst_3 = arith.constant dense<0.000000e+00> : vector<256xf32>
    %3 = vector.multi_reduction <add>, %2, %cst_3 [0] : vector<8x256xf32> to vector<256xf32>
    %4 = vector.shape_cast %3 : vector<256xf32> to vector<1x256xf32>
    %cst_4 = arith.constant 1.250000e-01 : f32
    %5 = vector.broadcast %cst_4 : f32 to vector<1x256xf32>
    %6 = arith.mulf %4, %5 : vector<1x256xf32>
    %7 = arith.mulf %2, %2 : vector<8x256xf32>
    %cst_5 = arith.constant dense<0.000000e+00> : vector<256xf32>
    %8 = vector.multi_reduction <add>, %7, %cst_5 [0] : vector<8x256xf32> to vector<256xf32>
    %9 = vector.shape_cast %8 : vector<256xf32> to vector<1x256xf32>
    %cst_6 = arith.constant 1.250000e-01 : f32
    %10 = vector.broadcast %cst_6 : f32 to vector<1x256xf32>
    %11 = arith.mulf %9, %10 : vector<1x256xf32>
    %12 = arith.mulf %6, %6 : vector<1x256xf32>
    %13 = arith.subf %11, %12 : vector<1x256xf32>
    %cst_7 = arith.constant 0.000000e+00 : f32
    %14 = vector.broadcast %cst_7 : f32 to vector<1x256xf32>
    %15 = arith.maximumf %13, %14 : vector<1x256xf32>
    %c0_8 = arith.constant 0 : index
    %c0_9 = arith.constant 0 : index
    %16 = vector.load %arg3[%c0_8, %c0_9] : memref<1x256xf32, #tpu.memory_space<vmem>>, vector<1x256xf32>
    %cst_10 = arith.constant 1.000000e-03 : f32
    %17 = vector.broadcast %cst_10 : f32 to vector<1x256xf32>
    %18 = arith.addf %15, %17 : vector<1x256xf32>
    %19 = math.rsqrt %18 : vector<1x256xf32>
    %20 = arith.mulf %16, %19 : vector<1x256xf32>
    %c0_11 = arith.constant 0 : index
    %c0_12 = arith.constant 0 : index
    %21 = vector.load %arg4[%c0_11, %c0_12] : memref<1x256xf32, #tpu.memory_space<vmem>>, vector<1x256xf32>
    %22 = arith.mulf %6, %20 : vector<1x256xf32>
    %23 = arith.subf %21, %22 : vector<1x256xf32>
    %24 = vector.broadcast %20 : vector<1x256xf32> to vector<8x256xf32>
    %25 = arith.mulf %2, %24 : vector<8x256xf32>
    %26 = vector.broadcast %23 : vector<1x256xf32> to vector<8x256xf32>
    %27 = arith.addf %25, %26 : vector<8x256xf32>
    %cst_13 = arith.constant 0.000000e+00 : f32
    %28 = vector.broadcast %cst_13 : f32 to vector<8x256xf32>
    %29 = arith.maximumf %27, %28 : vector<8x256xf32>
    %30 = arith.truncf %29 : vector<8x256xf32> to vector<8x256xbf16>
    %c0_14 = arith.constant 0 : index
    %c0_15 = arith.constant 0 : index
    %31 = vector.load %arg5[%c0_14, %c0_15] : memref<8x256xbf16, #tpu.memory_space<vmem>>, vector<8x256xbf16>
    tpu.vector_store %arg5[%c0_14, %c0_15], %30 {strides = array<i32>} : memref<8x256xbf16, #tpu.memory_space<vmem>>, vector<8x256xbf16>,
    return
  }
  func.func @transform_0(%arg0: i32) -> (i32, i32) {
    %c0_i32 = arith.constant 0 : i32
    %c0_i32_0 = arith.constant 0 : i32
    %c0_i32_1 = arith.constant 0 : i32
    return %c0_i32, %c0_i32_0 : i32, i32
  }
  func.func @transform_1(%arg0: i32) -> (i32, i32) {
    %c0_i32 = arith.constant 0 : i32
    %c0_i32_0 = arith.constant 0 : i32
    %c0_i32_1 = arith.constant 0 : i32
    return %c0_i32, %c0_i32_0 : i32, i32
  }
  func.func @transform_2(%arg0: i32) -> (i32, i32) {
    %c0_i32 = arith.constant 0 : i32
    %c0_i32_0 = arith.constant 0 : i32
    %c0_i32_1 = arith.constant 0 : i32
    return %c0_i32, %c0_i32_0 : i32, i32
  }
  func.func @transform_3(%arg0: i32) -> (i32, i32) {
    %c0_i32 = arith.constant 0 : i32
    %c0_i32_0 = arith.constant 0 : i32
    %c0_i32_1 = arith.constant 0 : i32
    return %c0_i32, %c0_i32_0 : i32, i32
  }
  func.func @transform_4(%arg0: i32) -> (i32, i32) {
    %c0_i32 = arith.constant 0 : i32
    %c0_i32_0 = arith.constant 0 : i32
    %c0_i32_1 = arith.constant 0 : i32
    return %c0_i32, %c0_i32_0 : i32, i32
  }
}

</mosaic_0001>

<llo_original>
// kernel: stem_forward.11
$region0: #{stem_forward.11}
  #allocation0 [shape = 'u32[]', space=smem, size = 0x4, offset = 0x4, fixed_abs, tag = 'smem constant byte address 0x4 - core index']
  #allocation1 [shape = 'u32[144,128]{1,0:T(1,128)}', space=vmem, size = 0x12000, scoped, tag = 'internal scratch']
  %s0 = inlined_call_operand.vmem [shape: bf16[736,128], index: 0, kind: input, shape index: {}, may-alias: {0,3}]
  %s1 = inlined_call_operand.vmem [shape: f32[1,128], index: 1, kind: input, shape index: {}]
  %s2 = inlined_call_operand.vmem [shape: f32[1,128], index: 2, kind: input, shape index: {}]
  %s3 = inlined_call_operand.vmem [shape: bf16[736,128], index: 3, kind: output, shape index: {}, may-alias: {0,3}]
  %s4 = sld [smem:[#allocation0]]
  $region45: #{stem_forward.11} parent=0
    _
  %s6 = ssub.s32 1, %s4
  %s7 = scalar_select 0, %s6, %s4
  loop: start=0, step=1, limit=4
  $region2: #{stem_forward.11} parent=0 // loop_pre_header
    _
  $region3: #{stem_forward.11} parent=0 // loop_header
    %s9 = sphi 0, %s13
    %p10 = scmp.ge.s32.totalorder %s9, 4
    %s19 = sphi 0, %s21
    %s22 = sphi 0, %s19
    %s23 = sphi 0, %s22
    %s39 = sphi 0, %s23
    %s43 = sphi 0, %s43
    %s45 = sphi 0, %s43
    %s46 = sphi 0, %s45
    %s60 = sphi 0, %s46
    %s64 = sphi 0, %s64
    %s66 = sphi 0, %s64
    %s67 = sphi 0, %s66
    %s81 = sphi 0, %s67
    %s87 = sphi 0, %s89
    %s90 = sphi 0, %s87
    %s91 = sphi 0, %s90
    %s107 = sphi 0, %s91
  $region4: #{stem_forward.11} parent=0 // loop_header_branch
    %12 = sbr.rel (%p10) target = $region8
  $region5: #{stem_forward.11} parent=0 // loop_body
    %s14 = ssub.s32 %s9, 1
    %s15 = ssub.s32 %s9, 2
    %s16 = sadd.s32 %s9, 1
    %s17 = ssub.s32 %s9, %s16
    %p18 = scmp.eq.s32.totalorder %s17, 0
    %s20 = sadd.s32 %s19, 1
    %s21 = scalar_select %p18, %s19, %s20
    %p24 = pneg %p18
    %p25 = scmp.eq.s32.totalorder %s9, 1
    %p26 = por %p24, %p25
    %p27 = scmp.ne.s32.totalorder %s19, %s22
    %p28 = scmp.eq.s32.totalorder %s9, 0
    %p29 = por %p27, %p28
    %p30 = scmp.ne.s32.totalorder %s19, %s22
    %p31 = scmp.eq.s32.totalorder %s14, 1
    %p32 = por %p30, %p31
    %p33 = scmp.ne.s32.totalorder %s22, %s23
    %p34 = scmp.eq.s32.totalorder %s14, 0
    %p35 = por %p33, %p34
    %p36 = scmp.ne.s32.totalorder %s22, %s23
    %p37 = scmp.eq.s32.totalorder %s15, 1
    %p38 = por %p36, %p37
    %p40 = scmp.ne.s32.totalorder %s23, %s39
    %p41 = scmp.eq.s32.totalorder %s15, 0
    %p42 = por %p40, %p41
    %s44 = sadd.s32 %s43, 1
    %p47 = scmp.eq.s32.totalorder %s9, 1
    %p48 = scmp.ne.s32.totalorder %s43, %s45
    %p49 = scmp.eq.s32.totalorder %s9, 0
    %p50 = por %p48, %p49
    %p51 = scmp.ne.s32.totalorder %s43, %s45
    %p52 = scmp.eq.s32.totalorder %s14, 1
    %p53 = por %p51, %p52
    %p54 = scmp.ne.s32.totalorder %s45, %s46
    %p55 = scmp.eq.s32.totalorder %s14, 0
    %p56 = por %p54, %p55
    %p57 = scmp.ne.s32.totalorder %s45, %s46
    %p58 = scmp.eq.s32.totalorder %s15, 1
    %p59 = por %p57, %p58
    %p61 = scmp.ne.s32.totalorder %s46, %s60
    %p62 = scmp.eq.s32.totalorder %s15, 0
    %p63 = por %p61, %p62
    %s65 = sadd.s32 %s64, 1
    %p68 = scmp.eq.s32.totalorder %s9, 1
    %p69 = scmp.ne.s32.totalorder %s64, %s66
    %p70 = scmp.eq.s32.totalorder %s9, 0
    %p71 = por %p69, %p70
    %p72 = scmp.ne.s32.totalorder %s64, %s66
    %p73 = scmp.eq.s32.totalorder %s14, 1
    %p74 = por %p72, %p73
    %p75 = scmp.ne.s32.totalorder %s66, %s67
    %p76 = scmp.eq.s32.totalorder %s14, 0
    %p77 = por %p75, %p76
    %p78 = scmp.ne.s32.totalorder %s66, %s67
    %p79 = scmp.eq.s32.totalorder %s15, 1
    %p80 = por %p78, %p79
    %p82 = scmp.ne.s32.totalorder %s67, %s81
    %p83 = scmp.eq.s32.totalorder %s15, 0
    %p84 = por %p82, %p83
    %s85 = ssub.s32 %s9, %s16
    %p86 = scmp.eq.s32.totalorder %s85, 0
    %s88 = sadd.s32 %s87, 1
    %s89 = scalar_select %p86, %s87, %s88
    %p92 = pneg %p86
    %p93 = scmp.eq.s32.totalorder %s9, 1
    %p94 = por %p92, %p93
    %p95 = scmp.ne.s32.totalorder %s87, %s90
    %p96 = scmp.eq.s32.totalorder %s9, 0
    %p97 = por %p95, %p96
    %p98 = scmp.ne.s32.totalorder %s87, %s90
    %p99 = scmp.eq.s32.totalorder %s14, 1
    %p100 = por %p98, %p99
    %p101 = scmp.ne.s32.totalorder %s90, %s91
    %p102 = scmp.eq.s32.totalorder %s14, 0
    %p103 = por %p101, %p102
    %p104 = scmp.ne.s32.totalorder %s90, %s91
    %p105 = scmp.eq.s32.totalorder %s15, 1
    %p106 = por %p104, %p105
    %p108 = scmp.ne.s32.totalorder %s91, %s107
    %p109 = scmp.eq.s32.totalorder %s15, 0
    %p110 = por %p108, %p109
    %p111 = scmp.le.s32.totalorder 1, %s9
    %p112 = scmp.lt.s32.totalorder %s9, 3
    %p113 = pnand %p111, %p112
    %p114 = pneg %p113
    // Predicated region
    $region9: #{stem_forward.11} parent=5 // pred_check
      _
    $region10: #{stem_forward.11} parent=5 // pred_check_branch
      %116 = sbr.rel (%p113) target = $region12
    $region11: #{stem_forward.11} parent=5 // pred_region
      %s117 = ssub.s32 %s9, 1
      // Predicated region
      $region13: #{stem_forward.11} parent=11 // pred_check
        %p118 = pneg %p56
      $region14: #{stem_forward.11} parent=11 // pred_check_branch
        %120 = sbr.rel (%p118) target = $region16
      $region15: #{stem_forward.11} parent=11 // pred_region
        _
      $region16: #{stem_forward.11} parent=11 // pred_fallthru
        _
      // Predicated region
      $region17: #{stem_forward.11} parent=11 // pred_check
        %p121 = pneg %p77
      $region18: #{stem_forward.11} parent=11 // pred_check_branch
        %123 = sbr.rel (%p121) target = $region20
      $region19: #{stem_forward.11} parent=11 // pred_region
        _
      $region20: #{stem_forward.11} parent=11 // pred_fallthru
        _
    $region12: #{stem_forward.11} parent=5 // pred_fallthru
      _
    %p124 = scmp.lt.s32.totalorder %s9, 2
    // Predicated region
    $region21: #{stem_forward.11} parent=5 // pred_check
      %p125 = pneg %p124
    $region22: #{stem_forward.11} parent=5 // pred_check_branch
      %127 = sbr.rel (%p125) target = $region24
    $region23: #{stem_forward.11} parent=5 // pred_region
      // Predicated region
      $region25: #{stem_forward.11} parent=23 // pred_check
        %p128 = pneg %p29
      $region26: #{stem_forward.11} parent=23 // pred_check_branch
        %130 = sbr.rel (%p128) target = $region28
      $region27: #{stem_forward.11} parent=23 // pred_region
        %s131 = smul.u32 46, %s9
        %p132 = scmp.lt.s32.totalorder %s131, 91
        %s133 = scalar_select %p132, %s131, 91
        %s134 = smul.addr %s133, 4
        %s135 = scalar_lea.vmem %s0, %s134
        %s136 = smul.u32 46, %s9
      $region28: #{stem_forward.11} parent=23 // pred_fallthru
        _
    $region24: #{stem_forward.11} parent=5 // pred_fallthru
      _
    %p137 = scmp.le.s32.totalorder 1, %s9
    %p138 = scmp.lt.s32.totalorder %s9, 3
    %p139 = pnand %p137, %p138
    %p140 = pneg %p139
    // Predicated region
    $region29: #{stem_forward.11} parent=5 // pred_check
      _
    $region30: #{stem_forward.11} parent=5 // pred_check_branch
      %142 = sbr.rel (%p139) target = $region32
    $region31: #{stem_forward.11} parent=5 // pred_region
      %s143 = ssub.s32 %s9, 1
      %s144 = smul.u32 46, %s14
      %p145 = scmp.lt.s32.totalorder %s144, 91
      %s146 = scalar_select %p145, %s144, 91
      %s147 = smul.addr %s146, 4
      %s148 = scalar_lea.vmem %s0, %s147
      %p149 = pneg %p35
      %p150 = pneg %p32
      %p151 = pneg %p56
      %p152 = pneg %p53
      %p153 = pneg %p77
      %p154 = pneg %p74
      %p155 = pneg %p103
      %p156 = pneg %p100
      %s157 = smul.u32 46, %s14
      %p158 = scmp.lt.s32.totalorder %s157, 91
      %s159 = scalar_select %p158, %s157, 91
      %s160 = smul.addr %s159, 4
      %s161 = scalar_lea.vmem %s3, %s160
      %s162 = smul.u32 46, %s14
      %p163 = scmp.lt.s32.totalorder %s162, 91
      %s164 = scalar_select %p163, %s162, 91
      %s165 = smul.addr %s164, 4
      %s166 = scalar_lea.vmem %s0, %s165
      %s167 = smul.u32 46, %s14
      %s168 = smul.u32 46, %s14
      %p169 = scmp.lt.s32.totalorder %s168, 91
      %s170 = scalar_select %p169, %s168, 91
      %s171 = smul.addr %s170, 4
      %s172 = scalar_lea.vmem %s3, %s171
      %s173 = smul.u32 46, %s14
      %v174 = vld [vmem:[%s166] sm:$0xf]
      %v175 = vld [vmem:[%s166 + $0x4] sm:$0xf]
      %v176 = vld [vmem:[%s166 + $0x8] sm:$0xf]
      %v177 = vld [vmem:[%s166 + $0xc] sm:$0xf]
      %v178 = vld [vmem:[%s166 + $0x10] sm:$0xf]
      %v179 = vld [vmem:[%s166 + $0x14] sm:$0xf]
      %v180 = vld [vmem:[%s166 + $0x18] sm:$0xf]
      %v181 = vld [vmem:[%s166 + $0x1c] sm:$0xf]
      %v182 = vld [vmem:[%s166 + $0x20] sm:$0xf]
      %v183 = vld [vmem:[%s166 + $0x24] sm:$0xf]
      %v184 = vld [vmem:[%s166 + $0x28] sm:$0xf]
      %v185 = vld [vmem:[%s166 + $0x2c] sm:$0xf]
      %v186 = vld [vmem:[%s166 + $0x30] sm:$0xf]
      %v187 = vld [vmem:[%s166 + $0x34] sm:$0xf]
      %v188 = vld [vmem:[%s166 + $0x38] sm:$0xf]
      %v189 = vld [vmem:[%s166 + $0x3c] sm:$0xf]
      %v190 = vld [vmem:[%s166 + $0x40] sm:$0xf]
      %v191 = vld [vmem:[%s166 + $0x44] sm:$0xf]
      %v192 = vld [vmem:[%s166 + $0x48] sm:$0xf]
      %v193 = vld [vmem:[%s166 + $0x4c] sm:$0xf]
      %v194 = vld [vmem:[%s166 + $0x50] sm:$0xf]
      %v195 = vld [vmem:[%s166 + $0x54] sm:$0xf]
      %v196 = vld [vmem:[%s166 + $0x58] sm:$0xf]
      %v197 = vld [vmem:[%s166 + $0x5c] sm:$0xf]
      %v198 = vld [vmem:[%s166 + $0x60] sm:$0xf]
      %v199 = vld [vmem:[%s166 + $0x64] sm:$0xf]
      %v200 = vld [vmem:[%s166 + $0x68] sm:$0xf]
      %v201 = vld [vmem:[%s166 + $0x6c] sm:$0xf]
      %v202 = vld [vmem:[%s166 + $0x70] sm:$0xf]
      %v203 = vld [vmem:[%s166 + $0x74] sm:$0xf]
      %v204 = vld [vmem:[%s166 + $0x78] sm:$0xf]
      %v205 = vld [vmem:[%s166 + $0x7c] sm:$0xf]
      %v206 = vld [vmem:[%s166 + $0x80] sm:$0xf]
      %v207 = vld [vmem:[%s166 + $0x84] sm:$0xf]
      %v208 = vld [vmem:[%s166 + $0x88] sm:$0xf]
      %v209 = vld [vmem:[%s166 + $0x8c] sm:$0xf]
      %v210 = vld [vmem:[%s166 + $0x90] sm:$0xf]
      %v211 = vld [vmem:[%s166 + $0x94] sm:$0xf]
      %v212 = vld [vmem:[%s166 + $0x98] sm:$0xf]
      %v213 = vld [vmem:[%s166 + $0x9c] sm:$0xf]
      %v214 = vld [vmem:[%s166 + $0xa0] sm:$0xf]
      %v215 = vld [vmem:[%s166 + $0xa4] sm:$0xf]
      %v216 = vld [vmem:[%s166 + $0xa8] sm:$0xf]
      %v217 = vld [vmem:[%s166 + $0xac] sm:$0xf]
      %v218 = vld [vmem:[%s166 + $0xb0] sm:$0xf]
      %v219 = vld [vmem:[%s166 + $0xb4] sm:$0xf]
      %v220 = vunpack.c.l.bf16 %v174
      %v221 = vunpack.c.l.bf16 %v175
      %v222 = vunpack.c.l.bf16 %v176
      %v223 = vunpack.c.l.bf16 %v177
      %v224 = vunpack.c.l.bf16 %v178
      %v225 = vunpack.c.l.bf16 %v179
      %v226 = vunpack.c.l.bf16 %v180
      %v227 = vunpack.c.l.bf16 %v181
      %v228 = vunpack.c.l.bf16 %v182
      %v229 = vunpack.c.l.bf16 %v183
      %v230 = vunpack.c.l.bf16 %v184
      %v231 = vunpack.c.l.bf16 %v185
      %v232 = vunpack.c.l.bf16 %v186
      %v233 = vunpack.c.l.bf16 %v187
      %v234 = vunpack.c.l.bf16 %v188
      %v235 = vunpack.c.l.bf16 %v189
      %v236 = vunpack.c.l.bf16 %v190
      %v237 = vunpack.c.l.bf16 %v191
      %v238 = vunpack.c.l.bf16 %v192
      %v239 = vunpack.c.l.bf16 %v193
      %v240 = vunpack.c.l.bf16 %v194
      %v241 = vunpack.c.l.bf16 %v195
      %v242 = vunpack.c.l.bf16 %v196
      %v243 = vunpack.c.l.bf16 %v197
      %v244 = vunpack.c.l.bf16 %v198
      %v245 = vunpack.c.l.bf16 %v199
      %v246 = vunpack.c.l.bf16 %v200
      %v247 = vunpack.c.l.bf16 %v201
      %v248 = vunpack.c.l.bf16 %v202
      %v249 = vunpack.c.l.bf16 %v203
      %v250 = vunpack.c.l.bf16 %v204
      %v251 = vunpack.c.l.bf16 %v205
      %v252 = vunpack.c.l.bf16 %v206
      %v253 = vunpack.c.l.bf16 %v207
      %v254 = vunpack.c.l.bf16 %v208
      %v255 = vunpack.c.l.bf16 %v209
      %v256 = vunpack.c.l.bf16 %v210
      %v257 = vunpack.c.l.bf16 %v211
      %v258 = vunpack.c.l.bf16 %v212
      %v259 = vunpack.c.l.bf16 %v213
      %v260 = vunpack.c.l.bf16 %v214
      %v261 = vunpack.c.l.bf16 %v215
      %v262 = vunpack.c.l.bf16 %v216
      %v263 = vunpack.c.l.bf16 %v217
      %v264 = vunpack.c.l.bf16 %v218
      %v265 = vunpack.c.l.bf16 %v219
      %v266 = vld [vmem:[%s1] sm:$0x1]
      %v268 = vlaneseq
      %v269 = vshrl.u32 %v268, 7
      %v270 = vsub.s32 0, %v269
      %v271 = vrot.slane %v266, %v270
      %v273 = vmul.f32 %v220, %v271
      %v274 = vmul.f32 %v221, %v271
      %v275 = vmul.f32 %v222, %v271
      %v276 = vmul.f32 %v223, %v271
      %v277 = vmul.f32 %v224, %v271
      %v278 = vmul.f32 %v225, %v271
      %v279 = vmul.f32 %v226, %v271
      %v280 = vmul.f32 %v227, %v271
      %v281 = vmul.f32 %v228, %v271
      %v282 = vmul.f32 %v229, %v271
      %v283 = vmul.f32 %v230, %v271
      %v284 = vmul.f32 %v231, %v271
      %v285 = vmul.f32 %v232, %v271
      %v286 = vmul.f32 %v233, %v271
      %v287 = vmul.f32 %v234, %v271
      %v288 = vmul.f32 %v235, %v271
      %v289 = vmul.f32 %v236, %v271
      %v290 = vmul.f32 %v237, %v271
      %v291 = vmul.f32 %v238, %v271
      %v292 = vmul.f32 %v239, %v271
      %v293 = vmul.f32 %v240, %v271
      %v294 = vmul.f32 %v241, %v271
      %v295 = vmul.f32 %v242, %v271
      %v296 = vmul.f32 %v243, %v271
      %v297 = vmul.f32 %v244, %v271
      %v298 = vmul.f32 %v245, %v271
      %v299 = vmul.f32 %v246, %v271
      %v300 = vmul.f32 %v247, %v271
      %v301 = vmul.f32 %v248, %v271
      %v302 = vmul.f32 %v249, %v271
      %v303 = vmul.f32 %v250, %v271
      %v304 = vmul.f32 %v251, %v271
      %v305 = vmul.f32 %v252, %v271
      %v306 = vmul.f32 %v253, %v271
      %v307 = vmul.f32 %v254, %v271
      %v308 = vmul.f32 %v255, %v271
      %v309 = vmul.f32 %v256, %v271
      %v310 = vmul.f32 %v257, %v271
      %v311 = vmul.f32 %v258, %v271
      %v312 = vmul.f32 %v259, %v271
      %v313 = vmul.f32 %v260, %v271
      %v314 = vmul.f32 %v261, %v271
      %v315 = vmul.f32 %v262, %v271
      %v316 = vmul.f32 %v263, %v271
      %v317 = vmul.f32 %v264, %v271
      %v318 = vmul.f32 %v265, %v271
      %v319 = vld [vmem:[%s2] sm:$0x1]
      %v321 = vlaneseq
      %v322 = vshrl.u32 %v321, 7
      %v323 = vsub.s32 0, %v322
      %v324 = vrot.slane %v319, %v323
      %v326 = vadd.f32 %v273, %v324
      %v327 = vadd.f32 %v274, %v324
      %v328 = vadd.f32 %v275, %v324
      %v329 = vadd.f32 %v276, %v324
      %v330 = vadd.f32 %v277, %v324
      %v331 = vadd.f32 %v278, %v324
      %v332 = vadd.f32 %v279, %v324
      %v333 = vadd.f32 %v280, %v324
      %v334 = vadd.f32 %v281, %v324
      %v335 = vadd.f32 %v282, %v324
      %v336 = vadd.f32 %v283, %v324
      %v337 = vadd.f32 %v284, %v324
      %v338 = vadd.f32 %v285, %v324
      %v339 = vadd.f32 %v286, %v324
      %v340 = vadd.f32 %v287, %v324
      %v341 = vadd.f32 %v288, %v324
      %v342 = vadd.f32 %v289, %v324
      %v343 = vadd.f32 %v290, %v324
      %v344 = vadd.f32 %v291, %v324
      %v345 = vadd.f32 %v292, %v324
      %v346 = vadd.f32 %v293, %v324
      %v347 = vadd.f32 %v294, %v324
      %v348 = vadd.f32 %v295, %v324
      %v349 = vadd.f32 %v296, %v324
      %v350 = vadd.f32 %v297, %v324
      %v351 = vadd.f32 %v298, %v324
      %v352 = vadd.f32 %v299, %v324
      %v353 = vadd.f32 %v300, %v324
      %v354 = vadd.f32 %v301, %v324
      %v355 = vadd.f32 %v302, %v324
      %v356 = vadd.f32 %v303, %v324
      %v357 = vadd.f32 %v304, %v324
      %v358 = vadd.f32 %v305, %v324
      %v359 = vadd.f32 %v306, %v324
      %v360 = vadd.f32 %v307, %v324
      %v361 = vadd.f32 %v308, %v324
      %v362 = vadd.f32 %v309, %v324
      %v363 = vadd.f32 %v310, %v324
      %v364 = vadd.f32 %v311, %v324
      %v365 = vadd.f32 %v312, %v324
      %v366 = vadd.f32 %v313, %v324
      %v367 = vadd.f32 %v314, %v324
      %v368 = vadd.f32 %v315, %v324
      %v369 = vadd.f32 %v316, %v324
      %v370 = vadd.f32 %v317, %v324
      %v371 = vadd.f32 %v318, %v324
      %v372 = vmax.f32 %v326, 0.0
      %v373 = vmax.f32 %v327, 0.0
      %v374 = vmax.f32 %v328, 0.0
      %v375 = vmax.f32 %v329, 0.0
      %v376 = vmax.f32 %v330, 0.0
      %v377 = vmax.f32 %v331, 0.0
      %v378 = vmax.f32 %v332, 0.0
      %v379 = vmax.f32 %v333, 0.0
      %v380 = vmax.f32 %v334, 0.0
      %v381 = vmax.f32 %v335, 0.0
      %v382 = vmax.f32 %v336, 0.0
      %v383 = vmax.f32 %v337, 0.0
      %v384 = vmax.f32 %v338, 0.0
      %v385 = vmax.f32 %v339, 0.0
      %v386 = vmax.f32 %v340, 0.0
      %v387 = vmax.f32 %v341, 0.0
      %v388 = vmax.f32 %v342, 0.0
      %v389 = vmax.f32 %v343, 0.0
      %v390 = vmax.f32 %v344, 0.0
      %v391 = vmax.f32 %v345, 0.0
      %v392 = vmax.f32 %v346, 0.0
      %v393 = vmax.f32 %v347, 0.0
      %v394 = vmax.f32 %v348, 0.0
      %v395 = vmax.f32 %v349, 0.0
      %v396 = vmax.f32 %v350, 0.0
      %v397 = vmax.f32 %v351, 0.0
      %v398 = vmax.f32 %v352, 0.0
      %v399 = vmax.f32 %v353, 0.0
      %v400 = vmax.f32 %v354, 0.0
      %v401 = vmax.f32 %v355, 0.0
      %v402 = vmax.f32 %v356, 0.0
      %v403 = vmax.f32 %v357, 0.0
      %v404 = vmax.f32 %v358, 0.0
      %v405 = vmax.f32 %v359, 0.0
      %v406 = vmax.f32 %v360, 0.0
      %v407 = vmax.f32 %v361, 0.0
      %v408 = vmax.f32 %v362, 0.0
      %v409 = vmax.f32 %v363, 0.0
      %v410 = vmax.f32 %v364, 0.0
      %v411 = vmax.f32 %v365, 0.0
      %v412 = vmax.f32 %v366, 0.0
      %v413 = vmax.f32 %v367, 0.0
      %v414 = vmax.f32 %v368, 0.0
      %v415 = vmax.f32 %v369, 0.0
      %v416 = vmax.f32 %v370, 0.0
      %v417 = vmax.f32 %v371, 0.0
      %v418 = vpack.c.bf16 %v373, %v372
      %v419 = vpack.c.bf16 %v375, %v374
      %v420 = vpack.c.bf16 %v377, %v376
      %v421 = vpack.c.bf16 %v379, %v378
      %v422 = vpack.c.bf16 %v381, %v380
      %v423 = vpack.c.bf16 %v383, %v382
      %v424 = vpack.c.bf16 %v385, %v384
      %v425 = vpack.c.bf16 %v387, %v386
      %v426 = vpack.c.bf16 %v389, %v388
      %v427 = vpack.c.bf16 %v391, %v390
      %v428 = vpack.c.bf16 %v393, %v392
      %v429 = vpack.c.bf16 %v395, %v394
      %v430 = vpack.c.bf16 %v397, %v396
      %v431 = vpack.c.bf16 %v399, %v398
      %v432 = vpack.c.bf16 %v401, %v400
      %v433 = vpack.c.bf16 %v403, %v402
      %v434 = vpack.c.bf16 %v405, %v404
      %v435 = vpack.c.bf16 %v407, %v406
      %v436 = vpack.c.bf16 %v409, %v408
      %v437 = vpack.c.bf16 %v411, %v410
      %v438 = vpack.c.bf16 %v413, %v412
      %v439 = vpack.c.bf16 %v415, %v414
      %v440 = vpack.c.bf16 %v417, %v416
      %v464 = vunpack.c.l.b16 %v418
      %v465 = vunpack.c.h.b16 %v418
      %v466 = vunpack.c.l.b16 %v419
      %v467 = vunpack.c.h.b16 %v419
      %v468 = vunpack.c.l.b16 %v420
      %v469 = vunpack.c.h.b16 %v420
      %v470 = vunpack.c.l.b16 %v421
      %v471 = vunpack.c.h.b16 %v421
      %v472 = vunpack.c.l.b16 %v422
      %v473 = vunpack.c.h.b16 %v422
      %v474 = vunpack.c.l.b16 %v423
      %v475 = vunpack.c.h.b16 %v423
      %v476 = vunpack.c.l.b16 %v424
      %v477 = vunpack.c.h.b16 %v424
      %v478 = vunpack.c.l.b16 %v425
      %v479 = vunpack.c.h.b16 %v425
      %v480 = vunpack.c.l.b16 %v426
      %v481 = vunpack.c.h.b16 %v426
      %v482 = vunpack.c.l.b16 %v427
      %v483 = vunpack.c.h.b16 %v427
      %v484 = vunpack.c.l.b16 %v428
      %v485 = vunpack.c.h.b16 %v428
      %v486 = vunpack.c.l.b16 %v429
      %v487 = vunpack.c.h.b16 %v429
      %v488 = vunpack.c.l.b16 %v430
      %v489 = vunpack.c.h.b16 %v430
      %v490 = vunpack.c.l.b16 %v431
      %v491 = vunpack.c.h.b16 %v431
      %v492 = vunpack.c.l.b16 %v432
      %v493 = vunpack.c.h.b16 %v432
      %v494 = vunpack.c.l.b16 %v433
      %v495 = vunpack.c.h.b16 %v433
      %v496 = vunpack.c.l.b16 %v434
      %v497 = vunpack.c.h.b16 %v434
      %v498 = vunpack.c.l.b16 %v435
      %v499 = vunpack.c.h.b16 %v435
      %v500 = vunpack.c.l.b16 %v436
      %v501 = vunpack.c.h.b16 %v436
      %v502 = vunpack.c.l.b16 %v437
      %v503 = vunpack.c.h.b16 %v437
      %v504 = vunpack.c.l.b16 %v438
      %v505 = vunpack.c.h.b16 %v438
      %v506 = vunpack.c.l.b16 %v439
      %v507 = vunpack.c.h.b16 %v439
      %v508 = vunpack.c.l.b16 %v440
      %v509 = vunpack.c.h.b16 %v440
      %v510 = vpack.c.b16 %v464, %v464
      %v511 = vpack.c.b16 %v465, %v465
      %v512 = vpack.c.b16 %v466, %v466
      %v513 = vpack.c.b16 %v467, %v467
      %v514 = vpack.c.b16 %v468, %v468
      %v515 = vpack.c.b16 %v469, %v469
      %v516 = vpack.c.b16 %v470, %v470
      %v517 = vpack.c.b16 %v471, %v471
      %v518 = vpack.c.b16 %v472, %v472
      %v519 = vpack.c.b16 %v473, %v473
      %v520 = vpack.c.b16 %v474, %v474
      %v521 = vpack.c.b16 %v475, %v475
      %v522 = vpack.c.b16 %v476, %v476
      %v523 = vpack.c.b16 %v477, %v477
      %v524 = vpack.c.b16 %v478, %v478
      %v525 = vpack.c.b16 %v479, %v479
      %v526 = vpack.c.b16 %v480, %v480
      %v527 = vpack.c.b16 %v481, %v481
      %v528 = vpack.c.b16 %v482, %v482
      %v529 = vpack.c.b16 %v483, %v483
      %v530 = vpack.c.b16 %v484, %v484
      %v531 = vpack.c.b16 %v485, %v485
      %v532 = vpack.c.b16 %v486, %v486
      %v533 = vpack.c.b16 %v487, %v487
      %v534 = vpack.c.b16 %v488, %v488
      %v535 = vpack.c.b16 %v489, %v489
      %v536 = vpack.c.b16 %v490, %v490
      %v537 = vpack.c.b16 %v491, %v491
      %v538 = vpack.c.b16 %v492, %v492
      %v539 = vpack.c.b16 %v493, %v493
      %v540 = vpack.c.b16 %v494, %v494
      %v541 = vpack.c.b16 %v495, %v495
      %v542 = vpack.c.b16 %v496, %v496
      %v543 = vpack.c.b16 %v497, %v497
      %v544 = vpack.c.b16 %v498, %v498
      %v545 = vpack.c.b16 %v499, %v499
      %v546 = vpack.c.b16 %v500, %v500
      %v547 = vpack.c.b16 %v501, %v501
      %v548 = vpack.c.b16 %v502, %v502
      %v549 = vpack.c.b16 %v503, %v503
      %v550 = vpack.c.b16 %v504, %v504
      %v551 = vpack.c.b16 %v505, %v505
      %v552 = vpack.c.b16 %v506, %v506
      %v553 = vpack.c.b16 %v507, %v507
      %v554 = vpack.c.b16 %v508, %v508
      %v555 = vpack.c.b16 %v509, %v509
      %602 = vst [vmem:[%s172] sm:$0xf] %v510
      %603 = vst [vmem:[%s172 + $0x4] sm:$0xf] %v511
      %604 = vst [vmem:[%s172 + $0x8] sm:$0xf] %v512
      %605 = vst [vmem:[%s172 + $0xc] sm:$0xf] %v513
      %606 = vst [vmem:[%s172 + $0x10] sm:$0xf] %v514
      %607 = vst [vmem:[%s172 + $0x14] sm:$0xf] %v515
      %608 = vst [vmem:[%s172 + $0x18] sm:$0xf] %v516
      %609 = vst [vmem:[%s172 + $0x1c] sm:$0xf] %v517
      %610 = vst [vmem:[%s172 + $0x20] sm:$0xf] %v518
      %611 = vst [vmem:[%s172 + $0x24] sm:$0xf] %v519
      %612 = vst [vmem:[%s172 + $0x28] sm:$0xf] %v520
      %613 = vst [vmem:[%s172 + $0x2c] sm:$0xf] %v521
      %614 = vst [vmem:[%s172 + $0x30] sm:$0xf] %v522
      %615 = vst [vmem:[%s172 + $0x34] sm:$0xf] %v523
      %616 = vst [vmem:[%s172 + $0x38] sm:$0xf] %v524
      %617 = vst [vmem:[%s172 + $0x3c] sm:$0xf] %v525
      %618 = vst [vmem:[%s172 + $0x40] sm:$0xf] %v526
      %619 = vst [vmem:[%s172 + $0x44] sm:$0xf] %v527
      %620 = vst [vmem:[%s172 + $0x48] sm:$0xf] %v528
      %621 = vst [vmem:[%s172 + $0x4c] sm:$0xf] %v529
      %622 = vst [vmem:[%s172 + $0x50] sm:$0xf] %v530
      %623 = vst [vmem:[%s172 + $0x54] sm:$0xf] %v531
      %624 = vst [vmem:[%s172 + $0x58] sm:$0xf] %v532
      %625 = vst [vmem:[%s172 + $0x5c] sm:$0xf] %v533
      %626 = vst [vmem:[%s172 + $0x60] sm:$0xf] %v534
      %627 = vst [vmem:[%s172 + $0x64] sm:$0xf] %v535
      %628 = vst [vmem:[%s172 + $0x68] sm:$0xf] %v536
      %629 = vst [vmem:[%s172 + $0x6c] sm:$0xf] %v537
      %630 = vst [vmem:[%s172 + $0x70] sm:$0xf] %v538
      %631 = vst [vmem:[%s172 + $0x74] sm:$0xf] %v539
      %632 = vst [vmem:[%s172 + $0x78] sm:$0xf] %v540
      %633 = vst [vmem:[%s172 + $0x7c] sm:$0xf] %v541
      %634 = vst [vmem:[%s172 + $0x80] sm:$0xf] %v542
      %635 = vst [vmem:[%s172 + $0x84] sm:$0xf] %v543
      %636 = vst [vmem:[%s172 + $0x88] sm:$0xf] %v544
      %637 = vst [vmem:[%s172 + $0x8c] sm:$0xf] %v545
      %638 = vst [vmem:[%s172 + $0x90] sm:$0xf] %v546
      %639 = vst [vmem:[%s172 + $0x94] sm:$0xf] %v547
      %640 = vst [vmem:[%s172 + $0x98] sm:$0xf] %v548
      %641 = vst [vmem:[%s172 + $0x9c] sm:$0xf] %v549
      %642 = vst [vmem:[%s172 + $0xa0] sm:$0xf] %v550
      %643 = vst [vmem:[%s172 + $0xa4] sm:$0xf] %v551
      %644 = vst [vmem:[%s172 + $0xa8] sm:$0xf] %v552
      %645 = vst [vmem:[%s172 + $0xac] sm:$0xf] %v553
      %646 = vst [vmem:[%s172 + $0xb0] sm:$0xf] %v554
      %647 = vst [vmem:[%s172 + $0xb4] sm:$0xf] %v555
      %s648 = smul.u32 46, %s14
      %p649 = scmp.lt.s32.totalorder %s648, 91
      %s650 = scalar_select %p649, %s648, 91
      %s651 = smul.addr %s650, 4
      %s652 = scalar_lea.vmem %s3, %s651
      // Predicated region
      $region33: #{stem_forward.11} parent=31 // pred_check
        %p653 = pneg %p100
      $region34: #{stem_forward.11} parent=31 // pred_check_branch
        %655 = sbr.rel (%p653) target = $region36
      $region35: #{stem_forward.11} parent=31 // pred_region
        %s656 = smul.u32 46, %s14
      $region36: #{stem_forward.11} parent=31 // pred_fallthru
        _
    $region32: #{stem_forward.11} parent=5 // pred_fallthru
      _
    %p657 = scmp.le.s32.totalorder 2, %s9
    // Predicated region
    $region37: #{stem_forward.11} parent=5 // pred_check
      %p658 = pneg %p657
    $region38: #{stem_forward.11} parent=5 // pred_check_branch
      %660 = sbr.rel (%p658) target = $region40
    $region39: #{stem_forward.11} parent=5 // pred_region
      %s661 = ssub.s32 %s9, 2
      // Predicated region
      $region41: #{stem_forward.11} parent=39 // pred_check
        %p662 = pneg %p106
      $region42: #{stem_forward.11} parent=39 // pred_check_branch
        %664 = sbr.rel (%p662) target = $region44
      $region43: #{stem_forward.11} parent=39 // pred_region
        %s665 = smul.u32 46, %s15
        %p666 = scmp.lt.s32.totalorder %s665, 91
        %s667 = scalar_select %p666, %s665, 91
        %s668 = smul.addr %s667, 4
        %s669 = scalar_lea.vmem %s3, %s668
      $region44: #{stem_forward.11} parent=39 // pred_fallthru
        _
    $region40: #{stem_forward.11} parent=5 // pred_fallthru
      _
  $region6: #{stem_forward.11} parent=0 // loop_footer
    %s13 = sadd.s32 1, %s9
  $region7: #{stem_forward.11} parent=0 // loop_footer_branch
    %8 = sbr.rel target = $region3
  $region8: #{stem_forward.11} parent=0 // loop_exit
    _

// kernel: stem_forward.10
$region0: #{stem_forward.10}
  #allocation0 [shape = 'u32[]', space=smem, size = 0x4, offset = 0x4, fixed_abs, tag = 'smem constant byte address 0x4 - core index']
  #allocation1 [shape = 'u32[144,128]{1,0:T(1,128)}', space=vmem, size = 0x12000, scoped, tag = 'internal scratch']
  %s0 = inlined_call_operand.vmem [shape: bf16[736,27], index: 0, kind: input, shape index: {}]
  %s1 = inlined_call_operand.vmem [shape: bf16[27,128], index: 1, kind: input, shape index: {}]
  %s2 = inlined_call_operand.vmem [shape: bf16[736,128], index: 2, kind: output, shape index: {0}]
  %s3 = inlined_call_operand.vmem [shape: f32[2,2,128], index: 3, kind: output, shape index: {1}]
  %4 = xla_tuple %s2, %s3
  %s5 = sld [smem:[#allocation0]]
  $region49: #{stem_forward.10} parent=0
    _
  %s7 = ssub.s32 1, %s5
  %s8 = scalar_select 0, %s7, %s5
  loop: start=0, step=1, limit=4
  $region2: #{stem_forward.10} parent=0 // loop_pre_header
    _
  $region3: #{stem_forward.10} parent=0 // loop_header
    %s10 = sphi 0, %s14
    %p11 = scmp.ge.s32.totalorder %s10, 4
    %s20 = sphi 0, %s22
    %s23 = sphi 0, %s20
    %s24 = sphi 0, %s23
    %s40 = sphi 0, %s24
    %s44 = sphi 0, %s44
    %s46 = sphi 0, %s44
    %s47 = sphi 0, %s46
    %s61 = sphi 0, %s47
    %s67 = sphi 0, %s69
    %s70 = sphi 0, %s67
    %s71 = sphi 0, %s70
    %s87 = sphi 0, %s71
    %s93 = sphi 0, %s95
    %s96 = sphi 0, %s93
    %s97 = sphi 0, %s96
    %s113 = sphi 0, %s97
  $region4: #{stem_forward.10} parent=0 // loop_header_branch
    %13 = sbr.rel (%p11) target = $region8
  $region5: #{stem_forward.10} parent=0 // loop_body
    %s15 = ssub.s32 %s10, 1
    %s16 = ssub.s32 %s10, 2
    %s17 = sadd.s32 %s10, 1
    %s18 = ssub.s32 %s10, %s17
    %p19 = scmp.eq.s32.totalorder %s18, 0
    %s21 = sadd.s32 %s20, 1
    %s22 = scalar_select %p19, %s20, %s21
    %p25 = pneg %p19
    %p26 = scmp.eq.s32.totalorder %s10, 1
    %p27 = por %p25, %p26
    %p28 = scmp.ne.s32.totalorder %s20, %s23
    %p29 = scmp.eq.s32.totalorder %s10, 0
    %p30 = por %p28, %p29
    %p31 = scmp.ne.s32.totalorder %s20, %s23
    %p32 = scmp.eq.s32.totalorder %s15, 1
    %p33 = por %p31, %p32
    %p34 = scmp.ne.s32.totalorder %s23, %s24
    %p35 = scmp.eq.s32.totalorder %s15, 0
    %p36 = por %p34, %p35
    %p37 = scmp.ne.s32.totalorder %s23, %s24
    %p38 = scmp.eq.s32.totalorder %s16, 1
    %p39 = por %p37, %p38
    %p41 = scmp.ne.s32.totalorder %s24, %s40
    %p42 = scmp.eq.s32.totalorder %s16, 0
    %p43 = por %p41, %p42
    %s45 = sadd.s32 %s44, 1
    %p48 = scmp.eq.s32.totalorder %s10, 1
    %p49 = scmp.ne.s32.totalorder %s44, %s46
    %p50 = scmp.eq.s32.totalorder %s10, 0
    %p51 = por %p49, %p50
    %p52 = scmp.ne.s32.totalorder %s44, %s46
    %p53 = scmp.eq.s32.totalorder %s15, 1
    %p54 = por %p52, %p53
    %p55 = scmp.ne.s32.totalorder %s46, %s47
    %p56 = scmp.eq.s32.totalorder %s15, 0
    %p57 = por %p55, %p56
    %p58 = scmp.ne.s32.totalorder %s46, %s47
    %p59 = scmp.eq.s32.totalorder %s16, 1
    %p60 = por %p58, %p59
    %p62 = scmp.ne.s32.totalorder %s47, %s61
    %p63 = scmp.eq.s32.totalorder %s16, 0
    %p64 = por %p62, %p63
    %s65 = ssub.s32 %s10, %s17
    %p66 = scmp.eq.s32.totalorder %s65, 0
    %s68 = sadd.s32 %s67, 1
    %s69 = scalar_select %p66, %s67, %s68
    %p72 = pneg %p66
    %p73 = scmp.eq.s32.totalorder %s10, 1
    %p74 = por %p72, %p73
    %p75 = scmp.ne.s32.totalorder %s67, %s70
    %p76 = scmp.eq.s32.totalorder %s10, 0
    %p77 = por %p75, %p76
    %p78 = scmp.ne.s32.totalorder %s67, %s70
    %p79 = scmp.eq.s32.totalorder %s15, 1
    %p80 = por %p78, %p79
    %p81 = scmp.ne.s32.totalorder %s70, %s71
    %p82 = scmp.eq.s32.totalorder %s15, 0
    %p83 = por %p81, %p82
    %p84 = scmp.ne.s32.totalorder %s70, %s71
    %p85 = scmp.eq.s32.totalorder %s16, 1
    %p86 = por %p84, %p85
    %p88 = scmp.ne.s32.totalorder %s71, %s87
    %p89 = scmp.eq.s32.totalorder %s16, 0
    %p90 = por %p88, %p89
    %s91 = ssub.s32 %s10, %s17
    %p92 = scmp.eq.s32.totalorder %s91, 0
    %s94 = sadd.s32 %s93, 1
    %s95 = scalar_select %p92, %s93, %s94
    %p98 = pneg %p92
    %p99 = scmp.eq.s32.totalorder %s10, 1
    %p100 = por %p98, %p99
    %p101 = scmp.ne.s32.totalorder %s93, %s96
    %p102 = scmp.eq.s32.totalorder %s10, 0
    %p103 = por %p101, %p102
    %p104 = scmp.ne.s32.totalorder %s93, %s96
    %p105 = scmp.eq.s32.totalorder %s15, 1
    %p106 = por %p104, %p105
    %p107 = scmp.ne.s32.totalorder %s96, %s97
    %p108 = scmp.eq.s32.totalorder %s15, 0
    %p109 = por %p107, %p108
    %p110 = scmp.ne.s32.totalorder %s96, %s97
    %p111 = scmp.eq.s32.totalorder %s16, 1
    %p112 = por %p110, %p111
    %p114 = scmp.ne.s32.totalorder %s97, %s113
    %p115 = scmp.eq.s32.totalorder %s16, 0
    %p116 = por %p114, %p115
    %p117 = scmp.le.s32.totalorder 1, %s10
    %p118 = scmp.lt.s32.totalorder %s10, 3
    %p119 = pnand %p117, %p118
    %p120 = pneg %p119
    // Predicated region
    $region9: #{stem_forward.10} parent=5 // pred_check
      _
    $region10: #{stem_forward.10} parent=5 // pred_check_branch
      %122 = sbr.rel (%p119) target = $region12
    $region11: #{stem_forward.10} parent=5 // pred_region
      %s123 = ssub.s32 %s10, 1
      // Predicated region
      $region13: #{stem_forward.10} parent=11 // pred_check
        %p124 = pneg %p57
      $region14: #{stem_forward.10} parent=11 // pred_check_branch
        %126 = sbr.rel (%p124) target = $region16
      $region15: #{stem_forward.10} parent=11 // pred_region
        _
      $region16: #{stem_forward.10} parent=11 // pred_fallthru
        _
    $region12: #{stem_forward.10} parent=5 // pred_fallthru
      _
    %p127 = scmp.lt.s32.totalorder %s10, 2
    // Predicated region
    $region17: #{stem_forward.10} parent=5 // pred_check
      %p128 = pneg %p127
    $region18: #{stem_forward.10} parent=5 // pred_check_branch
      %130 = sbr.rel (%p128) target = $region20
    $region19: #{stem_forward.10} parent=5 // pred_region
      // Predicated region
      $region21: #{stem_forward.10} parent=19 // pred_check
        %p131 = pneg %p30
      $region22: #{stem_forward.10} parent=19 // pred_check_branch
        %133 = sbr.rel (%p131) target = $region24
      $region23: #{stem_forward.10} parent=19 // pred_region
        %s134 = smul.u32 46, %s10
        %p135 = scmp.lt.s32.totalorder %s134, 91
        %s136 = scalar_select %p135, %s134, 91
        %s137 = smul.addr %s136, 4
        %s138 = scalar_lea.vmem %s0, %s137
        %s139 = smul.u32 46, %s10
      $region24: #{stem_forward.10} parent=19 // pred_fallthru
        _
    $region20: #{stem_forward.10} parent=5 // pred_fallthru
      _
    %p140 = scmp.le.s32.totalorder 1, %s10
    %p141 = scmp.lt.s32.totalorder %s10, 3
    %p142 = pnand %p140, %p141
    %p143 = pneg %p142
    // Predicated region
    $region25: #{stem_forward.10} parent=5 // pred_check
      _
    $region26: #{stem_forward.10} parent=5 // pred_check_branch
      %145 = sbr.rel (%p142) target = $region28
    $region27: #{stem_forward.10} parent=5 // pred_region
      %s146 = ssub.s32 %s10, 1
      %s147 = smul.u32 46, %s15
      %p148 = scmp.lt.s32.totalorder %s147, 91
      %s149 = scalar_select %p148, %s147, 91
      %s150 = smul.addr %s149, 4
      %s151 = scalar_lea.vmem %s0, %s150
      %p152 = pneg %p36
      %p153 = pneg %p33
      %p154 = pneg %p57
      %p155 = pneg %p54
      %p156 = pneg %p83
      %p157 = pneg %p80
      %s158 = smul.u32 46, %s15
      %p159 = scmp.lt.s32.totalorder %s158, 91
      %s160 = scalar_select %p159, %s158, 91
      %s161 = smul.addr %s160, 4
      %s162 = scalar_lea.vmem %s2, %s161
      %p163 = pneg %p109
      %p164 = pneg %p106
      %p165 = scmp.lt.s32.totalorder %s15, 1
      %s166 = scalar_select %p165, %s15, 1
      %s167 = smul.addr %s166, 2
      %s168 = scalar_lea.vmem %s3, %s167
      %s169 = smul.u32 46, %s15
      %p170 = scmp.lt.s32.totalorder %s169, 91
      %s171 = scalar_select %p170, %s169, 91
      %s172 = smul.addr %s171, 4
      %s173 = scalar_lea.vmem %s0, %s172
      %s174 = smul.u32 46, %s15
      %s175 = smul.u32 46, %s15
      %p176 = scmp.lt.s32.totalorder %s175, 91
      %s177 = scalar_select %p176, %s175, 91
      %s178 = smul.addr %s177, 4
      %s179 = scalar_lea.vmem %s2, %s178
      %s180 = smul.u32 46, %s15
      %p181 = scmp.lt.s32.totalorder %s15, 1
      %s182 = scalar_select %p181, %s15, 1
      %s183 = smul.addr %s182, 2
      %s184 = scalar_lea.vmem %s3, %s183
      %v186 = vld [vmem:[%s173] sm:$0xf]
      %v187 = vld [vmem:[%s173 + $0x4] sm:$0xf]
      %v188 = vld [vmem:[%s173 + $0x8] sm:$0xf]
      %v189 = vld [vmem:[%s173 + $0xc] sm:$0xf]
      %v190 = vld [vmem:[%s173 + $0x10] sm:$0xf]
      %v191 = vld [vmem:[%s173 + $0x14] sm:$0xf]
      %v192 = vld [vmem:[%s173 + $0x18] sm:$0xf]
      %v193 = vld [vmem:[%s173 + $0x1c] sm:$0xf]
      %v194 = vld [vmem:[%s173 + $0x20] sm:$0xf]
      %v195 = vld [vmem:[%s173 + $0x24] sm:$0xf]
      %v196 = vld [vmem:[%s173 + $0x28] sm:$0xf]
      %v197 = vld [vmem:[%s173 + $0x2c] sm:$0xf]
      %v198 = vld [vmem:[%s173 + $0x30] sm:$0xf]
      %v199 = vld [vmem:[%s173 + $0x34] sm:$0xf]
      %v200 = vld [vmem:[%s173 + $0x38] sm:$0xf]
      %v201 = vld [vmem:[%s173 + $0x3c] sm:$0xf]
      %v202 = vld [vmem:[%s173 + $0x40] sm:$0xf]
      %v203 = vld [vmem:[%s173 + $0x44] sm:$0xf]
      %v204 = vld [vmem:[%s173 + $0x48] sm:$0xf]
      %v205 = vld [vmem:[%s173 + $0x4c] sm:$0xf]
      %v206 = vld [vmem:[%s173 + $0x50] sm:$0xf]
      %v207 = vld [vmem:[%s173 + $0x54] sm:$0xf]
      %v208 = vld [vmem:[%s173 + $0x58] sm:$0xf]
      %v209 = vld [vmem:[%s173 + $0x5c] sm:$0xf]
      %v210 = vld [vmem:[%s173 + $0x60] sm:$0xf]
      %v211 = vld [vmem:[%s173 + $0x64] sm:$0xf]
      %v212 = vld [vmem:[%s173 + $0x68] sm:$0xf]
      %v213 = vld [vmem:[%s173 + $0x6c] sm:$0xf]
      %v214 = vld [vmem:[%s173 + $0x70] sm:$0xf]
      %v215 = vld [vmem:[%s173 + $0x74] sm:$0xf]
      %v216 = vld [vmem:[%s173 + $0x78] sm:$0xf]
      %v217 = vld [vmem:[%s173 + $0x7c] sm:$0xf]
      %v218 = vld [vmem:[%s173 + $0x80] sm:$0xf]
      %v219 = vld [vmem:[%s173 + $0x84] sm:$0xf]
      %v220 = vld [vmem:[%s173 + $0x88] sm:$0xf]
      %v221 = vld [vmem:[%s173 + $0x8c] sm:$0xf]
      %v222 = vld [vmem:[%s173 + $0x90] sm:$0xf]
      %v223 = vld [vmem:[%s173 + $0x94] sm:$0xf]
      %v224 = vld [vmem:[%s173 + $0x98] sm:$0xf]
      %v225 = vld [vmem:[%s173 + $0x9c] sm:$0xf]
      %v226 = vld [vmem:[%s173 + $0xa0] sm:$0xf]
      %v227 = vld [vmem:[%s173 + $0xa4] sm:$0xf]
      %v228 = vld [vmem:[%s173 + $0xa8] sm:$0xf]
      %v229 = vld [vmem:[%s173 + $0xac] sm:$0xf]
      %v230 = vld [vmem:[%s173 + $0xb0] sm:$0xf]
      %v231 = vld [vmem:[%s173 + $0xb4] sm:$0xf]
      %v232 = vld [vmem:[%s1] sm:$0xf]
      %v233 = vld [vmem:[%s1 + $0x4] sm:$0xf]
      %v234 = vld [vmem:[%s1 + $0x8] sm:$0xf]
      %v235 = vld [vmem:[%s1 + $0xc] sm:$0x3]
      %v282 = vunpack.c.l.b16 %v186
      %v283 = vunpack.c.l.b16 %v187
      %v284 = vunpack.c.l.b16 %v188
      %v285 = vunpack.c.l.b16 %v189
      %v286 = vunpack.c.l.b16 %v190
      %v287 = vunpack.c.l.b16 %v191
      %v288 = vunpack.c.l.b16 %v192
      %v289 = vunpack.c.l.b16 %v193
      %v290 = vunpack.c.l.b16 %v194
      %v291 = vunpack.c.l.b16 %v195
      %v292 = vunpack.c.l.b16 %v196
      %v293 = vunpack.c.l.b16 %v197
      %v294 = vunpack.c.l.b16 %v198
      %v295 = vunpack.c.l.b16 %v199
      %v296 = vunpack.c.l.b16 %v200
      %v297 = vunpack.c.l.b16 %v201
      %v298 = vunpack.c.l.b16 %v202
      %v299 = vunpack.c.l.b16 %v203
      %v300 = vunpack.c.l.b16 %v204
      %v301 = vunpack.c.l.b16 %v205
      %v302 = vunpack.c.l.b16 %v206
      %v303 = vunpack.c.l.b16 %v207
      %v304 = vunpack.c.l.b16 %v208
      %v305 = vunpack.c.l.b16 %v209
      %v306 = vunpack.c.l.b16 %v210
      %v307 = vunpack.c.l.b16 %v211
      %v308 = vunpack.c.l.b16 %v212
      %v309 = vunpack.c.l.b16 %v213
      %v310 = vunpack.c.l.b16 %v214
      %v311 = vunpack.c.l.b16 %v215
      %v312 = vunpack.c.l.b16 %v216
      %v313 = vunpack.c.l.b16 %v217
      %v314 = vunpack.c.l.b16 %v218
      %v315 = vunpack.c.l.b16 %v219
      %v316 = vunpack.c.l.b16 %v220
      %v317 = vunpack.c.l.b16 %v221
      %v318 = vunpack.c.l.b16 %v222
      %v319 = vunpack.c.l.b16 %v223
      %v320 = vunpack.c.l.b16 %v224
      %v321 = vunpack.c.l.b16 %v225
      %v322 = vunpack.c.l.b16 %v226
      %v323 = vunpack.c.l.b16 %v227
      %v324 = vunpack.c.l.b16 %v228
      %v325 = vunpack.c.l.b16 %v229
      %v326 = vunpack.c.l.b16 %v230
      %v327 = vunpack.c.l.b16 %v231
      %v328 = vpack.c.b16 %v283, %v282
      %v329 = vpack.c.b16 %v285, %v284
      %v330 = vpack.c.b16 %v287, %v286
      %v331 = vpack.c.b16 %v289, %v288
      %v332 = vpack.c.b16 %v291, %v290
      %v333 = vpack.c.b16 %v293, %v292
      %v334 = vpack.c.b16 %v295, %v294
      %v335 = vpack.c.b16 %v297, %v296
      %v336 = vpack.c.b16 %v299, %v298
      %v337 = vpack.c.b16 %v301, %v300
      %v338 = vpack.c.b16 %v303, %v302
      %v339 = vpack.c.b16 %v305, %v304
      %v340 = vpack.c.b16 %v307, %v306
      %v341 = vpack.c.b16 %v309, %v308
      %v342 = vpack.c.b16 %v311, %v310
      %v343 = vpack.c.b16 %v313, %v312
      %v344 = vpack.c.b16 %v315, %v314
      %v345 = vpack.c.b16 %v317, %v316
      %v346 = vpack.c.b16 %v319, %v318
      %v347 = vpack.c.b16 %v321, %v320
      %v348 = vpack.c.b16 %v323, %v322
      %v349 = vpack.c.b16 %v325, %v324
      %v350 = vpack.c.b16 %v327, %v326
      %v355 = vunpack.c.l.b16 %v232
      %v356 = vunpack.c.l.b16 %v233
      %v357 = vunpack.c.l.b16 %v234
      %v358 = vunpack.c.l.b16 %v235
      %v359 = vpack.c.b16 %v356, %v355
      %v360 = vpack.c.b16 %v358, %v357
      %vm362 = vcmask 220160
      %v364 = vsel %vm362, %v328, 0
      %v367 = vsel %vm362, %v329, 0
      %v370 = vsel %vm362, %v330, 0
      %v373 = vsel %vm362, %v331, 0
      %v376 = vsel %vm362, %v332, 0
      %v379 = vsel %vm362, %v333, 0
      %v382 = vsel %vm362, %v334, 0
      %v385 = vsel %vm362, %v335, 0
      %v388 = vsel %vm362, %v336, 0
      %v391 = vsel %vm362, %v337, 0
      %v394 = vsel %vm362, %v338, 0
      %v397 = vsel %vm362, %v339, 0
      %v400 = vsel %vm362, %v340, 0
      %v403 = vsel %vm362, %v341, 0
      %v406 = vsel %vm362, %v342, 0
      %v409 = vsel %vm362, %v343, 0
      %v412 = vsel %vm362, %v344, 0
      %v415 = vsel %vm362, %v345, 0
      %v418 = vsel %vm362, %v346, 0
      %v421 = vsel %vm362, %v347, 0
      %v424 = vsel %vm362, %v348, 0
      %v427 = vsel %vm362, %v349, 0
      %v430 = vsel %vm362, %v350, 0
      %vm432 = vcmask 1044480
      %vm433 = vcmask 1045504
      %v434 = vsel %vm432, 4294967295, 65535
      %v435 = vsel %vm433, %v434, 0
      %v437 = vand.u32 %v360, %v435
      %439 = vmatprep.subr.bf16.mxu0 0
      %440 = vmatpush1.bf16.msra.mxu0 %v359
      %441 = vmatprep.subr.bf16.mxu0 0
      %442 = vmatpush1.bf16.msra.mxu0 %v437
      %443 = vmatprep.subr.bf16.mxu0 0
      %444 = vmatpush1.bf16.msra.mxu0 0
      %445 = vmatprep.subr.bf16.mxu0 0
      %446 = vmatpush1.bf16.msra.mxu0 0
      %447 = vmatprep.subr.bf16.mxu0 0
      %448 = vmatpush1.bf16.msra.mxu0 0
      %449 = vmatprep.subr.bf16.mxu0 0
      %450 = vmatpush1.bf16.msra.mxu0 0
      %451 = vmatprep.subr.bf16.mxu0 0
      %452 = vmatpush1.bf16.msra.mxu0 0
      %453 = vmatprep.subr.bf16.mxu0 0
      %454 = vmatpush1.bf16.msra.mxu0 0
      %455 = vmatprep.subr.bf16.mxu0 0
      %456 = vmatpush1.bf16.msra.mxu0 0
      %457 = vmatprep.subr.bf16.mxu0 0
      %458 = vmatpush1.bf16.msra.mxu0 0
      %459 = vmatprep.subr.bf16.mxu0 0
      %460 = vmatpush1.bf16.msra.mxu0 0
      %461 = vmatprep.subr.bf16.mxu0 0
      %462 = vmatpush1.bf16.msra.mxu0 0
      %463 = vmatprep.subr.bf16.mxu0 0
      %464 = vmatpush1.bf16.msra.mxu0 0
      %465 = vmatprep.subr.bf16.mxu0 0
      %466 = vmatpush1.bf16.msra.mxu0 0
      %467 = vmatprep.subr.bf16.mxu0 0
      %468 = vmatpush1.bf16.msra.mxu0 0
      %469 = vmatprep.subr.bf16.mxu0 0
      %470 = vmatpush1.bf16.msra.mxu0 0
      %471 = vmatprep.mubr.bf16.mxu0 0
      %472 = vmatmul.mubr.bf16.gmra.mrb[0].mxu0 %v364
      %v473 = vpop.f32.mrb[0].mxu0
      %v474 = vadd.f32 0.0, %v473
      %v475 = vpop.f32.mrb[0].mxu0
      %v476 = vpop.f32.mrb[0].mxu0
      %v477 = vadd.f32 0.0, %v476
      %v478 = vpop.f32.mrb[0].mxu0
      %479 = vmatprep.mubr.bf16.mxu0 0
      %480 = vmatmul.mubr.bf16.gmra.mrb[0].mxu0 %v367
      %v481 = vpop.f32.mrb[0].mxu0
      %v482 = vadd.f32 0.0, %v481
      %v483 = vpop.f32.mrb[0].mxu0
      %v484 = vpop.f32.mrb[0].mxu0
      %v485 = vadd.f32 0.0, %v484
      %v486 = vpop.f32.mrb[0].mxu0
      %487 = vmatprep.mubr.bf16.mxu0 0
      %488 = vmatmul.mubr.bf16.gmra.mrb[0].mxu0 %v370
      %v489 = vpop.f32.mrb[0].mxu0
      %v490 = vadd.f32 0.0, %v489
      %v491 = vpop.f32.mrb[0].mxu0
      %v492 = vpop.f32.mrb[0].mxu0
      %v493 = vadd.f32 0.0, %v492
      %v494 = vpop.f32.mrb[0].mxu0
      %495 = vmatprep.mubr.bf16.mxu0 0
      %496 = vmatmul.mubr.bf16.gmra.mrb[0].mxu0 %v373
      %v497 = vpop.f32.mrb[0].mxu0
      %v498 = vadd.f32 0.0, %v497
      %v499 = vpop.f32.mrb[0].mxu0
      %v500 = vpop.f32.mrb[0].mxu0
      %v501 = vadd.f32 0.0, %v500
      %v502 = vpop.f32.mrb[0].mxu0
      %503 = vmatprep.mubr.bf16.mxu0 0
      %504 = vmatmul.mubr.bf16.gmra.mrb[0].mxu0 %v376
      %v505 = vpop.f32.mrb[0].mxu0
      %v506 = vadd.f32 0.0, %v505
      %v507 = vpop.f32.mrb[0].mxu0
      %v508 = vpop.f32.mrb[0].mxu0
      %v509 = vadd.f32 0.0, %v508
      %v510 = vpop.f32.mrb[0].mxu0
      %511 = vmatprep.mubr.bf16.mxu0 0
      %512 = vmatmul.mubr.bf16.gmra.mrb[0].mxu0 %v379
      %v513 = vpop.f32.mrb[0].mxu0
      %v514 = vadd.f32 0.0, %v513
      %v515 = vpop.f32.mrb[0].mxu0
      %v516 = vpop.f32.mrb[0].mxu0
      %v517 = vadd.f32 0.0, %v516
      %v518 = vpop.f32.mrb[0].mxu0
      %519 = vmatprep.mubr.bf16.mxu0 0
      %520 = vmatmul.mubr.bf16.gmra.mrb[0].mxu0 %v382
      %v521 = vpop.f32.mrb[0].mxu0
      %v522 = vadd.f32 0.0, %v521
      %v523 = vpop.f32.mrb[0].mxu0
      %v524 = vpop.f32.mrb[0].mxu0
      %v525 = vadd.f32 0.0, %v524
      %v526 = vpop.f32.mrb[0].mxu0
      %527 = vmatprep.mubr.bf16.mxu0 0
      %528 = vmatmul.mubr.bf16.gmra.mrb[0].mxu0 %v385
      %v529 = vpop.f32.mrb[0].mxu0
      %v530 = vadd.f32 0.0, %v529
      %v531 = vpop.f32.mrb[0].mxu0
      %v532 = vpop.f32.mrb[0].mxu0
      %v533 = vadd.f32 0.0, %v532
      %v534 = vpop.f32.mrb[0].mxu0
      %535 = vmatprep.mubr.bf16.mxu0 0
      %536 = vmatmul.mubr.bf16.gmra.mrb[0].mxu0 %v388
      %v537 = vpop.f32.mrb[0].mxu0
      %v538 = vadd.f32 0.0, %v537
      %v539 = vpop.f32.mrb[0].mxu0
      %v540 = vpop.f32.mrb[0].mxu0
      %v541 = vadd.f32 0.0, %v540
      %v542 = vpop.f32.mrb[0].mxu0
      %543 = vmatprep.mubr.bf16.mxu0 0
      %544 = vmatmul.mubr.bf16.gmra.mrb[0].mxu0 %v391
      %v545 = vpop.f32.mrb[0].mxu0
      %v546 = vadd.f32 0.0, %v545
      %v547 = vpop.f32.mrb[0].mxu0
      %v548 = vpop.f32.mrb[0].mxu0
      %v549 = vadd.f32 0.0, %v548
      %v550 = vpop.f32.mrb[0].mxu0
      %551 = vmatprep.mubr.bf16.mxu0 0
      %552 = vmatmul.mubr.bf16.gmra.mrb[0].mxu0 %v394
      %v553 = vpop.f32.mrb[0].mxu0
      %v554 = vadd.f32 0.0, %v553
      %v555 = vpop.f32.mrb[0].mxu0
      %v556 = vpop.f32.mrb[0].mxu0
      %v557 = vadd.f32 0.0, %v556
      %v558 = vpop.f32.mrb[0].mxu0
      %559 = vmatprep.mubr.bf16.mxu0 0
      %560 = vmatmul.mubr.bf16.gmra.mrb[0].mxu0 %v397
      %v561 = vpop.f32.mrb[0].mxu0
      %v562 = vadd.f32 0.0, %v561
      %v563 = vpop.f32.mrb[0].mxu0
      %v564 = vpop.f32.mrb[0].mxu0
      %v565 = vadd.f32 0.0, %v564
      %v566 = vpop.f32.mrb[0].mxu0
      %567 = vmatprep.mubr.bf16.mxu0 0
      %568 = vmatmul.mubr.bf16.gmra.mrb[0].mxu0 %v400
      %v569 = vpop.f32.mrb[0].mxu0
      %v570 = vadd.f32 0.0, %v569
      %v571 = vpop.f32.mrb[0].mxu0
      %v572 = vpop.f32.mrb[0].mxu0
      %v573 = vadd.f32 0.0, %v572
      %v574 = vpop.f32.mrb[0].mxu0
      %575 = vmatprep.mubr.bf16.mxu0 0
      %576 = vmatmul.mubr.bf16.gmra.mrb[0].mxu0 %v403
      %v577 = vpop.f32.mrb[0].mxu0
      %v578 = vadd.f32 0.0, %v577
      %v579 = vpop.f32.mrb[0].mxu0
      %v580 = vpop.f32.mrb[0].mxu0
      %v581 = vadd.f32 0.0, %v580
      %v582 = vpop.f32.mrb[0].mxu0
      %583 = vmatprep.mubr.bf16.mxu0 0
      %584 = vmatmul.mubr.bf16.gmra.mrb[0].mxu0 %v406
      %v585 = vpop.f32.mrb[0].mxu0
      %v586 = vadd.f32 0.0, %v585
      %v587 = vpop.f32.mrb[0].mxu0
      %v588 = vpop.f32.mrb[0].mxu0
      %v589 = vadd.f32 0.0, %v588
      %v590 = vpop.f32.mrb[0].mxu0
      %591 = vmatprep.mubr.bf16.mxu0 0
      %592 = vmatmul.mubr.bf16.gmra.mrb[0].mxu0 %v409
      %v593 = vpop.f32.mrb[0].mxu0
      %v594 = vadd.f32 0.0, %v593
      %v595 = vpop.f32.mrb[0].mxu0
      %v596 = vpop.f32.mrb[0].mxu0
      %v597 = vadd.f32 0.0, %v596
      %v598 = vpop.f32.mrb[0].mxu0
      %599 = vmatprep.mubr.bf16.mxu0 0
      %600 = vmatmul.mubr.bf16.gmra.mrb[0].mxu0 %v412
      %v601 = vpop.f32.mrb[0].mxu0
      %v602 = vadd.f32 0.0, %v601
      %v603 = vpop.f32.mrb[0].mxu0
      %v604 = vpop.f32.mrb[0].mxu0
      %v605 = vadd.f32 0.0, %v604
      %v606 = vpop.f32.mrb[0].mxu0
      %607 = vmatprep.mubr.bf16.mxu0 0
      %608 = vmatmul.mubr.bf16.gmra.mrb[0].mxu0 %v415
      %v609 = vpop.f32.mrb[0].mxu0
      %v610 = vadd.f32 0.0, %v609
      %v611 = vpop.f32.mrb[0].mxu0
      %v612 = vpop.f32.mrb[0].mxu0
      %v613 = vadd.f32 0.0, %v612
      %v614 = vpop.f32.mrb[0].mxu0
      %615 = vmatprep.mubr.bf16.mxu0 0
      %616 = vmatmul.mubr.bf16.gmra.mrb[0].mxu0 %v418
      %v617 = vpop.f32.mrb[0].mxu0
      %v618 = vadd.f32 0.0, %v617
      %v619 = vpop.f32.mrb[0].mxu0
      %v620 = vpop.f32.mrb[0].mxu0
      %v621 = vadd.f32 0.0, %v620
      %v622 = vpop.f32.mrb[0].mxu0
      %623 = vmatprep.mubr.bf16.mxu0 0
      %624 = vmatmul.mubr.bf16.gmra.mrb[0].mxu0 %v421
      %v625 = vpop.f32.mrb[0].mxu0
      %v626 = vadd.f32 0.0, %v625
      %v627 = vpop.f32.mrb[0].mxu0
      %v628 = vpop.f32.mrb[0].mxu0
      %v629 = vadd.f32 0.0, %v628
      %v630 = vpop.f32.mrb[0].mxu0
      %631 = vmatprep.mubr.bf16.mxu0 0
      %632 = vmatmul.mubr.bf16.gmra.mrb[0].mxu0 %v424
      %v633 = vpop.f32.mrb[0].mxu0
      %v634 = vadd.f32 0.0, %v633
      %v635 = vpop.f32.mrb[0].mxu0
      %v636 = vpop.f32.mrb[0].mxu0
      %v637 = vadd.f32 0.0, %v636
      %v638 = vpop.f32.mrb[0].mxu0
      %639 = vmatprep.mubr.bf16.mxu0 0
      %640 = vmatmul.mubr.bf16.gmra.mrb[0].mxu0 %v427
      %v641 = vpop.f32.mrb[0].mxu0
      %v642 = vadd.f32 0.0, %v641
      %v643 = vpop.f32.mrb[0].mxu0
      %v644 = vpop.f32.mrb[0].mxu0
      %v645 = vadd.f32 0.0, %v644
      %v646 = vpop.f32.mrb[0].mxu0
      %647 = vmatprep.mubr.bf16.mxu0 0
      %648 = vmatmul.mubr.bf16.gmra.mrb[0].mxu0 %v430
      %v649 = vpop.f32.mrb[0].mxu0
      %v650 = vadd.f32 0.0, %v649
      %v651 = vpop.f32.mrb[0].mxu0
      %v652 = vpop.f32.mrb[0].mxu0
      %v653 = vadd.f32 0.0, %v652
      %v654 = vpop.f32.mrb[0].mxu0
      %655 = vdwg.mxu0
      %v656 = vpack.c.bf16 %v477, %v474
      %v657 = vpack.c.bf16 %v485, %v482
      %v658 = vpack.c.bf16 %v493, %v490
      %v659 = vpack.c.bf16 %v501, %v498
      %v660 = vpack.c.bf16 %v509, %v506
      %v661 = vpack.c.bf16 %v517, %v514
      %v662 = vpack.c.bf16 %v525, %v522
      %v663 = vpack.c.bf16 %v533, %v530
      %v664 = vpack.c.bf16 %v541, %v538
      %v665 = vpack.c.bf16 %v549, %v546
      %v666 = vpack.c.bf16 %v557, %v554
      %v667 = vpack.c.bf16 %v565, %v562
      %v668 = vpack.c.bf16 %v573, %v570
      %v669 = vpack.c.bf16 %v581, %v578
      %v670 = vpack.c.bf16 %v589, %v586
      %v671 = vpack.c.bf16 %v597, %v594
      %v672 = vpack.c.bf16 %v605, %v602
      %v673 = vpack.c.bf16 %v613, %v610
      %v674 = vpack.c.bf16 %v621, %v618
      %v675 = vpack.c.bf16 %v629, %v626
      %v676 = vpack.c.bf16 %v637, %v634
      %v677 = vpack.c.bf16 %v645, %v642
      %v678 = vpack.c.bf16 %v653, %v650
      %v702 = vunpack.c.l.b16 %v656
      %v703 = vunpack.c.h.b16 %v656
      %v704 = vunpack.c.l.b16 %v657
      %v705 = vunpack.c.h.b16 %v657
      %v706 = vunpack.c.l.b16 %v658
      %v707 = vunpack.c.h.b16 %v658
      %v708 = vunpack.c.l.b16 %v659
      %v709 = vunpack.c.h.b16 %v659
      %v710 = vunpack.c.l.b16 %v660
      %v711 = vunpack.c.h.b16 %v660
      %v712 = vunpack.c.l.b16 %v661
      %v713 = vunpack.c.h.b16 %v661
      %v714 = vunpack.c.l.b16 %v662
      %v715 = vunpack.c.h.b16 %v662
      %v716 = vunpack.c.l.b16 %v663
      %v717 = vunpack.c.h.b16 %v663
      %v718 = vunpack.c.l.b16 %v664
      %v719 = vunpack.c.h.b16 %v664
      %v720 = vunpack.c.l.b16 %v665
      %v721 = vunpack.c.h.b16 %v665
      %v722 = vunpack.c.l.b16 %v666
      %v723 = vunpack.c.h.b16 %v666
      %v724 = vunpack.c.l.b16 %v667
      %v725 = vunpack.c.h.b16 %v667
      %v726 = vunpack.c.l.b16 %v668
      %v727 = vunpack.c.h.b16 %v668
      %v728 = vunpack.c.l.b16 %v669
      %v729 = vunpack.c.h.b16 %v669
      %v730 = vunpack.c.l.b16 %v670
      %v731 = vunpack.c.h.b16 %v670
      %v732 = vunpack.c.l.b16 %v671
      %v733 = vunpack.c.h.b16 %v671
      %v734 = vunpack.c.l.b16 %v672
      %v735 = vunpack.c.h.b16 %v672
      %v736 = vunpack.c.l.b16 %v673
      %v737 = vunpack.c.h.b16 %v673
      %v738 = vunpack.c.l.b16 %v674
      %v739 = vunpack.c.h.b16 %v674
      %v740 = vunpack.c.l.b16 %v675
      %v741 = vunpack.c.h.b16 %v675
      %v742 = vunpack.c.l.b16 %v676
      %v743 = vunpack.c.h.b16 %v676
      %v744 = vunpack.c.l.b16 %v677
      %v745 = vunpack.c.h.b16 %v677
      %v746 = vunpack.c.l.b16 %v678
      %v747 = vunpack.c.h.b16 %v678
      %v748 = vpack.c.b16 %v702, %v702
      %v749 = vpack.c.b16 %v703, %v703
      %v750 = vpack.c.b16 %v704, %v704
      %v751 = vpack.c.b16 %v705, %v705
      %v752 = vpack.c.b16 %v706, %v706
      %v753 = vpack.c.b16 %v707, %v707
      %v754 = vpack.c.b16 %v708, %v708
      %v755 = vpack.c.b16 %v709, %v709
      %v756 = vpack.c.b16 %v710, %v710
      %v757 = vpack.c.b16 %v711, %v711
      %v758 = vpack.c.b16 %v712, %v712
      %v759 = vpack.c.b16 %v713, %v713
      %v760 = vpack.c.b16 %v714, %v714
      %v761 = vpack.c.b16 %v715, %v715
      %v762 = vpack.c.b16 %v716, %v716
      %v763 = vpack.c.b16 %v717, %v717
      %v764 = vpack.c.b16 %v718, %v718
      %v765 = vpack.c.b16 %v719, %v719
      %v766 = vpack.c.b16 %v720, %v720
      %v767 = vpack.c.b16 %v721, %v721
      %v768 = vpack.c.b16 %v722, %v722
      %v769 = vpack.c.b16 %v723, %v723
      %v770 = vpack.c.b16 %v724, %v724
      %v771 = vpack.c.b16 %v725, %v725
      %v772 = vpack.c.b16 %v726, %v726
      %v773 = vpack.c.b16 %v727, %v727
      %v774 = vpack.c.b16 %v728, %v728
      %v775 = vpack.c.b16 %v729, %v729
      %v776 = vpack.c.b16 %v730, %v730
      %v777 = vpack.c.b16 %v731, %v731
      %v778 = vpack.c.b16 %v732, %v732
      %v779 = vpack.c.b16 %v733, %v733
      %v780 = vpack.c.b16 %v734, %v734
      %v781 = vpack.c.b16 %v735, %v735
      %v782 = vpack.c.b16 %v736, %v736
      %v783 = vpack.c.b16 %v737, %v737
      %v784 = vpack.c.b16 %v738, %v738
      %v785 = vpack.c.b16 %v739, %v739
      %v786 = vpack.c.b16 %v740, %v740
      %v787 = vpack.c.b16 %v741, %v741
      %v788 = vpack.c.b16 %v742, %v742
      %v789 = vpack.c.b16 %v743, %v743
      %v790 = vpack.c.b16 %v744, %v744
      %v791 = vpack.c.b16 %v745, %v745
      %v792 = vpack.c.b16 %v746, %v746
      %v793 = vpack.c.b16 %v747, %v747
      %840 = vst [vmem:[%s179] sm:$0xf] %v748
      %841 = vst [vmem:[%s179 + $0x4] sm:$0xf] %v749
      %842 = vst [vmem:[%s179 + $0x8] sm:$0xf] %v750
      %843 = vst [vmem:[%s179 + $0xc] sm:$0xf] %v751
      %844 = vst [vmem:[%s179 + $0x10] sm:$0xf] %v752
      %845 = vst [vmem:[%s179 + $0x14] sm:$0xf] %v753
      %846 = vst [vmem:[%s179 + $0x18] sm:$0xf] %v754
      %847 = vst [vmem:[%s179 + $0x1c] sm:$0xf] %v755
      %848 = vst [vmem:[%s179 + $0x20] sm:$0xf] %v756
      %849 = vst [vmem:[%s179 + $0x24] sm:$0xf] %v757
      %850 = vst [vmem:[%s179 + $0x28] sm:$0xf] %v758
      %851 = vst [vmem:[%s179 + $0x2c] sm:$0xf] %v759
      %852 = vst [vmem:[%s179 + $0x30] sm:$0xf] %v760
      %853 = vst [vmem:[%s179 + $0x34] sm:$0xf] %v761
      %854 = vst [vmem:[%s179 + $0x38] sm:$0xf] %v762
      %855 = vst [vmem:[%s179 + $0x3c] sm:$0xf] %v763
      %856 = vst [vmem:[%s179 + $0x40] sm:$0xf] %v764
      %857 = vst [vmem:[%s179 + $0x44] sm:$0xf] %v765
      %858 = vst [vmem:[%s179 + $0x48] sm:$0xf] %v766
      %859 = vst [vmem:[%s179 + $0x4c] sm:$0xf] %v767
      %860 = vst [vmem:[%s179 + $0x50] sm:$0xf] %v768
      %861 = vst [vmem:[%s179 + $0x54] sm:$0xf] %v769
      %862 = vst [vmem:[%s179 + $0x58] sm:$0xf] %v770
      %863 = vst [vmem:[%s179 + $0x5c] sm:$0xf] %v771
      %864 = vst [vmem:[%s179 + $0x60] sm:$0xf] %v772
      %865 = vst [vmem:[%s179 + $0x64] sm:$0xf] %v773
      %866 = vst [vmem:[%s179 + $0x68] sm:$0xf] %v774
      %867 = vst [vmem:[%s179 + $0x6c] sm:$0xf] %v775
      %868 = vst [vmem:[%s179 + $0x70] sm:$0xf] %v776
      %869 = vst [vmem:[%s179 + $0x74] sm:$0xf] %v777
      %870 = vst [vmem:[%s179 + $0x78] sm:$0xf] %v778
      %871 = vst [vmem:[%s179 + $0x7c] sm:$0xf] %v779
      %872 = vst [vmem:[%s179 + $0x80] sm:$0xf] %v780
      %873 = vst [vmem:[%s179 + $0x84] sm:$0xf] %v781
      %874 = vst [vmem:[%s179 + $0x88] sm:$0xf] %v782
      %875 = vst [vmem:[%s179 + $0x8c] sm:$0xf] %v783
      %876 = vst [vmem:[%s179 + $0x90] sm:$0xf] %v784
      %877 = vst [vmem:[%s179 + $0x94] sm:$0xf] %v785
      %878 = vst [vmem:[%s179 + $0x98] sm:$0xf] %v786
      %879 = vst [vmem:[%s179 + $0x9c] sm:$0xf] %v787
      %880 = vst [vmem:[%s179 + $0xa0] sm:$0xf] %v788
      %881 = vst [vmem:[%s179 + $0xa4] sm:$0xf] %v789
      %882 = vst [vmem:[%s179 + $0xa8] sm:$0xf] %v790
      %883 = vst [vmem:[%s179 + $0xac] sm:$0xf] %v791
      %884 = vst [vmem:[%s179 + $0xb0] sm:$0xf] %v792
      %885 = vst [vmem:[%s179 + $0xb4] sm:$0xf] %v793
      %v886 = vadd.f32 %v474, %v477
      %v887 = vadd.f32 %v886, %v482
      %v888 = vadd.f32 %v887, %v485
      %v889 = vadd.f32 %v888, %v490
      %v890 = vadd.f32 %v889, %v493
      %v891 = vadd.f32 %v890, %v498
      %v892 = vadd.f32 %v891, %v501
      %v893 = vadd.f32 %v892, %v506
      %v894 = vadd.f32 %v893, %v509
      %v895 = vadd.f32 %v894, %v514
      %v896 = vadd.f32 %v895, %v517
      %v897 = vadd.f32 %v896, %v522
      %v898 = vadd.f32 %v897, %v525
      %v899 = vadd.f32 %v898, %v530
      %v900 = vadd.f32 %v899, %v533
      %v901 = vadd.f32 %v900, %v538
      %v902 = vadd.f32 %v901, %v541
      %v903 = vadd.f32 %v902, %v546
      %v904 = vadd.f32 %v903, %v549
      %v905 = vadd.f32 %v904, %v554
      %v906 = vadd.f32 %v905, %v557
      %v907 = vadd.f32 %v906, %v562
      %v908 = vadd.f32 %v907, %v565
      %v909 = vadd.f32 %v908, %v570
      %v910 = vadd.f32 %v909, %v573
      %v911 = vadd.f32 %v910, %v578
      %v912 = vadd.f32 %v911, %v581
      %v913 = vadd.f32 %v912, %v586
      %v914 = vadd.f32 %v913, %v589
      %v915 = vadd.f32 %v914, %v594
      %v916 = vadd.f32 %v915, %v597
      %v917 = vadd.f32 %v916, %v602
      %v918 = vadd.f32 %v917, %v605
      %v919 = vadd.f32 %v918, %v610
      %v920 = vadd.f32 %v919, %v613
      %v921 = vadd.f32 %v920, %v618
      %v922 = vadd.f32 %v921, %v621
      %v923 = vadd.f32 %v922, %v626
      %v924 = vadd.f32 %v923, %v629
      %v925 = vadd.f32 %v924, %v634
      %v926 = vadd.f32 %v925, %v637
      %v927 = vadd.f32 %v926, %v642
      %v928 = vadd.f32 %v927, %v645
      %v929 = vadd.f32 %v928, %v650
      %v930 = vadd.f32 %v929, %v653
      %v931 = vrot.slane %v930, 4
      %v932 = vadd.f32 %v930, %v931
      %v933 = vrot.slane %v932, 2
      %v934 = vadd.f32 %v932, %v933
      %v935 = vrot.slane %v934, 1
      %v936 = vadd.f32 %v934, %v935
      %937 = vst [vmem:[%s184] sm:$0x1] %v936
      %v938 = vmul.f32 %v474, %v474
      %v939 = vmul.f32 %v477, %v477
      %v940 = vmul.f32 %v482, %v482
      %v941 = vmul.f32 %v485, %v485
      %v942 = vmul.f32 %v490, %v490
      %v943 = vmul.f32 %v493, %v493
      %v944 = vmul.f32 %v498, %v498
      %v945 = vmul.f32 %v501, %v501
      %v946 = vmul.f32 %v506, %v506
      %v947 = vmul.f32 %v509, %v509
      %v948 = vmul.f32 %v514, %v514
      %v949 = vmul.f32 %v517, %v517
      %v950 = vmul.f32 %v522, %v522
      %v951 = vmul.f32 %v525, %v525
      %v952 = vmul.f32 %v530, %v530
      %v953 = vmul.f32 %v533, %v533
      %v954 = vmul.f32 %v538, %v538
      %v955 = vmul.f32 %v541, %v541
      %v956 = vmul.f32 %v546, %v546
      %v957 = vmul.f32 %v549, %v549
      %v958 = vmul.f32 %v554, %v554
      %v959 = vmul.f32 %v557, %v557
      %v960 = vmul.f32 %v562, %v562
      %v961 = vmul.f32 %v565, %v565
      %v962 = vmul.f32 %v570, %v570
      %v963 = vmul.f32 %v573, %v573
      %v964 = vmul.f32 %v578, %v578
      %v965 = vmul.f32 %v581, %v581
      %v966 = vmul.f32 %v586, %v586
      %v967 = vmul.f32 %v589, %v589
      %v968 = vmul.f32 %v594, %v594
      %v969 = vmul.f32 %v597, %v597
      %v970 = vmul.f32 %v602, %v602
      %v971 = vmul.f32 %v605, %v605
      %v972 = vmul.f32 %v610, %v610
      %v973 = vmul.f32 %v613, %v613
      %v974 = vmul.f32 %v618, %v618
      %v975 = vmul.f32 %v621, %v621
      %v976 = vmul.f32 %v626, %v626
      %v977 = vmul.f32 %v629, %v629
      %v978 = vmul.f32 %v634, %v634
      %v979 = vmul.f32 %v637, %v637
      %v980 = vmul.f32 %v642, %v642
      %v981 = vmul.f32 %v645, %v645
      %v982 = vmul.f32 %v650, %v650
      %v983 = vmul.f32 %v653, %v653
      %v984 = vadd.f32 %v938, %v939
      %v985 = vadd.f32 %v984, %v940
      %v986 = vadd.f32 %v985, %v941
      %v987 = vadd.f32 %v986, %v942
      %v988 = vadd.f32 %v987, %v943
      %v989 = vadd.f32 %v988, %v944
      %v990 = vadd.f32 %v989, %v945
      %v991 = vadd.f32 %v990, %v946
      %v992 = vadd.f32 %v991, %v947
      %v993 = vadd.f32 %v992, %v948
      %v994 = vadd.f32 %v993, %v949
      %v995 = vadd.f32 %v994, %v950
      %v996 = vadd.f32 %v995, %v951
      %v997 = vadd.f32 %v996, %v952
      %v998 = vadd.f32 %v997, %v953
      %v999 = vadd.f32 %v998, %v954
      %v1000 = vadd.f32 %v999, %v955
      %v1001 = vadd.f32 %v1000, %v956
      %v1002 = vadd.f32 %v1001, %v957
      %v1003 = vadd.f32 %v1002, %v958
      %v1004 = vadd.f32 %v1003, %v959
      %v1005 = vadd.f32 %v1004, %v960
      %v1006 = vadd.f32 %v1005, %v961
      %v1007 = vadd.f32 %v1006, %v962
      %v1008 = vadd.f32 %v1007, %v963
      %v1009 = vadd.f32 %v1008, %v964
      %v1010 = vadd.f32 %v1009, %v965
      %v1011 = vadd.f32 %v1010, %v966
      %v1012 = vadd.f32 %v1011, %v967
      %v1013 = vadd.f32 %v1012, %v968
      %v1014 = vadd.f32 %v1013, %v969
      %v1015 = vadd.f32 %v1014, %v970
      %v1016 = vadd.f32 %v1015, %v971
      %v1017 = vadd.f32 %v1016, %v972
      %v1018 = vadd.f32 %v1017, %v973
      %v1019 = vadd.f32 %v1018, %v974
      %v1020 = vadd.f32 %v1019, %v975
      %v1021 = vadd.f32 %v1020, %v976
      %v1022 = vadd.f32 %v1021, %v977
      %v1023 = vadd.f32 %v1022, %v978
      %v1024 = vadd.f32 %v1023, %v979
      %v1025 = vadd.f32 %v1024, %v980
      %v1026 = vadd.f32 %v1025, %v981
      %v1027 = vadd.f32 %v1026, %v982
      %v1028 = vadd.f32 %v1027, %v983
      %v1029 = vrot.slane %v1028, 4
      %v1030 = vadd.f32 %v1028, %v1029
      %v1031 = vrot.slane %v1030, 2
      %v1032 = vadd.f32 %v1030, %v1031
      %v1033 = vrot.slane %v1032, 1
      %v1034 = vadd.f32 %v1032, %v1033
      %1035 = vst [vmem:[%s184 + $0x1] sm:$0x1] %v1034
      %s1036 = smul.u32 46, %s15
      %p1037 = scmp.lt.s32.totalorder %s1036, 91
      %s1038 = scalar_select %p1037, %s1036, 91
      %s1039 = smul.addr %s1038, 4
      %s1040 = scalar_lea.vmem %s2, %s1039
      %p1041 = scmp.lt.s32.totalorder %s15, 1
      %s1042 = scalar_select %p1041, %s15, 1
      %s1043 = smul.addr %s1042, 2
      %s1044 = scalar_lea.vmem %s3, %s1043
      // Predicated region
      $region29: #{stem_forward.10} parent=27 // pred_check
        %p1045 = pneg %p80
      $region30: #{stem_forward.10} parent=27 // pred_check_branch
        %1047 = sbr.rel (%p1045) target = $region32
      $region31: #{stem_forward.10} parent=27 // pred_region
        %s1048 = smul.u32 46, %s15
      $region32: #{stem_forward.10} parent=27 // pred_fallthru
        _
      // Predicated region
      $region33: #{stem_forward.10} parent=27 // pred_check
        %p1049 = pneg %p106
      $region34: #{stem_forward.10} parent=27 // pred_check_branch
        %1051 = sbr.rel (%p1049) target = $region36
      $region35: #{stem_forward.10} parent=27 // pred_region
        _
      $region36: #{stem_forward.10} parent=27 // pred_fallthru
        _
    $region28: #{stem_forward.10} parent=5 // pred_fallthru
      _
    %p1052 = scmp.le.s32.totalorder 2, %s10
    // Predicated region
    $region37: #{stem_forward.10} parent=5 // pred_check
      %p1053 = pneg %p1052
    $region38: #{stem_forward.10} parent=5 // pred_check_branch
      %1055 = sbr.rel (%p1053) target = $region40
    $region39: #{stem_forward.10} parent=5 // pred_region
      %s1056 = ssub.s32 %s10, 2
      // Predicated region
      $region41: #{stem_forward.10} parent=39 // pred_check
        %p1057 = pneg %p86
      $region42: #{stem_forward.10} parent=39 // pred_check_branch
        %1059 = sbr.rel (%p1057) target = $region44
      $region43: #{stem_forward.10} parent=39 // pred_region
        %s1060 = smul.u32 46, %s16
        %p1061 = scmp.lt.s32.totalorder %s1060, 91
        %s1062 = scalar_select %p1061, %s1060, 91
        %s1063 = smul.addr %s1062, 4
        %s1064 = scalar_lea.vmem %s2, %s1063
      $region44: #{stem_forward.10} parent=39 // pred_fallthru
        _
      // Predicated region
      $region45: #{stem_forward.10} parent=39 // pred_check
        %p1065 = pneg %p112
      $region46: #{stem_forward.10} parent=39 // pred_check_branch
        %1067 = sbr.rel (%p1065) target = $region48
      $region47: #{stem_forward.10} parent=39 // pred_region
        %p1068 = scmp.lt.s32.totalorder %s16, 1
        %s1069 = scalar_select %p1068, %s16, 1
        %s1070 = smul.addr %s1069, 2
        %s1071 = scalar_lea.vmem %s3, %s1070
      $region48: #{stem_forward.10} parent=39 // pred_fallthru
        _
    $region40: #{stem_forward.10} parent=5 // pred_fallthru
      _
  $region6: #{stem_forward.10} parent=0 // loop_footer
    %s14 = sadd.s32 1, %s10
  $region7: #{stem_forward.10} parent=0 // loop_footer_branch
    %9 = sbr.rel target = $region3
  $region8: #{stem_forward.10} parent=0 // loop_exit
    _

// kernel: stem_forward.13
$region0: #{stem_forward.13}
  #allocation0 [shape = 'u32[]', space=smem, size = 0x4, offset = 0x4, fixed_abs, tag = 'smem constant byte address 0x4 - core index']
  #allocation1 [shape = 'u32[144,128]{1,0:T(1,128)}', space=vmem, size = 0x12000, scoped, tag = 'internal scratch']
  %s0 = inlined_call_operand.vmem [shape: bf16[592,128], index: 0, kind: input, shape index: {}, may-alias: {0,3}]
  %s1 = inlined_call_operand.vmem [shape: f32[1,128], index: 1, kind: input, shape index: {}]
  %s2 = inlined_call_operand.vmem [shape: f32[1,128], index: 2, kind: input, shape index: {}]
  %s3 = inlined_call_operand.vmem [shape: bf16[592,128], index: 3, kind: output, shape index: {}, may-alias: {0,3}]
  %s4 = sld [smem:[#allocation0]]
  $region45: #{stem_forward.13} parent=0
    _
  %s6 = ssub.s32 1, %s4
  %s7 = scalar_select 0, %s6, %s4
  loop: start=0, step=1, limit=4
  $region2: #{stem_forward.13} parent=0 // loop_pre_header
    _
  $region3: #{stem_forward.13} parent=0 // loop_header
    %s9 = sphi 0, %s13
    %p10 = scmp.ge.s32.totalorder %s9, 4
    %s19 = sphi 0, %s21
    %s22 = sphi 0, %s19
    %s23 = sphi 0, %s22
    %s39 = sphi 0, %s23
    %s43 = sphi 0, %s43
    %s45 = sphi 0, %s43
    %s46 = sphi 0, %s45
    %s60 = sphi 0, %s46
    %s64 = sphi 0, %s64
    %s66 = sphi 0, %s64
    %s67 = sphi 0, %s66
    %s81 = sphi 0, %s67
    %s87 = sphi 0, %s89
    %s90 = sphi 0, %s87
    %s91 = sphi 0, %s90
    %s107 = sphi 0, %s91
  $region4: #{stem_forward.13} parent=0 // loop_header_branch
    %12 = sbr.rel (%p10) target = $region8
  $region5: #{stem_forward.13} parent=0 // loop_body
    %s14 = ssub.s32 %s9, 1
    %s15 = ssub.s32 %s9, 2
    %s16 = sadd.s32 %s9, 1
    %s17 = ssub.s32 %s9, %s16
    %p18 = scmp.eq.s32.totalorder %s17, 0
    %s20 = sadd.s32 %s19, 1
    %s21 = scalar_select %p18, %s19, %s20
    %p24 = pneg %p18
    %p25 = scmp.eq.s32.totalorder %s9, 1
    %p26 = por %p24, %p25
    %p27 = scmp.ne.s32.totalorder %s19, %s22
    %p28 = scmp.eq.s32.totalorder %s9, 0
    %p29 = por %p27, %p28
    %p30 = scmp.ne.s32.totalorder %s19, %s22
    %p31 = scmp.eq.s32.totalorder %s14, 1
    %p32 = por %p30, %p31
    %p33 = scmp.ne.s32.totalorder %s22, %s23
    %p34 = scmp.eq.s32.totalorder %s14, 0
    %p35 = por %p33, %p34
    %p36 = scmp.ne.s32.totalorder %s22, %s23
    %p37 = scmp.eq.s32.totalorder %s15, 1
    %p38 = por %p36, %p37
    %p40 = scmp.ne.s32.totalorder %s23, %s39
    %p41 = scmp.eq.s32.totalorder %s15, 0
    %p42 = por %p40, %p41
    %s44 = sadd.s32 %s43, 1
    %p47 = scmp.eq.s32.totalorder %s9, 1
    %p48 = scmp.ne.s32.totalorder %s43, %s45
    %p49 = scmp.eq.s32.totalorder %s9, 0
    %p50 = por %p48, %p49
    %p51 = scmp.ne.s32.totalorder %s43, %s45
    %p52 = scmp.eq.s32.totalorder %s14, 1
    %p53 = por %p51, %p52
    %p54 = scmp.ne.s32.totalorder %s45, %s46
    %p55 = scmp.eq.s32.totalorder %s14, 0
    %p56 = por %p54, %p55
    %p57 = scmp.ne.s32.totalorder %s45, %s46
    %p58 = scmp.eq.s32.totalorder %s15, 1
    %p59 = por %p57, %p58
    %p61 = scmp.ne.s32.totalorder %s46, %s60
    %p62 = scmp.eq.s32.totalorder %s15, 0
    %p63 = por %p61, %p62
    %s65 = sadd.s32 %s64, 1
    %p68 = scmp.eq.s32.totalorder %s9, 1
    %p69 = scmp.ne.s32.totalorder %s64, %s66
    %p70 = scmp.eq.s32.totalorder %s9, 0
    %p71 = por %p69, %p70
    %p72 = scmp.ne.s32.totalorder %s64, %s66
    %p73 = scmp.eq.s32.totalorder %s14, 1
    %p74 = por %p72, %p73
    %p75 = scmp.ne.s32.totalorder %s66, %s67
    %p76 = scmp.eq.s32.totalorder %s14, 0
    %p77 = por %p75, %p76
    %p78 = scmp.ne.s32.totalorder %s66, %s67
    %p79 = scmp.eq.s32.totalorder %s15, 1
    %p80 = por %p78, %p79
    %p82 = scmp.ne.s32.totalorder %s67, %s81
    %p83 = scmp.eq.s32.totalorder %s15, 0
    %p84 = por %p82, %p83
    %s85 = ssub.s32 %s9, %s16
    %p86 = scmp.eq.s32.totalorder %s85, 0
    %s88 = sadd.s32 %s87, 1
    %s89 = scalar_select %p86, %s87, %s88
    %p92 = pneg %p86
    %p93 = scmp.eq.s32.totalorder %s9, 1
    %p94 = por %p92, %p93
    %p95 = scmp.ne.s32.totalorder %s87, %s90
    %p96 = scmp.eq.s32.totalorder %s9, 0
    %p97 = por %p95, %p96
    %p98 = scmp.ne.s32.totalorder %s87, %s90
    %p99 = scmp.eq.s32.totalorder %s14, 1
    %p100 = por %p98, %p99
    %p101 = scmp.ne.s32.totalorder %s90, %s91
    %p102 = scmp.eq.s32.totalorder %s14, 0
    %p103 = por %p101, %p102
    %p104 = scmp.ne.s32.totalorder %s90, %s91
    %p105 = scmp.eq.s32.totalorder %s15, 1
    %p106 = por %p104, %p105
    %p108 = scmp.ne.s32.totalorder %s91, %s107
    %p109 = scmp.eq.s32.totalorder %s15, 0
    %p110 = por %p108, %p109
    %p111 = scmp.le.s32.totalorder 1, %s9
    %p112 = scmp.lt.s32.totalorder %s9, 3
    %p113 = pnand %p111, %p112
    %p114 = pneg %p113
    // Predicated region
    $region9: #{stem_forward.13} parent=5 // pred_check
      _
    $region10: #{stem_forward.13} parent=5 // pred_check_branch
      %116 = sbr.rel (%p113) target = $region12
    $region11: #{stem_forward.13} parent=5 // pred_region
      %s117 = ssub.s32 %s9, 1
      // Predicated region
      $region13: #{stem_forward.13} parent=11 // pred_check
        %p118 = pneg %p56
      $region14: #{stem_forward.13} parent=11 // pred_check_branch
        %120 = sbr.rel (%p118) target = $region16
      $region15: #{stem_forward.13} parent=11 // pred_region
        _
      $region16: #{stem_forward.13} parent=11 // pred_fallthru
        _
      // Predicated region
      $region17: #{stem_forward.13} parent=11 // pred_check
        %p121 = pneg %p77
      $region18: #{stem_forward.13} parent=11 // pred_check_branch
        %123 = sbr.rel (%p121) target = $region20
      $region19: #{stem_forward.13} parent=11 // pred_region
        _
      $region20: #{stem_forward.13} parent=11 // pred_fallthru
        _
    $region12: #{stem_forward.13} parent=5 // pred_fallthru
      _
    %p124 = scmp.lt.s32.totalorder %s9, 2
    // Predicated region
    $region21: #{stem_forward.13} parent=5 // pred_check
      %p125 = pneg %p124
    $region22: #{stem_forward.13} parent=5 // pred_check_branch
      %127 = sbr.rel (%p125) target = $region24
    $region23: #{stem_forward.13} parent=5 // pred_region
      // Predicated region
      $region25: #{stem_forward.13} parent=23 // pred_check
        %p128 = pneg %p29
      $region26: #{stem_forward.13} parent=23 // pred_check_branch
        %130 = sbr.rel (%p128) target = $region28
      $region27: #{stem_forward.13} parent=23 // pred_region
        %s131 = smul.u32 37, %s9
        %p132 = scmp.lt.s32.totalorder %s131, 73
        %s133 = scalar_select %p132, %s131, 73
        %s134 = smul.addr %s133, 4
        %s135 = scalar_lea.vmem %s0, %s134
        %s136 = smul.u32 37, %s9
      $region28: #{stem_forward.13} parent=23 // pred_fallthru
        _
    $region24: #{stem_forward.13} parent=5 // pred_fallthru
      _
    %p137 = scmp.le.s32.totalorder 1, %s9
    %p138 = scmp.lt.s32.totalorder %s9, 3
    %p139 = pnand %p137, %p138
    %p140 = pneg %p139
    // Predicated region
    $region29: #{stem_forward.13} parent=5 // pred_check
      _
    $region30: #{stem_forward.13} parent=5 // pred_check_branch
      %142 = sbr.rel (%p139) target = $region32
    $region31: #{stem_forward.13} parent=5 // pred_region
      %s143 = ssub.s32 %s9, 1
      %s144 = smul.u32 37, %s14
      %p145 = scmp.lt.s32.totalorder %s144, 73
      %s146 = scalar_select %p145, %s144, 73
      %s147 = smul.addr %s146, 4
      %s148 = scalar_lea.vmem %s0, %s147
      %p149 = pneg %p35
      %p150 = pneg %p32
      %p151 = pneg %p56
      %p152 = pneg %p53
      %p153 = pneg %p77
      %p154 = pneg %p74
      %p155 = pneg %p103
      %p156 = pneg %p100
      %s157 = smul.u32 37, %s14
      %p158 = scmp.lt.s32.totalorder %s157, 73
      %s159 = scalar_select %p158, %s157, 73
      %s160 = smul.addr %s159, 4
      %s161 = scalar_lea.vmem %s3, %s160
      %s162 = smul.u32 37, %s14
      %p163 = scmp.lt.s32.totalorder %s162, 73
      %s164 = scalar_select %p163, %s162, 73
      %s165 = smul.addr %s164, 4
      %s166 = scalar_lea.vmem %s0, %s165
      %s167 = smul.u32 37, %s14
      %s168 = smul.u32 37, %s14
      %p169 = scmp.lt.s32.totalorder %s168, 73
      %s170 = scalar_select %p169, %s168, 73
      %s171 = smul.addr %s170, 4
      %s172 = scalar_lea.vmem %s3, %s171
      %s173 = smul.u32 37, %s14
      %v174 = vld [vmem:[%s166] sm:$0xf]
      %v175 = vld [vmem:[%s166 + $0x4] sm:$0xf]
      %v176 = vld [vmem:[%s166 + $0x8] sm:$0xf]
      %v177 = vld [vmem:[%s166 + $0xc] sm:$0xf]
      %v178 = vld [vmem:[%s166 + $0x10] sm:$0xf]
      %v179 = vld [vmem:[%s166 + $0x14] sm:$0xf]
      %v180 = vld [vmem:[%s166 + $0x18] sm:$0xf]
      %v181 = vld [vmem:[%s166 + $0x1c] sm:$0xf]
      %v182 = vld [vmem:[%s166 + $0x20] sm:$0xf]
      %v183 = vld [vmem:[%s166 + $0x24] sm:$0xf]
      %v184 = vld [vmem:[%s166 + $0x28] sm:$0xf]
      %v185 = vld [vmem:[%s166 + $0x2c] sm:$0xf]
      %v186 = vld [vmem:[%s166 + $0x30] sm:$0xf]
      %v187 = vld [vmem:[%s166 + $0x34] sm:$0xf]
      %v188 = vld [vmem:[%s166 + $0x38] sm:$0xf]
      %v189 = vld [vmem:[%s166 + $0x3c] sm:$0xf]
      %v190 = vld [vmem:[%s166 + $0x40] sm:$0xf]
      %v191 = vld [vmem:[%s166 + $0x44] sm:$0xf]
      %v192 = vld [vmem:[%s166 + $0x48] sm:$0xf]
      %v193 = vld [vmem:[%s166 + $0x4c] sm:$0xf]
      %v194 = vld [vmem:[%s166 + $0x50] sm:$0xf]
      %v195 = vld [vmem:[%s166 + $0x54] sm:$0xf]
      %v196 = vld [vmem:[%s166 + $0x58] sm:$0xf]
      %v197 = vld [vmem:[%s166 + $0x5c] sm:$0xf]
      %v198 = vld [vmem:[%s166 + $0x60] sm:$0xf]
      %v199 = vld [vmem:[%s166 + $0x64] sm:$0xf]
      %v200 = vld [vmem:[%s166 + $0x68] sm:$0xf]
      %v201 = vld [vmem:[%s166 + $0x6c] sm:$0xf]
      %v202 = vld [vmem:[%s166 + $0x70] sm:$0xf]
      %v203 = vld [vmem:[%s166 + $0x74] sm:$0xf]
      %v204 = vld [vmem:[%s166 + $0x78] sm:$0xf]
      %v205 = vld [vmem:[%s166 + $0x7c] sm:$0xf]
      %v206 = vld [vmem:[%s166 + $0x80] sm:$0xf]
      %v207 = vld [vmem:[%s166 + $0x84] sm:$0xf]
      %v208 = vld [vmem:[%s166 + $0x88] sm:$0xf]
      %v209 = vld [vmem:[%s166 + $0x8c] sm:$0xf]
      %v210 = vld [vmem:[%s166 + $0x90] sm:$0xf]
      %v211 = vunpack.c.l.bf16 %v174
      %v212 = vunpack.c.l.bf16 %v175
      %v213 = vunpack.c.l.bf16 %v176
      %v214 = vunpack.c.l.bf16 %v177
      %v215 = vunpack.c.l.bf16 %v178
      %v216 = vunpack.c.l.bf16 %v179
      %v217 = vunpack.c.l.bf16 %v180
      %v218 = vunpack.c.l.bf16 %v181
      %v219 = vunpack.c.l.bf16 %v182
      %v220 = vunpack.c.l.bf16 %v183
      %v221 = vunpack.c.l.bf16 %v184
      %v222 = vunpack.c.l.bf16 %v185
      %v223 = vunpack.c.l.bf16 %v186
      %v224 = vunpack.c.l.bf16 %v187
      %v225 = vunpack.c.l.bf16 %v188
      %v226 = vunpack.c.l.bf16 %v189
      %v227 = vunpack.c.l.bf16 %v190
      %v228 = vunpack.c.l.bf16 %v191
      %v229 = vunpack.c.l.bf16 %v192
      %v230 = vunpack.c.l.bf16 %v193
      %v231 = vunpack.c.l.bf16 %v194
      %v232 = vunpack.c.l.bf16 %v195
      %v233 = vunpack.c.l.bf16 %v196
      %v234 = vunpack.c.l.bf16 %v197
      %v235 = vunpack.c.l.bf16 %v198
      %v236 = vunpack.c.l.bf16 %v199
      %v237 = vunpack.c.l.bf16 %v200
      %v238 = vunpack.c.l.bf16 %v201
      %v239 = vunpack.c.l.bf16 %v202
      %v240 = vunpack.c.l.bf16 %v203
      %v241 = vunpack.c.l.bf16 %v204
      %v242 = vunpack.c.l.bf16 %v205
      %v243 = vunpack.c.l.bf16 %v206
      %v244 = vunpack.c.l.bf16 %v207
      %v245 = vunpack.c.l.bf16 %v208
      %v246 = vunpack.c.l.bf16 %v209
      %v247 = vunpack.c.l.bf16 %v210
      %v248 = vld [vmem:[%s1] sm:$0x1]
      %v250 = vlaneseq
      %v251 = vshrl.u32 %v250, 7
      %v252 = vsub.s32 0, %v251
      %v253 = vrot.slane %v248, %v252
      %v255 = vmul.f32 %v211, %v253
      %v256 = vmul.f32 %v212, %v253
      %v257 = vmul.f32 %v213, %v253
      %v258 = vmul.f32 %v214, %v253
      %v259 = vmul.f32 %v215, %v253
      %v260 = vmul.f32 %v216, %v253
      %v261 = vmul.f32 %v217, %v253
      %v262 = vmul.f32 %v218, %v253
      %v263 = vmul.f32 %v219, %v253
      %v264 = vmul.f32 %v220, %v253
      %v265 = vmul.f32 %v221, %v253
      %v266 = vmul.f32 %v222, %v253
      %v267 = vmul.f32 %v223, %v253
      %v268 = vmul.f32 %v224, %v253
      %v269 = vmul.f32 %v225, %v253
      %v270 = vmul.f32 %v226, %v253
      %v271 = vmul.f32 %v227, %v253
      %v272 = vmul.f32 %v228, %v253
      %v273 = vmul.f32 %v229, %v253
      %v274 = vmul.f32 %v230, %v253
      %v275 = vmul.f32 %v231, %v253
      %v276 = vmul.f32 %v232, %v253
      %v277 = vmul.f32 %v233, %v253
      %v278 = vmul.f32 %v234, %v253
      %v279 = vmul.f32 %v235, %v253
      %v280 = vmul.f32 %v236, %v253
      %v281 = vmul.f32 %v237, %v253
      %v282 = vmul.f32 %v238, %v253
      %v283 = vmul.f32 %v239, %v253
      %v284 = vmul.f32 %v240, %v253
      %v285 = vmul.f32 %v241, %v253
      %v286 = vmul.f32 %v242, %v253
      %v287 = vmul.f32 %v243, %v253
      %v288 = vmul.f32 %v244, %v253
      %v289 = vmul.f32 %v245, %v253
      %v290 = vmul.f32 %v246, %v253
      %v291 = vmul.f32 %v247, %v253
      %v292 = vld [vmem:[%s2] sm:$0x1]
      %v294 = vlaneseq
      %v295 = vshrl.u32 %v294, 7
      %v296 = vsub.s32 0, %v295
      %v297 = vrot.slane %v292, %v296
      %v299 = vadd.f32 %v255, %v297
      %v300 = vadd.f32 %v256, %v297
      %v301 = vadd.f32 %v257, %v297
      %v302 = vadd.f32 %v258, %v297
      %v303 = vadd.f32 %v259, %v297
      %v304 = vadd.f32 %v260, %v297
      %v305 = vadd.f32 %v261, %v297
      %v306 = vadd.f32 %v262, %v297
      %v307 = vadd.f32 %v263, %v297
      %v308 = vadd.f32 %v264, %v297
      %v309 = vadd.f32 %v265, %v297
      %v310 = vadd.f32 %v266, %v297
      %v311 = vadd.f32 %v267, %v297
      %v312 = vadd.f32 %v268, %v297
      %v313 = vadd.f32 %v269, %v297
      %v314 = vadd.f32 %v270, %v297
      %v315 = vadd.f32 %v271, %v297
      %v316 = vadd.f32 %v272, %v297
      %v317 = vadd.f32 %v273, %v297
      %v318 = vadd.f32 %v274, %v297
      %v319 = vadd.f32 %v275, %v297
      %v320 = vadd.f32 %v276, %v297
      %v321 = vadd.f32 %v277, %v297
      %v322 = vadd.f32 %v278, %v297
      %v323 = vadd.f32 %v279, %v297
      %v324 = vadd.f32 %v280, %v297
      %v325 = vadd.f32 %v281, %v297
      %v326 = vadd.f32 %v282, %v297
      %v327 = vadd.f32 %v283, %v297
      %v328 = vadd.f32 %v284, %v297
      %v329 = vadd.f32 %v285, %v297
      %v330 = vadd.f32 %v286, %v297
      %v331 = vadd.f32 %v287, %v297
      %v332 = vadd.f32 %v288, %v297
      %v333 = vadd.f32 %v289, %v297
      %v334 = vadd.f32 %v290, %v297
      %v335 = vadd.f32 %v291, %v297
      %v336 = vmax.f32 %v299, 0.0
      %v337 = vmax.f32 %v300, 0.0
      %v338 = vmax.f32 %v301, 0.0
      %v339 = vmax.f32 %v302, 0.0
      %v340 = vmax.f32 %v303, 0.0
      %v341 = vmax.f32 %v304, 0.0
      %v342 = vmax.f32 %v305, 0.0
      %v343 = vmax.f32 %v306, 0.0
      %v344 = vmax.f32 %v307, 0.0
      %v345 = vmax.f32 %v308, 0.0
      %v346 = vmax.f32 %v309, 0.0
      %v347 = vmax.f32 %v310, 0.0
      %v348 = vmax.f32 %v311, 0.0
      %v349 = vmax.f32 %v312, 0.0
      %v350 = vmax.f32 %v313, 0.0
      %v351 = vmax.f32 %v314, 0.0
      %v352 = vmax.f32 %v315, 0.0
      %v353 = vmax.f32 %v316, 0.0
      %v354 = vmax.f32 %v317, 0.0
      %v355 = vmax.f32 %v318, 0.0
      %v356 = vmax.f32 %v319, 0.0
      %v357 = vmax.f32 %v320, 0.0
      %v358 = vmax.f32 %v321, 0.0
      %v359 = vmax.f32 %v322, 0.0
      %v360 = vmax.f32 %v323, 0.0
      %v361 = vmax.f32 %v324, 0.0
      %v362 = vmax.f32 %v325, 0.0
      %v363 = vmax.f32 %v326, 0.0
      %v364 = vmax.f32 %v327, 0.0
      %v365 = vmax.f32 %v328, 0.0
      %v366 = vmax.f32 %v329, 0.0
      %v367 = vmax.f32 %v330, 0.0
      %v368 = vmax.f32 %v331, 0.0
      %v369 = vmax.f32 %v332, 0.0
      %v370 = vmax.f32 %v333, 0.0
      %v371 = vmax.f32 %v334, 0.0
      %v372 = vmax.f32 %v335, 0.0
      %v373 = vpack.c.bf16 %v337, %v336
      %v374 = vpack.c.bf16 %v339, %v338
      %v375 = vpack.c.bf16 %v341, %v340
      %v376 = vpack.c.bf16 %v343, %v342
      %v377 = vpack.c.bf16 %v345, %v344
      %v378 = vpack.c.bf16 %v347, %v346
      %v379 = vpack.c.bf16 %v349, %v348
      %v380 = vpack.c.bf16 %v351, %v350
      %v381 = vpack.c.bf16 %v353, %v352
      %v382 = vpack.c.bf16 %v355, %v354
      %v383 = vpack.c.bf16 %v357, %v356
      %v384 = vpack.c.bf16 %v359, %v358
      %v385 = vpack.c.bf16 %v361, %v360
      %v386 = vpack.c.bf16 %v363, %v362
      %v387 = vpack.c.bf16 %v365, %v364
      %v388 = vpack.c.bf16 %v367, %v366
      %v389 = vpack.c.bf16 %v369, %v368
      %v390 = vpack.c.bf16 %v371, %v370
      %v391 = vpack.c.bf16 %v372, %v372
      %v411 = vunpack.c.l.b16 %v373
      %v412 = vunpack.c.h.b16 %v373
      %v413 = vunpack.c.l.b16 %v374
      %v414 = vunpack.c.h.b16 %v374
      %v415 = vunpack.c.l.b16 %v375
      %v416 = vunpack.c.h.b16 %v375
      %v417 = vunpack.c.l.b16 %v376
      %v418 = vunpack.c.h.b16 %v376
      %v419 = vunpack.c.l.b16 %v377
      %v420 = vunpack.c.h.b16 %v377
      %v421 = vunpack.c.l.b16 %v378
      %v422 = vunpack.c.h.b16 %v378
      %v423 = vunpack.c.l.b16 %v379
      %v424 = vunpack.c.h.b16 %v379
      %v425 = vunpack.c.l.b16 %v380
      %v426 = vunpack.c.h.b16 %v380
      %v427 = vunpack.c.l.b16 %v381
      %v428 = vunpack.c.h.b16 %v381
      %v429 = vunpack.c.l.b16 %v382
      %v430 = vunpack.c.h.b16 %v382
      %v431 = vunpack.c.l.b16 %v383
      %v432 = vunpack.c.h.b16 %v383
      %v433 = vunpack.c.l.b16 %v384
      %v434 = vunpack.c.h.b16 %v384
      %v435 = vunpack.c.l.b16 %v385
      %v436 = vunpack.c.h.b16 %v385
      %v437 = vunpack.c.l.b16 %v386
      %v438 = vunpack.c.h.b16 %v386
      %v439 = vunpack.c.l.b16 %v387
      %v440 = vunpack.c.h.b16 %v387
      %v441 = vunpack.c.l.b16 %v388
      %v442 = vunpack.c.h.b16 %v388
      %v443 = vunpack.c.l.b16 %v389
      %v444 = vunpack.c.h.b16 %v389
      %v445 = vunpack.c.l.b16 %v390
      %v446 = vunpack.c.h.b16 %v390
      %v447 = vunpack.c.l.b16 %v391
      %v448 = vpack.c.b16 %v411, %v411
      %v449 = vpack.c.b16 %v412, %v412
      %v450 = vpack.c.b16 %v413, %v413
      %v451 = vpack.c.b16 %v414, %v414
      %v452 = vpack.c.b16 %v415, %v415
      %v453 = vpack.c.b16 %v416, %v416
      %v454 = vpack.c.b16 %v417, %v417
      %v455 = vpack.c.b16 %v418, %v418
      %v456 = vpack.c.b16 %v419, %v419
      %v457 = vpack.c.b16 %v420, %v420
      %v458 = vpack.c.b16 %v421, %v421
      %v459 = vpack.c.b16 %v422, %v422
      %v460 = vpack.c.b16 %v423, %v423
      %v461 = vpack.c.b16 %v424, %v424
      %v462 = vpack.c.b16 %v425, %v425
      %v463 = vpack.c.b16 %v426, %v426
      %v464 = vpack.c.b16 %v427, %v427
      %v465 = vpack.c.b16 %v428, %v428
      %v466 = vpack.c.b16 %v429, %v429
      %v467 = vpack.c.b16 %v430, %v430
      %v468 = vpack.c.b16 %v431, %v431
      %v469 = vpack.c.b16 %v432, %v432
      %v470 = vpack.c.b16 %v433, %v433
      %v471 = vpack.c.b16 %v434, %v434
      %v472 = vpack.c.b16 %v435, %v435
      %v473 = vpack.c.b16 %v436, %v436
      %v474 = vpack.c.b16 %v437, %v437
      %v475 = vpack.c.b16 %v438, %v438
      %v476 = vpack.c.b16 %v439, %v439
      %v477 = vpack.c.b16 %v440, %v440
      %v478 = vpack.c.b16 %v441, %v441
      %v479 = vpack.c.b16 %v442, %v442
      %v480 = vpack.c.b16 %v443, %v443
      %v481 = vpack.c.b16 %v444, %v444
      %v482 = vpack.c.b16 %v445, %v445
      %v483 = vpack.c.b16 %v446, %v446
      %v484 = vpack.c.b16 %v447, %v447
      %522 = vst [vmem:[%s172] sm:$0xf] %v448
      %523 = vst [vmem:[%s172 + $0x4] sm:$0xf] %v449
      %524 = vst [vmem:[%s172 + $0x8] sm:$0xf] %v450
      %525 = vst [vmem:[%s172 + $0xc] sm:$0xf] %v451
      %526 = vst [vmem:[%s172 + $0x10] sm:$0xf] %v452
      %527 = vst [vmem:[%s172 + $0x14] sm:$0xf] %v453
      %528 = vst [vmem:[%s172 + $0x18] sm:$0xf] %v454
      %529 = vst [vmem:[%s172 + $0x1c] sm:$0xf] %v455
      %530 = vst [vmem:[%s172 + $0x20] sm:$0xf] %v456
      %531 = vst [vmem:[%s172 + $0x24] sm:$0xf] %v457
      %532 = vst [vmem:[%s172 + $0x28] sm:$0xf] %v458
      %533 = vst [vmem:[%s172 + $0x2c] sm:$0xf] %v459
      %534 = vst [vmem:[%s172 + $0x30] sm:$0xf] %v460
      %535 = vst [vmem:[%s172 + $0x34] sm:$0xf] %v461
      %536 = vst [vmem:[%s172 + $0x38] sm:$0xf] %v462
      %537 = vst [vmem:[%s172 + $0x3c] sm:$0xf] %v463
      %538 = vst [vmem:[%s172 + $0x40] sm:$0xf] %v464
      %539 = vst [vmem:[%s172 + $0x44] sm:$0xf] %v465
      %540 = vst [vmem:[%s172 + $0x48] sm:$0xf] %v466
      %541 = vst [vmem:[%s172 + $0x4c] sm:$0xf] %v467
      %542 = vst [vmem:[%s172 + $0x50] sm:$0xf] %v468
      %543 = vst [vmem:[%s172 + $0x54] sm:$0xf] %v469
      %544 = vst [vmem:[%s172 + $0x58] sm:$0xf] %v470
      %545 = vst [vmem:[%s172 + $0x5c] sm:$0xf] %v471
      %546 = vst [vmem:[%s172 + $0x60] sm:$0xf] %v472
      %547 = vst [vmem:[%s172 + $0x64] sm:$0xf] %v473
      %548 = vst [vmem:[%s172 + $0x68] sm:$0xf] %v474
      %549 = vst [vmem:[%s172 + $0x6c] sm:$0xf] %v475
      %550 = vst [vmem:[%s172 + $0x70] sm:$0xf] %v476
      %551 = vst [vmem:[%s172 + $0x74] sm:$0xf] %v477
      %552 = vst [vmem:[%s172 + $0x78] sm:$0xf] %v478
      %553 = vst [vmem:[%s172 + $0x7c] sm:$0xf] %v479
      %554 = vst [vmem:[%s172 + $0x80] sm:$0xf] %v480
      %555 = vst [vmem:[%s172 + $0x84] sm:$0xf] %v481
      %556 = vst [vmem:[%s172 + $0x88] sm:$0xf] %v482
      %557 = vst [vmem:[%s172 + $0x8c] sm:$0xf] %v483
      %558 = vst [vmem:[%s172 + $0x90] sm:$0xf] %v484
      %s559 = smul.u32 37, %s14
      %p560 = scmp.lt.s32.totalorder %s559, 73
      %s561 = scalar_select %p560, %s559, 73
      %s562 = smul.addr %s561, 4
      %s563 = scalar_lea.vmem %s3, %s562
      // Predicated region
      $region33: #{stem_forward.13} parent=31 // pred_check
        %p564 = pneg %p100
      $region34: #{stem_forward.13} parent=31 // pred_check_branch
        %566 = sbr.rel (%p564) target = $region36
      $region35: #{stem_forward.13} parent=31 // pred_region
        %s567 = smul.u32 37, %s14
      $region36: #{stem_forward.13} parent=31 // pred_fallthru
        _
    $region32: #{stem_forward.13} parent=5 // pred_fallthru
      _
    %p568 = scmp.le.s32.totalorder 2, %s9
    // Predicated region
    $region37: #{stem_forward.13} parent=5 // pred_check
      %p569 = pneg %p568
    $region38: #{stem_forward.13} parent=5 // pred_check_branch
      %571 = sbr.rel (%p569) target = $region40
    $region39: #{stem_forward.13} parent=5 // pred_region
      %s572 = ssub.s32 %s9, 2
      // Predicated region
      $region41: #{stem_forward.13} parent=39 // pred_check
        %p573 = pneg %p106
      $region42: #{stem_forward.13} parent=39 // pred_check_branch
        %575 = sbr.rel (%p573) target = $region44
      $region43: #{stem_forward.13} parent=39 // pred_region
        %s576 = smul.u32 37, %s15
        %p577 = scmp.lt.s32.totalorder %s576, 73
        %s578 = scalar_select %p577, %s576, 73
        %s579 = smul.addr %s578, 4
        %s580 = scalar_lea.vmem %s3, %s579
      $region44: #{stem_forward.13} parent=39 // pred_fallthru
        _
    $region40: #{stem_forward.13} parent=5 // pred_fallthru
      _
  $region6: #{stem_forward.13} parent=0 // loop_footer
    %s13 = sadd.s32 1, %s9
  $region7: #{stem_forward.13} parent=0 // loop_footer_branch
    %8 = sbr.rel target = $region3
  $region8: #{stem_forward.13} parent=0 // loop_exit
    _

// kernel: stem_forward.12
$region0: #{stem_forward.12}
  #allocation0 [shape = 'u32[]', space=smem, size = 0x4, offset = 0x4, fixed_abs, tag = 'smem constant byte address 0x4 - core index']
  #allocation1 [shape = 'u32[144,128]{1,0:T(1,128)}', space=vmem, size = 0x12000, scoped, tag = 'internal scratch']
  %s0 = inlined_call_operand.vmem [shape: bf16[592,288], index: 0, kind: input, shape index: {}]
  %s1 = inlined_call_operand.vmem [shape: bf16[288,128], index: 1, kind: input, shape index: {}]
  %s2 = inlined_call_operand.vmem [shape: bf16[592,128], index: 2, kind: output, shape index: {0}]
  %s3 = inlined_call_operand.vmem [shape: f32[2,2,128], index: 3, kind: output, shape index: {1}]
  %4 = xla_tuple %s2, %s3
  %s5 = sld [smem:[#allocation0]]
  $region49: #{stem_forward.12} parent=0
    _
  %s7 = ssub.s32 1, %s5
  %s8 = scalar_select 0, %s7, %s5
  loop: start=0, step=1, limit=4
  $region2: #{stem_forward.12} parent=0 // loop_pre_header
    _
  $region3: #{stem_forward.12} parent=0 // loop_header
    %s10 = sphi 0, %s14
    %p11 = scmp.ge.s32.totalorder %s10, 4
    %s20 = sphi 0, %s22
    %s23 = sphi 0, %s20
    %s24 = sphi 0, %s23
    %s40 = sphi 0, %s24
    %s44 = sphi 0, %s44
    %s46 = sphi 0, %s44
    %s47 = sphi 0, %s46
    %s61 = sphi 0, %s47
    %s67 = sphi 0, %s69
    %s70 = sphi 0, %s67
    %s71 = sphi 0, %s70
    %s87 = sphi 0, %s71
    %s93 = sphi 0, %s95
    %s96 = sphi 0, %s93
    %s97 = sphi 0, %s96
    %s113 = sphi 0, %s97
  $region4: #{stem_forward.12} parent=0 // loop_header_branch
    %13 = sbr.rel (%p11) target = $region8
  $region5: #{stem_forward.12} parent=0 // loop_body
    %s15 = ssub.s32 %s10, 1
    %s16 = ssub.s32 %s10, 2
    %s17 = sadd.s32 %s10, 1
    %s18 = ssub.s32 %s10, %s17
    %p19 = scmp.eq.s32.totalorder %s18, 0
    %s21 = sadd.s32 %s20, 1
    %s22 = scalar_select %p19, %s20, %s21
    %p25 = pneg %p19
    %p26 = scmp.eq.s32.totalorder %s10, 1
    %p27 = por %p25, %p26
    %p28 = scmp.ne.s32.totalorder %s20, %s23
    %p29 = scmp.eq.s32.totalorder %s10, 0
    %p30 = por %p28, %p29
    %p31 = scmp.ne.s32.totalorder %s20, %s23
    %p32 = scmp.eq.s32.totalorder %s15, 1
    %p33 = por %p31, %p32
    %p34 = scmp.ne.s32.totalorder %s23, %s24
    %p35 = scmp.eq.s32.totalorder %s15, 0
    %p36 = por %p34, %p35
    %p37 = scmp.ne.s32.totalorder %s23, %s24
    %p38 = scmp.eq.s32.totalorder %s16, 1
    %p39 = por %p37, %p38
    %p41 = scmp.ne.s32.totalorder %s24, %s40
    %p42 = scmp.eq.s32.totalorder %s16, 0
    %p43 = por %p41, %p42
    %s45 = sadd.s32 %s44, 1
    %p48 = scmp.eq.s32.totalorder %s10, 1
    %p49 = scmp.ne.s32.totalorder %s44, %s46
    %p50 = scmp.eq.s32.totalorder %s10, 0
    %p51 = por %p49, %p50
    %p52 = scmp.ne.s32.totalorder %s44, %s46
    %p53 = scmp.eq.s32.totalorder %s15, 1
    %p54 = por %p52, %p53
    %p55 = scmp.ne.s32.totalorder %s46, %s47
    %p56 = scmp.eq.s32.totalorder %s15, 0
    %p57 = por %p55, %p56
    %p58 = scmp.ne.s32.totalorder %s46, %s47
    %p59 = scmp.eq.s32.totalorder %s16, 1
    %p60 = por %p58, %p59
    %p62 = scmp.ne.s32.totalorder %s47, %s61
    %p63 = scmp.eq.s32.totalorder %s16, 0
    %p64 = por %p62, %p63
    %s65 = ssub.s32 %s10, %s17
    %p66 = scmp.eq.s32.totalorder %s65, 0
    %s68 = sadd.s32 %s67, 1
    %s69 = scalar_select %p66, %s67, %s68
    %p72 = pneg %p66
    %p73 = scmp.eq.s32.totalorder %s10, 1
    %p74 = por %p72, %p73
    %p75 = scmp.ne.s32.totalorder %s67, %s70
    %p76 = scmp.eq.s32.totalorder %s10, 0
    %p77 = por %p75, %p76
    %p78 = scmp.ne.s32.totalorder %s67, %s70
    %p79 = scmp.eq.s32.totalorder %s15, 1
    %p80 = por %p78, %p79
    %p81 = scmp.ne.s32.totalorder %s70, %s71
    %p82 = scmp.eq.s32.totalorder %s15, 0
    %p83 = por %p81, %p82
    %p84 = scmp.ne.s32.totalorder %s70, %s71
    %p85 = scmp.eq.s32.totalorder %s16, 1
    %p86 = por %p84, %p85
    %p88 = scmp.ne.s32.totalorder %s71, %s87
    %p89 = scmp.eq.s32.totalorder %s16, 0
    %p90 = por %p88, %p89
    %s91 = ssub.s32 %s10, %s17
    %p92 = scmp.eq.s32.totalorder %s91, 0
    %s94 = sadd.s32 %s93, 1
    %s95 = scalar_select %p92, %s93, %s94
    %p98 = pneg %p92
    %p99 = scmp.eq.s32.totalorder %s10, 1
    %p100 = por %p98, %p99
    %p101 = scmp.ne.s32.totalorder %s93, %s96
    %p102 = scmp.eq.s32.totalorder %s10, 0
    %p103 = por %p101, %p102
    %p104 = scmp.ne.s32.totalorder %s93, %s96
    %p105 = scmp.eq.s32.totalorder %s15, 1
    %p106 = por %p104, %p105
    %p107 = scmp.ne.s32.totalorder %s96, %s97
    %p108 = scmp.eq.s32.totalorder %s15, 0
    %p109 = por %p107, %p108
    %p110 = scmp.ne.s32.totalorder %s96, %s97
    %p111 = scmp.eq.s32.totalorder %s16, 1
    %p112 = por %p110, %p111
    %p114 = scmp.ne.s32.totalorder %s97, %s113
    %p115 = scmp.eq.s32.totalorder %s16, 0
    %p116 = por %p114, %p115
    %p117 = scmp.le.s32.totalorder 1, %s10
    %p118 = scmp.lt.s32.totalorder %s10, 3
    %p119 = pnand %p117, %p118
    %p120 = pneg %p119
    // Predicated region
    $region9: #{stem_forward.12} parent=5 // pred_check
      _
    $region10: #{stem_forward.12} parent=5 // pred_check_branch
      %122 = sbr.rel (%p119) target = $region12
    $region11: #{stem_forward.12} parent=5 // pred_region
      %s123 = ssub.s32 %s10, 1
      // Predicated region
      $region13: #{stem_forward.12} parent=11 // pred_check
        %p124 = pneg %p57
      $region14: #{stem_forward.12} parent=11 // pred_check_branch
        %126 = sbr.rel (%p124) target = $region16
      $region15: #{stem_forward.12} parent=11 // pred_region
        _
      $region16: #{stem_forward.12} parent=11 // pred_fallthru
        _
    $region12: #{stem_forward.12} parent=5 // pred_fallthru
      _
    %p127 = scmp.lt.s32.totalorder %s10, 2
    // Predicated region
    $region17: #{stem_forward.12} parent=5 // pred_check
      %p128 = pneg %p127
    $region18: #{stem_forward.12} parent=5 // pred_check_branch
      %130 = sbr.rel (%p128) target = $region20
    $region19: #{stem_forward.12} parent=5 // pred_region
      // Predicated region
      $region21: #{stem_forward.12} parent=19 // pred_check
        %p131 = pneg %p30
      $region22: #{stem_forward.12} parent=19 // pred_check_branch
        %133 = sbr.rel (%p131) target = $region24
      $region23: #{stem_forward.12} parent=19 // pred_region
        %s134 = smul.u32 37, %s10
        %p135 = scmp.lt.s32.totalorder %s134, 73
        %s136 = scalar_select %p135, %s134, 73
        %s137 = smul.addr %s136, 3
        %s138 = smul.addr %s137, 4
        %s139 = scalar_lea.vmem %s0, %s138
        %s140 = smul.u32 37, %s10
      $region24: #{stem_forward.12} parent=19 // pred_fallthru
        _
    $region20: #{stem_forward.12} parent=5 // pred_fallthru
      _
    %p141 = scmp.le.s32.totalorder 1, %s10
    %p142 = scmp.lt.s32.totalorder %s10, 3
    %p143 = pnand %p141, %p142
    %p144 = pneg %p143
    // Predicated region
    $region25: #{stem_forward.12} parent=5 // pred_check
      _
    $region26: #{stem_forward.12} parent=5 // pred_check_branch
      %146 = sbr.rel (%p143) target = $region28
    $region27: #{stem_forward.12} parent=5 // pred_region
      %s147 = ssub.s32 %s10, 1
      %s148 = smul.u32 37, %s15
      %p149 = scmp.lt.s32.totalorder %s148, 73
      %s150 = scalar_select %p149, %s148, 73
      %s151 = smul.addr %s150, 3
      %s152 = smul.addr %s151, 4
      %s153 = scalar_lea.vmem %s0, %s152
      %p154 = pneg %p36
      %p155 = pneg %p33
      %p156 = pneg %p57
      %p157 = pneg %p54
      %p158 = pneg %p83
      %p159 = pneg %p80
      %s160 = smul.u32 37, %s15
      %p161 = scmp.lt.s32.totalorder %s160, 73
      %s162 = scalar_select %p161, %s160, 73
      %s163 = smul.addr %s162, 4
      %s164 = scalar_lea.vmem %s2, %s163
      %p165 = pneg %p109
      %p166 = pneg %p106
      %p167 = scmp.lt.s32.totalorder %s15, 1
      %s168 = scalar_select %p167, %s15, 1
      %s169 = smul.addr %s168, 2
      %s170 = scalar_lea.vmem %s3, %s169
      %s171 = smul.u32 37, %s15
      %p172 = scmp.lt.s32.totalorder %s171, 73
      %s173 = scalar_select %p172, %s171, 73
      %s174 = smul.addr %s173, 3
      %s175 = smul.addr %s174, 4
      %s176 = scalar_lea.vmem %s0, %s175
      %s177 = smul.u32 37, %s15
      %s178 = smul.u32 37, %s15
      %p179 = scmp.lt.s32.totalorder %s178, 73
      %s180 = scalar_select %p179, %s178, 73
      %s181 = smul.addr %s180, 4
      %s182 = scalar_lea.vmem %s2, %s181
      %s183 = smul.u32 37, %s15
      %p184 = scmp.lt.s32.totalorder %s15, 1
      %s185 = scalar_select %p184, %s15, 1
      %s186 = smul.addr %s185, 2
      %s187 = scalar_lea.vmem %s3, %s186
      %v189 = vld [vmem:[%s176] sm:$0xff]
      %v190 = vld [vmem:[%s176 + $0x8] sm:$0xf]
      %v191 = vld [vmem:[%s176 + $0xc] sm:$0xff]
      %v192 = vld [vmem:[%s176 + $0x14] sm:$0xf]
      %v193 = vld [vmem:[%s176 + $0x18] sm:$0xff]
      %v194 = vld [vmem:[%s176 + $0x20] sm:$0xf]
      %v195 = vld [vmem:[%s176 + $0x24] sm:$0xff]
      %v196 = vld [vmem:[%s176 + $0x2c] sm:$0xf]
      %v197 = vld [vmem:[%s176 + $0x30] sm:$0xff]
      %v198 = vld [vmem:[%s176 + $0x38] sm:$0xf]
      %v199 = vld [vmem:[%s176 + $0x3c] sm:$0xff]
      %v200 = vld [vmem:[%s176 + $0x44] sm:$0xf]
      %v201 = vld [vmem:[%s176 + $0x48] sm:$0xff]
      %v202 = vld [vmem:[%s176 + $0x50] sm:$0xf]
      %v203 = vld [vmem:[%s176 + $0x54] sm:$0xff]
      %v204 = vld [vmem:[%s176 + $0x5c] sm:$0xf]
      %v205 = vld [vmem:[%s176 + $0x60] sm:$0xff]
      %v206 = vld [vmem:[%s176 + $0x68] sm:$0xf]
      %v207 = vld [vmem:[%s176 + $0x6c] sm:$0xff]
      %v208 = vld [vmem:[%s176 + $0x74] sm:$0xf]
      %v209 = vld [vmem:[%s176 + $0x78] sm:$0xff]
      %v210 = vld [vmem:[%s176 + $0x80] sm:$0xf]
      %v211 = vld [vmem:[%s176 + $0x84] sm:$0xff]
      %v212 = vld [vmem:[%s176 + $0x8c] sm:$0xf]
      %v213 = vld [vmem:[%s176 + $0x90] sm:$0xff]
      %v214 = vld [vmem:[%s176 + $0x98] sm:$0xf]
      %v215 = vld [vmem:[%s176 + $0x9c] sm:$0xff]
      %v216 = vld [vmem:[%s176 + $0xa4] sm:$0xf]
      %v217 = vld [vmem:[%s176 + $0xa8] sm:$0xff]
      %v218 = vld [vmem:[%s176 + $0xb0] sm:$0xf]
      %v219 = vld [vmem:[%s176 + $0xb4] sm:$0xff]
      %v220 = vld [vmem:[%s176 + $0xbc] sm:$0xf]
      %v221 = vld [vmem:[%s176 + $0xc0] sm:$0xff]
      %v222 = vld [vmem:[%s176 + $0xc8] sm:$0xf]
      %v223 = vld [vmem:[%s176 + $0xcc] sm:$0xff]
      %v224 = vld [vmem:[%s176 + $0xd4] sm:$0xf]
      %v225 = vld [vmem:[%s176 + $0xd8] sm:$0xff]
      %v226 = vld [vmem:[%s176 + $0xe0] sm:$0xf]
      %v227 = vld [vmem:[%s176 + $0xe4] sm:$0xff]
      %v228 = vld [vmem:[%s176 + $0xec] sm:$0xf]
      %v229 = vld [vmem:[%s176 + $0xf0] sm:$0xff]
      %v230 = vld [vmem:[%s176 + $0xf8] sm:$0xf]
      %v231 = vld [vmem:[%s176 + $0xfc] sm:$0xff]
      %v232 = vld [vmem:[%s176 + $0x104] sm:$0xf]
      %v233 = vld [vmem:[%s176 + $0x108] sm:$0xff]
      %v234 = vld [vmem:[%s176 + $0x110] sm:$0xf]
      %v235 = vld [vmem:[%s176 + $0x114] sm:$0xff]
      %v236 = vld [vmem:[%s176 + $0x11c] sm:$0xf]
      %v237 = vld [vmem:[%s176 + $0x120] sm:$0xff]
      %v238 = vld [vmem:[%s176 + $0x128] sm:$0xf]
      %v239 = vld [vmem:[%s176 + $0x12c] sm:$0xff]
      %v240 = vld [vmem:[%s176 + $0x134] sm:$0xf]
      %v241 = vld [vmem:[%s176 + $0x138] sm:$0xff]
      %v242 = vld [vmem:[%s176 + $0x140] sm:$0xf]
      %v243 = vld [vmem:[%s176 + $0x144] sm:$0xff]
      %v244 = vld [vmem:[%s176 + $0x14c] sm:$0xf]
      %v245 = vld [vmem:[%s176 + $0x150] sm:$0xff]
      %v246 = vld [vmem:[%s176 + $0x158] sm:$0xf]
      %v247 = vld [vmem:[%s176 + $0x15c] sm:$0xff]
      %v248 = vld [vmem:[%s176 + $0x164] sm:$0xf]
      %v249 = vld [vmem:[%s176 + $0x168] sm:$0xff]
      %v250 = vld [vmem:[%s176 + $0x170] sm:$0xf]
      %v251 = vld [vmem:[%s176 + $0x174] sm:$0xff]
      %v252 = vld [vmem:[%s176 + $0x17c] sm:$0xf]
      %v253 = vld [vmem:[%s176 + $0x180] sm:$0xff]
      %v254 = vld [vmem:[%s176 + $0x188] sm:$0xf]
      %v255 = vld [vmem:[%s176 + $0x18c] sm:$0xff]
      %v256 = vld [vmem:[%s176 + $0x194] sm:$0xf]
      %v257 = vld [vmem:[%s176 + $0x198] sm:$0xff]
      %v258 = vld [vmem:[%s176 + $0x1a0] sm:$0xf]
      %v259 = vld [vmem:[%s176 + $0x1a4] sm:$0xff]
      %v260 = vld [vmem:[%s176 + $0x1ac] sm:$0xf]
      %v261 = vld [vmem:[%s176 + $0x1b0] sm:$0xff]
      %v262 = vld [vmem:[%s176 + $0x1b8] sm:$0xf]
      %v263 = vld [vmem:[%s1] sm:$0xf]
      %v264 = vld [vmem:[%s1 + $0x4] sm:$0xf]
      %v265 = vld [vmem:[%s1 + $0x8] sm:$0xf]
      %v266 = vld [vmem:[%s1 + $0xc] sm:$0xf]
      %v267 = vld [vmem:[%s1 + $0x10] sm:$0xf]
      %v268 = vld [vmem:[%s1 + $0x14] sm:$0xf]
      %v269 = vld [vmem:[%s1 + $0x18] sm:$0xf]
      %v270 = vld [vmem:[%s1 + $0x1c] sm:$0xf]
      %v271 = vld [vmem:[%s1 + $0x20] sm:$0xf]
      %v272 = vld [vmem:[%s1 + $0x24] sm:$0xf]
      %v273 = vld [vmem:[%s1 + $0x28] sm:$0xf]
      %v274 = vld [vmem:[%s1 + $0x2c] sm:$0xf]
      %v275 = vld [vmem:[%s1 + $0x30] sm:$0xf]
      %v276 = vld [vmem:[%s1 + $0x34] sm:$0xf]
      %v277 = vld [vmem:[%s1 + $0x38] sm:$0xf]
      %v278 = vld [vmem:[%s1 + $0x3c] sm:$0xf]
      %v279 = vld [vmem:[%s1 + $0x40] sm:$0xf]
      %v280 = vld [vmem:[%s1 + $0x44] sm:$0xf]
      %v281 = vld [vmem:[%s1 + $0x48] sm:$0xf]
      %v282 = vld [vmem:[%s1 + $0x4c] sm:$0xf]
      %v283 = vld [vmem:[%s1 + $0x50] sm:$0xf]
      %v284 = vld [vmem:[%s1 + $0x54] sm:$0xf]
      %v285 = vld [vmem:[%s1 + $0x58] sm:$0xf]
      %v286 = vld [vmem:[%s1 + $0x5c] sm:$0xf]
      %v287 = vld [vmem:[%s1 + $0x60] sm:$0xf]
      %v288 = vld [vmem:[%s1 + $0x64] sm:$0xf]
      %v289 = vld [vmem:[%s1 + $0x68] sm:$0xf]
      %v290 = vld [vmem:[%s1 + $0x6c] sm:$0xf]
      %v291 = vld [vmem:[%s1 + $0x70] sm:$0xf]
      %v292 = vld [vmem:[%s1 + $0x74] sm:$0xf]
      %v293 = vld [vmem:[%s1 + $0x78] sm:$0xf]
      %v294 = vld [vmem:[%s1 + $0x7c] sm:$0xf]
      %v295 = vld [vmem:[%s1 + $0x80] sm:$0xf]
      %v296 = vld [vmem:[%s1 + $0x84] sm:$0xf]
      %v297 = vld [vmem:[%s1 + $0x88] sm:$0xf]
      %v298 = vld [vmem:[%s1 + $0x8c] sm:$0xf]
      %v373 = vunpack.c.l.b16 %v189
      %v374 = vunpack.c.h.b16 %v189
      %v375 = vunpack.c.l.b16 %v190
      %v376 = vunpack.c.l.b16 %v191
      %v377 = vunpack.c.h.b16 %v191
      %v378 = vunpack.c.l.b16 %v192
      %v379 = vunpack.c.l.b16 %v193
      %v380 = vunpack.c.h.b16 %v193
      %v381 = vunpack.c.l.b16 %v194
      %v382 = vunpack.c.l.b16 %v195
      %v383 = vunpack.c.h.b16 %v195
      %v384 = vunpack.c.l.b16 %v196
      %v385 = vunpack.c.l.b16 %v197
      %v386 = vunpack.c.h.b16 %v197
      %v387 = vunpack.c.l.b16 %v198
      %v388 = vunpack.c.l.b16 %v199
      %v389 = vunpack.c.h.b16 %v199
      %v390 = vunpack.c.l.b16 %v200
      %v391 = vunpack.c.l.b16 %v201
      %v392 = vunpack.c.h.b16 %v201
      %v393 = vunpack.c.l.b16 %v202
      %v394 = vunpack.c.l.b16 %v203
      %v395 = vunpack.c.h.b16 %v203
      %v396 = vunpack.c.l.b16 %v204
      %v397 = vunpack.c.l.b16 %v205
      %v398 = vunpack.c.h.b16 %v205
      %v399 = vunpack.c.l.b16 %v206
      %v400 = vunpack.c.l.b16 %v207
      %v401 = vunpack.c.h.b16 %v207
      %v402 = vunpack.c.l.b16 %v208
      %v403 = vunpack.c.l.b16 %v209
      %v404 = vunpack.c.h.b16 %v209
      %v405 = vunpack.c.l.b16 %v210
      %v406 = vunpack.c.l.b16 %v211
      %v407 = vunpack.c.h.b16 %v211
      %v408 = vunpack.c.l.b16 %v212
      %v409 = vunpack.c.l.b16 %v213
      %v410 = vunpack.c.h.b16 %v213
      %v411 = vunpack.c.l.b16 %v214
      %v412 = vunpack.c.l.b16 %v215
      %v413 = vunpack.c.h.b16 %v215
      %v414 = vunpack.c.l.b16 %v216
      %v415 = vunpack.c.l.b16 %v217
      %v416 = vunpack.c.h.b16 %v217
      %v417 = vunpack.c.l.b16 %v218
      %v418 = vunpack.c.l.b16 %v219
      %v419 = vunpack.c.h.b16 %v219
      %v420 = vunpack.c.l.b16 %v220
      %v421 = vunpack.c.l.b16 %v221
      %v422 = vunpack.c.h.b16 %v221
      %v423 = vunpack.c.l.b16 %v222
      %v424 = vunpack.c.l.b16 %v223
      %v425 = vunpack.c.h.b16 %v223
      %v426 = vunpack.c.l.b16 %v224
      %v427 = vunpack.c.l.b16 %v225
      %v428 = vunpack.c.h.b16 %v225
      %v429 = vunpack.c.l.b16 %v226
      %v430 = vunpack.c.l.b16 %v227
      %v431 = vunpack.c.h.b16 %v227
      %v432 = vunpack.c.l.b16 %v228
      %v433 = vunpack.c.l.b16 %v229
      %v434 = vunpack.c.h.b16 %v229
      %v435 = vunpack.c.l.b16 %v230
      %v436 = vunpack.c.l.b16 %v231
      %v437 = vunpack.c.h.b16 %v231
      %v438 = vunpack.c.l.b16 %v232
      %v439 = vunpack.c.l.b16 %v233
      %v440 = vunpack.c.h.b16 %v233
      %v441 = vunpack.c.l.b16 %v234
      %v442 = vunpack.c.l.b16 %v235
      %v443 = vunpack.c.h.b16 %v235
      %v444 = vunpack.c.l.b16 %v236
      %v445 = vunpack.c.l.b16 %v237
      %v446 = vunpack.c.h.b16 %v237
      %v447 = vunpack.c.l.b16 %v238
      %v448 = vunpack.c.l.b16 %v239
      %v449 = vunpack.c.h.b16 %v239
      %v450 = vunpack.c.l.b16 %v240
      %v451 = vunpack.c.l.b16 %v241
      %v452 = vunpack.c.h.b16 %v241
      %v453 = vunpack.c.l.b16 %v242
      %v454 = vunpack.c.l.b16 %v243
      %v455 = vunpack.c.h.b16 %v243
      %v456 = vunpack.c.l.b16 %v244
      %v457 = vunpack.c.l.b16 %v245
      %v458 = vunpack.c.h.b16 %v245
      %v459 = vunpack.c.l.b16 %v246
      %v460 = vunpack.c.l.b16 %v247
      %v461 = vunpack.c.h.b16 %v247
      %v462 = vunpack.c.l.b16 %v248
      %v463 = vunpack.c.l.b16 %v249
      %v464 = vunpack.c.h.b16 %v249
      %v465 = vunpack.c.l.b16 %v250
      %v466 = vunpack.c.l.b16 %v251
      %v467 = vunpack.c.h.b16 %v251
      %v468 = vunpack.c.l.b16 %v252
      %v469 = vunpack.c.l.b16 %v253
      %v470 = vunpack.c.h.b16 %v253
      %v471 = vunpack.c.l.b16 %v254
      %v472 = vunpack.c.l.b16 %v255
      %v473 = vunpack.c.h.b16 %v255
      %v474 = vunpack.c.l.b16 %v256
      %v475 = vunpack.c.l.b16 %v257
      %v476 = vunpack.c.h.b16 %v257
      %v477 = vunpack.c.l.b16 %v258
      %v478 = vunpack.c.l.b16 %v259
      %v479 = vunpack.c.h.b16 %v259
      %v480 = vunpack.c.l.b16 %v260
      %v481 = vunpack.c.l.b16 %v261
      %v482 = vunpack.c.h.b16 %v261
      %v483 = vunpack.c.l.b16 %v262
      %v484 = vpack.c.b16 %v376, %v373
      %v485 = vpack.c.b16 %v377, %v374
      %v486 = vpack.c.b16 %v378, %v375
      %v487 = vpack.c.b16 %v382, %v379
      %v488 = vpack.c.b16 %v383, %v380
      %v489 = vpack.c.b16 %v384, %v381
      %v490 = vpack.c.b16 %v388, %v385
      %v491 = vpack.c.b16 %v389, %v386
      %v492 = vpack.c.b16 %v390, %v387
      %v493 = vpack.c.b16 %v394, %v391
      %v494 = vpack.c.b16 %v395, %v392
      %v495 = vpack.c.b16 %v396, %v393
      %v496 = vpack.c.b16 %v400, %v397
      %v497 = vpack.c.b16 %v401, %v398
      %v498 = vpack.c.b16 %v402, %v399
      %v499 = vpack.c.b16 %v406, %v403
      %v500 = vpack.c.b16 %v407, %v404
      %v501 = vpack.c.b16 %v408, %v405
      %v502 = vpack.c.b16 %v412, %v409
      %v503 = vpack.c.b16 %v413, %v410
      %v504 = vpack.c.b16 %v414, %v411
      %v505 = vpack.c.b16 %v418, %v415
      %v506 = vpack.c.b16 %v419, %v416
      %v507 = vpack.c.b16 %v420, %v417
      %v508 = vpack.c.b16 %v424, %v421
      %v509 = vpack.c.b16 %v425, %v422
      %v510 = vpack.c.b16 %v426, %v423
      %v511 = vpack.c.b16 %v430, %v427
      %v512 = vpack.c.b16 %v431, %v428
      %v513 = vpack.c.b16 %v432, %v429
      %v514 = vpack.c.b16 %v436, %v433
      %v515 = vpack.c.b16 %v437, %v434
      %v516 = vpack.c.b16 %v438, %v435
      %v517 = vpack.c.b16 %v442, %v439
      %v518 = vpack.c.b16 %v443, %v440
      %v519 = vpack.c.b16 %v444, %v441
      %v520 = vpack.c.b16 %v448, %v445
      %v521 = vpack.c.b16 %v449, %v446
      %v522 = vpack.c.b16 %v450, %v447
      %v523 = vpack.c.b16 %v454, %v451
      %v524 = vpack.c.b16 %v455, %v452
      %v525 = vpack.c.b16 %v456, %v453
      %v526 = vpack.c.b16 %v460, %v457
      %v527 = vpack.c.b16 %v461, %v458
      %v528 = vpack.c.b16 %v462, %v459
      %v529 = vpack.c.b16 %v466, %v463
      %v530 = vpack.c.b16 %v467, %v464
      %v531 = vpack.c.b16 %v468, %v465
      %v532 = vpack.c.b16 %v472, %v469
      %v533 = vpack.c.b16 %v473, %v470
      %v534 = vpack.c.b16 %v474, %v471
      %v535 = vpack.c.b16 %v478, %v475
      %v536 = vpack.c.b16 %v479, %v476
      %v537 = vpack.c.b16 %v480, %v477
      %v538 = vpack.c.b16 %v481, %v481
      %v539 = vpack.c.b16 %v482, %v482
      %v540 = vpack.c.b16 %v483, %v483
      %v615 = vunpack.c.l.b16 %v263
      %v616 = vunpack.c.l.b16 %v264
      %v617 = vunpack.c.l.b16 %v265
      %v618 = vunpack.c.l.b16 %v266
      %v619 = vunpack.c.l.b16 %v267
      %v620 = vunpack.c.l.b16 %v268
      %v621 = vunpack.c.l.b16 %v269
      %v622 = vunpack.c.l.b16 %v270
      %v623 = vunpack.c.l.b16 %v271
      %v624 = vunpack.c.l.b16 %v272
      %v625 = vunpack.c.l.b16 %v273
      %v626 = vunpack.c.l.b16 %v274
      %v627 = vunpack.c.l.b16 %v275
      %v628 = vunpack.c.l.b16 %v276
      %v629 = vunpack.c.l.b16 %v277
      %v630 = vunpack.c.l.b16 %v278
      %v631 = vunpack.c.l.b16 %v279
      %v632 = vunpack.c.l.b16 %v280
      %v633 = vunpack.c.l.b16 %v281
      %v634 = vunpack.c.l.b16 %v282
      %v635 = vunpack.c.l.b16 %v283
      %v636 = vunpack.c.l.b16 %v284
      %v637 = vunpack.c.l.b16 %v285
      %v638 = vunpack.c.l.b16 %v286
      %v639 = vunpack.c.l.b16 %v287
      %v640 = vunpack.c.l.b16 %v288
      %v641 = vunpack.c.l.b16 %v289
      %v642 = vunpack.c.l.b16 %v290
      %v643 = vunpack.c.l.b16 %v291
      %v644 = vunpack.c.l.b16 %v292
      %v645 = vunpack.c.l.b16 %v293
      %v646 = vunpack.c.l.b16 %v294
      %v647 = vunpack.c.l.b16 %v295
      %v648 = vunpack.c.l.b16 %v296
      %v649 = vunpack.c.l.b16 %v297
      %v650 = vunpack.c.l.b16 %v298
      %v651 = vpack.c.b16 %v616, %v615
      %v652 = vpack.c.b16 %v618, %v617
      %v653 = vpack.c.b16 %v620, %v619
      %v654 = vpack.c.b16 %v622, %v621
      %v655 = vpack.c.b16 %v624, %v623
      %v656 = vpack.c.b16 %v626, %v625
      %v657 = vpack.c.b16 %v628, %v627
      %v658 = vpack.c.b16 %v630, %v629
      %v659 = vpack.c.b16 %v632, %v631
      %v660 = vpack.c.b16 %v634, %v633
      %v661 = vpack.c.b16 %v636, %v635
      %v662 = vpack.c.b16 %v638, %v637
      %v663 = vpack.c.b16 %v640, %v639
      %v664 = vpack.c.b16 %v642, %v641
      %v665 = vpack.c.b16 %v644, %v643
      %v666 = vpack.c.b16 %v646, %v645
      %v667 = vpack.c.b16 %v648, %v647
      %v668 = vpack.c.b16 %v650, %v649
      %vm687 = vcmask 261120
      %v689 = vsel %vm687, %v486, 0
      %v692 = vsel %vm687, %v489, 0
      %v695 = vsel %vm687, %v492, 0
      %v698 = vsel %vm687, %v495, 0
      %v701 = vsel %vm687, %v498, 0
      %v704 = vsel %vm687, %v501, 0
      %v707 = vsel %vm687, %v504, 0
      %v710 = vsel %vm687, %v507, 0
      %v713 = vsel %vm687, %v510, 0
      %v716 = vsel %vm687, %v513, 0
      %v719 = vsel %vm687, %v516, 0
      %v722 = vsel %vm687, %v519, 0
      %v725 = vsel %vm687, %v522, 0
      %v728 = vsel %vm687, %v525, 0
      %v731 = vsel %vm687, %v528, 0
      %v734 = vsel %vm687, %v531, 0
      %v737 = vsel %vm687, %v534, 0
      %v740 = vsel %vm687, %v537, 0
      %v743 = vsel %vm687, %v540, 0
      %745 = vmatprep.subr.bf16.mxu0 0
      %746 = vmatpush1.bf16.msra.mxu0 %v651
      %747 = vmatprep.subr.bf16.mxu0 0
      %748 = vmatpush1.bf16.msra.mxu0 %v652
      %749 = vmatprep.subr.bf16.mxu0 0
      %750 = vmatpush1.bf16.msra.mxu0 %v653
      %751 = vmatprep.subr.bf16.mxu0 0
      %752 = vmatpush1.bf16.msra.mxu0 %v654
      %753 = vmatprep.subr.bf16.mxu0 0
      %754 = vmatpush1.bf16.msra.mxu0 %v655
      %755 = vmatprep.subr.bf16.mxu0 0
      %756 = vmatpush1.bf16.msra.mxu0 %v656
      %757 = vmatprep.subr.bf16.mxu0 0
      %758 = vmatpush1.bf16.msra.mxu0 %v657
      %759 = vmatprep.subr.bf16.mxu0 0
      %760 = vmatpush1.bf16.msra.mxu0 %v658
      %761 = vmatprep.subr.bf16.mxu0 0
      %762 = vmatpush1.bf16.msra.mxu0 %v659
      %763 = vmatprep.subr.bf16.mxu0 0
      %764 = vmatpush1.bf16.msra.mxu0 %v660
      %765 = vmatprep.subr.bf16.mxu0 0
      %766 = vmatpush1.bf16.msra.mxu0 %v661
      %767 = vmatprep.subr.bf16.mxu0 0
      %768 = vmatpush1.bf16.msra.mxu0 %v662
      %769 = vmatprep.subr.bf16.mxu0 0
      %770 = vmatpush1.bf16.msra.mxu0 %v663
      %771 = vmatprep.subr.bf16.mxu0 0
      %772 = vmatpush1.bf16.msra.mxu0 %v664
      %773 = vmatprep.subr.bf16.mxu0 0
      %774 = vmatpush1.bf16.msra.mxu0 %v665
      %775 = vmatprep.subr.bf16.mxu0 0
      %776 = vmatpush1.bf16.msra.mxu0 %v666
      %777 = vmatprep.mubr.bf16.mxu0 %v485
      %778 = vmatmul.mubr.bf16.gmra.mrb[0].mxu0 %v484
      %v779 = vpop.f32.mrb[0].mxu0
      %v780 = vadd.f32 0.0, %v779
      %v781 = vpop.f32.mrb[0].mxu0
      %v782 = vpop.f32.mrb[0].mxu0
      %v783 = vadd.f32 0.0, %v782
      %v784 = vpop.f32.mrb[0].mxu0
      %785 = vmatprep.mubr.bf16.mxu0 %v488
      %786 = vmatmul.mubr.bf16.gmra.mrb[0].mxu0 %v487
      %v787 = vpop.f32.mrb[0].mxu0
      %v788 = vadd.f32 0.0, %v787
      %v789 = vpop.f32.mrb[0].mxu0
      %v790 = vpop.f32.mrb[0].mxu0
      %v791 = vadd.f32 0.0, %v790
      %v792 = vpop.f32.mrb[0].mxu0
      %793 = vmatprep.mubr.bf16.mxu0 %v491
      %794 = vmatmul.mubr.bf16.gmra.mrb[0].mxu0 %v490
      %v795 = vpop.f32.mrb[0].mxu0
      %v796 = vadd.f32 0.0, %v795
      %v797 = vpop.f32.mrb[0].mxu0
      %v798 = vpop.f32.mrb[0].mxu0
      %v799 = vadd.f32 0.0, %v798
      %v800 = vpop.f32.mrb[0].mxu0
      %801 = vmatprep.mubr.bf16.mxu0 %v494
      %802 = vmatmul.mubr.bf16.gmra.mrb[0].mxu0 %v493
      %v803 = vpop.f32.mrb[0].mxu0
      %v804 = vadd.f32 0.0, %v803
      %v805 = vpop.f32.mrb[0].mxu0
      %v806 = vpop.f32.mrb[0].mxu0
      %v807 = vadd.f32 0.0, %v806
      %v808 = vpop.f32.mrb[0].mxu0
      %809 = vmatprep.mubr.bf16.mxu0 %v497
      %810 = vmatmul.mubr.bf16.gmra.mrb[0].mxu0 %v496
      %v811 = vpop.f32.mrb[0].mxu0
      %v812 = vadd.f32 0.0, %v811
      %v813 = vpop.f32.mrb[0].mxu0
      %v814 = vpop.f32.mrb[0].mxu0
      %v815 = vadd.f32 0.0, %v814
      %v816 = vpop.f32.mrb[0].mxu0
      %817 = vmatprep.mubr.bf16.mxu0 %v500
      %818 = vmatmul.mubr.bf16.gmra.mrb[0].mxu0 %v499
      %v819 = vpop.f32.mrb[0].mxu0
      %v820 = vadd.f32 0.0, %v819
      %v821 = vpop.f32.mrb[0].mxu0
      %v822 = vpop.f32.mrb[0].mxu0
      %v823 = vadd.f32 0.0, %v822
      %v824 = vpop.f32.mrb[0].mxu0
      %825 = vmatprep.mubr.bf16.mxu0 %v503
      %826 = vmatmul.mubr.bf16.gmra.mrb[0].mxu0 %v502
      %v827 = vpop.f32.mrb[0].mxu0
      %v828 = vadd.f32 0.0, %v827
      %v829 = vpop.f32.mrb[0].mxu0
      %v830 = vpop.f32.mrb[0].mxu0
      %v831 = vadd.f32 0.0, %v830
      %v832 = vpop.f32.mrb[0].mxu0
      %833 = vmatprep.mubr.bf16.mxu0 %v506
      %834 = vmatmul.mubr.bf16.gmra.mrb[0].mxu0 %v505
      %v835 = vpop.f32.mrb[0].mxu0
      %v836 = vadd.f32 0.0, %v835
      %v837 = vpop.f32.mrb[0].mxu0
      %v838 = vpop.f32.mrb[0].mxu0
      %v839 = vadd.f32 0.0, %v838
      %v840 = vpop.f32.mrb[0].mxu0
      %841 = vmatprep.mubr.bf16.mxu0 %v509
      %842 = vmatmul.mubr.bf16.gmra.mrb[0].mxu0 %v508
      %v843 = vpop.f32.mrb[0].mxu0
      %v844 = vadd.f32 0.0, %v843
      %v845 = vpop.f32.mrb[0].mxu0
      %v846 = vpop.f32.mrb[0].mxu0
      %v847 = vadd.f32 0.0, %v846
      %v848 = vpop.f32.mrb[0].mxu0
      %849 = vmatprep.mubr.bf16.mxu0 %v512
      %850 = vmatmul.mubr.bf16.gmra.mrb[0].mxu0 %v511
      %v851 = vpop.f32.mrb[0].mxu0
      %v852 = vadd.f32 0.0, %v851
      %v853 = vpop.f32.mrb[0].mxu0
      %v854 = vpop.f32.mrb[0].mxu0
      %v855 = vadd.f32 0.0, %v854
      %v856 = vpop.f32.mrb[0].mxu0
      %857 = vmatprep.mubr.bf16.mxu0 %v515
      %858 = vmatmul.mubr.bf16.gmra.mrb[0].mxu0 %v514
      %v859 = vpop.f32.mrb[0].mxu0
      %v860 = vadd.f32 0.0, %v859
      %v861 = vpop.f32.mrb[0].mxu0
      %v862 = vpop.f32.mrb[0].mxu0
      %v863 = vadd.f32 0.0, %v862
      %v864 = vpop.f32.mrb[0].mxu0
      %865 = vmatprep.mubr.bf16.mxu0 %v518
      %866 = vmatmul.mubr.bf16.gmra.mrb[0].mxu0 %v517
      %v867 = vpop.f32.mrb[0].mxu0
      %v868 = vadd.f32 0.0, %v867
      %v869 = vpop.f32.mrb[0].mxu0
      %v870 = vpop.f32.mrb[0].mxu0
      %v871 = vadd.f32 0.0, %v870
      %v872 = vpop.f32.mrb[0].mxu0
      %873 = vmatprep.mubr.bf16.mxu0 %v521
      %874 = vmatmul.mubr.bf16.gmra.mrb[0].mxu0 %v520
      %v875 = vpop.f32.mrb[0].mxu0
      %v876 = vadd.f32 0.0, %v875
      %v877 = vpop.f32.mrb[0].mxu0
      %v878 = vpop.f32.mrb[0].mxu0
      %v879 = vadd.f32 0.0, %v878
      %v880 = vpop.f32.mrb[0].mxu0
      %881 = vmatprep.mubr.bf16.mxu0 %v524
      %882 = vmatmul.mubr.bf16.gmra.mrb[0].mxu0 %v523
      %v883 = vpop.f32.mrb[0].mxu0
      %v884 = vadd.f32 0.0, %v883
      %v885 = vpop.f32.mrb[0].mxu0
      %v886 = vpop.f32.mrb[0].mxu0
      %v887 = vadd.f32 0.0, %v886
      %v888 = vpop.f32.mrb[0].mxu0
      %889 = vmatprep.mubr.bf16.mxu0 %v527
      %890 = vmatmul.mubr.bf16.gmra.mrb[0].mxu0 %v526
      %v891 = vpop.f32.mrb[0].mxu0
      %v892 = vadd.f32 0.0, %v891
      %v893 = vpop.f32.mrb[0].mxu0
      %v894 = vpop.f32.mrb[0].mxu0
      %v895 = vadd.f32 0.0, %v894
      %v896 = vpop.f32.mrb[0].mxu0
      %897 = vmatprep.mubr.bf16.mxu0 %v530
      %898 = vmatmul.mubr.bf16.gmra.mrb[0].mxu0 %v529
      %v899 = vpop.f32.mrb[0].mxu0
      %v900 = vadd.f32 0.0, %v899
      %v901 = vpop.f32.mrb[0].mxu0
      %v902 = vpop.f32.mrb[0].mxu0
      %v903 = vadd.f32 0.0, %v902
      %v904 = vpop.f32.mrb[0].mxu0
      %905 = vmatprep.mubr.bf16.mxu0 %v533
      %906 = vmatmul.mubr.bf16.gmra.mrb[0].mxu0 %v532
      %v907 = vpop.f32.mrb[0].mxu0
      %v908 = vadd.f32 0.0, %v907
      %v909 = vpop.f32.mrb[0].mxu0
      %v910 = vpop.f32.mrb[0].mxu0
      %v911 = vadd.f32 0.0, %v910
      %v912 = vpop.f32.mrb[0].mxu0
      %913 = vmatprep.mubr.bf16.mxu0 %v536
      %914 = vmatmul.mubr.bf16.gmra.mrb[0].mxu0 %v535
      %v915 = vpop.f32.mrb[0].mxu0
      %v916 = vadd.f32 0.0, %v915
      %v917 = vpop.f32.mrb[0].mxu0
      %v918 = vpop.f32.mrb[0].mxu0
      %v919 = vadd.f32 0.0, %v918
      %v920 = vpop.f32.mrb[0].mxu0
      %921 = vmatprep.mubr.bf16.mxu0 %v539
      %922 = vmatmul.mubr.bf16.gmra.mrb[0].mxu0 %v538
      %v923 = vpop.f32.mrb[0].mxu0
      %v924 = vadd.f32 0.0, %v923
      %v925 = vpop.f32.mrb[0].mxu0
      %v926 = vpop.f32.mrb[0].mxu0
      %v927 = vpop.f32.mrb[0].mxu0
      %928 = vdwg.mxu0
      %929 = vmatprep.subr.bf16.mxu0 0
      %930 = vmatpush1.bf16.msra.mxu0 %v667
      %931 = vmatprep.subr.bf16.mxu0 0
      %932 = vmatpush1.bf16.msra.mxu0 %v668
      %933 = vmatprep.subr.bf16.mxu0 0
      %934 = vmatpush1.bf16.msra.mxu0 0
      %935 = vmatprep.subr.bf16.mxu0 0
      %936 = vmatpush1.bf16.msra.mxu0 0
      %937 = vmatprep.subr.bf16.mxu0 0
      %938 = vmatpush1.bf16.msra.mxu0 0
      %939 = vmatprep.subr.bf16.mxu0 0
      %940 = vmatpush1.bf16.msra.mxu0 0
      %941 = vmatprep.subr.bf16.mxu0 0
      %942 = vmatpush1.bf16.msra.mxu0 0
      %943 = vmatprep.subr.bf16.mxu0 0
      %944 = vmatpush1.bf16.msra.mxu0 0
      %945 = vmatprep.subr.bf16.mxu0 0
      %946 = vmatpush1.bf16.msra.mxu0 0
      %947 = vmatprep.subr.bf16.mxu0 0
      %948 = vmatpush1.bf16.msra.mxu0 0
      %949 = vmatprep.subr.bf16.mxu0 0
      %950 = vmatpush1.bf16.msra.mxu0 0
      %951 = vmatprep.subr.bf16.mxu0 0
      %952 = vmatpush1.bf16.msra.mxu0 0
      %953 = vmatprep.subr.bf16.mxu0 0
      %954 = vmatpush1.bf16.msra.mxu0 0
      %955 = vmatprep.subr.bf16.mxu0 0
      %956 = vmatpush1.bf16.msra.mxu0 0
      %957 = vmatprep.subr.bf16.mxu0 0
      %958 = vmatpush1.bf16.msra.mxu0 0
      %959 = vmatprep.subr.bf16.mxu0 0
      %960 = vmatpush1.bf16.msra.mxu0 0
      %961 = vmatprep.mubr.bf16.mxu0 0
      %962 = vmatmul.mubr.bf16.gmra.mrb[0].mxu0 %v689
      %v963 = vpop.f32.mrb[0].mxu0
      %v964 = vadd.f32 %v780, %v963
      %v965 = vpop.f32.mrb[0].mxu0
      %v966 = vpop.f32.mrb[0].mxu0
      %v967 = vadd.f32 %v783, %v966
      %v968 = vpop.f32.mrb[0].mxu0
      %969 = vmatprep.mubr.bf16.mxu0 0
      %970 = vmatmul.mubr.bf16.gmra.mrb[0].mxu0 %v692
      %v971 = vpop.f32.mrb[0].mxu0
      %v972 = vadd.f32 %v788, %v971
      %v973 = vpop.f32.mrb[0].mxu0
      %v974 = vpop.f32.mrb[0].mxu0
      %v975 = vadd.f32 %v791, %v974
      %v976 = vpop.f32.mrb[0].mxu0
      %977 = vmatprep.mubr.bf16.mxu0 0
      %978 = vmatmul.mubr.bf16.gmra.mrb[0].mxu0 %v695
      %v979 = vpop.f32.mrb[0].mxu0
      %v980 = vadd.f32 %v796, %v979
      %v981 = vpop.f32.mrb[0].mxu0
      %v982 = vpop.f32.mrb[0].mxu0
      %v983 = vadd.f32 %v799, %v982
      %v984 = vpop.f32.mrb[0].mxu0
      %985 = vmatprep.mubr.bf16.mxu0 0
      %986 = vmatmul.mubr.bf16.gmra.mrb[0].mxu0 %v698
      %v987 = vpop.f32.mrb[0].mxu0
      %v988 = vadd.f32 %v804, %v987
      %v989 = vpop.f32.mrb[0].mxu0
      %v990 = vpop.f32.mrb[0].mxu0
      %v991 = vadd.f32 %v807, %v990
      %v992 = vpop.f32.mrb[0].mxu0
      %993 = vmatprep.mubr.bf16.mxu0 0
      %994 = vmatmul.mubr.bf16.gmra.mrb[0].mxu0 %v701
      %v995 = vpop.f32.mrb[0].mxu0
      %v996 = vadd.f32 %v812, %v995
      %v997 = vpop.f32.mrb[0].mxu0
      %v998 = vpop.f32.mrb[0].mxu0
      %v999 = vadd.f32 %v815, %v998
      %v1000 = vpop.f32.mrb[0].mxu0
      %1001 = vmatprep.mubr.bf16.mxu0 0
      %1002 = vmatmul.mubr.bf16.gmra.mrb[0].mxu0 %v704
      %v1003 = vpop.f32.mrb[0].mxu0
      %v1004 = vadd.f32 %v820, %v1003
      %v1005 = vpop.f32.mrb[0].mxu0
      %v1006 = vpop.f32.mrb[0].mxu0
      %v1007 = vadd.f32 %v823, %v1006
      %v1008 = vpop.f32.mrb[0].mxu0
      %1009 = vmatprep.mubr.bf16.mxu0 0
      %1010 = vmatmul.mubr.bf16.gmra.mrb[0].mxu0 %v707
      %v1011 = vpop.f32.mrb[0].mxu0
      %v1012 = vadd.f32 %v828, %v1011
      %v1013 = vpop.f32.mrb[0].mxu0
      %v1014 = vpop.f32.mrb[0].mxu0
      %v1015 = vadd.f32 %v831, %v1014
      %v1016 = vpop.f32.mrb[0].mxu0
      %1017 = vmatprep.mubr.bf16.mxu0 0
      %1018 = vmatmul.mubr.bf16.gmra.mrb[0].mxu0 %v710
      %v1019 = vpop.f32.mrb[0].mxu0
      %v1020 = vadd.f32 %v836, %v1019
      %v1021 = vpop.f32.mrb[0].mxu0
      %v1022 = vpop.f32.mrb[0].mxu0
      %v1023 = vadd.f32 %v839, %v1022
      %v1024 = vpop.f32.mrb[0].mxu0
      %1025 = vmatprep.mubr.bf16.mxu0 0
      %1026 = vmatmul.mubr.bf16.gmra.mrb[0].mxu0 %v713
      %v1027 = vpop.f32.mrb[0].mxu0
      %v1028 = vadd.f32 %v844, %v1027
      %v1029 = vpop.f32.mrb[0].mxu0
      %v1030 = vpop.f32.mrb[0].mxu0
      %v1031 = vadd.f32 %v847, %v1030
      %v1032 = vpop.f32.mrb[0].mxu0
      %1033 = vmatprep.mubr.bf16.mxu0 0
      %1034 = vmatmul.mubr.bf16.gmra.mrb[0].mxu0 %v716
      %v1035 = vpop.f32.mrb[0].mxu0
      %v1036 = vadd.f32 %v852, %v1035
      %v1037 = vpop.f32.mrb[0].mxu0
      %v1038 = vpop.f32.mrb[0].mxu0
      %v1039 = vadd.f32 %v855, %v1038
      %v1040 = vpop.f32.mrb[0].mxu0
      %1041 = vmatprep.mubr.bf16.mxu0 0
      %1042 = vmatmul.mubr.bf16.gmra.mrb[0].mxu0 %v719
      %v1043 = vpop.f32.mrb[0].mxu0
      %v1044 = vadd.f32 %v860, %v1043
      %v1045 = vpop.f32.mrb[0].mxu0
      %v1046 = vpop.f32.mrb[0].mxu0
      %v1047 = vadd.f32 %v863, %v1046
      %v1048 = vpop.f32.mrb[0].mxu0
      %1049 = vmatprep.mubr.bf16.mxu0 0
      %1050 = vmatmul.mubr.bf16.gmra.mrb[0].mxu0 %v722
      %v1051 = vpop.f32.mrb[0].mxu0
      %v1052 = vadd.f32 %v868, %v1051
      %v1053 = vpop.f32.mrb[0].mxu0
      %v1054 = vpop.f32.mrb[0].mxu0
      %v1055 = vadd.f32 %v871, %v1054
      %v1056 = vpop.f32.mrb[0].mxu0
      %1057 = vmatprep.mubr.bf16.mxu0 0
      %1058 = vmatmul.mubr.bf16.gmra.mrb[0].mxu0 %v725
      %v1059 = vpop.f32.mrb[0].mxu0
      %v1060 = vadd.f32 %v876, %v1059
      %v1061 = vpop.f32.mrb[0].mxu0
      %v1062 = vpop.f32.mrb[0].mxu0
      %v1063 = vadd.f32 %v879, %v1062
      %v1064 = vpop.f32.mrb[0].mxu0
      %1065 = vmatprep.mubr.bf16.mxu0 0
      %1066 = vmatmul.mubr.bf16.gmra.mrb[0].mxu0 %v728
      %v1067 = vpop.f32.mrb[0].mxu0
      %v1068 = vadd.f32 %v884, %v1067
      %v1069 = vpop.f32.mrb[0].mxu0
      %v1070 = vpop.f32.mrb[0].mxu0
      %v1071 = vadd.f32 %v887, %v1070
      %v1072 = vpop.f32.mrb[0].mxu0
      %1073 = vmatprep.mubr.bf16.mxu0 0
      %1074 = vmatmul.mubr.bf16.gmra.mrb[0].mxu0 %v731
      %v1075 = vpop.f32.mrb[0].mxu0
      %v1076 = vadd.f32 %v892, %v1075
      %v1077 = vpop.f32.mrb[0].mxu0
      %v1078 = vpop.f32.mrb[0].mxu0
      %v1079 = vadd.f32 %v895, %v1078
      %v1080 = vpop.f32.mrb[0].mxu0
      %1081 = vmatprep.mubr.bf16.mxu0 0
      %1082 = vmatmul.mubr.bf16.gmra.mrb[0].mxu0 %v734
      %v1083 = vpop.f32.mrb[0].mxu0
      %v1084 = vadd.f32 %v900, %v1083
      %v1085 = vpop.f32.mrb[0].mxu0
      %v1086 = vpop.f32.mrb[0].mxu0
      %v1087 = vadd.f32 %v903, %v1086
      %v1088 = vpop.f32.mrb[0].mxu0
      %1089 = vmatprep.mubr.bf16.mxu0 0
      %1090 = vmatmul.mubr.bf16.gmra.mrb[0].mxu0 %v737
      %v1091 = vpop.f32.mrb[0].mxu0
      %v1092 = vadd.f32 %v908, %v1091
      %v1093 = vpop.f32.mrb[0].mxu0
      %v1094 = vpop.f32.mrb[0].mxu0
      %v1095 = vadd.f32 %v911, %v1094
      %v1096 = vpop.f32.mrb[0].mxu0
      %1097 = vmatprep.mubr.bf16.mxu0 0
      %1098 = vmatmul.mubr.bf16.gmra.mrb[0].mxu0 %v740
      %v1099 = vpop.f32.mrb[0].mxu0
      %v1100 = vadd.f32 %v916, %v1099
      %v1101 = vpop.f32.mrb[0].mxu0
      %v1102 = vpop.f32.mrb[0].mxu0
      %v1103 = vadd.f32 %v919, %v1102
      %v1104 = vpop.f32.mrb[0].mxu0
      %1105 = vmatprep.mubr.bf16.mxu0 0
      %1106 = vmatmul.mubr.bf16.gmra.mrb[0].mxu0 %v743
      %v1107 = vpop.f32.mrb[0].mxu0
      %v1108 = vadd.f32 %v924, %v1107
      %v1109 = vpop.f32.mrb[0].mxu0
      %v1110 = vpop.f32.mrb[0].mxu0
      %v1111 = vpop.f32.mrb[0].mxu0
      %1112 = vdwg.mxu0
      %v1113 = vpack.c.bf16 %v967, %v964
      %v1114 = vpack.c.bf16 %v975, %v972
      %v1115 = vpack.c.bf16 %v983, %v980
      %v1116 = vpack.c.bf16 %v991, %v988
      %v1117 = vpack.c.bf16 %v999, %v996
      %v1118 = vpack.c.bf16 %v1007, %v1004
      %v1119 = vpack.c.bf16 %v1015, %v1012
      %v1120 = vpack.c.bf16 %v1023, %v1020
      %v1121 = vpack.c.bf16 %v1031, %v1028
      %v1122 = vpack.c.bf16 %v1039, %v1036
      %v1123 = vpack.c.bf16 %v1047, %v1044
      %v1124 = vpack.c.bf16 %v1055, %v1052
      %v1125 = vpack.c.bf16 %v1063, %v1060
      %v1126 = vpack.c.bf16 %v1071, %v1068
      %v1127 = vpack.c.bf16 %v1079, %v1076
      %v1128 = vpack.c.bf16 %v1087, %v1084
      %v1129 = vpack.c.bf16 %v1095, %v1092
      %v1130 = vpack.c.bf16 %v1103, %v1100
      %v1131 = vpack.c.bf16 %v1108, %v1108
      %v1151 = vunpack.c.l.b16 %v1113
      %v1152 = vunpack.c.h.b16 %v1113
      %v1153 = vunpack.c.l.b16 %v1114
      %v1154 = vunpack.c.h.b16 %v1114
      %v1155 = vunpack.c.l.b16 %v1115
      %v1156 = vunpack.c.h.b16 %v1115
      %v1157 = vunpack.c.l.b16 %v1116
      %v1158 = vunpack.c.h.b16 %v1116
      %v1159 = vunpack.c.l.b16 %v1117
      %v1160 = vunpack.c.h.b16 %v1117
      %v1161 = vunpack.c.l.b16 %v1118
      %v1162 = vunpack.c.h.b16 %v1118
      %v1163 = vunpack.c.l.b16 %v1119
      %v1164 = vunpack.c.h.b16 %v1119
      %v1165 = vunpack.c.l.b16 %v1120
      %v1166 = vunpack.c.h.b16 %v1120
      %v1167 = vunpack.c.l.b16 %v1121
      %v1168 = vunpack.c.h.b16 %v1121
      %v1169 = vunpack.c.l.b16 %v1122
      %v1170 = vunpack.c.h.b16 %v1122
      %v1171 = vunpack.c.l.b16 %v1123
      %v1172 = vunpack.c.h.b16 %v1123
      %v1173 = vunpack.c.l.b16 %v1124
      %v1174 = vunpack.c.h.b16 %v1124
      %v1175 = vunpack.c.l.b16 %v1125
      %v1176 = vunpack.c.h.b16 %v1125
      %v1177 = vunpack.c.l.b16 %v1126
      %v1178 = vunpack.c.h.b16 %v1126
      %v1179 = vunpack.c.l.b16 %v1127
      %v1180 = vunpack.c.h.b16 %v1127
      %v1181 = vunpack.c.l.b16 %v1128
      %v1182 = vunpack.c.h.b16 %v1128
      %v1183 = vunpack.c.l.b16 %v1129
      %v1184 = vunpack.c.h.b16 %v1129
      %v1185 = vunpack.c.l.b16 %v1130
      %v1186 = vunpack.c.h.b16 %v1130
      %v1187 = vunpack.c.l.b16 %v1131
      %v1188 = vpack.c.b16 %v1151, %v1151
      %v1189 = vpack.c.b16 %v1152, %v1152
      %v1190 = vpack.c.b16 %v1153, %v1153
      %v1191 = vpack.c.b16 %v1154, %v1154
      %v1192 = vpack.c.b16 %v1155, %v1155
      %v1193 = vpack.c.b16 %v1156, %v1156
      %v1194 = vpack.c.b16 %v1157, %v1157
      %v1195 = vpack.c.b16 %v1158, %v1158
      %v1196 = vpack.c.b16 %v1159, %v1159
      %v1197 = vpack.c.b16 %v1160, %v1160
      %v1198 = vpack.c.b16 %v1161, %v1161
      %v1199 = vpack.c.b16 %v1162, %v1162
      %v1200 = vpack.c.b16 %v1163, %v1163
      %v1201 = vpack.c.b16 %v1164, %v1164
      %v1202 = vpack.c.b16 %v1165, %v1165
      %v1203 = vpack.c.b16 %v1166, %v1166
      %v1204 = vpack.c.b16 %v1167, %v1167
      %v1205 = vpack.c.b16 %v1168, %v1168
      %v1206 = vpack.c.b16 %v1169, %v1169
      %v1207 = vpack.c.b16 %v1170, %v1170
      %v1208 = vpack.c.b16 %v1171, %v1171
      %v1209 = vpack.c.b16 %v1172, %v1172
      %v1210 = vpack.c.b16 %v1173, %v1173
      %v1211 = vpack.c.b16 %v1174, %v1174
      %v1212 = vpack.c.b16 %v1175, %v1175
      %v1213 = vpack.c.b16 %v1176, %v1176
      %v1214 = vpack.c.b16 %v1177, %v1177
      %v1215 = vpack.c.b16 %v1178, %v1178
      %v1216 = vpack.c.b16 %v1179, %v1179
      %v1217 = vpack.c.b16 %v1180, %v1180
      %v1218 = vpack.c.b16 %v1181, %v1181
      %v1219 = vpack.c.b16 %v1182, %v1182
      %v1220 = vpack.c.b16 %v1183, %v1183
      %v1221 = vpack.c.b16 %v1184, %v1184
      %v1222 = vpack.c.b16 %v1185, %v1185
      %v1223 = vpack.c.b16 %v1186, %v1186
      %v1224 = vpack.c.b16 %v1187, %v1187
      %1262 = vst [vmem:[%s182] sm:$0xf] %v1188
      %1263 = vst [vmem:[%s182 + $0x4] sm:$0xf] %v1189
      %1264 = vst [vmem:[%s182 + $0x8] sm:$0xf] %v1190
      %1265 = vst [vmem:[%s182 + $0xc] sm:$0xf] %v1191
      %1266 = vst [vmem:[%s182 + $0x10] sm:$0xf] %v1192
      %1267 = vst [vmem:[%s182 + $0x14] sm:$0xf] %v1193
      %1268 = vst [vmem:[%s182 + $0x18] sm:$0xf] %v1194
      %1269 = vst [vmem:[%s182 + $0x1c] sm:$0xf] %v1195
      %1270 = vst [vmem:[%s182 + $0x20] sm:$0xf] %v1196
      %1271 = vst [vmem:[%s182 + $0x24] sm:$0xf] %v1197
      %1272 = vst [vmem:[%s182 + $0x28] sm:$0xf] %v1198
      %1273 = vst [vmem:[%s182 + $0x2c] sm:$0xf] %v1199
      %1274 = vst [vmem:[%s182 + $0x30] sm:$0xf] %v1200
      %1275 = vst [vmem:[%s182 + $0x34] sm:$0xf] %v1201
      %1276 = vst [vmem:[%s182 + $0x38] sm:$0xf] %v1202
      %1277 = vst [vmem:[%s182 + $0x3c] sm:$0xf] %v1203
      %1278 = vst [vmem:[%s182 + $0x40] sm:$0xf] %v1204
      %1279 = vst [vmem:[%s182 + $0x44] sm:$0xf] %v1205
      %1280 = vst [vmem:[%s182 + $0x48] sm:$0xf] %v1206
      %1281 = vst [vmem:[%s182 + $0x4c] sm:$0xf] %v1207
      %1282 = vst [vmem:[%s182 + $0x50] sm:$0xf] %v1208
      %1283 = vst [vmem:[%s182 + $0x54] sm:$0xf] %v1209
      %1284 = vst [vmem:[%s182 + $0x58] sm:$0xf] %v1210
      %1285 = vst [vmem:[%s182 + $0x5c] sm:$0xf] %v1211
      %1286 = vst [vmem:[%s182 + $0x60] sm:$0xf] %v1212
      %1287 = vst [vmem:[%s182 + $0x64] sm:$0xf] %v1213
      %1288 = vst [vmem:[%s182 + $0x68] sm:$0xf] %v1214
      %1289 = vst [vmem:[%s182 + $0x6c] sm:$0xf] %v1215
      %1290 = vst [vmem:[%s182 + $0x70] sm:$0xf] %v1216
      %1291 = vst [vmem:[%s182 + $0x74] sm:$0xf] %v1217
      %1292 = vst [vmem:[%s182 + $0x78] sm:$0xf] %v1218
      %1293 = vst [vmem:[%s182 + $0x7c] sm:$0xf] %v1219
      %1294 = vst [vmem:[%s182 + $0x80] sm:$0xf] %v1220
      %1295 = vst [vmem:[%s182 + $0x84] sm:$0xf] %v1221
      %1296 = vst [vmem:[%s182 + $0x88] sm:$0xf] %v1222
      %1297 = vst [vmem:[%s182 + $0x8c] sm:$0xf] %v1223
      %1298 = vst [vmem:[%s182 + $0x90] sm:$0xf] %v1224
      %v1299 = vadd.f32 %v964, %v967
      %v1300 = vadd.f32 %v1299, %v972
      %v1301 = vadd.f32 %v1300, %v975
      %v1302 = vadd.f32 %v1301, %v980
      %v1303 = vadd.f32 %v1302, %v983
      %v1304 = vadd.f32 %v1303, %v988
      %v1305 = vadd.f32 %v1304, %v991
      %v1306 = vadd.f32 %v1305, %v996
      %v1307 = vadd.f32 %v1306, %v999
      %v1308 = vadd.f32 %v1307, %v1004
      %v1309 = vadd.f32 %v1308, %v1007
      %v1310 = vadd.f32 %v1309, %v1012
      %v1311 = vadd.f32 %v1310, %v1015
      %v1312 = vadd.f32 %v1311, %v1020
      %v1313 = vadd.f32 %v1312, %v1023
      %v1314 = vadd.f32 %v1313, %v1028
      %v1315 = vadd.f32 %v1314, %v1031
      %v1316 = vadd.f32 %v1315, %v1036
      %v1317 = vadd.f32 %v1316, %v1039
      %v1318 = vadd.f32 %v1317, %v1044
      %v1319 = vadd.f32 %v1318, %v1047
      %v1320 = vadd.f32 %v1319, %v1052
      %v1321 = vadd.f32 %v1320, %v1055
      %v1322 = vadd.f32 %v1321, %v1060
      %v1323 = vadd.f32 %v1322, %v1063
      %v1324 = vadd.f32 %v1323, %v1068
      %v1325 = vadd.f32 %v1324, %v1071
      %v1326 = vadd.f32 %v1325, %v1076
      %v1327 = vadd.f32 %v1326, %v1079
      %v1328 = vadd.f32 %v1327, %v1084
      %v1329 = vadd.f32 %v1328, %v1087
      %v1330 = vadd.f32 %v1329, %v1092
      %v1331 = vadd.f32 %v1330, %v1095
      %v1332 = vadd.f32 %v1331, %v1100
      %v1333 = vadd.f32 %v1332, %v1103
      %v1334 = vadd.f32 %v1333, %v1108
      %v1335 = vrot.slane %v1334, 4
      %v1336 = vadd.f32 %v1334, %v1335
      %v1337 = vrot.slane %v1336, 2
      %v1338 = vadd.f32 %v1336, %v1337
      %v1339 = vrot.slane %v1338, 1
      %v1340 = vadd.f32 %v1338, %v1339
      %1341 = vst [vmem:[%s187] sm:$0x1] %v1340
      %v1342 = vmul.f32 %v964, %v964
      %v1343 = vmul.f32 %v967, %v967
      %v1344 = vmul.f32 %v972, %v972
      %v1345 = vmul.f32 %v975, %v975
      %v1346 = vmul.f32 %v980, %v980
      %v1347 = vmul.f32 %v983, %v983
      %v1348 = vmul.f32 %v988, %v988
      %v1349 = vmul.f32 %v991, %v991
      %v1350 = vmul.f32 %v996, %v996
      %v1351 = vmul.f32 %v999, %v999
      %v1352 = vmul.f32 %v1004, %v1004
      %v1353 = vmul.f32 %v1007, %v1007
      %v1354 = vmul.f32 %v1012, %v1012
      %v1355 = vmul.f32 %v1015, %v1015
      %v1356 = vmul.f32 %v1020, %v1020
      %v1357 = vmul.f32 %v1023, %v1023
      %v1358 = vmul.f32 %v1028, %v1028
      %v1359 = vmul.f32 %v1031, %v1031
      %v1360 = vmul.f32 %v1036, %v1036
      %v1361 = vmul.f32 %v1039, %v1039
      %v1362 = vmul.f32 %v1044, %v1044
      %v1363 = vmul.f32 %v1047, %v1047
      %v1364 = vmul.f32 %v1052, %v1052
      %v1365 = vmul.f32 %v1055, %v1055
      %v1366 = vmul.f32 %v1060, %v1060
      %v1367 = vmul.f32 %v1063, %v1063
      %v1368 = vmul.f32 %v1068, %v1068
      %v1369 = vmul.f32 %v1071, %v1071
      %v1370 = vmul.f32 %v1076, %v1076
      %v1371 = vmul.f32 %v1079, %v1079
      %v1372 = vmul.f32 %v1084, %v1084
      %v1373 = vmul.f32 %v1087, %v1087
      %v1374 = vmul.f32 %v1092, %v1092
      %v1375 = vmul.f32 %v1095, %v1095
      %v1376 = vmul.f32 %v1100, %v1100
      %v1377 = vmul.f32 %v1103, %v1103
      %v1378 = vmul.f32 %v1108, %v1108
      %v1379 = vadd.f32 %v1342, %v1343
      %v1380 = vadd.f32 %v1379, %v1344
      %v1381 = vadd.f32 %v1380, %v1345
      %v1382 = vadd.f32 %v1381, %v1346
      %v1383 = vadd.f32 %v1382, %v1347
      %v1384 = vadd.f32 %v1383, %v1348
      %v1385 = vadd.f32 %v1384, %v1349
      %v1386 = vadd.f32 %v1385, %v1350
      %v1387 = vadd.f32 %v1386, %v1351
      %v1388 = vadd.f32 %v1387, %v1352
      %v1389 = vadd.f32 %v1388, %v1353
      %v1390 = vadd.f32 %v1389, %v1354
      %v1391 = vadd.f32 %v1390, %v1355
      %v1392 = vadd.f32 %v1391, %v1356
      %v1393 = vadd.f32 %v1392, %v1357
      %v1394 = vadd.f32 %v1393, %v1358
      %v1395 = vadd.f32 %v1394, %v1359
      %v1396 = vadd.f32 %v1395, %v1360
      %v1397 = vadd.f32 %v1396, %v1361
      %v1398 = vadd.f32 %v1397, %v1362
      %v1399 = vadd.f32 %v1398, %v1363
      %v1400 = vadd.f32 %v1399, %v1364
      %v1401 = vadd.f32 %v1400, %v1365
      %v1402 = vadd.f32 %v1401, %v1366
      %v1403 = vadd.f32 %v1402, %v1367
      %v1404 = vadd.f32 %v1403, %v1368
      %v1405 = vadd.f32 %v1404, %v1369
      %v1406 = vadd.f32 %v1405, %v1370
      %v1407 = vadd.f32 %v1406, %v1371
      %v1408 = vadd.f32 %v1407, %v1372
      %v1409 = vadd.f32 %v1408, %v1373
      %v1410 = vadd.f32 %v1409, %v1374
      %v1411 = vadd.f32 %v1410, %v1375
      %v1412 = vadd.f32 %v1411, %v1376
      %v1413 = vadd.f32 %v1412, %v1377
      %v1414 = vadd.f32 %v1413, %v1378
      %v1415 = vrot.slane %v1414, 4
      %v1416 = vadd.f32 %v1414, %v1415
      %v1417 = vrot.slane %v1416, 2
      %v1418 = vadd.f32 %v1416, %v1417
      %v1419 = vrot.slane %v1418, 1
      %v1420 = vadd.f32 %v1418, %v1419
      %1421 = vst [vmem:[%s187 + $0x1] sm:$0x1] %v1420
      %s1422 = smul.u32 37, %s15
      %p1423 = scmp.lt.s32.totalorder %s1422, 73
      %s1424 = scalar_select %p1423, %s1422, 73
      %s1425 = smul.addr %s1424, 4
      %s1426 = scalar_lea.vmem %s2, %s1425
      %p1427 = scmp.lt.s32.totalorder %s15, 1
      %s1428 = scalar_select %p1427, %s15, 1
      %s1429 = smul.addr %s1428, 2
      %s1430 = scalar_lea.vmem %s3, %s1429
      // Predicated region
      $region29: #{stem_forward.12} parent=27 // pred_check
        %p1431 = pneg %p80
      $region30: #{stem_forward.12} parent=27 // pred_check_branch
        %1433 = sbr.rel (%p1431) target = $region32
      $region31: #{stem_forward.12} parent=27 // pred_region
        %s1434 = smul.u32 37, %s15
      $region32: #{stem_forward.12} parent=27 // pred_fallthru
        _
      // Predicated region
      $region33: #{stem_forward.12} parent=27 // pred_check
        %p1435 = pneg %p106
      $region34: #{stem_forward.12} parent=27 // pred_check_branch
        %1437 = sbr.rel (%p1435) target = $region36
      $region35: #{stem_forward.12} parent=27 // pred_region
        _
      $region36: #{stem_forward.12} parent=27 // pred_fallthru
        _
    $region28: #{stem_forward.12} parent=5 // pred_fallthru
      _
    %p1438 = scmp.le.s32.totalorder 2, %s10
    // Predicated region
    $region37: #{stem_forward.12} parent=5 // pred_check
      %p1439 = pneg %p1438
    $region38: #{stem_forward.12} parent=5 // pred_check_branch
      %1441 = sbr.rel (%p1439) target = $region40
    $region39: #{stem_forward.12} parent=5 // pred_region
      %s1442 = ssub.s32 %s10, 2
      // Predicated region
      $region41: #{stem_forward.12} parent=39 // pred_check
        %p1443 = pneg %p86
      $region42: #{stem_forward.12} parent=39 // pred_check_branch
        %1445 = sbr.rel (%p1443) target = $region44
      $region43: #{stem_forward.12} parent=39 // pred_region
        %s1446 = smul.u32 37, %s16
        %p1447 = scmp.lt.s32.totalorder %s1446, 73
        %s1448 = scalar_select %p1447, %s1446, 73
        %s1449 = smul.addr %s1448, 4
        %s1450 = scalar_lea.vmem %s2, %s1449
      $region44: #{stem_forward.12} parent=39 // pred_fallthru
        _
      // Predicated region
      $region45: #{stem_forward.12} parent=39 // pred_check
        %p1451 = pneg %p112
      $region46: #{stem_forward.12} parent=39 // pred_check_branch
        %1453 = sbr.rel (%p1451) target = $region48
      $region47: #{stem_forward.12} parent=39 // pred_region
        %p1454 = scmp.lt.s32.totalorder %s16, 1
        %s1455 = scalar_select %p1454, %s16, 1
        %s1456 = smul.addr %s1455, 2
        %s1457 = scalar_lea.vmem %s3, %s1456
      $region48: #{stem_forward.12} parent=39 // pred_fallthru
        _
    $region40: #{stem_forward.12} parent=5 // pred_fallthru
      _
  $region6: #{stem_forward.12} parent=0 // loop_footer
    %s14 = sadd.s32 1, %s10
  $region7: #{stem_forward.12} parent=0 // loop_footer_branch
    %9 = sbr.rel target = $region3
  $region8: #{stem_forward.12} parent=0 // loop_exit
    _

// kernel: stem_forward.16
$region0: #{stem_forward.16}
  #allocation0 [shape = 'u32[]', space=smem, size = 0x4, offset = 0x4, fixed_abs, tag = 'smem constant byte address 0x4 - core index']
  #allocation1 [shape = 'u32[144,128]{1,0:T(1,128)}', space=vmem, size = 0x12000, scoped, tag = 'internal scratch']
  %s0 = inlined_call_operand.vmem [shape: bf16[2,9,9,128], index: 0, kind: input, shape index: {}]
  %s1 = inlined_call_operand.vmem [shape: bf16[2,9,8,128], index: 1, kind: input, shape index: {}]
  %s2 = inlined_call_operand.vmem [shape: bf16[2,8,9,128], index: 2, kind: input, shape index: {}]
  %s3 = inlined_call_operand.vmem [shape: bf16[2,8,8,128], index: 3, kind: input, shape index: {}]
  %s4 = inlined_call_operand.vmem [shape: bf16[2,8,8,128], index: 4, kind: output, shape index: {}]
  %s5 = sld [smem:[#allocation0]]
  $region49: #{stem_forward.16} parent=0
    _
  %s7 = ssub.s32 1, %s5
  %s8 = scalar_select 0, %s7, %s5
  loop: start=0, step=1, limit=4
  $region2: #{stem_forward.16} parent=0 // loop_pre_header
    _
  $region3: #{stem_forward.16} parent=0 // loop_header
    %s10 = sphi 0, %s14
    %p11 = scmp.ge.s32.totalorder %s10, 4
    %s20 = sphi 0, %s22
    %s23 = sphi 0, %s20
    %s24 = sphi 0, %s23
    %s40 = sphi 0, %s24
    %s46 = sphi 0, %s48
    %s49 = sphi 0, %s46
    %s50 = sphi 0, %s49
    %s66 = sphi 0, %s50
    %s72 = sphi 0, %s74
    %s75 = sphi 0, %s72
    %s76 = sphi 0, %s75
    %s92 = sphi 0, %s76
    %s98 = sphi 0, %s100
    %s101 = sphi 0, %s98
    %s102 = sphi 0, %s101
    %s118 = sphi 0, %s102
    %s124 = sphi 0, %s126
    %s127 = sphi 0, %s124
    %s128 = sphi 0, %s127
    %s144 = sphi 0, %s128
  $region4: #{stem_forward.16} parent=0 // loop_header_branch
    %13 = sbr.rel (%p11) target = $region8
  $region5: #{stem_forward.16} parent=0 // loop_body
    %s15 = ssub.s32 %s10, 1
    %s16 = ssub.s32 %s10, 2
    %s17 = sadd.s32 %s10, 1
    %s18 = ssub.s32 %s10, %s17
    %p19 = scmp.eq.s32.totalorder %s18, 0
    %s21 = sadd.s32 %s20, 1
    %s22 = scalar_select %p19, %s20, %s21
    %p25 = pneg %p19
    %p26 = scmp.eq.s32.totalorder %s10, 1
    %p27 = por %p25, %p26
    %p28 = scmp.ne.s32.totalorder %s20, %s23
    %p29 = scmp.eq.s32.totalorder %s10, 0
    %p30 = por %p28, %p29
    %p31 = scmp.ne.s32.totalorder %s20, %s23
    %p32 = scmp.eq.s32.totalorder %s15, 1
    %p33 = por %p31, %p32
    %p34 = scmp.ne.s32.totalorder %s23, %s24
    %p35 = scmp.eq.s32.totalorder %s15, 0
    %p36 = por %p34, %p35
    %p37 = scmp.ne.s32.totalorder %s23, %s24
    %p38 = scmp.eq.s32.totalorder %s16, 1
    %p39 = por %p37, %p38
    %p41 = scmp.ne.s32.totalorder %s24, %s40
    %p42 = scmp.eq.s32.totalorder %s16, 0
    %p43 = por %p41, %p42
    %s44 = ssub.s32 %s10, %s17
    %p45 = scmp.eq.s32.totalorder %s44, 0
    %s47 = sadd.s32 %s46, 1
    %s48 = scalar_select %p45, %s46, %s47
    %p51 = pneg %p45
    %p52 = scmp.eq.s32.totalorder %s10, 1
    %p53 = por %p51, %p52
    %p54 = scmp.ne.s32.totalorder %s46, %s49
    %p55 = scmp.eq.s32.totalorder %s10, 0
    %p56 = por %p54, %p55
    %p57 = scmp.ne.s32.totalorder %s46, %s49
    %p58 = scmp.eq.s32.totalorder %s15, 1
    %p59 = por %p57, %p58
    %p60 = scmp.ne.s32.totalorder %s49, %s50
    %p61 = scmp.eq.s32.totalorder %s15, 0
    %p62 = por %p60, %p61
    %p63 = scmp.ne.s32.totalorder %s49, %s50
    %p64 = scmp.eq.s32.totalorder %s16, 1
    %p65 = por %p63, %p64
    %p67 = scmp.ne.s32.totalorder %s50, %s66
    %p68 = scmp.eq.s32.totalorder %s16, 0
    %p69 = por %p67, %p68
    %s70 = ssub.s32 %s10, %s17
    %p71 = scmp.eq.s32.totalorder %s70, 0
    %s73 = sadd.s32 %s72, 1
    %s74 = scalar_select %p71, %s72, %s73
    %p77 = pneg %p71
    %p78 = scmp.eq.s32.totalorder %s10, 1
    %p79 = por %p77, %p78
    %p80 = scmp.ne.s32.totalorder %s72, %s75
    %p81 = scmp.eq.s32.totalorder %s10, 0
    %p82 = por %p80, %p81
    %p83 = scmp.ne.s32.totalorder %s72, %s75
    %p84 = scmp.eq.s32.totalorder %s15, 1
    %p85 = por %p83, %p84
    %p86 = scmp.ne.s32.totalorder %s75, %s76
    %p87 = scmp.eq.s32.totalorder %s15, 0
    %p88 = por %p86, %p87
    %p89 = scmp.ne.s32.totalorder %s75, %s76
    %p90 = scmp.eq.s32.totalorder %s16, 1
    %p91 = por %p89, %p90
    %p93 = scmp.ne.s32.totalorder %s76, %s92
    %p94 = scmp.eq.s32.totalorder %s16, 0
    %p95 = por %p93, %p94
    %s96 = ssub.s32 %s10, %s17
    %p97 = scmp.eq.s32.totalorder %s96, 0
    %s99 = sadd.s32 %s98, 1
    %s100 = scalar_select %p97, %s98, %s99
    %p103 = pneg %p97
    %p104 = scmp.eq.s32.totalorder %s10, 1
    %p105 = por %p103, %p104
    %p106 = scmp.ne.s32.totalorder %s98, %s101
    %p107 = scmp.eq.s32.totalorder %s10, 0
    %p108 = por %p106, %p107
    %p109 = scmp.ne.s32.totalorder %s98, %s101
    %p110 = scmp.eq.s32.totalorder %s15, 1
    %p111 = por %p109, %p110
    %p112 = scmp.ne.s32.totalorder %s101, %s102
    %p113 = scmp.eq.s32.totalorder %s15, 0
    %p114 = por %p112, %p113
    %p115 = scmp.ne.s32.totalorder %s101, %s102
    %p116 = scmp.eq.s32.totalorder %s16, 1
    %p117 = por %p115, %p116
    %p119 = scmp.ne.s32.totalorder %s102, %s118
    %p120 = scmp.eq.s32.totalorder %s16, 0
    %p121 = por %p119, %p120
    %s122 = ssub.s32 %s10, %s17
    %p123 = scmp.eq.s32.totalorder %s122, 0
    %s125 = sadd.s32 %s124, 1
    %s126 = scalar_select %p123, %s124, %s125
    %p129 = pneg %p123
    %p130 = scmp.eq.s32.totalorder %s10, 1
    %p131 = por %p129, %p130
    %p132 = scmp.ne.s32.totalorder %s124, %s127
    %p133 = scmp.eq.s32.totalorder %s10, 0
    %p134 = por %p132, %p133
    %p135 = scmp.ne.s32.totalorder %s124, %s127
    %p136 = scmp.eq.s32.totalorder %s15, 1
    %p137 = por %p135, %p136
    %p138 = scmp.ne.s32.totalorder %s127, %s128
    %p139 = scmp.eq.s32.totalorder %s15, 0
    %p140 = por %p138, %p139
    %p141 = scmp.ne.s32.totalorder %s127, %s128
    %p142 = scmp.eq.s32.totalorder %s16, 1
    %p143 = por %p141, %p142
    %p145 = scmp.ne.s32.totalorder %s128, %s144
    %p146 = scmp.eq.s32.totalorder %s16, 0
    %p147 = por %p145, %p146
    %p148 = scmp.le.s32.totalorder 1, %s10
    %p149 = scmp.lt.s32.totalorder %s10, 3
    %p150 = pnand %p148, %p149
    %p151 = pneg %p150
    // Predicated region
    $region9: #{stem_forward.16} parent=5 // pred_check
      _
    $region10: #{stem_forward.16} parent=5 // pred_check_branch
      %153 = sbr.rel (%p150) target = $region12
    $region11: #{stem_forward.16} parent=5 // pred_region
      %s154 = ssub.s32 %s10, 1
    $region12: #{stem_forward.16} parent=5 // pred_fallthru
      _
    %p155 = scmp.lt.s32.totalorder %s10, 2
    // Predicated region
    $region13: #{stem_forward.16} parent=5 // pred_check
      %p156 = pneg %p155
    $region14: #{stem_forward.16} parent=5 // pred_check_branch
      %158 = sbr.rel (%p156) target = $region16
    $region15: #{stem_forward.16} parent=5 // pred_region
      // Predicated region
      $region17: #{stem_forward.16} parent=15 // pred_check
        %p159 = pneg %p30
      $region18: #{stem_forward.16} parent=15 // pred_check_branch
        %161 = sbr.rel (%p159) target = $region20
      $region19: #{stem_forward.16} parent=15 // pred_region
        %p162 = scmp.lt.s32.totalorder %s10, 1
        %s163 = scalar_select %p162, %s10, 1
        %s164 = smul.addr %s163, 18
        %s165 = smul.addr %s164, 4
        %s166 = scalar_lea.vmem %s0, %s165
      $region20: #{stem_forward.16} parent=15 // pred_fallthru
        _
      // Predicated region
      $region21: #{stem_forward.16} parent=15 // pred_check
        %p167 = pneg %p56
      $region22: #{stem_forward.16} parent=15 // pred_check_branch
        %169 = sbr.rel (%p167) target = $region24
      $region23: #{stem_forward.16} parent=15 // pred_region
        %p170 = scmp.lt.s32.totalorder %s10, 1
        %s171 = scalar_select %p170, %s10, 1
        %s172 = smul.addr %s171, 9
        %s173 = smul.addr %s172, 4
        %s174 = scalar_lea.vmem %s1, %s173
      $region24: #{stem_forward.16} parent=15 // pred_fallthru
        _
      // Predicated region
      $region25: #{stem_forward.16} parent=15 // pred_check
        %p175 = pneg %p82
      $region26: #{stem_forward.16} parent=15 // pred_check_branch
        %177 = sbr.rel (%p175) target = $region28
      $region27: #{stem_forward.16} parent=15 // pred_region
        %p178 = scmp.lt.s32.totalorder %s10, 1
        %s179 = scalar_select %p178, %s10, 1
        %s180 = smul.addr %s179, 16
        %s181 = smul.addr %s180, 4
        %s182 = scalar_lea.vmem %s2, %s181
      $region28: #{stem_forward.16} parent=15 // pred_fallthru
        _
      // Predicated region
      $region29: #{stem_forward.16} parent=15 // pred_check
        %p183 = pneg %p108
      $region30: #{stem_forward.16} parent=15 // pred_check_branch
        %185 = sbr.rel (%p183) target = $region32
      $region31: #{stem_forward.16} parent=15 // pred_region
        %p186 = scmp.lt.s32.totalorder %s10, 1
        %s187 = scalar_select %p186, %s10, 1
        %s188 = smul.addr %s187, 8
        %s189 = smul.addr %s188, 4
        %s190 = scalar_lea.vmem %s3, %s189
      $region32: #{stem_forward.16} parent=15 // pred_fallthru
        _
    $region16: #{stem_forward.16} parent=5 // pred_fallthru
      _
    %p191 = scmp.le.s32.totalorder 1, %s10
    %p192 = scmp.lt.s32.totalorder %s10, 3
    %p193 = pnand %p191, %p192
    %p194 = pneg %p193
    // Predicated region
    $region33: #{stem_forward.16} parent=5 // pred_check
      _
    $region34: #{stem_forward.16} parent=5 // pred_check_branch
      %196 = sbr.rel (%p193) target = $region36
    $region35: #{stem_forward.16} parent=5 // pred_region
      %s197 = ssub.s32 %s10, 1
      %p198 = scmp.lt.s32.totalorder %s15, 1
      %s199 = scalar_select %p198, %s15, 1
      %s200 = smul.addr %s199, 18
      %s201 = smul.addr %s200, 4
      %s202 = scalar_lea.vmem %s0, %s201
      %p203 = pneg %p36
      %p204 = pneg %p33
      %p205 = scmp.lt.s32.totalorder %s15, 1
      %s206 = scalar_select %p205, %s15, 1
      %s207 = smul.addr %s206, 9
      %s208 = smul.addr %s207, 4
      %s209 = scalar_lea.vmem %s1, %s208
      %p210 = pneg %p62
      %p211 = pneg %p59
      %p212 = scmp.lt.s32.totalorder %s15, 1
      %s213 = scalar_select %p212, %s15, 1
      %s214 = smul.addr %s213, 16
      %s215 = smul.addr %s214, 4
      %s216 = scalar_lea.vmem %s2, %s215
      %p217 = pneg %p88
      %p218 = pneg %p85
      %p219 = scmp.lt.s32.totalorder %s15, 1
      %s220 = scalar_select %p219, %s15, 1
      %s221 = smul.addr %s220, 8
      %s222 = smul.addr %s221, 4
      %s223 = scalar_lea.vmem %s3, %s222
      %p224 = pneg %p114
      %p225 = pneg %p111
      %p226 = pneg %p140
      %p227 = pneg %p137
      %p228 = scmp.lt.s32.totalorder %s15, 1
      %s229 = scalar_select %p228, %s15, 1
      %s230 = smul.addr %s229, 8
      %s231 = smul.addr %s230, 4
      %s232 = scalar_lea.vmem %s4, %s231
      %p233 = scmp.lt.s32.totalorder %s15, 1
      %s234 = scalar_select %p233, %s15, 1
      %s235 = smul.addr %s234, 18
      %s236 = smul.addr %s235, 4
      %s237 = scalar_lea.vmem %s0, %s236
      %p238 = scmp.lt.s32.totalorder %s15, 1
      %s239 = scalar_select %p238, %s15, 1
      %s240 = smul.addr %s239, 9
      %s241 = smul.addr %s240, 4
      %s242 = scalar_lea.vmem %s1, %s241
      %p243 = scmp.lt.s32.totalorder %s15, 1
      %s244 = scalar_select %p243, %s15, 1
      %s245 = smul.addr %s244, 16
      %s246 = smul.addr %s245, 4
      %s247 = scalar_lea.vmem %s2, %s246
      %p248 = scmp.lt.s32.totalorder %s15, 1
      %s249 = scalar_select %p248, %s15, 1
      %s250 = smul.addr %s249, 8
      %s251 = smul.addr %s250, 4
      %s252 = scalar_lea.vmem %s3, %s251
      %p253 = scmp.lt.s32.totalorder %s15, 1
      %s254 = scalar_select %p253, %s15, 1
      %s255 = smul.addr %s254, 8
      %s256 = smul.addr %s255, 4
      %s257 = scalar_lea.vmem %s4, %s256
      %v258 = vld [vmem:[%s252] sm:$0xf]
      %v259 = vld [vmem:[%s252 + $0x4] sm:$0xf]
      %v260 = vld [vmem:[%s252 + $0x8] sm:$0xf]
      %v261 = vld [vmem:[%s252 + $0xc] sm:$0xf]
      %v262 = vld [vmem:[%s252 + $0x10] sm:$0xf]
      %v263 = vld [vmem:[%s252 + $0x14] sm:$0xf]
      %v264 = vld [vmem:[%s252 + $0x18] sm:$0xf]
      %v265 = vld [vmem:[%s252 + $0x1c] sm:$0xf]
      %v266 = vld [vmem:[%s237] sm:$0xf]
      %v267 = vld [vmem:[%s237 + $0x8] sm:$0xf]
      %v268 = vld [vmem:[%s237 + $0x10] sm:$0xf]
      %v269 = vld [vmem:[%s237 + $0x18] sm:$0xf]
      %v270 = vld [vmem:[%s237 + $0x20] sm:$0xf]
      %v271 = vld [vmem:[%s237 + $0x28] sm:$0xf]
      %v272 = vld [vmem:[%s237 + $0x30] sm:$0xf]
      %v273 = vld [vmem:[%s237 + $0x38] sm:$0xf]
      %v274 = vmax.bf16 %v258, %v266
      %v275 = vmax.bf16 %v259, %v267
      %v276 = vmax.bf16 %v260, %v268
      %v277 = vmax.bf16 %v261, %v269
      %v278 = vmax.bf16 %v262, %v270
      %v279 = vmax.bf16 %v263, %v271
      %v280 = vmax.bf16 %v264, %v272
      %v281 = vmax.bf16 %v265, %v273
      %v282 = vld [vmem:[%s237 + $0x4] sm:$0x1]
      %v283 = vld [vmem:[%s237 + $0xc] sm:$0x1]
      %v284 = vld [vmem:[%s237 + $0x14] sm:$0x1]
      %v285 = vld [vmem:[%s237 + $0x1c] sm:$0x1]
      %v286 = vld [vmem:[%s237 + $0x24] sm:$0x1]
      %v287 = vld [vmem:[%s237 + $0x2c] sm:$0x1]
      %v288 = vld [vmem:[%s237 + $0x34] sm:$0x1]
      %v289 = vld [vmem:[%s237 + $0x3c] sm:$0x1]
      %vm290 = vsmask.f32 3328
      %vm291 = vsmask.f32 7440
      %vm292 = vmor %vm290, %vm291
      %v294 = vshrl.u32 %v266, 16
      %v296 = vrot.slane %v294, 4
      %v297 = vshll.u32 %v266, 16
      %v299 = vrot.slane %v297, 5
      %v300 = vor.u32 %v296, %v299
      %v301 = vrot.slane %v300, 4
      %v303 = vshll.u32 %v282, 16
      %v305 = vrot.slane %v303, 5
      %v306 = vsel %vm292, %v301, %v305
      %v308 = vshrl.u32 %v267, 16
      %v310 = vrot.slane %v308, 4
      %v311 = vshll.u32 %v267, 16
      %v313 = vrot.slane %v311, 5
      %v314 = vor.u32 %v310, %v313
      %v315 = vrot.slane %v314, 4
      %v317 = vshll.u32 %v283, 16
      %v319 = vrot.slane %v317, 5
      %v320 = vsel %vm292, %v315, %v319
      %v322 = vshrl.u32 %v268, 16
      %v324 = vrot.slane %v322, 4
      %v325 = vshll.u32 %v268, 16
      %v327 = vrot.slane %v325, 5
      %v328 = vor.u32 %v324, %v327
      %v329 = vrot.slane %v328, 4
      %v331 = vshll.u32 %v284, 16
      %v333 = vrot.slane %v331, 5
      %v334 = vsel %vm292, %v329, %v333
      %v336 = vshrl.u32 %v269, 16
      %v338 = vrot.slane %v336, 4
      %v339 = vshll.u32 %v269, 16
      %v341 = vrot.slane %v339, 5
      %v342 = vor.u32 %v338, %v341
      %v343 = vrot.slane %v342, 4
      %v345 = vshll.u32 %v285, 16
      %v347 = vrot.slane %v345, 5
      %v348 = vsel %vm292, %v343, %v347
      %v350 = vshrl.u32 %v270, 16
      %v352 = vrot.slane %v350, 4
      %v353 = vshll.u32 %v270, 16
      %v355 = vrot.slane %v353, 5
      %v356 = vor.u32 %v352, %v355
      %v357 = vrot.slane %v356, 4
      %v359 = vshll.u32 %v286, 16
      %v361 = vrot.slane %v359, 5
      %v362 = vsel %vm292, %v357, %v361
      %v364 = vshrl.u32 %v271, 16
      %v366 = vrot.slane %v364, 4
      %v367 = vshll.u32 %v271, 16
      %v369 = vrot.slane %v367, 5
      %v370 = vor.u32 %v366, %v369
      %v371 = vrot.slane %v370, 4
      %v373 = vshll.u32 %v287, 16
      %v375 = vrot.slane %v373, 5
      %v376 = vsel %vm292, %v371, %v375
      %v378 = vshrl.u32 %v272, 16
      %v380 = vrot.slane %v378, 4
      %v381 = vshll.u32 %v272, 16
      %v383 = vrot.slane %v381, 5
      %v384 = vor.u32 %v380, %v383
      %v385 = vrot.slane %v384, 4
      %v387 = vshll.u32 %v288, 16
      %v389 = vrot.slane %v387, 5
      %v390 = vsel %vm292, %v385, %v389
      %v392 = vshrl.u32 %v273, 16
      %v394 = vrot.slane %v392, 4
      %v395 = vshll.u32 %v273, 16
      %v397 = vrot.slane %v395, 5
      %v398 = vor.u32 %v394, %v397
      %v399 = vrot.slane %v398, 4
      %v401 = vshll.u32 %v289, 16
      %v403 = vrot.slane %v401, 5
      %v404 = vsel %vm292, %v399, %v403
      %v413 = vmax.bf16 %v274, %v306
      %v414 = vmax.bf16 %v275, %v320
      %v415 = vmax.bf16 %v276, %v334
      %v416 = vmax.bf16 %v277, %v348
      %v417 = vmax.bf16 %v278, %v362
      %v418 = vmax.bf16 %v279, %v376
      %v419 = vmax.bf16 %v280, %v390
      %v420 = vmax.bf16 %v281, %v404
      %s421 = scalar_lea.vmem %s237, 8
      %v422 = vld [vmem:[%s421] sm:$0xf]
      %v423 = vld [vmem:[%s421 + $0x8] sm:$0xf]
      %v424 = vld [vmem:[%s421 + $0x10] sm:$0xf]
      %v425 = vld [vmem:[%s421 + $0x18] sm:$0xf]
      %v426 = vld [vmem:[%s421 + $0x20] sm:$0xf]
      %v427 = vld [vmem:[%s421 + $0x28] sm:$0xf]
      %v428 = vld [vmem:[%s421 + $0x30] sm:$0xf]
      %v429 = vld [vmem:[%s421 + $0x38] sm:$0xf]
      %v430 = vmax.bf16 %v413, %v422
      %v431 = vmax.bf16 %v414, %v423
      %v432 = vmax.bf16 %v415, %v424
      %v433 = vmax.bf16 %v416, %v425
      %v434 = vmax.bf16 %v417, %v426
      %v435 = vmax.bf16 %v418, %v427
      %v436 = vmax.bf16 %v419, %v428
      %v437 = vmax.bf16 %v420, %v429
      %v438 = vld [vmem:[%s421 + $0x4] sm:$0x1]
      %v439 = vld [vmem:[%s421 + $0xc] sm:$0x1]
      %v440 = vld [vmem:[%s421 + $0x14] sm:$0x1]
      %v441 = vld [vmem:[%s421 + $0x1c] sm:$0x1]
      %v442 = vld [vmem:[%s421 + $0x24] sm:$0x1]
      %v443 = vld [vmem:[%s421 + $0x2c] sm:$0x1]
      %v444 = vld [vmem:[%s421 + $0x34] sm:$0x1]
      %v445 = vld [vmem:[%s421 + $0x3c] sm:$0x1]
      %v447 = vshrl.u32 %v422, 16
      %v449 = vrot.slane %v447, 4
      %v450 = vshll.u32 %v422, 16
      %v452 = vrot.slane %v450, 5
      %v453 = vor.u32 %v449, %v452
      %v454 = vrot.slane %v453, 4
      %v456 = vshll.u32 %v438, 16
      %v458 = vrot.slane %v456, 5
      %v459 = vsel %vm292, %v454, %v458
      %v461 = vshrl.u32 %v423, 16
      %v463 = vrot.slane %v461, 4
      %v464 = vshll.u32 %v423, 16
      %v466 = vrot.slane %v464, 5
      %v467 = vor.u32 %v463, %v466
      %v468 = vrot.slane %v467, 4
      %v470 = vshll.u32 %v439, 16
      %v472 = vrot.slane %v470, 5
      %v473 = vsel %vm292, %v468, %v472
      %v475 = vshrl.u32 %v424, 16
      %v477 = vrot.slane %v475, 4
      %v478 = vshll.u32 %v424, 16
      %v480 = vrot.slane %v478, 5
      %v481 = vor.u32 %v477, %v480
      %v482 = vrot.slane %v481, 4
      %v484 = vshll.u32 %v440, 16
      %v486 = vrot.slane %v484, 5
      %v487 = vsel %vm292, %v482, %v486
      %v489 = vshrl.u32 %v425, 16
      %v491 = vrot.slane %v489, 4
      %v492 = vshll.u32 %v425, 16
      %v494 = vrot.slane %v492, 5
      %v495 = vor.u32 %v491, %v494
      %v496 = vrot.slane %v495, 4
      %v498 = vshll.u32 %v441, 16
      %v500 = vrot.slane %v498, 5
      %v501 = vsel %vm292, %v496, %v500
      %v503 = vshrl.u32 %v426, 16
      %v505 = vrot.slane %v503, 4
      %v506 = vshll.u32 %v426, 16
      %v508 = vrot.slane %v506, 5
      %v509 = vor.u32 %v505, %v508
      %v510 = vrot.slane %v509, 4
      %v512 = vshll.u32 %v442, 16
      %v514 = vrot.slane %v512, 5
      %v515 = vsel %vm292, %v510, %v514
      %v517 = vshrl.u32 %v427, 16
      %v519 = vrot.slane %v517, 4
      %v520 = vshll.u32 %v427, 16
      %v522 = vrot.slane %v520, 5
      %v523 = vor.u32 %v519, %v522
      %v524 = vrot.slane %v523, 4
      %v526 = vshll.u32 %v443, 16
      %v528 = vrot.slane %v526, 5
      %v529 = vsel %vm292, %v524, %v528
      %v531 = vshrl.u32 %v428, 16
      %v533 = vrot.slane %v531, 4
      %v534 = vshll.u32 %v428, 16
      %v536 = vrot.slane %v534, 5
      %v537 = vor.u32 %v533, %v536
      %v538 = vrot.slane %v537, 4
      %v540 = vshll.u32 %v444, 16
      %v542 = vrot.slane %v540, 5
      %v543 = vsel %vm292, %v538, %v542
      %v545 = vshrl.u32 %v429, 16
      %v547 = vrot.slane %v545, 4
      %v548 = vshll.u32 %v429, 16
      %v550 = vrot.slane %v548, 5
      %v551 = vor.u32 %v547, %v550
      %v552 = vrot.slane %v551, 4
      %v554 = vshll.u32 %v445, 16
      %v556 = vrot.slane %v554, 5
      %v557 = vsel %vm292, %v552, %v556
      %v566 = vmax.bf16 %v430, %v459
      %v567 = vmax.bf16 %v431, %v473
      %v568 = vmax.bf16 %v432, %v487
      %v569 = vmax.bf16 %v433, %v501
      %v570 = vmax.bf16 %v434, %v515
      %v571 = vmax.bf16 %v435, %v529
      %v572 = vmax.bf16 %v436, %v543
      %v573 = vmax.bf16 %v437, %v557
      %v574 = vld [vmem:[%s242] sm:$0xf]
      %v575 = vld [vmem:[%s242 + $0x4] sm:$0xf]
      %v576 = vld [vmem:[%s242 + $0x8] sm:$0xf]
      %v577 = vld [vmem:[%s242 + $0xc] sm:$0xf]
      %v578 = vld [vmem:[%s242 + $0x10] sm:$0xf]
      %v579 = vld [vmem:[%s242 + $0x14] sm:$0xf]
      %v580 = vld [vmem:[%s242 + $0x18] sm:$0xf]
      %v581 = vld [vmem:[%s242 + $0x1c] sm:$0xf]
      %v582 = vmax.bf16 %v566, %v574
      %v583 = vmax.bf16 %v567, %v575
      %v584 = vmax.bf16 %v568, %v576
      %v585 = vmax.bf16 %v569, %v577
      %v586 = vmax.bf16 %v570, %v578
      %v587 = vmax.bf16 %v571, %v579
      %v588 = vmax.bf16 %v572, %v580
      %v589 = vmax.bf16 %v573, %v581
      %s590 = scalar_lea.vmem %s242, 4
      %v591 = vld [vmem:[%s590] sm:$0xf]
      %v592 = vld [vmem:[%s590 + $0x4] sm:$0xf]
      %v593 = vld [vmem:[%s590 + $0x8] sm:$0xf]
      %v594 = vld [vmem:[%s590 + $0xc] sm:$0xf]
      %v595 = vld [vmem:[%s590 + $0x10] sm:$0xf]
      %v596 = vld [vmem:[%s590 + $0x14] sm:$0xf]
      %v597 = vld [vmem:[%s590 + $0x18] sm:$0xf]
      %v598 = vld [vmem:[%s590 + $0x1c] sm:$0xf]
      %v599 = vmax.bf16 %v582, %v591
      %v600 = vmax.bf16 %v583, %v592
      %v601 = vmax.bf16 %v584, %v593
      %v602 = vmax.bf16 %v585, %v594
      %v603 = vmax.bf16 %v586, %v595
      %v604 = vmax.bf16 %v587, %v596
      %v605 = vmax.bf16 %v588, %v597
      %v606 = vmax.bf16 %v589, %v598
      %v607 = vld [vmem:[%s247] sm:$0xf]
      %v608 = vld [vmem:[%s247 + $0x8] sm:$0xf]
      %v609 = vld [vmem:[%s247 + $0x10] sm:$0xf]
      %v610 = vld [vmem:[%s247 + $0x18] sm:$0xf]
      %v611 = vld [vmem:[%s247 + $0x20] sm:$0xf]
      %v612 = vld [vmem:[%s247 + $0x28] sm:$0xf]
      %v613 = vld [vmem:[%s247 + $0x30] sm:$0xf]
      %v614 = vld [vmem:[%s247 + $0x38] sm:$0xf]
      %v615 = vmax.bf16 %v599, %v607
      %v616 = vmax.bf16 %v600, %v608
      %v617 = vmax.bf16 %v601, %v609
      %v618 = vmax.bf16 %v602, %v610
      %v619 = vmax.bf16 %v603, %v611
      %v620 = vmax.bf16 %v604, %v612
      %v621 = vmax.bf16 %v605, %v613
      %v622 = vmax.bf16 %v606, %v614
      %v623 = vld [vmem:[%s247 + $0x4] sm:$0x1]
      %v624 = vld [vmem:[%s247 + $0xc] sm:$0x1]
      %v625 = vld [vmem:[%s247 + $0x14] sm:$0x1]
      %v626 = vld [vmem:[%s247 + $0x1c] sm:$0x1]
      %v627 = vld [vmem:[%s247 + $0x24] sm:$0x1]
      %v628 = vld [vmem:[%s247 + $0x2c] sm:$0x1]
      %v629 = vld [vmem:[%s247 + $0x34] sm:$0x1]
      %v630 = vld [vmem:[%s247 + $0x3c] sm:$0x1]
      %v632 = vshrl.u32 %v607, 16
      %v634 = vrot.slane %v632, 4
      %v635 = vshll.u32 %v607, 16
      %v637 = vrot.slane %v635, 5
      %v638 = vor.u32 %v634, %v637
      %v639 = vrot.slane %v638, 4
      %v641 = vshll.u32 %v623, 16
      %v643 = vrot.slane %v641, 5
      %v644 = vsel %vm292, %v639, %v643
      %v646 = vshrl.u32 %v608, 16
      %v648 = vrot.slane %v646, 4
      %v649 = vshll.u32 %v608, 16
      %v651 = vrot.slane %v649, 5
      %v652 = vor.u32 %v648, %v651
      %v653 = vrot.slane %v652, 4
      %v655 = vshll.u32 %v624, 16
      %v657 = vrot.slane %v655, 5
      %v658 = vsel %vm292, %v653, %v657
      %v660 = vshrl.u32 %v609, 16
      %v662 = vrot.slane %v660, 4
      %v663 = vshll.u32 %v609, 16
      %v665 = vrot.slane %v663, 5
      %v666 = vor.u32 %v662, %v665
      %v667 = vrot.slane %v666, 4
      %v669 = vshll.u32 %v625, 16
      %v671 = vrot.slane %v669, 5
      %v672 = vsel %vm292, %v667, %v671
      %v674 = vshrl.u32 %v610, 16
      %v676 = vrot.slane %v674, 4
      %v677 = vshll.u32 %v610, 16
      %v679 = vrot.slane %v677, 5
      %v680 = vor.u32 %v676, %v679
      %v681 = vrot.slane %v680, 4
      %v683 = vshll.u32 %v626, 16
      %v685 = vrot.slane %v683, 5
      %v686 = vsel %vm292, %v681, %v685
      %v688 = vshrl.u32 %v611, 16
      %v690 = vrot.slane %v688, 4
      %v691 = vshll.u32 %v611, 16
      %v693 = vrot.slane %v691, 5
      %v694 = vor.u32 %v690, %v693
      %v695 = vrot.slane %v694, 4
      %v697 = vshll.u32 %v627, 16
      %v699 = vrot.slane %v697, 5
      %v700 = vsel %vm292, %v695, %v699
      %v702 = vshrl.u32 %v612, 16
      %v704 = vrot.slane %v702, 4
      %v705 = vshll.u32 %v612, 16
      %v707 = vrot.slane %v705, 5
      %v708 = vor.u32 %v704, %v707
      %v709 = vrot.slane %v708, 4
      %v711 = vshll.u32 %v628, 16
      %v713 = vrot.slane %v711, 5
      %v714 = vsel %vm292, %v709, %v713
      %v716 = vshrl.u32 %v613, 16
      %v718 = vrot.slane %v716, 4
      %v719 = vshll.u32 %v613, 16
      %v721 = vrot.slane %v719, 5
      %v722 = vor.u32 %v718, %v721
      %v723 = vrot.slane %v722, 4
      %v725 = vshll.u32 %v629, 16
      %v727 = vrot.slane %v725, 5
      %v728 = vsel %vm292, %v723, %v727
      %v730 = vshrl.u32 %v614, 16
      %v732 = vrot.slane %v730, 4
      %v733 = vshll.u32 %v614, 16
      %v735 = vrot.slane %v733, 5
      %v736 = vor.u32 %v732, %v735
      %v737 = vrot.slane %v736, 4
      %v739 = vshll.u32 %v630, 16
      %v741 = vrot.slane %v739, 5
      %v742 = vsel %vm292, %v737, %v741
      %v751 = vmax.bf16 %v615, %v644
      %v752 = vmax.bf16 %v616, %v658
      %v753 = vmax.bf16 %v617, %v672
      %v754 = vmax.bf16 %v618, %v686
      %v755 = vmax.bf16 %v619, %v700
      %v756 = vmax.bf16 %v620, %v714
      %v757 = vmax.bf16 %v621, %v728
      %v758 = vmax.bf16 %v622, %v742
      %759 = vst [vmem:[%s257] sm:$0xf] %v751
      %760 = vst [vmem:[%s257 + $0x4] sm:$0xf] %v752
      %761 = vst [vmem:[%s257 + $0x8] sm:$0xf] %v753
      %762 = vst [vmem:[%s257 + $0xc] sm:$0xf] %v754
      %763 = vst [vmem:[%s257 + $0x10] sm:$0xf] %v755
      %764 = vst [vmem:[%s257 + $0x14] sm:$0xf] %v756
      %765 = vst [vmem:[%s257 + $0x18] sm:$0xf] %v757
      %766 = vst [vmem:[%s257 + $0x1c] sm:$0xf] %v758
      %p767 = scmp.lt.s32.totalorder %s15, 1
      %s768 = scalar_select %p767, %s15, 1
      %s769 = smul.addr %s768, 8
      %s770 = smul.addr %s769, 4
      %s771 = scalar_lea.vmem %s4, %s770
      // Predicated region
      $region37: #{stem_forward.16} parent=35 // pred_check
        %p772 = pneg %p137
      $region38: #{stem_forward.16} parent=35 // pred_check_branch
        %774 = sbr.rel (%p772) target = $region40
      $region39: #{stem_forward.16} parent=35 // pred_region
        _
      $region40: #{stem_forward.16} parent=35 // pred_fallthru
        _
    $region36: #{stem_forward.16} parent=5 // pred_fallthru
      _
    %p775 = scmp.le.s32.totalorder 2, %s10
    // Predicated region
    $region41: #{stem_forward.16} parent=5 // pred_check
      %p776 = pneg %p775
    $region42: #{stem_forward.16} parent=5 // pred_check_branch
      %778 = sbr.rel (%p776) target = $region44
    $region43: #{stem_forward.16} parent=5 // pred_region
      %s779 = ssub.s32 %s10, 2
      // Predicated region
      $region45: #{stem_forward.16} parent=43 // pred_check
        %p780 = pneg %p143
      $region46: #{stem_forward.16} parent=43 // pred_check_branch
        %782 = sbr.rel (%p780) target = $region48
      $region47: #{stem_forward.16} parent=43 // pred_region
        %p783 = scmp.lt.s32.totalorder %s16, 1
        %s784 = scalar_select %p783, %s16, 1
        %s785 = smul.addr %s784, 8
        %s786 = smul.addr %s785, 4
        %s787 = scalar_lea.vmem %s4, %s786
      $region48: #{stem_forward.16} parent=43 // pred_fallthru
        _
    $region44: #{stem_forward.16} parent=5 // pred_fallthru
      _
  $region6: #{stem_forward.16} parent=0 // loop_footer
    %s14 = sadd.s32 1, %s10
  $region7: #{stem_forward.16} parent=0 // loop_footer_branch
    %9 = sbr.rel target = $region3
  $region8: #{stem_forward.16} parent=0 // loop_exit
    _

// kernel: stem_forward.17
$region0: #{stem_forward.17}
  #allocation0 [shape = 'u32[]', space=smem, size = 0x4, offset = 0x4, fixed_abs, tag = 'smem constant byte address 0x4 - core index']
  #allocation1 [shape = 'u32[144,128]{1,0:T(1,128)}', space=vmem, size = 0x12000, scoped, tag = 'internal scratch']
  %s0 = inlined_call_operand.vmem [shape: bf16[128,128], index: 0, kind: input, shape index: {}]
  %s1 = inlined_call_operand.vmem [shape: bf16[128,128], index: 1, kind: input, shape index: {}]
  %s2 = inlined_call_operand.vmem [shape: f32[1,128], index: 2, kind: input, shape index: {}]
  %s3 = inlined_call_operand.vmem [shape: f32[1,128], index: 3, kind: input, shape index: {}]
  %s4 = inlined_call_operand.vmem [shape: bf16[128,128], index: 4, kind: output, shape index: {}]
  %s5 = sld [smem:[#allocation0]]
  $region26: #{stem_forward.17} parent=0
    _
  %s7 = ssub.s32 1, %s5
  %s8 = scalar_select 0, %s7, %s5
  // Predicated region
  $region2: #{stem_forward.17} parent=0 // pred_check
    _
  $region3: #{stem_forward.17} parent=0 // pred_check_branch
    %10 = sbr.rel (0) target = $region5
  $region4: #{stem_forward.17} parent=0 // pred_region
    _
  $region5: #{stem_forward.17} parent=0 // pred_fallthru
    _
  // Predicated region
  $region6: #{stem_forward.17} parent=0 // pred_check
    _
  $region7: #{stem_forward.17} parent=0 // pred_check_branch
    %12 = sbr.rel (0) target = $region9
  $region8: #{stem_forward.17} parent=0 // pred_region
    _
  $region9: #{stem_forward.17} parent=0 // pred_fallthru
    _
  // Predicated region
  $region10: #{stem_forward.17} parent=0 // pred_check
    _
  $region11: #{stem_forward.17} parent=0 // pred_check_branch
    %14 = sbr.rel (0) target = $region13
  $region12: #{stem_forward.17} parent=0 // pred_region
    _
  $region13: #{stem_forward.17} parent=0 // pred_fallthru
    _
  // Predicated region
  $region14: #{stem_forward.17} parent=0 // pred_check
    _
  $region15: #{stem_forward.17} parent=0 // pred_check_branch
    %16 = sbr.rel (0) target = $region17
  $region16: #{stem_forward.17} parent=0 // pred_region
    _
  $region17: #{stem_forward.17} parent=0 // pred_fallthru
    _
  %v18 = vld [vmem:[%s0] sm:$0xf]
  %v19 = vld [vmem:[%s0 + $0x4] sm:$0xf]
  %v20 = vld [vmem:[%s0 + $0x8] sm:$0xf]
  %v21 = vld [vmem:[%s0 + $0xc] sm:$0xf]
  %v22 = vld [vmem:[%s0 + $0x10] sm:$0xf]
  %v23 = vld [vmem:[%s0 + $0x14] sm:$0xf]
  %v24 = vld [vmem:[%s0 + $0x18] sm:$0xf]
  %v25 = vld [vmem:[%s0 + $0x1c] sm:$0xf]
  %v26 = vld [vmem:[%s0 + $0x20] sm:$0xf]
  %v27 = vld [vmem:[%s0 + $0x24] sm:$0xf]
  %v28 = vld [vmem:[%s0 + $0x28] sm:$0xf]
  %v29 = vld [vmem:[%s0 + $0x2c] sm:$0xf]
  %v30 = vld [vmem:[%s0 + $0x30] sm:$0xf]
  %v31 = vld [vmem:[%s0 + $0x34] sm:$0xf]
  %v32 = vld [vmem:[%s0 + $0x38] sm:$0xf]
  %v33 = vld [vmem:[%s0 + $0x3c] sm:$0xf]
  %v34 = vld [vmem:[%s1] sm:$0xf]
  %v35 = vld [vmem:[%s1 + $0x4] sm:$0xf]
  %v36 = vld [vmem:[%s1 + $0x8] sm:$0xf]
  %v37 = vld [vmem:[%s1 + $0xc] sm:$0xf]
  %v38 = vld [vmem:[%s1 + $0x10] sm:$0xf]
  %v39 = vld [vmem:[%s1 + $0x14] sm:$0xf]
  %v40 = vld [vmem:[%s1 + $0x18] sm:$0xf]
  %v41 = vld [vmem:[%s1 + $0x1c] sm:$0xf]
  %v42 = vld [vmem:[%s1 + $0x20] sm:$0xf]
  %v43 = vld [vmem:[%s1 + $0x24] sm:$0xf]
  %v44 = vld [vmem:[%s1 + $0x28] sm:$0xf]
  %v45 = vld [vmem:[%s1 + $0x2c] sm:$0xf]
  %v46 = vld [vmem:[%s1 + $0x30] sm:$0xf]
  %v47 = vld [vmem:[%s1 + $0x34] sm:$0xf]
  %v48 = vld [vmem:[%s1 + $0x38] sm:$0xf]
  %v49 = vld [vmem:[%s1 + $0x3c] sm:$0xf]
  %v66 = vunpack.c.l.b16 %v18
  %v67 = vunpack.c.l.b16 %v19
  %v68 = vunpack.c.l.b16 %v20
  %v69 = vunpack.c.l.b16 %v21
  %v70 = vunpack.c.l.b16 %v22
  %v71 = vunpack.c.l.b16 %v23
  %v72 = vunpack.c.l.b16 %v24
  %v73 = vunpack.c.l.b16 %v25
  %v74 = vunpack.c.l.b16 %v26
  %v75 = vunpack.c.l.b16 %v27
  %v76 = vunpack.c.l.b16 %v28
  %v77 = vunpack.c.l.b16 %v29
  %v78 = vunpack.c.l.b16 %v30
  %v79 = vunpack.c.l.b16 %v31
  %v80 = vunpack.c.l.b16 %v32
  %v81 = vunpack.c.l.b16 %v33
  %v82 = vpack.c.b16 %v67, %v66
  %v83 = vpack.c.b16 %v69, %v68
  %v84 = vpack.c.b16 %v71, %v70
  %v85 = vpack.c.b16 %v73, %v72
  %v86 = vpack.c.b16 %v75, %v74
  %v87 = vpack.c.b16 %v77, %v76
  %v88 = vpack.c.b16 %v79, %v78
  %v89 = vpack.c.b16 %v81, %v80
  %v114 = vunpack.c.l.b16 %v34
  %v115 = vunpack.c.l.b16 %v35
  %v116 = vunpack.c.l.b16 %v36
  %v117 = vunpack.c.l.b16 %v37
  %v118 = vunpack.c.l.b16 %v38
  %v119 = vunpack.c.l.b16 %v39
  %v120 = vunpack.c.l.b16 %v40
  %v121 = vunpack.c.l.b16 %v41
  %v122 = vunpack.c.l.b16 %v42
  %v123 = vunpack.c.l.b16 %v43
  %v124 = vunpack.c.l.b16 %v44
  %v125 = vunpack.c.l.b16 %v45
  %v126 = vunpack.c.l.b16 %v46
  %v127 = vunpack.c.l.b16 %v47
  %v128 = vunpack.c.l.b16 %v48
  %v129 = vunpack.c.l.b16 %v49
  %v130 = vpack.c.b16 %v115, %v114
  %v131 = vpack.c.b16 %v117, %v116
  %v132 = vpack.c.b16 %v119, %v118
  %v133 = vpack.c.b16 %v121, %v120
  %v134 = vpack.c.b16 %v123, %v122
  %v135 = vpack.c.b16 %v125, %v124
  %v136 = vpack.c.b16 %v127, %v126
  %v137 = vpack.c.b16 %v129, %v128
  %146 = vmatprep.subr.bf16.mxu0 0
  %147 = vmatpush1.bf16.msra.mxu0 %v130
  %148 = vmatprep.subr.bf16.mxu0 0
  %149 = vmatpush1.bf16.msra.mxu0 %v131
  %150 = vmatprep.subr.bf16.mxu0 0
  %151 = vmatpush1.bf16.msra.mxu0 %v132
  %152 = vmatprep.subr.bf16.mxu0 0
  %153 = vmatpush1.bf16.msra.mxu0 %v133
  %154 = vmatprep.subr.bf16.mxu0 0
  %155 = vmatpush1.bf16.msra.mxu0 %v134
  %156 = vmatprep.subr.bf16.mxu0 0
  %157 = vmatpush1.bf16.msra.mxu0 %v135
  %158 = vmatprep.subr.bf16.mxu0 0
  %159 = vmatpush1.bf16.msra.mxu0 %v136
  %160 = vmatprep.subr.bf16.mxu0 0
  %161 = vmatpush1.bf16.msra.mxu0 %v137
  %162 = vmatprep.subr.bf16.mxu0 0
  %163 = vmatpush1.bf16.msra.mxu0 0
  %164 = vmatprep.subr.bf16.mxu0 0
  %165 = vmatpush1.bf16.msra.mxu0 0
  %166 = vmatprep.subr.bf16.mxu0 0
  %167 = vmatpush1.bf16.msra.mxu0 0
  %168 = vmatprep.subr.bf16.mxu0 0
  %169 = vmatpush1.bf16.msra.mxu0 0
  %170 = vmatprep.subr.bf16.mxu0 0
  %171 = vmatpush1.bf16.msra.mxu0 0
  %172 = vmatprep.subr.bf16.mxu0 0
  %173 = vmatpush1.bf16.msra.mxu0 0
  %174 = vmatprep.subr.bf16.mxu0 0
  %175 = vmatpush1.bf16.msra.mxu0 0
  %176 = vmatprep.subr.bf16.mxu0 0
  %177 = vmatpush1.bf16.msra.mxu0 0
  %178 = vmatprep.mubr.bf16.mxu0 0
  %179 = vmatmul.mubr.bf16.gmra.mrb[0].mxu0 %v82
  %v180 = vpop.f32.mrb[0].mxu0
  %v181 = vadd.f32 0.0, %v180
  %v182 = vpop.f32.mrb[0].mxu0
  %v183 = vpop.f32.mrb[0].mxu0
  %v184 = vadd.f32 0.0, %v183
  %v185 = vpop.f32.mrb[0].mxu0
  %186 = vmatprep.mubr.bf16.mxu0 0
  %187 = vmatmul.mubr.bf16.gmra.mrb[0].mxu0 %v83
  %v188 = vpop.f32.mrb[0].mxu0
  %v189 = vadd.f32 0.0, %v188
  %v190 = vpop.f32.mrb[0].mxu0
  %v191 = vpop.f32.mrb[0].mxu0
  %v192 = vadd.f32 0.0, %v191
  %v193 = vpop.f32.mrb[0].mxu0
  %194 = vmatprep.mubr.bf16.mxu0 0
  %195 = vmatmul.mubr.bf16.gmra.mrb[0].mxu0 %v84
  %v196 = vpop.f32.mrb[0].mxu0
  %v197 = vadd.f32 0.0, %v196
  %v198 = vpop.f32.mrb[0].mxu0
  %v199 = vpop.f32.mrb[0].mxu0
  %v200 = vadd.f32 0.0, %v199
  %v201 = vpop.f32.mrb[0].mxu0
  %202 = vmatprep.mubr.bf16.mxu0 0
  %203 = vmatmul.mubr.bf16.gmra.mrb[0].mxu0 %v85
  %v204 = vpop.f32.mrb[0].mxu0
  %v205 = vadd.f32 0.0, %v204
  %v206 = vpop.f32.mrb[0].mxu0
  %v207 = vpop.f32.mrb[0].mxu0
  %v208 = vadd.f32 0.0, %v207
  %v209 = vpop.f32.mrb[0].mxu0
  %210 = vmatprep.mubr.bf16.mxu0 0
  %211 = vmatmul.mubr.bf16.gmra.mrb[0].mxu0 %v86
  %v212 = vpop.f32.mrb[0].mxu0
  %v213 = vadd.f32 0.0, %v212
  %v214 = vpop.f32.mrb[0].mxu0
  %v215 = vpop.f32.mrb[0].mxu0
  %v216 = vadd.f32 0.0, %v215
  %v217 = vpop.f32.mrb[0].mxu0
  %218 = vmatprep.mubr.bf16.mxu0 0
  %219 = vmatmul.mubr.bf16.gmra.mrb[0].mxu0 %v87
  %v220 = vpop.f32.mrb[0].mxu0
  %v221 = vadd.f32 0.0, %v220
  %v222 = vpop.f32.mrb[0].mxu0
  %v223 = vpop.f32.mrb[0].mxu0
  %v224 = vadd.f32 0.0, %v223
  %v225 = vpop.f32.mrb[0].mxu0
  %226 = vmatprep.mubr.bf16.mxu0 0
  %227 = vmatmul.mubr.bf16.gmra.mrb[0].mxu0 %v88
  %v228 = vpop.f32.mrb[0].mxu0
  %v229 = vadd.f32 0.0, %v228
  %v230 = vpop.f32.mrb[0].mxu0
  %v231 = vpop.f32.mrb[0].mxu0
  %v232 = vadd.f32 0.0, %v231
  %v233 = vpop.f32.mrb[0].mxu0
  %234 = vmatprep.mubr.bf16.mxu0 0
  %235 = vmatmul.mubr.bf16.gmra.mrb[0].mxu0 %v89
  %v236 = vpop.f32.mrb[0].mxu0
  %v237 = vadd.f32 0.0, %v236
  %v238 = vpop.f32.mrb[0].mxu0
  %v239 = vpop.f32.mrb[0].mxu0
  %v240 = vadd.f32 0.0, %v239
  %v241 = vpop.f32.mrb[0].mxu0
  %242 = vdwg.mxu0
  %v243 = vadd.f32 %v181, %v184
  %v244 = vadd.f32 %v243, %v189
  %v245 = vadd.f32 %v244, %v192
  %v246 = vadd.f32 %v245, %v197
  %v247 = vadd.f32 %v246, %v200
  %v248 = vadd.f32 %v247, %v205
  %v249 = vadd.f32 %v248, %v208
  %v250 = vadd.f32 %v249, %v213
  %v251 = vadd.f32 %v250, %v216
  %v252 = vadd.f32 %v251, %v221
  %v253 = vadd.f32 %v252, %v224
  %v254 = vadd.f32 %v253, %v229
  %v255 = vadd.f32 %v254, %v232
  %v256 = vadd.f32 %v255, %v237
  %v257 = vadd.f32 %v256, %v240
  %v258 = vrot.slane %v257, 4
  %v259 = vadd.f32 %v257, %v258
  %v260 = vrot.slane %v259, 2
  %v261 = vadd.f32 %v259, %v260
  %v262 = vrot.slane %v261, 1
  %v263 = vadd.f32 %v261, %v262
  %v264 = vmul.f32 %v263, 0.0078125
  %v265 = vmul.f32 %v181, %v181
  %v266 = vmul.f32 %v184, %v184
  %v267 = vmul.f32 %v189, %v189
  %v268 = vmul.f32 %v192, %v192
  %v269 = vmul.f32 %v197, %v197
  %v270 = vmul.f32 %v200, %v200
  %v271 = vmul.f32 %v205, %v205
  %v272 = vmul.f32 %v208, %v208
  %v273 = vmul.f32 %v213, %v213
  %v274 = vmul.f32 %v216, %v216
  %v275 = vmul.f32 %v221, %v221
  %v276 = vmul.f32 %v224, %v224
  %v277 = vmul.f32 %v229, %v229
  %v278 = vmul.f32 %v232, %v232
  %v279 = vmul.f32 %v237, %v237
  %v280 = vmul.f32 %v240, %v240
  %v281 = vadd.f32 %v265, %v266
  %v282 = vadd.f32 %v281, %v267
  %v283 = vadd.f32 %v282, %v268
  %v284 = vadd.f32 %v283, %v269
  %v285 = vadd.f32 %v284, %v270
  %v286 = vadd.f32 %v285, %v271
  %v287 = vadd.f32 %v286, %v272
  %v288 = vadd.f32 %v287, %v273
  %v289 = vadd.f32 %v288, %v274
  %v290 = vadd.f32 %v289, %v275
  %v291 = vadd.f32 %v290, %v276
  %v292 = vadd.f32 %v291, %v277
  %v293 = vadd.f32 %v292, %v278
  %v294 = vadd.f32 %v293, %v279
  %v295 = vadd.f32 %v294, %v280
  %v296 = vrot.slane %v295, 4
  %v297 = vadd.f32 %v295, %v296
  %v298 = vrot.slane %v297, 2
  %v299 = vadd.f32 %v297, %v298
  %v300 = vrot.slane %v299, 1
  %v301 = vadd.f32 %v299, %v300
  %v302 = vmul.f32 %v301, 0.0078125
  %v303 = vmul.f32 %v264, %v264
  %v304 = vsub.f32 %v302, %v303
  %v305 = vmax.f32 %v304, 0.0
  %v306 = vld [vmem:[%s2] sm:$0x1]
  %v307 = vadd.f32 %v305, 0.001
  %v308 = vrsqrt.pop %v307
  %v309 = vmul.f32 %v306, %v308
  %v310 = vld [vmem:[%s3] sm:$0x1]
  %v311 = vmul.f32 %v264, %v309
  %v312 = vsub.f32 %v310, %v311
  %v314 = vlaneseq
  %v315 = vshrl.u32 %v314, 7
  %v316 = vsub.s32 0, %v315
  %v317 = vrot.slane %v309, %v316
  %v319 = vmul.f32 %v181, %v317
  %v320 = vmul.f32 %v184, %v317
  %v321 = vmul.f32 %v189, %v317
  %v322 = vmul.f32 %v192, %v317
  %v323 = vmul.f32 %v197, %v317
  %v324 = vmul.f32 %v200, %v317
  %v325 = vmul.f32 %v205, %v317
  %v326 = vmul.f32 %v208, %v317
  %v327 = vmul.f32 %v213, %v317
  %v328 = vmul.f32 %v216, %v317
  %v329 = vmul.f32 %v221, %v317
  %v330 = vmul.f32 %v224, %v317
  %v331 = vmul.f32 %v229, %v317
  %v332 = vmul.f32 %v232, %v317
  %v333 = vmul.f32 %v237, %v317
  %v334 = vmul.f32 %v240, %v317
  %v336 = vlaneseq
  %v337 = vshrl.u32 %v336, 7
  %v338 = vsub.s32 0, %v337
  %v339 = vrot.slane %v312, %v338
  %v341 = vadd.f32 %v319, %v339
  %v342 = vadd.f32 %v320, %v339
  %v343 = vadd.f32 %v321, %v339
  %v344 = vadd.f32 %v322, %v339
  %v345 = vadd.f32 %v323, %v339
  %v346 = vadd.f32 %v324, %v339
  %v347 = vadd.f32 %v325, %v339
  %v348 = vadd.f32 %v326, %v339
  %v349 = vadd.f32 %v327, %v339
  %v350 = vadd.f32 %v328, %v339
  %v351 = vadd.f32 %v329, %v339
  %v352 = vadd.f32 %v330, %v339
  %v353 = vadd.f32 %v331, %v339
  %v354 = vadd.f32 %v332, %v339
  %v355 = vadd.f32 %v333, %v339
  %v356 = vadd.f32 %v334, %v339
  %v357 = vmax.f32 %v341, 0.0
  %v358 = vmax.f32 %v342, 0.0
  %v359 = vmax.f32 %v343, 0.0
  %v360 = vmax.f32 %v344, 0.0
  %v361 = vmax.f32 %v345, 0.0
  %v362 = vmax.f32 %v346, 0.0
  %v363 = vmax.f32 %v347, 0.0
  %v364 = vmax.f32 %v348, 0.0
  %v365 = vmax.f32 %v349, 0.0
  %v366 = vmax.f32 %v350, 0.0
  %v367 = vmax.f32 %v351, 0.0
  %v368 = vmax.f32 %v352, 0.0
  %v369 = vmax.f32 %v353, 0.0
  %v370 = vmax.f32 %v354, 0.0
  %v371 = vmax.f32 %v355, 0.0
  %v372 = vmax.f32 %v356, 0.0
  %v373 = vpack.c.bf16 %v358, %v357
  %v374 = vpack.c.bf16 %v360, %v359
  %v375 = vpack.c.bf16 %v362, %v361
  %v376 = vpack.c.bf16 %v364, %v363
  %v377 = vpack.c.bf16 %v366, %v365
  %v378 = vpack.c.bf16 %v368, %v367
  %v379 = vpack.c.bf16 %v370, %v369
  %v380 = vpack.c.bf16 %v372, %v371
  %v389 = vunpack.c.l.b16 %v373
  %v390 = vunpack.c.h.b16 %v373
  %v391 = vunpack.c.l.b16 %v374
  %v392 = vunpack.c.h.b16 %v374
  %v393 = vunpack.c.l.b16 %v375
  %v394 = vunpack.c.h.b16 %v375
  %v395 = vunpack.c.l.b16 %v376
  %v396 = vunpack.c.h.b16 %v376
  %v397 = vunpack.c.l.b16 %v377
  %v398 = vunpack.c.h.b16 %v377
  %v399 = vunpack.c.l.b16 %v378
  %v400 = vunpack.c.h.b16 %v378
  %v401 = vunpack.c.l.b16 %v379
  %v402 = vunpack.c.h.b16 %v379
  %v403 = vunpack.c.l.b16 %v380
  %v404 = vunpack.c.h.b16 %v380
  %v405 = vpack.c.b16 %v389, %v389
  %v406 = vpack.c.b16 %v390, %v390
  %v407 = vpack.c.b16 %v391, %v391
  %v408 = vpack.c.b16 %v392, %v392
  %v409 = vpack.c.b16 %v393, %v393
  %v410 = vpack.c.b16 %v394, %v394
  %v411 = vpack.c.b16 %v395, %v395
  %v412 = vpack.c.b16 %v396, %v396
  %v413 = vpack.c.b16 %v397, %v397
  %v414 = vpack.c.b16 %v398, %v398
  %v415 = vpack.c.b16 %v399, %v399
  %v416 = vpack.c.b16 %v400, %v400
  %v417 = vpack.c.b16 %v401, %v401
  %v418 = vpack.c.b16 %v402, %v402
  %v419 = vpack.c.b16 %v403, %v403
  %v420 = vpack.c.b16 %v404, %v404
  %437 = vst [vmem:[%s4] sm:$0xf] %v405
  %438 = vst [vmem:[%s4 + $0x4] sm:$0xf] %v406
  %439 = vst [vmem:[%s4 + $0x8] sm:$0xf] %v407
  %440 = vst [vmem:[%s4 + $0xc] sm:$0xf] %v408
  %441 = vst [vmem:[%s4 + $0x10] sm:$0xf] %v409
  %442 = vst [vmem:[%s4 + $0x14] sm:$0xf] %v410
  %443 = vst [vmem:[%s4 + $0x18] sm:$0xf] %v411
  %444 = vst [vmem:[%s4 + $0x1c] sm:$0xf] %v412
  %445 = vst [vmem:[%s4 + $0x20] sm:$0xf] %v413
  %446 = vst [vmem:[%s4 + $0x24] sm:$0xf] %v414
  %447 = vst [vmem:[%s4 + $0x28] sm:$0xf] %v415
  %448 = vst [vmem:[%s4 + $0x2c] sm:$0xf] %v416
  %449 = vst [vmem:[%s4 + $0x30] sm:$0xf] %v417
  %450 = vst [vmem:[%s4 + $0x34] sm:$0xf] %v418
  %451 = vst [vmem:[%s4 + $0x38] sm:$0xf] %v419
  %452 = vst [vmem:[%s4 + $0x3c] sm:$0xf] %v420
  // Predicated region
  $region18: #{stem_forward.17} parent=0 // pred_check
    _
  $region19: #{stem_forward.17} parent=0 // pred_check_branch
    %454 = sbr.rel (0) target = $region21
  $region20: #{stem_forward.17} parent=0 // pred_region
    _
  $region21: #{stem_forward.17} parent=0 // pred_fallthru
    _
  // Predicated region
  $region22: #{stem_forward.17} parent=0 // pred_check
    _
  $region23: #{stem_forward.17} parent=0 // pred_check_branch
    %456 = sbr.rel (0) target = $region25
  $region24: #{stem_forward.17} parent=0 // pred_region
    _
  $region25: #{stem_forward.17} parent=0 // pred_fallthru
    _

// kernel: stem_forward.18
$region0: #{stem_forward.18}
  #allocation0 [shape = 'u32[]', space=smem, size = 0x4, offset = 0x4, fixed_abs, tag = 'smem constant byte address 0x4 - core index']
  #allocation1 [shape = 'u32[144,128]{1,0:T(1,128)}', space=vmem, size = 0x12000, scoped, tag = 'internal scratch']
  %s0 = inlined_call_operand.vmem [shape: bf16[72,720], index: 0, kind: input, shape index: {}]
  %s1 = inlined_call_operand.vmem [shape: bf16[720,256], index: 1, kind: input, shape index: {}]
  %s2 = inlined_call_operand.vmem [shape: f32[1,256], index: 2, kind: input, shape index: {}]
  %s3 = inlined_call_operand.vmem [shape: f32[1,256], index: 3, kind: input, shape index: {}]
  %s4 = inlined_call_operand.vmem [shape: bf16[72,256], index: 4, kind: output, shape index: {}]
  %s5 = sld [smem:[#allocation0]]
  $region26: #{stem_forward.18} parent=0
    _
  %s7 = ssub.s32 1, %s5
  %s8 = scalar_select 0, %s7, %s5
  // Predicated region
  $region2: #{stem_forward.18} parent=0 // pred_check
    _
  $region3: #{stem_forward.18} parent=0 // pred_check_branch
    %10 = sbr.rel (0) target = $region5
  $region4: #{stem_forward.18} parent=0 // pred_region
    _
  $region5: #{stem_forward.18} parent=0 // pred_fallthru
    _
  // Predicated region
  $region6: #{stem_forward.18} parent=0 // pred_check
    _
  $region7: #{stem_forward.18} parent=0 // pred_check_branch
    %12 = sbr.rel (0) target = $region9
  $region8: #{stem_forward.18} parent=0 // pred_region
    _
  $region9: #{stem_forward.18} parent=0 // pred_fallthru
    _
  // Predicated region
  $region10: #{stem_forward.18} parent=0 // pred_check
    _
  $region11: #{stem_forward.18} parent=0 // pred_check_branch
    %14 = sbr.rel (0) target = $region13
  $region12: #{stem_forward.18} parent=0 // pred_region
    _
  $region13: #{stem_forward.18} parent=0 // pred_fallthru
    _
  // Predicated region
  $region14: #{stem_forward.18} parent=0 // pred_check
    _
  $region15: #{stem_forward.18} parent=0 // pred_check_branch
    %16 = sbr.rel (0) target = $region17
  $region16: #{stem_forward.18} parent=0 // pred_region
    _
  $region17: #{stem_forward.18} parent=0 // pred_fallthru
    _
  %v18 = vld [vmem:[%s0] sm:$0xff]
  %v19 = vld [vmem:[%s0 + $0x8] sm:$0xff]
  %v20 = vld [vmem:[%s0 + $0x10] sm:$0xff]
  %v21 = vld [vmem:[%s0 + $0x18] sm:$0xff]
  %v22 = vld [vmem:[%s0 + $0x20] sm:$0xff]
  %v23 = vld [vmem:[%s0 + $0x28] sm:$0xff]
  %v24 = vld [vmem:[%s0 + $0x30] sm:$0xff]
  %v25 = vld [vmem:[%s0 + $0x38] sm:$0xff]
  %v26 = vld [vmem:[%s0 + $0x40] sm:$0xff]
  %v27 = vld [vmem:[%s0 + $0x48] sm:$0xff]
  %v28 = vld [vmem:[%s0 + $0x50] sm:$0xff]
  %v29 = vld [vmem:[%s0 + $0x58] sm:$0xff]
  %v30 = vld [vmem:[%s0 + $0x60] sm:$0xff]
  %v31 = vld [vmem:[%s0 + $0x68] sm:$0xff]
  %v32 = vld [vmem:[%s0 + $0x70] sm:$0xff]
  %v33 = vld [vmem:[%s0 + $0x78] sm:$0xff]
  %v34 = vld [vmem:[%s0 + $0x80] sm:$0xff]
  %v35 = vld [vmem:[%s0 + $0x88] sm:$0xff]
  %v36 = vld [vmem:[%s0 + $0x90] sm:$0xff]
  %v37 = vld [vmem:[%s0 + $0x98] sm:$0xff]
  %v38 = vld [vmem:[%s0 + $0xa0] sm:$0xff]
  %v39 = vld [vmem:[%s0 + $0xa8] sm:$0xff]
  %v40 = vld [vmem:[%s0 + $0xb0] sm:$0xff]
  %v41 = vld [vmem:[%s0 + $0xb8] sm:$0xff]
  %v42 = vld [vmem:[%s0 + $0xc0] sm:$0xff]
  %v43 = vld [vmem:[%s0 + $0xc8] sm:$0xff]
  %v44 = vld [vmem:[%s0 + $0xd0] sm:$0xff]
  %v45 = vld [vmem:[%s1] sm:$0xff]
  %v46 = vld [vmem:[%s1 + $0x8] sm:$0xff]
  %v47 = vld [vmem:[%s1 + $0x10] sm:$0xff]
  %v48 = vld [vmem:[%s1 + $0x18] sm:$0xff]
  %v49 = vld [vmem:[%s1 + $0x20] sm:$0xff]
  %v50 = vld [vmem:[%s1 + $0x28] sm:$0xff]
  %v51 = vld [vmem:[%s1 + $0x30] sm:$0xff]
  %v52 = vld [vmem:[%s1 + $0x38] sm:$0xff]
  %v53 = vld [vmem:[%s1 + $0x40] sm:$0xff]
  %v54 = vld [vmem:[%s1 + $0x48] sm:$0xff]
  %v55 = vld [vmem:[%s1 + $0x50] sm:$0xff]
  %v56 = vld [vmem:[%s1 + $0x58] sm:$0xff]
  %v57 = vld [vmem:[%s1 + $0x60] sm:$0xff]
  %v58 = vld [vmem:[%s1 + $0x68] sm:$0xff]
  %v59 = vld [vmem:[%s1 + $0x70] sm:$0xff]
  %v60 = vld [vmem:[%s1 + $0x78] sm:$0xff]
  %v61 = vld [vmem:[%s1 + $0x80] sm:$0xff]
  %v62 = vld [vmem:[%s1 + $0x88] sm:$0xff]
  %v63 = vld [vmem:[%s1 + $0x90] sm:$0xff]
  %v64 = vld [vmem:[%s1 + $0x98] sm:$0xff]
  %v65 = vld [vmem:[%s1 + $0xa0] sm:$0xff]
  %v66 = vld [vmem:[%s1 + $0xa8] sm:$0xff]
  %v67 = vld [vmem:[%s1 + $0xb0] sm:$0xff]
  %v68 = vld [vmem:[%s1 + $0xb8] sm:$0xff]
  %v69 = vld [vmem:[%s1 + $0xc0] sm:$0xff]
  %v70 = vld [vmem:[%s1 + $0xc8] sm:$0xff]
  %v71 = vld [vmem:[%s1 + $0xd0] sm:$0xff]
  %v72 = vld [vmem:[%s1 + $0xd8] sm:$0xff]
  %v73 = vld [vmem:[%s1 + $0xe0] sm:$0xff]
  %v74 = vld [vmem:[%s1 + $0xe8] sm:$0xff]
  %v75 = vld [vmem:[%s1 + $0xf0] sm:$0xff]
  %v76 = vld [vmem:[%s1 + $0xf8] sm:$0xff]
  %v77 = vld [vmem:[%s1 + $0x100] sm:$0xff]
  %v78 = vld [vmem:[%s1 + $0x108] sm:$0xff]
  %v79 = vld [vmem:[%s1 + $0x110] sm:$0xff]
  %v80 = vld [vmem:[%s1 + $0x118] sm:$0xff]
  %v81 = vld [vmem:[%s1 + $0x120] sm:$0xff]
  %v82 = vld [vmem:[%s1 + $0x128] sm:$0xff]
  %v83 = vld [vmem:[%s1 + $0x130] sm:$0xff]
  %v84 = vld [vmem:[%s1 + $0x138] sm:$0xff]
  %v85 = vld [vmem:[%s1 + $0x140] sm:$0xff]
  %v86 = vld [vmem:[%s1 + $0x148] sm:$0xff]
  %v87 = vld [vmem:[%s1 + $0x150] sm:$0xff]
  %v88 = vld [vmem:[%s1 + $0x158] sm:$0xff]
  %v89 = vld [vmem:[%s1 + $0x160] sm:$0xff]
  %v90 = vld [vmem:[%s1 + $0x168] sm:$0xff]
  %v91 = vld [vmem:[%s1 + $0x170] sm:$0xff]
  %v92 = vld [vmem:[%s1 + $0x178] sm:$0xff]
  %v93 = vld [vmem:[%s1 + $0x180] sm:$0xff]
  %v94 = vld [vmem:[%s1 + $0x188] sm:$0xff]
  %v95 = vld [vmem:[%s1 + $0x190] sm:$0xff]
  %v96 = vld [vmem:[%s1 + $0x198] sm:$0xff]
  %v97 = vld [vmem:[%s1 + $0x1a0] sm:$0xff]
  %v98 = vld [vmem:[%s1 + $0x1a8] sm:$0xff]
  %v99 = vld [vmem:[%s1 + $0x1b0] sm:$0xff]
  %v100 = vld [vmem:[%s1 + $0x1b8] sm:$0xff]
  %v101 = vld [vmem:[%s1 + $0x1c0] sm:$0xff]
  %v102 = vld [vmem:[%s1 + $0x1c8] sm:$0xff]
  %v103 = vld [vmem:[%s1 + $0x1d0] sm:$0xff]
  %v104 = vld [vmem:[%s1 + $0x1d8] sm:$0xff]
  %v105 = vld [vmem:[%s1 + $0x1e0] sm:$0xff]
  %v106 = vld [vmem:[%s1 + $0x1e8] sm:$0xff]
  %v107 = vld [vmem:[%s1 + $0x1f0] sm:$0xff]
  %v108 = vld [vmem:[%s1 + $0x1f8] sm:$0xff]
  %v109 = vld [vmem:[%s1 + $0x200] sm:$0xff]
  %v110 = vld [vmem:[%s1 + $0x208] sm:$0xff]
  %v111 = vld [vmem:[%s1 + $0x210] sm:$0xff]
  %v112 = vld [vmem:[%s1 + $0x218] sm:$0xff]
  %v113 = vld [vmem:[%s1 + $0x220] sm:$0xff]
  %v114 = vld [vmem:[%s1 + $0x228] sm:$0xff]
  %v115 = vld [vmem:[%s1 + $0x230] sm:$0xff]
  %v116 = vld [vmem:[%s1 + $0x238] sm:$0xff]
  %v117 = vld [vmem:[%s1 + $0x240] sm:$0xff]
  %v118 = vld [vmem:[%s1 + $0x248] sm:$0xff]
  %v119 = vld [vmem:[%s1 + $0x250] sm:$0xff]
  %v120 = vld [vmem:[%s1 + $0x258] sm:$0xff]
  %v121 = vld [vmem:[%s1 + $0x260] sm:$0xff]
  %v122 = vld [vmem:[%s1 + $0x268] sm:$0xff]
  %v123 = vld [vmem:[%s1 + $0x270] sm:$0xff]
  %v124 = vld [vmem:[%s1 + $0x278] sm:$0xff]
  %v125 = vld [vmem:[%s1 + $0x280] sm:$0xff]
  %v126 = vld [vmem:[%s1 + $0x288] sm:$0xff]
  %v127 = vld [vmem:[%s1 + $0x290] sm:$0xff]
  %v128 = vld [vmem:[%s1 + $0x298] sm:$0xff]
  %v129 = vld [vmem:[%s1 + $0x2a0] sm:$0xff]
  %v130 = vld [vmem:[%s1 + $0x2a8] sm:$0xff]
  %v131 = vld [vmem:[%s1 + $0x2b0] sm:$0xff]
  %v132 = vld [vmem:[%s1 + $0x2b8] sm:$0xff]
  %v133 = vld [vmem:[%s1 + $0x2c0] sm:$0xff]
  %v134 = vld [vmem:[%s1 + $0x2c8] sm:$0xff]
  %v162 = vunpack.c.l.b16 %v18
  %v163 = vunpack.c.h.b16 %v18
  %v164 = vunpack.c.l.b16 %v19
  %v165 = vunpack.c.h.b16 %v19
  %v166 = vunpack.c.l.b16 %v20
  %v167 = vunpack.c.h.b16 %v20
  %v168 = vunpack.c.l.b16 %v21
  %v169 = vunpack.c.h.b16 %v21
  %v170 = vunpack.c.l.b16 %v22
  %v171 = vunpack.c.h.b16 %v22
  %v172 = vunpack.c.l.b16 %v23
  %v173 = vunpack.c.h.b16 %v23
  %v174 = vunpack.c.l.b16 %v24
  %v175 = vunpack.c.h.b16 %v24
  %v176 = vunpack.c.l.b16 %v25
  %v177 = vunpack.c.h.b16 %v25
  %v178 = vunpack.c.l.b16 %v26
  %v179 = vunpack.c.h.b16 %v26
  %v180 = vunpack.c.l.b16 %v27
  %v181 = vunpack.c.h.b16 %v27
  %v182 = vunpack.c.l.b16 %v28
  %v183 = vunpack.c.h.b16 %v28
  %v184 = vunpack.c.l.b16 %v29
  %v185 = vunpack.c.h.b16 %v29
  %v186 = vunpack.c.l.b16 %v30
  %v187 = vunpack.c.h.b16 %v30
  %v188 = vunpack.c.l.b16 %v31
  %v189 = vunpack.c.h.b16 %v31
  %v190 = vunpack.c.l.b16 %v32
  %v191 = vunpack.c.h.b16 %v32
  %v192 = vunpack.c.l.b16 %v33
  %v193 = vunpack.c.h.b16 %v33
  %v194 = vunpack.c.l.b16 %v34
  %v195 = vunpack.c.h.b16 %v34
  %v196 = vunpack.c.l.b16 %v35
  %v197 = vunpack.c.h.b16 %v35
  %v198 = vunpack.c.l.b16 %v36
  %v199 = vunpack.c.h.b16 %v36
  %v200 = vunpack.c.l.b16 %v37
  %v201 = vunpack.c.h.b16 %v37
  %v202 = vunpack.c.l.b16 %v38
  %v203 = vunpack.c.h.b16 %v38
  %v204 = vunpack.c.l.b16 %v39
  %v205 = vunpack.c.h.b16 %v39
  %v206 = vunpack.c.l.b16 %v40
  %v207 = vunpack.c.h.b16 %v40
  %v208 = vunpack.c.l.b16 %v41
  %v209 = vunpack.c.h.b16 %v41
  %v210 = vunpack.c.l.b16 %v42
  %v211 = vunpack.c.h.b16 %v42
  %v212 = vunpack.c.l.b16 %v43
  %v213 = vunpack.c.h.b16 %v43
  %v214 = vunpack.c.l.b16 %v44
  %v215 = vunpack.c.h.b16 %v44
  %v216 = vpack.c.b16 %v168, %v162
  %v217 = vpack.c.b16 %v169, %v163
  %v218 = vpack.c.b16 %v170, %v164
  %v219 = vpack.c.b16 %v171, %v165
  %v220 = vpack.c.b16 %v172, %v166
  %v221 = vpack.c.b16 %v173, %v167
  %v222 = vpack.c.b16 %v180, %v174
  %v223 = vpack.c.b16 %v181, %v175
  %v224 = vpack.c.b16 %v182, %v176
  %v225 = vpack.c.b16 %v183, %v177
  %v226 = vpack.c.b16 %v184, %v178
  %v227 = vpack.c.b16 %v185, %v179
  %v228 = vpack.c.b16 %v192, %v186
  %v229 = vpack.c.b16 %v193, %v187
  %v230 = vpack.c.b16 %v194, %v188
  %v231 = vpack.c.b16 %v195, %v189
  %v232 = vpack.c.b16 %v196, %v190
  %v233 = vpack.c.b16 %v197, %v191
  %v234 = vpack.c.b16 %v204, %v198
  %v235 = vpack.c.b16 %v205, %v199
  %v236 = vpack.c.b16 %v206, %v200
  %v237 = vpack.c.b16 %v207, %v201
  %v238 = vpack.c.b16 %v208, %v202
  %v239 = vpack.c.b16 %v209, %v203
  %v240 = vpack.c.b16 %v210, %v210
  %v241 = vpack.c.b16 %v211, %v211
  %v242 = vpack.c.b16 %v212, %v212
  %v243 = vpack.c.b16 %v213, %v213
  %v244 = vpack.c.b16 %v214, %v214
  %v245 = vpack.c.b16 %v215, %v215
  %v361 = vunpack.c.l.b16 %v45
  %v362 = vunpack.c.h.b16 %v45
  %v363 = vunpack.c.l.b16 %v46
  %v364 = vunpack.c.h.b16 %v46
  %v365 = vunpack.c.l.b16 %v47
  %v366 = vunpack.c.h.b16 %v47
  %v367 = vunpack.c.l.b16 %v48
  %v368 = vunpack.c.h.b16 %v48
  %v369 = vunpack.c.l.b16 %v49
  %v370 = vunpack.c.h.b16 %v49
  %v371 = vunpack.c.l.b16 %v50
  %v372 = vunpack.c.h.b16 %v50
  %v373 = vunpack.c.l.b16 %v51
  %v374 = vunpack.c.h.b16 %v51
  %v375 = vunpack.c.l.b16 %v52
  %v376 = vunpack.c.h.b16 %v52
  %v377 = vunpack.c.l.b16 %v53
  %v378 = vunpack.c.h.b16 %v53
  %v379 = vunpack.c.l.b16 %v54
  %v380 = vunpack.c.h.b16 %v54
  %v381 = vunpack.c.l.b16 %v55
  %v382 = vunpack.c.h.b16 %v55
  %v383 = vunpack.c.l.b16 %v56
  %v384 = vunpack.c.h.b16 %v56
  %v385 = vunpack.c.l.b16 %v57
  %v386 = vunpack.c.h.b16 %v57
  %v387 = vunpack.c.l.b16 %v58
  %v388 = vunpack.c.h.b16 %v58
  %v389 = vunpack.c.l.b16 %v59
  %v390 = vunpack.c.h.b16 %v59
  %v391 = vunpack.c.l.b16 %v60
  %v392 = vunpack.c.h.b16 %v60
  %v393 = vunpack.c.l.b16 %v61
  %v394 = vunpack.c.h.b16 %v61
  %v395 = vunpack.c.l.b16 %v62
  %v396 = vunpack.c.h.b16 %v62
  %v397 = vunpack.c.l.b16 %v63
  %v398 = vunpack.c.h.b16 %v63
  %v399 = vunpack.c.l.b16 %v64
  %v400 = vunpack.c.h.b16 %v64
  %v401 = vunpack.c.l.b16 %v65
  %v402 = vunpack.c.h.b16 %v65
  %v403 = vunpack.c.l.b16 %v66
  %v404 = vunpack.c.h.b16 %v66
  %v405 = vunpack.c.l.b16 %v67
  %v406 = vunpack.c.h.b16 %v67
  %v407 = vunpack.c.l.b16 %v68
  %v408 = vunpack.c.h.b16 %v68
  %v409 = vunpack.c.l.b16 %v69
  %v410 = vunpack.c.h.b16 %v69
  %v411 = vunpack.c.l.b16 %v70
  %v412 = vunpack.c.h.b16 %v70
  %v413 = vunpack.c.l.b16 %v71
  %v414 = vunpack.c.h.b16 %v71
  %v415 = vunpack.c.l.b16 %v72
  %v416 = vunpack.c.h.b16 %v72
  %v417 = vunpack.c.l.b16 %v73
  %v418 = vunpack.c.h.b16 %v73
  %v419 = vunpack.c.l.b16 %v74
  %v420 = vunpack.c.h.b16 %v74
  %v421 = vunpack.c.l.b16 %v75
  %v422 = vunpack.c.h.b16 %v75
  %v423 = vunpack.c.l.b16 %v76
  %v424 = vunpack.c.h.b16 %v76
  %v425 = vunpack.c.l.b16 %v77
  %v426 = vunpack.c.h.b16 %v77
  %v427 = vunpack.c.l.b16 %v78
  %v428 = vunpack.c.h.b16 %v78
  %v429 = vunpack.c.l.b16 %v79
  %v430 = vunpack.c.h.b16 %v79
  %v431 = vunpack.c.l.b16 %v80
  %v432 = vunpack.c.h.b16 %v80
  %v433 = vunpack.c.l.b16 %v81
  %v434 = vunpack.c.h.b16 %v81
  %v435 = vunpack.c.l.b16 %v82
  %v436 = vunpack.c.h.b16 %v82
  %v437 = vunpack.c.l.b16 %v83
  %v438 = vunpack.c.h.b16 %v83
  %v439 = vunpack.c.l.b16 %v84
  %v440 = vunpack.c.h.b16 %v84
  %v441 = vunpack.c.l.b16 %v85
  %v442 = vunpack.c.h.b16 %v85
  %v443 = vunpack.c.l.b16 %v86
  %v444 = vunpack.c.h.b16 %v86
  %v445 = vunpack.c.l.b16 %v87
  %v446 = vunpack.c.h.b16 %v87
  %v447 = vunpack.c.l.b16 %v88
  %v448 = vunpack.c.h.b16 %v88
  %v449 = vunpack.c.l.b16 %v89
  %v450 = vunpack.c.h.b16 %v89
  %v451 = vunpack.c.l.b16 %v90
  %v452 = vunpack.c.h.b16 %v90
  %v453 = vunpack.c.l.b16 %v91
  %v454 = vunpack.c.h.b16 %v91
  %v455 = vunpack.c.l.b16 %v92
  %v456 = vunpack.c.h.b16 %v92
  %v457 = vunpack.c.l.b16 %v93
  %v458 = vunpack.c.h.b16 %v93
  %v459 = vunpack.c.l.b16 %v94
  %v460 = vunpack.c.h.b16 %v94
  %v461 = vunpack.c.l.b16 %v95
  %v462 = vunpack.c.h.b16 %v95
  %v463 = vunpack.c.l.b16 %v96
  %v464 = vunpack.c.h.b16 %v96
  %v465 = vunpack.c.l.b16 %v97
  %v466 = vunpack.c.h.b16 %v97
  %v467 = vunpack.c.l.b16 %v98
  %v468 = vunpack.c.h.b16 %v98
  %v469 = vunpack.c.l.b16 %v99
  %v470 = vunpack.c.h.b16 %v99
  %v471 = vunpack.c.l.b16 %v100
  %v472 = vunpack.c.h.b16 %v100
  %v473 = vunpack.c.l.b16 %v101
  %v474 = vunpack.c.h.b16 %v101
  %v475 = vunpack.c.l.b16 %v102
  %v476 = vunpack.c.h.b16 %v102
  %v477 = vunpack.c.l.b16 %v103
  %v478 = vunpack.c.h.b16 %v103
  %v479 = vunpack.c.l.b16 %v104
  %v480 = vunpack.c.h.b16 %v104
  %v481 = vunpack.c.l.b16 %v105
  %v482 = vunpack.c.h.b16 %v105
  %v483 = vunpack.c.l.b16 %v106
  %v484 = vunpack.c.h.b16 %v106
  %v485 = vunpack.c.l.b16 %v107
  %v486 = vunpack.c.h.b16 %v107
  %v487 = vunpack.c.l.b16 %v108
  %v488 = vunpack.c.h.b16 %v108
  %v489 = vunpack.c.l.b16 %v109
  %v490 = vunpack.c.h.b16 %v109
  %v491 = vunpack.c.l.b16 %v110
  %v492 = vunpack.c.h.b16 %v110
  %v493 = vunpack.c.l.b16 %v111
  %v494 = vunpack.c.h.b16 %v111
  %v495 = vunpack.c.l.b16 %v112
  %v496 = vunpack.c.h.b16 %v112
  %v497 = vunpack.c.l.b16 %v113
  %v498 = vunpack.c.h.b16 %v113
  %v499 = vunpack.c.l.b16 %v114
  %v500 = vunpack.c.h.b16 %v114
  %v501 = vunpack.c.l.b16 %v115
  %v502 = vunpack.c.h.b16 %v115
  %v503 = vunpack.c.l.b16 %v116
  %v504 = vunpack.c.h.b16 %v116
  %v505 = vunpack.c.l.b16 %v117
  %v506 = vunpack.c.h.b16 %v117
  %v507 = vunpack.c.l.b16 %v118
  %v508 = vunpack.c.h.b16 %v118
  %v509 = vunpack.c.l.b16 %v119
  %v510 = vunpack.c.h.b16 %v119
  %v511 = vunpack.c.l.b16 %v120
  %v512 = vunpack.c.h.b16 %v120
  %v513 = vunpack.c.l.b16 %v121
  %v514 = vunpack.c.h.b16 %v121
  %v515 = vunpack.c.l.b16 %v122
  %v516 = vunpack.c.h.b16 %v122
  %v517 = vunpack.c.l.b16 %v123
  %v518 = vunpack.c.h.b16 %v123
  %v519 = vunpack.c.l.b16 %v124
  %v520 = vunpack.c.h.b16 %v124
  %v521 = vunpack.c.l.b16 %v125
  %v522 = vunpack.c.h.b16 %v125
  %v523 = vunpack.c.l.b16 %v126
  %v524 = vunpack.c.h.b16 %v126
  %v525 = vunpack.c.l.b16 %v127
  %v526 = vunpack.c.h.b16 %v127
  %v527 = vunpack.c.l.b16 %v128
  %v528 = vunpack.c.h.b16 %v128
  %v529 = vunpack.c.l.b16 %v129
  %v530 = vunpack.c.h.b16 %v129
  %v531 = vunpack.c.l.b16 %v130
  %v532 = vunpack.c.h.b16 %v130
  %v533 = vunpack.c.l.b16 %v131
  %v534 = vunpack.c.h.b16 %v131
  %v535 = vunpack.c.l.b16 %v132
  %v536 = vunpack.c.h.b16 %v132
  %v537 = vunpack.c.l.b16 %v133
  %v538 = vunpack.c.h.b16 %v133
  %v539 = vunpack.c.l.b16 %v134
  %v540 = vunpack.c.h.b16 %v134
  %v541 = vpack.c.b16 %v363, %v361
  %v542 = vpack.c.b16 %v364, %v362
  %v543 = vpack.c.b16 %v367, %v365
  %v544 = vpack.c.b16 %v368, %v366
  %v545 = vpack.c.b16 %v371, %v369
  %v546 = vpack.c.b16 %v372, %v370
  %v547 = vpack.c.b16 %v375, %v373
  %v548 = vpack.c.b16 %v376, %v374
  %v549 = vpack.c.b16 %v379, %v377
  %v550 = vpack.c.b16 %v380, %v378
  %v551 = vpack.c.b16 %v383, %v381
  %v552 = vpack.c.b16 %v384, %v382
  %v553 = vpack.c.b16 %v387, %v385
  %v554 = vpack.c.b16 %v388, %v386
  %v555 = vpack.c.b16 %v391, %v389
  %v556 = vpack.c.b16 %v392, %v390
  %v557 = vpack.c.b16 %v395, %v393
  %v558 = vpack.c.b16 %v396, %v394
  %v559 = vpack.c.b16 %v399, %v397
  %v560 = vpack.c.b16 %v400, %v398
  %v561 = vpack.c.b16 %v403, %v401
  %v562 = vpack.c.b16 %v404, %v402
  %v563 = vpack.c.b16 %v407, %v405
  %v564 = vpack.c.b16 %v408, %v406
  %v565 = vpack.c.b16 %v411, %v409
  %v566 = vpack.c.b16 %v412, %v410
  %v567 = vpack.c.b16 %v415, %v413
  %v568 = vpack.c.b16 %v416, %v414
  %v569 = vpack.c.b16 %v419, %v417
  %v570 = vpack.c.b16 %v420, %v418
  %v571 = vpack.c.b16 %v423, %v421
  %v572 = vpack.c.b16 %v424, %v422
  %v573 = vpack.c.b16 %v427, %v425
  %v574 = vpack.c.b16 %v428, %v426
  %v575 = vpack.c.b16 %v431, %v429
  %v576 = vpack.c.b16 %v432, %v430
  %v577 = vpack.c.b16 %v435, %v433
  %v578 = vpack.c.b16 %v436, %v434
  %v579 = vpack.c.b16 %v439, %v437
  %v580 = vpack.c.b16 %v440, %v438
  %v581 = vpack.c.b16 %v443, %v441
  %v582 = vpack.c.b16 %v444, %v442
  %v583 = vpack.c.b16 %v447, %v445
  %v584 = vpack.c.b16 %v448, %v446
  %v585 = vpack.c.b16 %v451, %v449
  %v586 = vpack.c.b16 %v452, %v450
  %v587 = vpack.c.b16 %v455, %v453
  %v588 = vpack.c.b16 %v456, %v454
  %v589 = vpack.c.b16 %v459, %v457
  %v590 = vpack.c.b16 %v460, %v458
  %v591 = vpack.c.b16 %v463, %v461
  %v592 = vpack.c.b16 %v464, %v462
  %v593 = vpack.c.b16 %v467, %v465
  %v594 = vpack.c.b16 %v468, %v466
  %v595 = vpack.c.b16 %v471, %v469
  %v596 = vpack.c.b16 %v472, %v470
  %v597 = vpack.c.b16 %v475, %v473
  %v598 = vpack.c.b16 %v476, %v474
  %v599 = vpack.c.b16 %v479, %v477
  %v600 = vpack.c.b16 %v480, %v478
  %v601 = vpack.c.b16 %v483, %v481
  %v602 = vpack.c.b16 %v484, %v482
  %v603 = vpack.c.b16 %v487, %v485
  %v604 = vpack.c.b16 %v488, %v486
  %v605 = vpack.c.b16 %v491, %v489
  %v606 = vpack.c.b16 %v492, %v490
  %v607 = vpack.c.b16 %v495, %v493
  %v608 = vpack.c.b16 %v496, %v494
  %v609 = vpack.c.b16 %v499, %v497
  %v610 = vpack.c.b16 %v500, %v498
  %v611 = vpack.c.b16 %v503, %v501
  %v612 = vpack.c.b16 %v504, %v502
  %v613 = vpack.c.b16 %v507, %v505
  %v614 = vpack.c.b16 %v508, %v506
  %v615 = vpack.c.b16 %v511, %v509
  %v616 = vpack.c.b16 %v512, %v510
  %v617 = vpack.c.b16 %v515, %v513
  %v618 = vpack.c.b16 %v516, %v514
  %v619 = vpack.c.b16 %v519, %v517
  %v620 = vpack.c.b16 %v520, %v518
  %v621 = vpack.c.b16 %v523, %v521
  %v622 = vpack.c.b16 %v524, %v522
  %v623 = vpack.c.b16 %v527, %v525
  %v624 = vpack.c.b16 %v528, %v526
  %v625 = vpack.c.b16 %v531, %v529
  %v626 = vpack.c.b16 %v532, %v530
  %v627 = vpack.c.b16 %v535, %v533
  %v628 = vpack.c.b16 %v536, %v534
  %v629 = vpack.c.b16 %v539, %v537
  %v630 = vpack.c.b16 %v540, %v538
  %vm721 = vcmask 654336
  %v723 = vsel %vm721, %v221, 0
  %v726 = vsel %vm721, %v227, 0
  %v729 = vsel %vm721, %v233, 0
  %v732 = vsel %vm721, %v239, 0
  %v735 = vsel %vm721, %v245, 0
  %737 = vmatprep.subr.bf16.mxu0 %v542
  %738 = vmatpush1.bf16.msra.mxu0 %v541
  %739 = vmatprep.subr.bf16.mxu0 %v544
  %740 = vmatpush1.bf16.msra.mxu0 %v543
  %741 = vmatprep.subr.bf16.mxu0 %v546
  %742 = vmatpush1.bf16.msra.mxu0 %v545
  %743 = vmatprep.subr.bf16.mxu0 %v548
  %744 = vmatpush1.bf16.msra.mxu0 %v547
  %745 = vmatprep.subr.bf16.mxu0 %v550
  %746 = vmatpush1.bf16.msra.mxu0 %v549
  %747 = vmatprep.subr.bf16.mxu0 %v552
  %748 = vmatpush1.bf16.msra.mxu0 %v551
  %749 = vmatprep.subr.bf16.mxu0 %v554
  %750 = vmatpush1.bf16.msra.mxu0 %v553
  %751 = vmatprep.subr.bf16.mxu0 %v556
  %752 = vmatpush1.bf16.msra.mxu0 %v555
  %753 = vmatprep.subr.bf16.mxu0 %v558
  %754 = vmatpush1.bf16.msra.mxu0 %v557
  %755 = vmatprep.subr.bf16.mxu0 %v560
  %756 = vmatpush1.bf16.msra.mxu0 %v559
  %757 = vmatprep.subr.bf16.mxu0 %v562
  %758 = vmatpush1.bf16.msra.mxu0 %v561
  %759 = vmatprep.subr.bf16.mxu0 %v564
  %760 = vmatpush1.bf16.msra.mxu0 %v563
  %761 = vmatprep.subr.bf16.mxu0 %v566
  %762 = vmatpush1.bf16.msra.mxu0 %v565
  %763 = vmatprep.subr.bf16.mxu0 %v568
  %764 = vmatpush1.bf16.msra.mxu0 %v567
  %765 = vmatprep.subr.bf16.mxu0 %v570
  %766 = vmatpush1.bf16.msra.mxu0 %v569
  %767 = vmatprep.subr.bf16.mxu0 %v572
  %768 = vmatpush1.bf16.msra.mxu0 %v571
  %769 = vmatprep.mubr.bf16.mxu0 %v217
  %770 = vmatmul.mubr.bf16.gmra.mrb[0].mxu0 %v216
  %v771 = vpop.f32.mrb[0].mxu0
  %v772 = vadd.f32 0.0, %v771
  %v773 = vpop.f32.mrb[0].mxu0
  %v774 = vadd.f32 0.0, %v773
  %v775 = vpop.f32.mrb[0].mxu0
  %v776 = vadd.f32 0.0, %v775
  %v777 = vpop.f32.mrb[0].mxu0
  %v778 = vadd.f32 0.0, %v777
  %779 = vmatprep.mubr.bf16.mxu0 %v223
  %780 = vmatmul.mubr.bf16.gmra.mrb[0].mxu0 %v222
  %v781 = vpop.f32.mrb[0].mxu0
  %v782 = vadd.f32 0.0, %v781
  %v783 = vpop.f32.mrb[0].mxu0
  %v784 = vadd.f32 0.0, %v783
  %v785 = vpop.f32.mrb[0].mxu0
  %v786 = vadd.f32 0.0, %v785
  %v787 = vpop.f32.mrb[0].mxu0
  %v788 = vadd.f32 0.0, %v787
  %789 = vmatprep.mubr.bf16.mxu0 %v229
  %790 = vmatmul.mubr.bf16.gmra.mrb[0].mxu0 %v228
  %v791 = vpop.f32.mrb[0].mxu0
  %v792 = vadd.f32 0.0, %v791
  %v793 = vpop.f32.mrb[0].mxu0
  %v794 = vadd.f32 0.0, %v793
  %v795 = vpop.f32.mrb[0].mxu0
  %v796 = vadd.f32 0.0, %v795
  %v797 = vpop.f32.mrb[0].mxu0
  %v798 = vadd.f32 0.0, %v797
  %799 = vmatprep.mubr.bf16.mxu0 %v235
  %800 = vmatmul.mubr.bf16.gmra.mrb[0].mxu0 %v234
  %v801 = vpop.f32.mrb[0].mxu0
  %v802 = vadd.f32 0.0, %v801
  %v803 = vpop.f32.mrb[0].mxu0
  %v804 = vadd.f32 0.0, %v803
  %v805 = vpop.f32.mrb[0].mxu0
  %v806 = vadd.f32 0.0, %v805
  %v807 = vpop.f32.mrb[0].mxu0
  %v808 = vadd.f32 0.0, %v807
  %809 = vmatprep.mubr.bf16.mxu0 %v241
  %810 = vmatmul.mubr.bf16.gmra.mrb[0].mxu0 %v240
  %v811 = vpop.f32.mrb[0].mxu0
  %v812 = vadd.f32 0.0, %v811
  %v813 = vpop.f32.mrb[0].mxu0
  %v814 = vadd.f32 0.0, %v813
  %v815 = vpop.f32.mrb[0].mxu0
  %v816 = vpop.f32.mrb[0].mxu0
  %817 = vdwg.mxu0
  %818 = vmatprep.subr.bf16.mxu0 %v574
  %819 = vmatpush1.bf16.msra.mxu0 %v573
  %820 = vmatprep.subr.bf16.mxu0 %v576
  %821 = vmatpush1.bf16.msra.mxu0 %v575
  %822 = vmatprep.subr.bf16.mxu0 %v578
  %823 = vmatpush1.bf16.msra.mxu0 %v577
  %824 = vmatprep.subr.bf16.mxu0 %v580
  %825 = vmatpush1.bf16.msra.mxu0 %v579
  %826 = vmatprep.subr.bf16.mxu0 %v582
  %827 = vmatpush1.bf16.msra.mxu0 %v581
  %828 = vmatprep.subr.bf16.mxu0 %v584
  %829 = vmatpush1.bf16.msra.mxu0 %v583
  %830 = vmatprep.subr.bf16.mxu0 %v586
  %831 = vmatpush1.bf16.msra.mxu0 %v585
  %832 = vmatprep.subr.bf16.mxu0 %v588
  %833 = vmatpush1.bf16.msra.mxu0 %v587
  %834 = vmatprep.subr.bf16.mxu0 %v590
  %835 = vmatpush1.bf16.msra.mxu0 %v589
  %836 = vmatprep.subr.bf16.mxu0 %v592
  %837 = vmatpush1.bf16.msra.mxu0 %v591
  %838 = vmatprep.subr.bf16.mxu0 %v594
  %839 = vmatpush1.bf16.msra.mxu0 %v593
  %840 = vmatprep.subr.bf16.mxu0 %v596
  %841 = vmatpush1.bf16.msra.mxu0 %v595
  %842 = vmatprep.subr.bf16.mxu0 %v598
  %843 = vmatpush1.bf16.msra.mxu0 %v597
  %844 = vmatprep.subr.bf16.mxu0 %v600
  %845 = vmatpush1.bf16.msra.mxu0 %v599
  %846 = vmatprep.subr.bf16.mxu0 %v602
  %847 = vmatpush1.bf16.msra.mxu0 %v601
  %848 = vmatprep.subr.bf16.mxu0 %v604
  %849 = vmatpush1.bf16.msra.mxu0 %v603
  %850 = vmatprep.mubr.bf16.mxu0 %v219
  %851 = vmatmul.mubr.bf16.gmra.mrb[0].mxu0 %v218
  %v852 = vpop.f32.mrb[0].mxu0
  %v853 = vadd.f32 %v772, %v852
  %v854 = vpop.f32.mrb[0].mxu0
  %v855 = vadd.f32 %v774, %v854
  %v856 = vpop.f32.mrb[0].mxu0
  %v857 = vadd.f32 %v776, %v856
  %v858 = vpop.f32.mrb[0].mxu0
  %v859 = vadd.f32 %v778, %v858
  %860 = vmatprep.mubr.bf16.mxu0 %v225
  %861 = vmatmul.mubr.bf16.gmra.mrb[0].mxu0 %v224
  %v862 = vpop.f32.mrb[0].mxu0
  %v863 = vadd.f32 %v782, %v862
  %v864 = vpop.f32.mrb[0].mxu0
  %v865 = vadd.f32 %v784, %v864
  %v866 = vpop.f32.mrb[0].mxu0
  %v867 = vadd.f32 %v786, %v866
  %v868 = vpop.f32.mrb[0].mxu0
  %v869 = vadd.f32 %v788, %v868
  %870 = vmatprep.mubr.bf16.mxu0 %v231
  %871 = vmatmul.mubr.bf16.gmra.mrb[0].mxu0 %v230
  %v872 = vpop.f32.mrb[0].mxu0
  %v873 = vadd.f32 %v792, %v872
  %v874 = vpop.f32.mrb[0].mxu0
  %v875 = vadd.f32 %v794, %v874
  %v876 = vpop.f32.mrb[0].mxu0
  %v877 = vadd.f32 %v796, %v876
  %v878 = vpop.f32.mrb[0].mxu0
  %v879 = vadd.f32 %v798, %v878
  %880 = vmatprep.mubr.bf16.mxu0 %v237
  %881 = vmatmul.mubr.bf16.gmra.mrb[0].mxu0 %v236
  %v882 = vpop.f32.mrb[0].mxu0
  %v883 = vadd.f32 %v802, %v882
  %v884 = vpop.f32.mrb[0].mxu0
  %v885 = vadd.f32 %v804, %v884
  %v886 = vpop.f32.mrb[0].mxu0
  %v887 = vadd.f32 %v806, %v886
  %v888 = vpop.f32.mrb[0].mxu0
  %v889 = vadd.f32 %v808, %v888
  %890 = vmatprep.mubr.bf16.mxu0 %v243
  %891 = vmatmul.mubr.bf16.gmra.mrb[0].mxu0 %v242
  %v892 = vpop.f32.mrb[0].mxu0
  %v893 = vadd.f32 %v812, %v892
  %v894 = vpop.f32.mrb[0].mxu0
  %v895 = vadd.f32 %v814, %v894
  %v896 = vpop.f32.mrb[0].mxu0
  %v897 = vpop.f32.mrb[0].mxu0
  %898 = vdwg.mxu0
  %899 = vmatprep.subr.bf16.mxu0 %v606
  %900 = vmatpush1.bf16.msra.mxu0 %v605
  %901 = vmatprep.subr.bf16.mxu0 %v608
  %902 = vmatpush1.bf16.msra.mxu0 %v607
  %903 = vmatprep.subr.bf16.mxu0 %v610
  %904 = vmatpush1.bf16.msra.mxu0 %v609
  %905 = vmatprep.subr.bf16.mxu0 %v612
  %906 = vmatpush1.bf16.msra.mxu0 %v611
  %907 = vmatprep.subr.bf16.mxu0 %v614
  %908 = vmatpush1.bf16.msra.mxu0 %v613
  %909 = vmatprep.subr.bf16.mxu0 %v616
  %910 = vmatpush1.bf16.msra.mxu0 %v615
  %911 = vmatprep.subr.bf16.mxu0 %v618
  %912 = vmatpush1.bf16.msra.mxu0 %v617
  %913 = vmatprep.subr.bf16.mxu0 %v620
  %914 = vmatpush1.bf16.msra.mxu0 %v619
  %915 = vmatprep.subr.bf16.mxu0 %v622
  %916 = vmatpush1.bf16.msra.mxu0 %v621
  %917 = vmatprep.subr.bf16.mxu0 %v624
  %918 = vmatpush1.bf16.msra.mxu0 %v623
  %919 = vmatprep.subr.bf16.mxu0 %v626
  %920 = vmatpush1.bf16.msra.mxu0 %v625
  %921 = vmatprep.subr.bf16.mxu0 %v628
  %922 = vmatpush1.bf16.msra.mxu0 %v627
  %923 = vmatprep.subr.bf16.mxu0 %v630
  %924 = vmatpush1.bf16.msra.mxu0 %v629
  %925 = vmatprep.subr.bf16.mxu0 0
  %926 = vmatpush1.bf16.msra.mxu0 0
  %927 = vmatprep.subr.bf16.mxu0 0
  %928 = vmatpush1.bf16.msra.mxu0 0
  %929 = vmatprep.subr.bf16.mxu0 0
  %930 = vmatpush1.bf16.msra.mxu0 0
  %931 = vmatprep.mubr.bf16.mxu0 %v723
  %932 = vmatmul.mubr.bf16.gmra.mrb[0].mxu0 %v220
  %v933 = vpop.f32.mrb[0].mxu0
  %v934 = vadd.f32 %v853, %v933
  %v935 = vpop.f32.mrb[0].mxu0
  %v936 = vadd.f32 %v855, %v935
  %v937 = vpop.f32.mrb[0].mxu0
  %v938 = vadd.f32 %v857, %v937
  %v939 = vpop.f32.mrb[0].mxu0
  %v940 = vadd.f32 %v859, %v939
  %941 = vmatprep.mubr.bf16.mxu0 %v726
  %942 = vmatmul.mubr.bf16.gmra.mrb[0].mxu0 %v226
  %v943 = vpop.f32.mrb[0].mxu0
  %v944 = vadd.f32 %v863, %v943
  %v945 = vpop.f32.mrb[0].mxu0
  %v946 = vadd.f32 %v865, %v945
  %v947 = vpop.f32.mrb[0].mxu0
  %v948 = vadd.f32 %v867, %v947
  %v949 = vpop.f32.mrb[0].mxu0
  %v950 = vadd.f32 %v869, %v949
  %951 = vmatprep.mubr.bf16.mxu0 %v729
  %952 = vmatmul.mubr.bf16.gmra.mrb[0].mxu0 %v232
  %v953 = vpop.f32.mrb[0].mxu0
  %v954 = vadd.f32 %v873, %v953
  %v955 = vpop.f32.mrb[0].mxu0
  %v956 = vadd.f32 %v875, %v955
  %v957 = vpop.f32.mrb[0].mxu0
  %v958 = vadd.f32 %v877, %v957
  %v959 = vpop.f32.mrb[0].mxu0
  %v960 = vadd.f32 %v879, %v959
  %961 = vmatprep.mubr.bf16.mxu0 %v732
  %962 = vmatmul.mubr.bf16.gmra.mrb[0].mxu0 %v238
  %v963 = vpop.f32.mrb[0].mxu0
  %v964 = vadd.f32 %v883, %v963
  %v965 = vpop.f32.mrb[0].mxu0
  %v966 = vadd.f32 %v885, %v965
  %v967 = vpop.f32.mrb[0].mxu0
  %v968 = vadd.f32 %v887, %v967
  %v969 = vpop.f32.mrb[0].mxu0
  %v970 = vadd.f32 %v889, %v969
  %971 = vmatprep.mubr.bf16.mxu0 %v735
  %972 = vmatmul.mubr.bf16.gmra.mrb[0].mxu0 %v244
  %v973 = vpop.f32.mrb[0].mxu0
  %v974 = vadd.f32 %v893, %v973
  %v975 = vpop.f32.mrb[0].mxu0
  %v976 = vadd.f32 %v895, %v975
  %v977 = vpop.f32.mrb[0].mxu0
  %v978 = vpop.f32.mrb[0].mxu0
  %979 = vdwg.mxu0
  %v980 = vadd.f32 %v934, %v938
  %v981 = vadd.f32 %v980, %v944
  %v982 = vadd.f32 %v981, %v948
  %v983 = vadd.f32 %v982, %v954
  %v984 = vadd.f32 %v983, %v958
  %v985 = vadd.f32 %v984, %v964
  %v986 = vadd.f32 %v985, %v968
  %v987 = vadd.f32 %v986, %v974
  %v988 = vrot.slane %v987, 4
  %v989 = vadd.f32 %v987, %v988
  %v990 = vrot.slane %v989, 2
  %v991 = vadd.f32 %v989, %v990
  %v992 = vrot.slane %v991, 1
  %v993 = vadd.f32 %v991, %v992
  %v994 = vadd.f32 %v936, %v940
  %v995 = vadd.f32 %v994, %v946
  %v996 = vadd.f32 %v995, %v950
  %v997 = vadd.f32 %v996, %v956
  %v998 = vadd.f32 %v997, %v960
  %v999 = vadd.f32 %v998, %v966
  %v1000 = vadd.f32 %v999, %v970
  %v1001 = vadd.f32 %v1000, %v976
  %v1002 = vrot.slane %v1001, 4
  %v1003 = vadd.f32 %v1001, %v1002
  %v1004 = vrot.slane %v1003, 2
  %v1005 = vadd.f32 %v1003, %v1004
  %v1006 = vrot.slane %v1005, 1
  %v1007 = vadd.f32 %v1005, %v1006
  %v1008 = vmul.f32 %v993, 0.013888889
  %v1009 = vmul.f32 %v1007, 0.013888889
  %v1010 = vmul.f32 %v934, %v934
  %v1011 = vmul.f32 %v936, %v936
  %v1012 = vmul.f32 %v938, %v938
  %v1013 = vmul.f32 %v940, %v940
  %v1014 = vmul.f32 %v944, %v944
  %v1015 = vmul.f32 %v946, %v946
  %v1016 = vmul.f32 %v948, %v948
  %v1017 = vmul.f32 %v950, %v950
  %v1018 = vmul.f32 %v954, %v954
  %v1019 = vmul.f32 %v956, %v956
  %v1020 = vmul.f32 %v958, %v958
  %v1021 = vmul.f32 %v960, %v960
  %v1022 = vmul.f32 %v964, %v964
  %v1023 = vmul.f32 %v966, %v966
  %v1024 = vmul.f32 %v968, %v968
  %v1025 = vmul.f32 %v970, %v970
  %v1026 = vmul.f32 %v974, %v974
  %v1027 = vmul.f32 %v976, %v976
  %v1028 = vadd.f32 %v1010, %v1012
  %v1029 = vadd.f32 %v1028, %v1014
  %v1030 = vadd.f32 %v1029, %v1016
  %v1031 = vadd.f32 %v1030, %v1018
  %v1032 = vadd.f32 %v1031, %v1020
  %v1033 = vadd.f32 %v1032, %v1022
  %v1034 = vadd.f32 %v1033, %v1024
  %v1035 = vadd.f32 %v1034, %v1026
  %v1036 = vrot.slane %v1035, 4
  %v1037 = vadd.f32 %v1035, %v1036
  %v1038 = vrot.slane %v1037, 2
  %v1039 = vadd.f32 %v1037, %v1038
  %v1040 = vrot.slane %v1039, 1
  %v1041 = vadd.f32 %v1039, %v1040
  %v1042 = vadd.f32 %v1011, %v1013
  %v1043 = vadd.f32 %v1042, %v1015
  %v1044 = vadd.f32 %v1043, %v1017
  %v1045 = vadd.f32 %v1044, %v1019
  %v1046 = vadd.f32 %v1045, %v1021
  %v1047 = vadd.f32 %v1046, %v1023
  %v1048 = vadd.f32 %v1047, %v1025
  %v1049 = vadd.f32 %v1048, %v1027
  %v1050 = vrot.slane %v1049, 4
  %v1051 = vadd.f32 %v1049, %v1050
  %v1052 = vrot.slane %v1051, 2
  %v1053 = vadd.f32 %v1051, %v1052
  %v1054 = vrot.slane %v1053, 1
  %v1055 = vadd.f32 %v1053, %v1054
  %v1056 = vmul.f32 %v1041, 0.013888889
  %v1057 = vmul.f32 %v1055, 0.013888889
  %v1058 = vmul.f32 %v1008, %v1008
  %v1059 = vmul.f32 %v1009, %v1009
  %v1060 = vsub.f32 %v1056, %v1058
  %v1061 = vsub.f32 %v1057, %v1059
  %v1062 = vmax.f32 %v1060, 0.0
  %v1063 = vmax.f32 %v1061, 0.0
  %v1064 = vld [vmem:[%s2] sm:$0x3]
  %v1065 = vadd.f32 %v1062, 0.001
  %v1066 = vadd.f32 %v1063, 0.001
  %v1067 = vrsqrt.pop %v1065
  %v1068 = vrsqrt.pop %v1066
  %v1071 = vcombine.low %v1067, %v1068
  %v1073 = vunpack.c.l.s4 1966171168
  %v1074 = vunpack.c.0.s8 %v1073
  %v1075 = vlaneseq
  %v1076 = vshrl.u32 %v1075, 7
  %v1077 = vsub.s32 %v1074, %v1076
  %v1078 = vrot.slane %v1071, %v1077
  %v1080 = vunpack.c.l.s4 1966171168
  %v1081 = vunpack.c.0.s8 %v1080
  %v1082 = vlaneseq
  %v1083 = vshrl.u32 %v1082, 7
  %v1084 = vsub.s32 %v1081, %v1083
  %v1085 = vrot.slane %v1078, %v1084
  %v1087 = vmul.f32 %v1064, %v1085
  %v1088 = vld [vmem:[%s3] sm:$0x3]
  %v1090 = vlaneseq
  %v1091 = vshrl.u32 %v1090, 7
  %v1092 = vsub.s32 0, %v1091
  %v1093 = vrot.slane %v1087, %v1092
  %v1094 = vlaneseq
  %v1095 = vshrl.u32 %v1094, 7
  %v1096 = vsub.s32 1, %v1095
  %v1097 = vrot.slane %v1087, %v1096
  %v1100 = vmul.f32 %v1008, %v1093
  %v1101 = vmul.f32 %v1009, %v1097
  %v1104 = vcombine.low %v1100, %v1101
  %v1106 = vunpack.c.l.s4 1966171168
  %v1107 = vunpack.c.0.s8 %v1106
  %v1108 = vlaneseq
  %v1109 = vshrl.u32 %v1108, 7
  %v1110 = vsub.s32 %v1107, %v1109
  %v1111 = vrot.slane %v1104, %v1110
  %v1113 = vunpack.c.l.s4 1966171168
  %v1114 = vunpack.c.0.s8 %v1113
  %v1115 = vlaneseq
  %v1116 = vshrl.u32 %v1115, 7
  %v1117 = vsub.s32 %v1114, %v1116
  %v1118 = vrot.slane %v1111, %v1117
  %v1120 = vsub.f32 %v1088, %v1118
  %v1121 = vmul.f32 %v934, %v1093
  %v1122 = vmul.f32 %v936, %v1097
  %v1123 = vmul.f32 %v938, %v1093
  %v1124 = vmul.f32 %v940, %v1097
  %v1125 = vmul.f32 %v944, %v1093
  %v1126 = vmul.f32 %v946, %v1097
  %v1127 = vmul.f32 %v948, %v1093
  %v1128 = vmul.f32 %v950, %v1097
  %v1129 = vmul.f32 %v954, %v1093
  %v1130 = vmul.f32 %v956, %v1097
  %v1131 = vmul.f32 %v958, %v1093
  %v1132 = vmul.f32 %v960, %v1097
  %v1133 = vmul.f32 %v964, %v1093
  %v1134 = vmul.f32 %v966, %v1097
  %v1135 = vmul.f32 %v968, %v1093
  %v1136 = vmul.f32 %v970, %v1097
  %v1137 = vmul.f32 %v974, %v1093
  %v1138 = vmul.f32 %v976, %v1097
  %v1140 = vlaneseq
  %v1141 = vshrl.u32 %v1140, 7
  %v1142 = vsub.s32 0, %v1141
  %v1143 = vrot.slane %v1120, %v1142
  %v1144 = vlaneseq
  %v1145 = vshrl.u32 %v1144, 7
  %v1146 = vsub.s32 1, %v1145
  %v1147 = vrot.slane %v1120, %v1146
  %v1150 = vadd.f32 %v1121, %v1143
  %v1151 = vadd.f32 %v1122, %v1147
  %v1152 = vadd.f32 %v1123, %v1143
  %v1153 = vadd.f32 %v1124, %v1147
  %v1154 = vadd.f32 %v1125, %v1143
  %v1155 = vadd.f32 %v1126, %v1147
  %v1156 = vadd.f32 %v1127, %v1143
  %v1157 = vadd.f32 %v1128, %v1147
  %v1158 = vadd.f32 %v1129, %v1143
  %v1159 = vadd.f32 %v1130, %v1147
  %v1160 = vadd.f32 %v1131, %v1143
  %v1161 = vadd.f32 %v1132, %v1147
  %v1162 = vadd.f32 %v1133, %v1143
  %v1163 = vadd.f32 %v1134, %v1147
  %v1164 = vadd.f32 %v1135, %v1143
  %v1165 = vadd.f32 %v1136, %v1147
  %v1166 = vadd.f32 %v1137, %v1143
  %v1167 = vadd.f32 %v1138, %v1147
  %v1168 = vmax.f32 %v1150, 0.0
  %v1169 = vmax.f32 %v1151, 0.0
  %v1170 = vmax.f32 %v1152, 0.0
  %v1171 = vmax.f32 %v1153, 0.0
  %v1172 = vmax.f32 %v1154, 0.0
  %v1173 = vmax.f32 %v1155, 0.0
  %v1174 = vmax.f32 %v1156, 0.0
  %v1175 = vmax.f32 %v1157, 0.0
  %v1176 = vmax.f32 %v1158, 0.0
  %v1177 = vmax.f32 %v1159, 0.0
  %v1178 = vmax.f32 %v1160, 0.0
  %v1179 = vmax.f32 %v1161, 0.0
  %v1180 = vmax.f32 %v1162, 0.0
  %v1181 = vmax.f32 %v1163, 0.0
  %v1182 = vmax.f32 %v1164, 0.0
  %v1183 = vmax.f32 %v1165, 0.0
  %v1184 = vmax.f32 %v1166, 0.0
  %v1185 = vmax.f32 %v1167, 0.0
  %v1186 = vpack.c.bf16 %v1170, %v1168
  %v1187 = vpack.c.bf16 %v1171, %v1169
  %v1188 = vpack.c.bf16 %v1174, %v1172
  %v1189 = vpack.c.bf16 %v1175, %v1173
  %v1190 = vpack.c.bf16 %v1178, %v1176
  %v1191 = vpack.c.bf16 %v1179, %v1177
  %v1192 = vpack.c.bf16 %v1182, %v1180
  %v1193 = vpack.c.bf16 %v1183, %v1181
  %v1194 = vpack.c.bf16 %v1184, %v1184
  %v1195 = vpack.c.bf16 %v1185, %v1185
  %v1206 = vunpack.c.l.b16 %v1186
  %v1207 = vunpack.c.l.b16 %v1187
  %v1208 = vunpack.c.h.b16 %v1186
  %v1209 = vunpack.c.h.b16 %v1187
  %v1210 = vunpack.c.l.b16 %v1188
  %v1211 = vunpack.c.l.b16 %v1189
  %v1212 = vunpack.c.h.b16 %v1188
  %v1213 = vunpack.c.h.b16 %v1189
  %v1214 = vunpack.c.l.b16 %v1190
  %v1215 = vunpack.c.l.b16 %v1191
  %v1216 = vunpack.c.h.b16 %v1190
  %v1217 = vunpack.c.h.b16 %v1191
  %v1218 = vunpack.c.l.b16 %v1192
  %v1219 = vunpack.c.l.b16 %v1193
  %v1220 = vunpack.c.h.b16 %v1192
  %v1221 = vunpack.c.h.b16 %v1193
  %v1222 = vunpack.c.l.b16 %v1194
  %v1223 = vunpack.c.l.b16 %v1195
  %v1224 = vpack.c.b16 %v1207, %v1206
  %v1225 = vpack.c.b16 %v1209, %v1208
  %v1226 = vpack.c.b16 %v1211, %v1210
  %v1227 = vpack.c.b16 %v1213, %v1212
  %v1228 = vpack.c.b16 %v1215, %v1214
  %v1229 = vpack.c.b16 %v1217, %v1216
  %v1230 = vpack.c.b16 %v1219, %v1218
  %v1231 = vpack.c.b16 %v1221, %v1220
  %v1232 = vpack.c.b16 %v1223, %v1222
  %1242 = vst [vmem:[%s4] sm:$0xff] %v1224
  %1243 = vst [vmem:[%s4 + $0x8] sm:$0xff] %v1225
  %1244 = vst [vmem:[%s4 + $0x10] sm:$0xff] %v1226
  %1245 = vst [vmem:[%s4 + $0x18] sm:$0xff] %v1227
  %1246 = vst [vmem:[%s4 + $0x20] sm:$0xff] %v1228
  %1247 = vst [vmem:[%s4 + $0x28] sm:$0xff] %v1229
  %1248 = vst [vmem:[%s4 + $0x30] sm:$0xff] %v1230
  %1249 = vst [vmem:[%s4 + $0x38] sm:$0xff] %v1231
  %1250 = vst [vmem:[%s4 + $0x40] sm:$0xff] %v1232
  // Predicated region
  $region18: #{stem_forward.18} parent=0 // pred_check
    _
  $region19: #{stem_forward.18} parent=0 // pred_check_branch
    %1252 = sbr.rel (0) target = $region21
  $region20: #{stem_forward.18} parent=0 // pred_region
    _
  $region21: #{stem_forward.18} parent=0 // pred_fallthru
    _
  // Predicated region
  $region22: #{stem_forward.18} parent=0 // pred_check
    _
  $region23: #{stem_forward.18} parent=0 // pred_check_branch
    %1254 = sbr.rel (0) target = $region25
  $region24: #{stem_forward.18} parent=0 // pred_region
    _
  $region25: #{stem_forward.18} parent=0 // pred_fallthru
    _

// kernel: stem_forward.19
$region0: #{stem_forward.19}
  #allocation0 [shape = 'u32[]', space=smem, size = 0x4, offset = 0x4, fixed_abs, tag = 'smem constant byte address 0x4 - core index']
  #allocation1 [shape = 'u32[144,128]{1,0:T(1,128)}', space=vmem, size = 0x12000, scoped, tag = 'internal scratch']
  %s0 = inlined_call_operand.vmem [shape: bf16[8,1728], index: 0, kind: input, shape index: {}]
  %s1 = inlined_call_operand.vmem [shape: bf16[1728,256], index: 1, kind: input, shape index: {}]
  %s2 = inlined_call_operand.vmem [shape: f32[1,256], index: 2, kind: input, shape index: {}]
  %s3 = inlined_call_operand.vmem [shape: f32[1,256], index: 3, kind: input, shape index: {}]
  %s4 = inlined_call_operand.vmem [shape: bf16[8,256], index: 4, kind: output, shape index: {}]
  %s5 = sld [smem:[#allocation0]]
  $region26: #{stem_forward.19} parent=0
    _
  %s7 = ssub.s32 1, %s5
  %s8 = scalar_select 0, %s7, %s5
  // Predicated region
  $region2: #{stem_forward.19} parent=0 // pred_check
    _
  $region3: #{stem_forward.19} parent=0 // pred_check_branch
    %10 = sbr.rel (0) target = $region5
  $region4: #{stem_forward.19} parent=0 // pred_region
    _
  $region5: #{stem_forward.19} parent=0 // pred_fallthru
    _
  // Predicated region
  $region6: #{stem_forward.19} parent=0 // pred_check
    _
  $region7: #{stem_forward.19} parent=0 // pred_check_branch
    %12 = sbr.rel (0) target = $region9
  $region8: #{stem_forward.19} parent=0 // pred_region
    _
  $region9: #{stem_forward.19} parent=0 // pred_fallthru
    _
  // Predicated region
  $region10: #{stem_forward.19} parent=0 // pred_check
    _
  $region11: #{stem_forward.19} parent=0 // pred_check_branch
    %14 = sbr.rel (0) target = $region13
  $region12: #{stem_forward.19} parent=0 // pred_region
    _
  $region13: #{stem_forward.19} parent=0 // pred_fallthru
    _
  // Predicated region
  $region14: #{stem_forward.19} parent=0 // pred_check
    _
  $region15: #{stem_forward.19} parent=0 // pred_check_branch
    %16 = sbr.rel (0) target = $region17
  $region16: #{stem_forward.19} parent=0 // pred_region
    _
  $region17: #{stem_forward.19} parent=0 // pred_fallthru
    _
  %v18 = vld [vmem:[%s0] sm:$0xff]
  %v19 = vld [vmem:[%s0 + $0x8] sm:$0xff]
  %v20 = vld [vmem:[%s0 + $0x10] sm:$0xff]
  %v21 = vld [vmem:[%s0 + $0x18] sm:$0xff]
  %v22 = vld [vmem:[%s0 + $0x20] sm:$0xff]
  %v23 = vld [vmem:[%s0 + $0x28] sm:$0xff]
  %v24 = vld [vmem:[%s0 + $0x30] sm:$0xff]
  %v25 = vld [vmem:[%s1] sm:$0xff]
  %v26 = vld [vmem:[%s1 + $0x8] sm:$0xff]
  %v27 = vld [vmem:[%s1 + $0x10] sm:$0xff]
  %v28 = vld [vmem:[%s1 + $0x18] sm:$0xff]
  %v29 = vld [vmem:[%s1 + $0x20] sm:$0xff]
  %v30 = vld [vmem:[%s1 + $0x28] sm:$0xff]
  %v31 = vld [vmem:[%s1 + $0x30] sm:$0xff]
  %v32 = vld [vmem:[%s1 + $0x38] sm:$0xff]
  %v33 = vld [vmem:[%s1 + $0x40] sm:$0xff]
  %v34 = vld [vmem:[%s1 + $0x48] sm:$0xff]
  %v35 = vld [vmem:[%s1 + $0x50] sm:$0xff]
  %v36 = vld [vmem:[%s1 + $0x58] sm:$0xff]
  %v37 = vld [vmem:[%s1 + $0x60] sm:$0xff]
  %v38 = vld [vmem:[%s1 + $0x68] sm:$0xff]
  %v39 = vld [vmem:[%s1 + $0x70] sm:$0xff]
  %v40 = vld [vmem:[%s1 + $0x78] sm:$0xff]
  %v41 = vld [vmem:[%s1 + $0x80] sm:$0xff]
  %v42 = vld [vmem:[%s1 + $0x88] sm:$0xff]
  %v43 = vld [vmem:[%s1 + $0x90] sm:$0xff]
  %v44 = vld [vmem:[%s1 + $0x98] sm:$0xff]
  %v45 = vld [vmem:[%s1 + $0xa0] sm:$0xff]
  %v46 = vld [vmem:[%s1 + $0xa8] sm:$0xff]
  %v47 = vld [vmem:[%s1 + $0xb0] sm:$0xff]
  %v48 = vld [vmem:[%s1 + $0xb8] sm:$0xff]
  %v49 = vld [vmem:[%s1 + $0xc0] sm:$0xff]
  %v50 = vld [vmem:[%s1 + $0xc8] sm:$0xff]
  %v51 = vld [vmem:[%s1 + $0xd0] sm:$0xff]
  %v52 = vld [vmem:[%s1 + $0xd8] sm:$0xff]
  %v53 = vld [vmem:[%s1 + $0xe0] sm:$0xff]
  %v54 = vld [vmem:[%s1 + $0xe8] sm:$0xff]
  %v55 = vld [vmem:[%s1 + $0xf0] sm:$0xff]
  %v56 = vld [vmem:[%s1 + $0xf8] sm:$0xff]
  %v57 = vld [vmem:[%s1 + $0x100] sm:$0xff]
  %v58 = vld [vmem:[%s1 + $0x108] sm:$0xff]
  %v59 = vld [vmem:[%s1 + $0x110] sm:$0xff]
  %v60 = vld [vmem:[%s1 + $0x118] sm:$0xff]
  %v61 = vld [vmem:[%s1 + $0x120] sm:$0xff]
  %v62 = vld [vmem:[%s1 + $0x128] sm:$0xff]
  %v63 = vld [vmem:[%s1 + $0x130] sm:$0xff]
  %v64 = vld [vmem:[%s1 + $0x138] sm:$0xff]
  %v65 = vld [vmem:[%s1 + $0x140] sm:$0xff]
  %v66 = vld [vmem:[%s1 + $0x148] sm:$0xff]
  %v67 = vld [vmem:[%s1 + $0x150] sm:$0xff]
  %v68 = vld [vmem:[%s1 + $0x158] sm:$0xff]
  %v69 = vld [vmem:[%s1 + $0x160] sm:$0xff]
  %v70 = vld [vmem:[%s1 + $0x168] sm:$0xff]
  %v71 = vld [vmem:[%s1 + $0x170] sm:$0xff]
  %v72 = vld [vmem:[%s1 + $0x178] sm:$0xff]
  %v73 = vld [vmem:[%s1 + $0x180] sm:$0xff]
  %v74 = vld [vmem:[%s1 + $0x188] sm:$0xff]
  %v75 = vld [vmem:[%s1 + $0x190] sm:$0xff]
  %v76 = vld [vmem:[%s1 + $0x198] sm:$0xff]
  %v77 = vld [vmem:[%s1 + $0x1a0] sm:$0xff]
  %v78 = vld [vmem:[%s1 + $0x1a8] sm:$0xff]
  %v79 = vld [vmem:[%s1 + $0x1b0] sm:$0xff]
  %v80 = vld [vmem:[%s1 + $0x1b8] sm:$0xff]
  %v81 = vld [vmem:[%s1 + $0x1c0] sm:$0xff]
  %v82 = vld [vmem:[%s1 + $0x1c8] sm:$0xff]
  %v83 = vld [vmem:[%s1 + $0x1d0] sm:$0xff]
  %v84 = vld [vmem:[%s1 + $0x1d8] sm:$0xff]
  %v85 = vld [vmem:[%s1 + $0x1e0] sm:$0xff]
  %v86 = vld [vmem:[%s1 + $0x1e8] sm:$0xff]
  %v87 = vld [vmem:[%s1 + $0x1f0] sm:$0xff]
  %v88 = vld [vmem:[%s1 + $0x1f8] sm:$0xff]
  %v89 = vld [vmem:[%s1 + $0x200] sm:$0xff]
  %v90 = vld [vmem:[%s1 + $0x208] sm:$0xff]
  %v91 = vld [vmem:[%s1 + $0x210] sm:$0xff]
  %v92 = vld [vmem:[%s1 + $0x218] sm:$0xff]
  %v93 = vld [vmem:[%s1 + $0x220] sm:$0xff]
  %v94 = vld [vmem:[%s1 + $0x228] sm:$0xff]
  %v95 = vld [vmem:[%s1 + $0x230] sm:$0xff]
  %v96 = vld [vmem:[%s1 + $0x238] sm:$0xff]
  %v97 = vld [vmem:[%s1 + $0x240] sm:$0xff]
  %v98 = vld [vmem:[%s1 + $0x248] sm:$0xff]
  %v99 = vld [vmem:[%s1 + $0x250] sm:$0xff]
  %v100 = vld [vmem:[%s1 + $0x258] sm:$0xff]
  %v101 = vld [vmem:[%s1 + $0x260] sm:$0xff]
  %v102 = vld [vmem:[%s1 + $0x268] sm:$0xff]
  %v103 = vld [vmem:[%s1 + $0x270] sm:$0xff]
  %v104 = vld [vmem:[%s1 + $0x278] sm:$0xff]
  %v105 = vld [vmem:[%s1 + $0x280] sm:$0xff]
  %v106 = vld [vmem:[%s1 + $0x288] sm:$0xff]
  %v107 = vld [vmem:[%s1 + $0x290] sm:$0xff]
  %v108 = vld [vmem:[%s1 + $0x298] sm:$0xff]
  %v109 = vld [vmem:[%s1 + $0x2a0] sm:$0xff]
  %v110 = vld [vmem:[%s1 + $0x2a8] sm:$0xff]
  %v111 = vld [vmem:[%s1 + $0x2b0] sm:$0xff]
  %v112 = vld [vmem:[%s1 + $0x2b8] sm:$0xff]
  %v113 = vld [vmem:[%s1 + $0x2c0] sm:$0xff]
  %v114 = vld [vmem:[%s1 + $0x2c8] sm:$0xff]
  %v115 = vld [vmem:[%s1 + $0x2d0] sm:$0xff]
  %v116 = vld [vmem:[%s1 + $0x2d8] sm:$0xff]
  %v117 = vld [vmem:[%s1 + $0x2e0] sm:$0xff]
  %v118 = vld [vmem:[%s1 + $0x2e8] sm:$0xff]
  %v119 = vld [vmem:[%s1 + $0x2f0] sm:$0xff]
  %v120 = vld [vmem:[%s1 + $0x2f8] sm:$0xff]
  %v121 = vld [vmem:[%s1 + $0x300] sm:$0xff]
  %v122 = vld [vmem:[%s1 + $0x308] sm:$0xff]
  %v123 = vld [vmem:[%s1 + $0x310] sm:$0xff]
  %v124 = vld [vmem:[%s1 + $0x318] sm:$0xff]
  %v125 = vld [vmem:[%s1 + $0x320] sm:$0xff]
  %v126 = vld [vmem:[%s1 + $0x328] sm:$0xff]
  %v127 = vld [vmem:[%s1 + $0x330] sm:$0xff]
  %v128 = vld [vmem:[%s1 + $0x338] sm:$0xff]
  %v129 = vld [vmem:[%s1 + $0x340] sm:$0xff]
  %v130 = vld [vmem:[%s1 + $0x348] sm:$0xff]
  %v131 = vld [vmem:[%s1 + $0x350] sm:$0xff]
  %v132 = vld [vmem:[%s1 + $0x358] sm:$0xff]
  %v133 = vld [vmem:[%s1 + $0x360] sm:$0xff]
  %v134 = vld [vmem:[%s1 + $0x368] sm:$0xff]
  %v135 = vld [vmem:[%s1 + $0x370] sm:$0xff]
  %v136 = vld [vmem:[%s1 + $0x378] sm:$0xff]
  %v137 = vld [vmem:[%s1 + $0x380] sm:$0xff]
  %v138 = vld [vmem:[%s1 + $0x388] sm:$0xff]
  %v139 = vld [vmem:[%s1 + $0x390] sm:$0xff]
  %v140 = vld [vmem:[%s1 + $0x398] sm:$0xff]
  %v141 = vld [vmem:[%s1 + $0x3a0] sm:$0xff]
  %v142 = vld [vmem:[%s1 + $0x3a8] sm:$0xff]
  %v143 = vld [vmem:[%s1 + $0x3b0] sm:$0xff]
  %v144 = vld [vmem:[%s1 + $0x3b8] sm:$0xff]
  %v145 = vld [vmem:[%s1 + $0x3c0] sm:$0xff]
  %v146 = vld [vmem:[%s1 + $0x3c8] sm:$0xff]
  %v147 = vld [vmem:[%s1 + $0x3d0] sm:$0xff]
  %v148 = vld [vmem:[%s1 + $0x3d8] sm:$0xff]
  %v149 = vld [vmem:[%s1 + $0x3e0] sm:$0xff]
  %v150 = vld [vmem:[%s1 + $0x3e8] sm:$0xff]
  %v151 = vld [vmem:[%s1 + $0x3f0] sm:$0xff]
  %v152 = vld [vmem:[%s1 + $0x3f8] sm:$0xff]
  %v153 = vld [vmem:[%s1 + $0x400] sm:$0xff]
  %v154 = vld [vmem:[%s1 + $0x408] sm:$0xff]
  %v155 = vld [vmem:[%s1 + $0x410] sm:$0xff]
  %v156 = vld [vmem:[%s1 + $0x418] sm:$0xff]
  %v157 = vld [vmem:[%s1 + $0x420] sm:$0xff]
  %v158 = vld [vmem:[%s1 + $0x428] sm:$0xff]
  %v159 = vld [vmem:[%s1 + $0x430] sm:$0xff]
  %v160 = vld [vmem:[%s1 + $0x438] sm:$0xff]
  %v161 = vld [vmem:[%s1 + $0x440] sm:$0xff]
  %v162 = vld [vmem:[%s1 + $0x448] sm:$0xff]
  %v163 = vld [vmem:[%s1 + $0x450] sm:$0xff]
  %v164 = vld [vmem:[%s1 + $0x458] sm:$0xff]
  %v165 = vld [vmem:[%s1 + $0x460] sm:$0xff]
  %v166 = vld [vmem:[%s1 + $0x468] sm:$0xff]
  %v167 = vld [vmem:[%s1 + $0x470] sm:$0xff]
  %v168 = vld [vmem:[%s1 + $0x478] sm:$0xff]
  %v169 = vld [vmem:[%s1 + $0x480] sm:$0xff]
  %v170 = vld [vmem:[%s1 + $0x488] sm:$0xff]
  %v171 = vld [vmem:[%s1 + $0x490] sm:$0xff]
  %v172 = vld [vmem:[%s1 + $0x498] sm:$0xff]
  %v173 = vld [vmem:[%s1 + $0x4a0] sm:$0xff]
  %v174 = vld [vmem:[%s1 + $0x4a8] sm:$0xff]
  %v175 = vld [vmem:[%s1 + $0x4b0] sm:$0xff]
  %v176 = vld [vmem:[%s1 + $0x4b8] sm:$0xff]
  %v177 = vld [vmem:[%s1 + $0x4c0] sm:$0xff]
  %v178 = vld [vmem:[%s1 + $0x4c8] sm:$0xff]
  %v179 = vld [vmem:[%s1 + $0x4d0] sm:$0xff]
  %v180 = vld [vmem:[%s1 + $0x4d8] sm:$0xff]
  %v181 = vld [vmem:[%s1 + $0x4e0] sm:$0xff]
  %v182 = vld [vmem:[%s1 + $0x4e8] sm:$0xff]
  %v183 = vld [vmem:[%s1 + $0x4f0] sm:$0xff]
  %v184 = vld [vmem:[%s1 + $0x4f8] sm:$0xff]
  %v185 = vld [vmem:[%s1 + $0x500] sm:$0xff]
  %v186 = vld [vmem:[%s1 + $0x508] sm:$0xff]
  %v187 = vld [vmem:[%s1 + $0x510] sm:$0xff]
  %v188 = vld [vmem:[%s1 + $0x518] sm:$0xff]
  %v189 = vld [vmem:[%s1 + $0x520] sm:$0xff]
  %v190 = vld [vmem:[%s1 + $0x528] sm:$0xff]
  %v191 = vld [vmem:[%s1 + $0x530] sm:$0xff]
  %v192 = vld [vmem:[%s1 + $0x538] sm:$0xff]
  %v193 = vld [vmem:[%s1 + $0x540] sm:$0xff]
  %v194 = vld [vmem:[%s1 + $0x548] sm:$0xff]
  %v195 = vld [vmem:[%s1 + $0x550] sm:$0xff]
  %v196 = vld [vmem:[%s1 + $0x558] sm:$0xff]
  %v197 = vld [vmem:[%s1 + $0x560] sm:$0xff]
  %v198 = vld [vmem:[%s1 + $0x568] sm:$0xff]
  %v199 = vld [vmem:[%s1 + $0x570] sm:$0xff]
  %v200 = vld [vmem:[%s1 + $0x578] sm:$0xff]
  %v201 = vld [vmem:[%s1 + $0x580] sm:$0xff]
  %v202 = vld [vmem:[%s1 + $0x588] sm:$0xff]
  %v203 = vld [vmem:[%s1 + $0x590] sm:$0xff]
  %v204 = vld [vmem:[%s1 + $0x598] sm:$0xff]
  %v205 = vld [vmem:[%s1 + $0x5a0] sm:$0xff]
  %v206 = vld [vmem:[%s1 + $0x5a8] sm:$0xff]
  %v207 = vld [vmem:[%s1 + $0x5b0] sm:$0xff]
  %v208 = vld [vmem:[%s1 + $0x5b8] sm:$0xff]
  %v209 = vld [vmem:[%s1 + $0x5c0] sm:$0xff]
  %v210 = vld [vmem:[%s1 + $0x5c8] sm:$0xff]
  %v211 = vld [vmem:[%s1 + $0x5d0] sm:$0xff]
  %v212 = vld [vmem:[%s1 + $0x5d8] sm:$0xff]
  %v213 = vld [vmem:[%s1 + $0x5e0] sm:$0xff]
  %v214 = vld [vmem:[%s1 + $0x5e8] sm:$0xff]
  %v215 = vld [vmem:[%s1 + $0x5f0] sm:$0xff]
  %v216 = vld [vmem:[%s1 + $0x5f8] sm:$0xff]
  %v217 = vld [vmem:[%s1 + $0x600] sm:$0xff]
  %v218 = vld [vmem:[%s1 + $0x608] sm:$0xff]
  %v219 = vld [vmem:[%s1 + $0x610] sm:$0xff]
  %v220 = vld [vmem:[%s1 + $0x618] sm:$0xff]
  %v221 = vld [vmem:[%s1 + $0x620] sm:$0xff]
  %v222 = vld [vmem:[%s1 + $0x628] sm:$0xff]
  %v223 = vld [vmem:[%s1 + $0x630] sm:$0xff]
  %v224 = vld [vmem:[%s1 + $0x638] sm:$0xff]
  %v225 = vld [vmem:[%s1 + $0x640] sm:$0xff]
  %v226 = vld [vmem:[%s1 + $0x648] sm:$0xff]
  %v227 = vld [vmem:[%s1 + $0x650] sm:$0xff]
  %v228 = vld [vmem:[%s1 + $0x658] sm:$0xff]
  %v229 = vld [vmem:[%s1 + $0x660] sm:$0xff]
  %v230 = vld [vmem:[%s1 + $0x668] sm:$0xff]
  %v231 = vld [vmem:[%s1 + $0x670] sm:$0xff]
  %v232 = vld [vmem:[%s1 + $0x678] sm:$0xff]
  %v233 = vld [vmem:[%s1 + $0x680] sm:$0xff]
  %v234 = vld [vmem:[%s1 + $0x688] sm:$0xff]
  %v235 = vld [vmem:[%s1 + $0x690] sm:$0xff]
  %v236 = vld [vmem:[%s1 + $0x698] sm:$0xff]
  %v237 = vld [vmem:[%s1 + $0x6a0] sm:$0xff]
  %v238 = vld [vmem:[%s1 + $0x6a8] sm:$0xff]
  %v239 = vld [vmem:[%s1 + $0x6b0] sm:$0xff]
  %v240 = vld [vmem:[%s1 + $0x6b8] sm:$0xff]
  %v248 = vunpack.c.l.b16 %v18
  %v249 = vunpack.c.h.b16 %v18
  %v250 = vunpack.c.l.b16 %v19
  %v251 = vunpack.c.h.b16 %v19
  %v252 = vunpack.c.l.b16 %v20
  %v253 = vunpack.c.h.b16 %v20
  %v254 = vunpack.c.l.b16 %v21
  %v255 = vunpack.c.h.b16 %v21
  %v256 = vunpack.c.l.b16 %v22
  %v257 = vunpack.c.h.b16 %v22
  %v258 = vunpack.c.l.b16 %v23
  %v259 = vunpack.c.h.b16 %v23
  %v260 = vunpack.c.l.b16 %v24
  %v261 = vunpack.c.h.b16 %v24
  %v262 = vpack.c.b16 %v248, %v248
  %v263 = vpack.c.b16 %v249, %v249
  %v264 = vpack.c.b16 %v250, %v250
  %v265 = vpack.c.b16 %v251, %v251
  %v266 = vpack.c.b16 %v252, %v252
  %v267 = vpack.c.b16 %v253, %v253
  %v268 = vpack.c.b16 %v254, %v254
  %v269 = vpack.c.b16 %v255, %v255
  %v270 = vpack.c.b16 %v256, %v256
  %v271 = vpack.c.b16 %v257, %v257
  %v272 = vpack.c.b16 %v258, %v258
  %v273 = vpack.c.b16 %v259, %v259
  %v274 = vpack.c.b16 %v260, %v260
  %v275 = vpack.c.b16 %v261, %v261
  %v505 = vunpack.c.l.b16 %v25
  %v506 = vunpack.c.h.b16 %v25
  %v507 = vunpack.c.l.b16 %v26
  %v508 = vunpack.c.h.b16 %v26
  %v509 = vunpack.c.l.b16 %v27
  %v510 = vunpack.c.h.b16 %v27
  %v511 = vunpack.c.l.b16 %v28
  %v512 = vunpack.c.h.b16 %v28
  %v513 = vunpack.c.l.b16 %v29
  %v514 = vunpack.c.h.b16 %v29
  %v515 = vunpack.c.l.b16 %v30
  %v516 = vunpack.c.h.b16 %v30
  %v517 = vunpack.c.l.b16 %v31
  %v518 = vunpack.c.h.b16 %v31
  %v519 = vunpack.c.l.b16 %v32
  %v520 = vunpack.c.h.b16 %v32
  %v521 = vunpack.c.l.b16 %v33
  %v522 = vunpack.c.h.b16 %v33
  %v523 = vunpack.c.l.b16 %v34
  %v524 = vunpack.c.h.b16 %v34
  %v525 = vunpack.c.l.b16 %v35
  %v526 = vunpack.c.h.b16 %v35
  %v527 = vunpack.c.l.b16 %v36
  %v528 = vunpack.c.h.b16 %v36
  %v529 = vunpack.c.l.b16 %v37
  %v530 = vunpack.c.h.b16 %v37
  %v531 = vunpack.c.l.b16 %v38
  %v532 = vunpack.c.h.b16 %v38
  %v533 = vunpack.c.l.b16 %v39
  %v534 = vunpack.c.h.b16 %v39
  %v535 = vunpack.c.l.b16 %v40
  %v536 = vunpack.c.h.b16 %v40
  %v537 = vunpack.c.l.b16 %v41
  %v538 = vunpack.c.h.b16 %v41
  %v539 = vunpack.c.l.b16 %v42
  %v540 = vunpack.c.h.b16 %v42
  %v541 = vunpack.c.l.b16 %v43
  %v542 = vunpack.c.h.b16 %v43
  %v543 = vunpack.c.l.b16 %v44
  %v544 = vunpack.c.h.b16 %v44
  %v545 = vunpack.c.l.b16 %v45
  %v546 = vunpack.c.h.b16 %v45
  %v547 = vunpack.c.l.b16 %v46
  %v548 = vunpack.c.h.b16 %v46
  %v549 = vunpack.c.l.b16 %v47
  %v550 = vunpack.c.h.b16 %v47
  %v551 = vunpack.c.l.b16 %v48
  %v552 = vunpack.c.h.b16 %v48
  %v553 = vunpack.c.l.b16 %v49
  %v554 = vunpack.c.h.b16 %v49
  %v555 = vunpack.c.l.b16 %v50
  %v556 = vunpack.c.h.b16 %v50
  %v557 = vunpack.c.l.b16 %v51
  %v558 = vunpack.c.h.b16 %v51
  %v559 = vunpack.c.l.b16 %v52
  %v560 = vunpack.c.h.b16 %v52
  %v561 = vunpack.c.l.b16 %v53
  %v562 = vunpack.c.h.b16 %v53
  %v563 = vunpack.c.l.b16 %v54
  %v564 = vunpack.c.h.b16 %v54
  %v565 = vunpack.c.l.b16 %v55
  %v566 = vunpack.c.h.b16 %v55
  %v567 = vunpack.c.l.b16 %v56
  %v568 = vunpack.c.h.b16 %v56
  %v569 = vunpack.c.l.b16 %v57
  %v570 = vunpack.c.h.b16 %v57
  %v571 = vunpack.c.l.b16 %v58
  %v572 = vunpack.c.h.b16 %v58
  %v573 = vunpack.c.l.b16 %v59
  %v574 = vunpack.c.h.b16 %v59
  %v575 = vunpack.c.l.b16 %v60
  %v576 = vunpack.c.h.b16 %v60
  %v577 = vunpack.c.l.b16 %v61
  %v578 = vunpack.c.h.b16 %v61
  %v579 = vunpack.c.l.b16 %v62
  %v580 = vunpack.c.h.b16 %v62
  %v581 = vunpack.c.l.b16 %v63
  %v582 = vunpack.c.h.b16 %v63
  %v583 = vunpack.c.l.b16 %v64
  %v584 = vunpack.c.h.b16 %v64
  %v585 = vunpack.c.l.b16 %v65
  %v586 = vunpack.c.h.b16 %v65
  %v587 = vunpack.c.l.b16 %v66
  %v588 = vunpack.c.h.b16 %v66
  %v589 = vunpack.c.l.b16 %v67
  %v590 = vunpack.c.h.b16 %v67
  %v591 = vunpack.c.l.b16 %v68
  %v592 = vunpack.c.h.b16 %v68
  %v593 = vunpack.c.l.b16 %v69
  %v594 = vunpack.c.h.b16 %v69
  %v595 = vunpack.c.l.b16 %v70
  %v596 = vunpack.c.h.b16 %v70
  %v597 = vunpack.c.l.b16 %v71
  %v598 = vunpack.c.h.b16 %v71
  %v599 = vunpack.c.l.b16 %v72
  %v600 = vunpack.c.h.b16 %v72
  %v601 = vunpack.c.l.b16 %v73
  %v602 = vunpack.c.h.b16 %v73
  %v603 = vunpack.c.l.b16 %v74
  %v604 = vunpack.c.h.b16 %v74
  %v605 = vunpack.c.l.b16 %v75
  %v606 = vunpack.c.h.b16 %v75
  %v607 = vunpack.c.l.b16 %v76
  %v608 = vunpack.c.h.b16 %v76
  %v609 = vunpack.c.l.b16 %v77
  %v610 = vunpack.c.h.b16 %v77
  %v611 = vunpack.c.l.b16 %v78
  %v612 = vunpack.c.h.b16 %v78
  %v613 = vunpack.c.l.b16 %v79
  %v614 = vunpack.c.h.b16 %v79
  %v615 = vunpack.c.l.b16 %v80
  %v616 = vunpack.c.h.b16 %v80
  %v617 = vunpack.c.l.b16 %v81
  %v618 = vunpack.c.h.b16 %v81
  %v619 = vunpack.c.l.b16 %v82
  %v620 = vunpack.c.h.b16 %v82
  %v621 = vunpack.c.l.b16 %v83
  %v622 = vunpack.c.h.b16 %v83
  %v623 = vunpack.c.l.b16 %v84
  %v624 = vunpack.c.h.b16 %v84
  %v625 = vunpack.c.l.b16 %v85
  %v626 = vunpack.c.h.b16 %v85
  %v627 = vunpack.c.l.b16 %v86
  %v628 = vunpack.c.h.b16 %v86
  %v629 = vunpack.c.l.b16 %v87
  %v630 = vunpack.c.h.b16 %v87
  %v631 = vunpack.c.l.b16 %v88
  %v632 = vunpack.c.h.b16 %v88
  %v633 = vunpack.c.l.b16 %v89
  %v634 = vunpack.c.h.b16 %v89
  %v635 = vunpack.c.l.b16 %v90
  %v636 = vunpack.c.h.b16 %v90
  %v637 = vunpack.c.l.b16 %v91
  %v638 = vunpack.c.h.b16 %v91
  %v639 = vunpack.c.l.b16 %v92
  %v640 = vunpack.c.h.b16 %v92
  %v641 = vunpack.c.l.b16 %v93
  %v642 = vunpack.c.h.b16 %v93
  %v643 = vunpack.c.l.b16 %v94
  %v644 = vunpack.c.h.b16 %v94
  %v645 = vunpack.c.l.b16 %v95
  %v646 = vunpack.c.h.b16 %v95
  %v647 = vunpack.c.l.b16 %v96
  %v648 = vunpack.c.h.b16 %v96
  %v649 = vunpack.c.l.b16 %v97
  %v650 = vunpack.c.h.b16 %v97
  %v651 = vunpack.c.l.b16 %v98
  %v652 = vunpack.c.h.b16 %v98
  %v653 = vunpack.c.l.b16 %v99
  %v654 = vunpack.c.h.b16 %v99
  %v655 = vunpack.c.l.b16 %v100
  %v656 = vunpack.c.h.b16 %v100
  %v657 = vunpack.c.l.b16 %v101
  %v658 = vunpack.c.h.b16 %v101
  %v659 = vunpack.c.l.b16 %v102
  %v660 = vunpack.c.h.b16 %v102
  %v661 = vunpack.c.l.b16 %v103
  %v662 = vunpack.c.h.b16 %v103
  %v663 = vunpack.c.l.b16 %v104
  %v664 = vunpack.c.h.b16 %v104
  %v665 = vunpack.c.l.b16 %v105
  %v666 = vunpack.c.h.b16 %v105
  %v667 = vunpack.c.l.b16 %v106
  %v668 = vunpack.c.h.b16 %v106
  %v669 = vunpack.c.l.b16 %v107
  %v670 = vunpack.c.h.b16 %v107
  %v671 = vunpack.c.l.b16 %v108
  %v672 = vunpack.c.h.b16 %v108
  %v673 = vunpack.c.l.b16 %v109
  %v674 = vunpack.c.h.b16 %v109
  %v675 = vunpack.c.l.b16 %v110
  %v676 = vunpack.c.h.b16 %v110
  %v677 = vunpack.c.l.b16 %v111
  %v678 = vunpack.c.h.b16 %v111
  %v679 = vunpack.c.l.b16 %v112
  %v680 = vunpack.c.h.b16 %v112
  %v681 = vunpack.c.l.b16 %v113
  %v682 = vunpack.c.h.b16 %v113
  %v683 = vunpack.c.l.b16 %v114
  %v684 = vunpack.c.h.b16 %v114
  %v685 = vunpack.c.l.b16 %v115
  %v686 = vunpack.c.h.b16 %v115
  %v687 = vunpack.c.l.b16 %v116
  %v688 = vunpack.c.h.b16 %v116
  %v689 = vunpack.c.l.b16 %v117
  %v690 = vunpack.c.h.b16 %v117
  %v691 = vunpack.c.l.b16 %v118
  %v692 = vunpack.c.h.b16 %v118
  %v693 = vunpack.c.l.b16 %v119
  %v694 = vunpack.c.h.b16 %v119
  %v695 = vunpack.c.l.b16 %v120
  %v696 = vunpack.c.h.b16 %v120
  %v697 = vunpack.c.l.b16 %v121
  %v698 = vunpack.c.h.b16 %v121
  %v699 = vunpack.c.l.b16 %v122
  %v700 = vunpack.c.h.b16 %v122
  %v701 = vunpack.c.l.b16 %v123
  %v702 = vunpack.c.h.b16 %v123
  %v703 = vunpack.c.l.b16 %v124
  %v704 = vunpack.c.h.b16 %v124
  %v705 = vunpack.c.l.b16 %v125
  %v706 = vunpack.c.h.b16 %v125
  %v707 = vunpack.c.l.b16 %v126
  %v708 = vunpack.c.h.b16 %v126
  %v709 = vunpack.c.l.b16 %v127
  %v710 = vunpack.c.h.b16 %v127
  %v711 = vunpack.c.l.b16 %v128
  %v712 = vunpack.c.h.b16 %v128
  %v713 = vunpack.c.l.b16 %v129
  %v714 = vunpack.c.h.b16 %v129
  %v715 = vunpack.c.l.b16 %v130
  %v716 = vunpack.c.h.b16 %v130
  %v717 = vunpack.c.l.b16 %v131
  %v718 = vunpack.c.h.b16 %v131
  %v719 = vunpack.c.l.b16 %v132
  %v720 = vunpack.c.h.b16 %v132
  %v721 = vunpack.c.l.b16 %v133
  %v722 = vunpack.c.h.b16 %v133
  %v723 = vunpack.c.l.b16 %v134
  %v724 = vunpack.c.h.b16 %v134
  %v725 = vunpack.c.l.b16 %v135
  %v726 = vunpack.c.h.b16 %v135
  %v727 = vunpack.c.l.b16 %v136
  %v728 = vunpack.c.h.b16 %v136
  %v729 = vunpack.c.l.b16 %v137
  %v730 = vunpack.c.h.b16 %v137
  %v731 = vunpack.c.l.b16 %v138
  %v732 = vunpack.c.h.b16 %v138
  %v733 = vunpack.c.l.b16 %v139
  %v734 = vunpack.c.h.b16 %v139
  %v735 = vunpack.c.l.b16 %v140
  %v736 = vunpack.c.h.b16 %v140
  %v737 = vunpack.c.l.b16 %v141
  %v738 = vunpack.c.h.b16 %v141
  %v739 = vunpack.c.l.b16 %v142
  %v740 = vunpack.c.h.b16 %v142
  %v741 = vunpack.c.l.b16 %v143
  %v742 = vunpack.c.h.b16 %v143
  %v743 = vunpack.c.l.b16 %v144
  %v744 = vunpack.c.h.b16 %v144
  %v745 = vunpack.c.l.b16 %v145
  %v746 = vunpack.c.h.b16 %v145
  %v747 = vunpack.c.l.b16 %v146
  %v748 = vunpack.c.h.b16 %v146
  %v749 = vunpack.c.l.b16 %v147
  %v750 = vunpack.c.h.b16 %v147
  %v751 = vunpack.c.l.b16 %v148
  %v752 = vunpack.c.h.b16 %v148
  %v753 = vunpack.c.l.b16 %v149
  %v754 = vunpack.c.h.b16 %v149
  %v755 = vunpack.c.l.b16 %v150
  %v756 = vunpack.c.h.b16 %v150
  %v757 = vunpack.c.l.b16 %v151
  %v758 = vunpack.c.h.b16 %v151
  %v759 = vunpack.c.l.b16 %v152
  %v760 = vunpack.c.h.b16 %v152
  %v761 = vunpack.c.l.b16 %v153
  %v762 = vunpack.c.h.b16 %v153
  %v763 = vunpack.c.l.b16 %v154
  %v764 = vunpack.c.h.b16 %v154
  %v765 = vunpack.c.l.b16 %v155
  %v766 = vunpack.c.h.b16 %v155
  %v767 = vunpack.c.l.b16 %v156
  %v768 = vunpack.c.h.b16 %v156
  %v769 = vunpack.c.l.b16 %v157
  %v770 = vunpack.c.h.b16 %v157
  %v771 = vunpack.c.l.b16 %v158
  %v772 = vunpack.c.h.b16 %v158
  %v773 = vunpack.c.l.b16 %v159
  %v774 = vunpack.c.h.b16 %v159
  %v775 = vunpack.c.l.b16 %v160
  %v776 = vunpack.c.h.b16 %v160
  %v777 = vunpack.c.l.b16 %v161
  %v778 = vunpack.c.h.b16 %v161
  %v779 = vunpack.c.l.b16 %v162
  %v780 = vunpack.c.h.b16 %v162
  %v781 = vunpack.c.l.b16 %v163
  %v782 = vunpack.c.h.b16 %v163
  %v783 = vunpack.c.l.b16 %v164
  %v784 = vunpack.c.h.b16 %v164
  %v785 = vunpack.c.l.b16 %v165
  %v786 = vunpack.c.h.b16 %v165
  %v787 = vunpack.c.l.b16 %v166
  %v788 = vunpack.c.h.b16 %v166
  %v789 = vunpack.c.l.b16 %v167
  %v790 = vunpack.c.h.b16 %v167
  %v791 = vunpack.c.l.b16 %v168
  %v792 = vunpack.c.h.b16 %v168
  %v793 = vunpack.c.l.b16 %v169
  %v794 = vunpack.c.h.b16 %v169
  %v795 = vunpack.c.l.b16 %v170
  %v796 = vunpack.c.h.b16 %v170
  %v797 = vunpack.c.l.b16 %v171
  %v798 = vunpack.c.h.b16 %v171
  %v799 = vunpack.c.l.b16 %v172
  %v800 = vunpack.c.h.b16 %v172
  %v801 = vunpack.c.l.b16 %v173
  %v802 = vunpack.c.h.b16 %v173
  %v803 = vunpack.c.l.b16 %v174
  %v804 = vunpack.c.h.b16 %v174
  %v805 = vunpack.c.l.b16 %v175
  %v806 = vunpack.c.h.b16 %v175
  %v807 = vunpack.c.l.b16 %v176
  %v808 = vunpack.c.h.b16 %v176
  %v809 = vunpack.c.l.b16 %v177
  %v810 = vunpack.c.h.b16 %v177
  %v811 = vunpack.c.l.b16 %v178
  %v812 = vunpack.c.h.b16 %v178
  %v813 = vunpack.c.l.b16 %v179
  %v814 = vunpack.c.h.b16 %v179
  %v815 = vunpack.c.l.b16 %v180
  %v816 = vunpack.c.h.b16 %v180
  %v817 = vunpack.c.l.b16 %v181
  %v818 = vunpack.c.h.b16 %v181
  %v819 = vunpack.c.l.b16 %v182
  %v820 = vunpack.c.h.b16 %v182
  %v821 = vunpack.c.l.b16 %v183
  %v822 = vunpack.c.h.b16 %v183
  %v823 = vunpack.c.l.b16 %v184
  %v824 = vunpack.c.h.b16 %v184
  %v825 = vunpack.c.l.b16 %v185
  %v826 = vunpack.c.h.b16 %v185
  %v827 = vunpack.c.l.b16 %v186
  %v828 = vunpack.c.h.b16 %v186
  %v829 = vunpack.c.l.b16 %v187
  %v830 = vunpack.c.h.b16 %v187
  %v831 = vunpack.c.l.b16 %v188
  %v832 = vunpack.c.h.b16 %v188
  %v833 = vunpack.c.l.b16 %v189
  %v834 = vunpack.c.h.b16 %v189
  %v835 = vunpack.c.l.b16 %v190
  %v836 = vunpack.c.h.b16 %v190
  %v837 = vunpack.c.l.b16 %v191
  %v838 = vunpack.c.h.b16 %v191
  %v839 = vunpack.c.l.b16 %v192
  %v840 = vunpack.c.h.b16 %v192
  %v841 = vunpack.c.l.b16 %v193
  %v842 = vunpack.c.h.b16 %v193
  %v843 = vunpack.c.l.b16 %v194
  %v844 = vunpack.c.h.b16 %v194
  %v845 = vunpack.c.l.b16 %v195
  %v846 = vunpack.c.h.b16 %v195
  %v847 = vunpack.c.l.b16 %v196
  %v848 = vunpack.c.h.b16 %v196
  %v849 = vunpack.c.l.b16 %v197
  %v850 = vunpack.c.h.b16 %v197
  %v851 = vunpack.c.l.b16 %v198
  %v852 = vunpack.c.h.b16 %v198
  %v853 = vunpack.c.l.b16 %v199
  %v854 = vunpack.c.h.b16 %v199
  %v855 = vunpack.c.l.b16 %v200
  %v856 = vunpack.c.h.b16 %v200
  %v857 = vunpack.c.l.b16 %v201
  %v858 = vunpack.c.h.b16 %v201
  %v859 = vunpack.c.l.b16 %v202
  %v860 = vunpack.c.h.b16 %v202
  %v861 = vunpack.c.l.b16 %v203
  %v862 = vunpack.c.h.b16 %v203
  %v863 = vunpack.c.l.b16 %v204
  %v864 = vunpack.c.h.b16 %v204
  %v865 = vunpack.c.l.b16 %v205
  %v866 = vunpack.c.h.b16 %v205
  %v867 = vunpack.c.l.b16 %v206
  %v868 = vunpack.c.h.b16 %v206
  %v869 = vunpack.c.l.b16 %v207
  %v870 = vunpack.c.h.b16 %v207
  %v871 = vunpack.c.l.b16 %v208
  %v872 = vunpack.c.h.b16 %v208
  %v873 = vunpack.c.l.b16 %v209
  %v874 = vunpack.c.h.b16 %v209
  %v875 = vunpack.c.l.b16 %v210
  %v876 = vunpack.c.h.b16 %v210
  %v877 = vunpack.c.l.b16 %v211
  %v878 = vunpack.c.h.b16 %v211
  %v879 = vunpack.c.l.b16 %v212
  %v880 = vunpack.c.h.b16 %v212
  %v881 = vunpack.c.l.b16 %v213
  %v882 = vunpack.c.h.b16 %v213
  %v883 = vunpack.c.l.b16 %v214
  %v884 = vunpack.c.h.b16 %v214
  %v885 = vunpack.c.l.b16 %v215
  %v886 = vunpack.c.h.b16 %v215
  %v887 = vunpack.c.l.b16 %v216
  %v888 = vunpack.c.h.b16 %v216
  %v889 = vunpack.c.l.b16 %v217
  %v890 = vunpack.c.h.b16 %v217
  %v891 = vunpack.c.l.b16 %v218
  %v892 = vunpack.c.h.b16 %v218
  %v893 = vunpack.c.l.b16 %v219
  %v894 = vunpack.c.h.b16 %v219
  %v895 = vunpack.c.l.b16 %v220
  %v896 = vunpack.c.h.b16 %v220
  %v897 = vunpack.c.l.b16 %v221
  %v898 = vunpack.c.h.b16 %v221
  %v899 = vunpack.c.l.b16 %v222
  %v900 = vunpack.c.h.b16 %v222
  %v901 = vunpack.c.l.b16 %v223
  %v902 = vunpack.c.h.b16 %v223
  %v903 = vunpack.c.l.b16 %v224
  %v904 = vunpack.c.h.b16 %v224
  %v905 = vunpack.c.l.b16 %v225
  %v906 = vunpack.c.h.b16 %v225
  %v907 = vunpack.c.l.b16 %v226
  %v908 = vunpack.c.h.b16 %v226
  %v909 = vunpack.c.l.b16 %v227
  %v910 = vunpack.c.h.b16 %v227
  %v911 = vunpack.c.l.b16 %v228
  %v912 = vunpack.c.h.b16 %v228
  %v913 = vunpack.c.l.b16 %v229
  %v914 = vunpack.c.h.b16 %v229
  %v915 = vunpack.c.l.b16 %v230
  %v916 = vunpack.c.h.b16 %v230
  %v917 = vunpack.c.l.b16 %v231
  %v918 = vunpack.c.h.b16 %v231
  %v919 = vunpack.c.l.b16 %v232
  %v920 = vunpack.c.h.b16 %v232
  %v921 = vunpack.c.l.b16 %v233
  %v922 = vunpack.c.h.b16 %v233
  %v923 = vunpack.c.l.b16 %v234
  %v924 = vunpack.c.h.b16 %v234
  %v925 = vunpack.c.l.b16 %v235
  %v926 = vunpack.c.h.b16 %v235
  %v927 = vunpack.c.l.b16 %v236
  %v928 = vunpack.c.h.b16 %v236
  %v929 = vunpack.c.l.b16 %v237
  %v930 = vunpack.c.h.b16 %v237
  %v931 = vunpack.c.l.b16 %v238
  %v932 = vunpack.c.h.b16 %v238
  %v933 = vunpack.c.l.b16 %v239
  %v934 = vunpack.c.h.b16 %v239
  %v935 = vunpack.c.l.b16 %v240
  %v936 = vunpack.c.h.b16 %v240
  %v937 = vpack.c.b16 %v507, %v505
  %v938 = vpack.c.b16 %v508, %v506
  %v939 = vpack.c.b16 %v511, %v509
  %v940 = vpack.c.b16 %v512, %v510
  %v941 = vpack.c.b16 %v515, %v513
  %v942 = vpack.c.b16 %v516, %v514
  %v943 = vpack.c.b16 %v519, %v517
  %v944 = vpack.c.b16 %v520, %v518
  %v945 = vpack.c.b16 %v523, %v521
  %v946 = vpack.c.b16 %v524, %v522
  %v947 = vpack.c.b16 %v527, %v525
  %v948 = vpack.c.b16 %v528, %v526
  %v949 = vpack.c.b16 %v531, %v529
  %v950 = vpack.c.b16 %v532, %v530
  %v951 = vpack.c.b16 %v535, %v533
  %v952 = vpack.c.b16 %v536, %v534
  %v953 = vpack.c.b16 %v539, %v537
  %v954 = vpack.c.b16 %v540, %v538
  %v955 = vpack.c.b16 %v543, %v541
  %v956 = vpack.c.b16 %v544, %v542
  %v957 = vpack.c.b16 %v547, %v545
  %v958 = vpack.c.b16 %v548, %v546
  %v959 = vpack.c.b16 %v551, %v549
  %v960 = vpack.c.b16 %v552, %v550
  %v961 = vpack.c.b16 %v555, %v553
  %v962 = vpack.c.b16 %v556, %v554
  %v963 = vpack.c.b16 %v559, %v557
  %v964 = vpack.c.b16 %v560, %v558
  %v965 = vpack.c.b16 %v563, %v561
  %v966 = vpack.c.b16 %v564, %v562
  %v967 = vpack.c.b16 %v567, %v565
  %v968 = vpack.c.b16 %v568, %v566
  %v969 = vpack.c.b16 %v571, %v569
  %v970 = vpack.c.b16 %v572, %v570
  %v971 = vpack.c.b16 %v575, %v573
  %v972 = vpack.c.b16 %v576, %v574
  %v973 = vpack.c.b16 %v579, %v577
  %v974 = vpack.c.b16 %v580, %v578
  %v975 = vpack.c.b16 %v583, %v581
  %v976 = vpack.c.b16 %v584, %v582
  %v977 = vpack.c.b16 %v587, %v585
  %v978 = vpack.c.b16 %v588, %v586
  %v979 = vpack.c.b16 %v591, %v589
  %v980 = vpack.c.b16 %v592, %v590
  %v981 = vpack.c.b16 %v595, %v593
  %v982 = vpack.c.b16 %v596, %v594
  %v983 = vpack.c.b16 %v599, %v597
  %v984 = vpack.c.b16 %v600, %v598
  %v985 = vpack.c.b16 %v603, %v601
  %v986 = vpack.c.b16 %v604, %v602
  %v987 = vpack.c.b16 %v607, %v605
  %v988 = vpack.c.b16 %v608, %v606
  %v989 = vpack.c.b16 %v611, %v609
  %v990 = vpack.c.b16 %v612, %v610
  %v991 = vpack.c.b16 %v615, %v613
  %v992 = vpack.c.b16 %v616, %v614
  %v993 = vpack.c.b16 %v619, %v617
  %v994 = vpack.c.b16 %v620, %v618
  %v995 = vpack.c.b16 %v623, %v621
  %v996 = vpack.c.b16 %v624, %v622
  %v997 = vpack.c.b16 %v627, %v625
  %v998 = vpack.c.b16 %v628, %v626
  %v999 = vpack.c.b16 %v631, %v629
  %v1000 = vpack.c.b16 %v632, %v630
  %v1001 = vpack.c.b16 %v635, %v633
  %v1002 = vpack.c.b16 %v636, %v634
  %v1003 = vpack.c.b16 %v639, %v637
  %v1004 = vpack.c.b16 %v640, %v638
  %v1005 = vpack.c.b16 %v643, %v641
  %v1006 = vpack.c.b16 %v644, %v642
  %v1007 = vpack.c.b16 %v647, %v645
  %v1008 = vpack.c.b16 %v648, %v646
  %v1009 = vpack.c.b16 %v651, %v649
  %v1010 = vpack.c.b16 %v652, %v650
  %v1011 = vpack.c.b16 %v655, %v653
  %v1012 = vpack.c.b16 %v656, %v654
  %v1013 = vpack.c.b16 %v659, %v657
  %v1014 = vpack.c.b16 %v660, %v658
  %v1015 = vpack.c.b16 %v663, %v661
  %v1016 = vpack.c.b16 %v664, %v662
  %v1017 = vpack.c.b16 %v667, %v665
  %v1018 = vpack.c.b16 %v668, %v666
  %v1019 = vpack.c.b16 %v671, %v669
  %v1020 = vpack.c.b16 %v672, %v670
  %v1021 = vpack.c.b16 %v675, %v673
  %v1022 = vpack.c.b16 %v676, %v674
  %v1023 = vpack.c.b16 %v679, %v677
  %v1024 = vpack.c.b16 %v680, %v678
  %v1025 = vpack.c.b16 %v683, %v681
  %v1026 = vpack.c.b16 %v684, %v682
  %v1027 = vpack.c.b16 %v687, %v685
  %v1028 = vpack.c.b16 %v688, %v686
  %v1029 = vpack.c.b16 %v691, %v689
  %v1030 = vpack.c.b16 %v692, %v690
  %v1031 = vpack.c.b16 %v695, %v693
  %v1032 = vpack.c.b16 %v696, %v694
  %v1033 = vpack.c.b16 %v699, %v697
  %v1034 = vpack.c.b16 %v700, %v698
  %v1035 = vpack.c.b16 %v703, %v701
  %v1036 = vpack.c.b16 %v704, %v702
  %v1037 = vpack.c.b16 %v707, %v705
  %v1038 = vpack.c.b16 %v708, %v706
  %v1039 = vpack.c.b16 %v711, %v709
  %v1040 = vpack.c.b16 %v712, %v710
  %v1041 = vpack.c.b16 %v715, %v713
  %v1042 = vpack.c.b16 %v716, %v714
  %v1043 = vpack.c.b16 %v719, %v717
  %v1044 = vpack.c.b16 %v720, %v718
  %v1045 = vpack.c.b16 %v723, %v721
  %v1046 = vpack.c.b16 %v724, %v722
  %v1047 = vpack.c.b16 %v727, %v725
  %v1048 = vpack.c.b16 %v728, %v726
  %v1049 = vpack.c.b16 %v731, %v729
  %v1050 = vpack.c.b16 %v732, %v730
  %v1051 = vpack.c.b16 %v735, %v733
  %v1052 = vpack.c.b16 %v736, %v734
  %v1053 = vpack.c.b16 %v739, %v737
  %v1054 = vpack.c.b16 %v740, %v738
  %v1055 = vpack.c.b16 %v743, %v741
  %v1056 = vpack.c.b16 %v744, %v742
  %v1057 = vpack.c.b16 %v747, %v745
  %v1058 = vpack.c.b16 %v748, %v746
  %v1059 = vpack.c.b16 %v751, %v749
  %v1060 = vpack.c.b16 %v752, %v750
  %v1061 = vpack.c.b16 %v755, %v753
  %v1062 = vpack.c.b16 %v756, %v754
  %v1063 = vpack.c.b16 %v759, %v757
  %v1064 = vpack.c.b16 %v760, %v758
  %v1065 = vpack.c.b16 %v763, %v761
  %v1066 = vpack.c.b16 %v764, %v762
  %v1067 = vpack.c.b16 %v767, %v765
  %v1068 = vpack.c.b16 %v768, %v766
  %v1069 = vpack.c.b16 %v771, %v769
  %v1070 = vpack.c.b16 %v772, %v770
  %v1071 = vpack.c.b16 %v775, %v773
  %v1072 = vpack.c.b16 %v776, %v774
  %v1073 = vpack.c.b16 %v779, %v777
  %v1074 = vpack.c.b16 %v780, %v778
  %v1075 = vpack.c.b16 %v783, %v781
  %v1076 = vpack.c.b16 %v784, %v782
  %v1077 = vpack.c.b16 %v787, %v785
  %v1078 = vpack.c.b16 %v788, %v786
  %v1079 = vpack.c.b16 %v791, %v789
  %v1080 = vpack.c.b16 %v792, %v790
  %v1081 = vpack.c.b16 %v795, %v793
  %v1082 = vpack.c.b16 %v796, %v794
  %v1083 = vpack.c.b16 %v799, %v797
  %v1084 = vpack.c.b16 %v800, %v798
  %v1085 = vpack.c.b16 %v803, %v801
  %v1086 = vpack.c.b16 %v804, %v802
  %v1087 = vpack.c.b16 %v807, %v805
  %v1088 = vpack.c.b16 %v808, %v806
  %v1089 = vpack.c.b16 %v811, %v809
  %v1090 = vpack.c.b16 %v812, %v810
  %v1091 = vpack.c.b16 %v815, %v813
  %v1092 = vpack.c.b16 %v816, %v814
  %v1093 = vpack.c.b16 %v819, %v817
  %v1094 = vpack.c.b16 %v820, %v818
  %v1095 = vpack.c.b16 %v823, %v821
  %v1096 = vpack.c.b16 %v824, %v822
  %v1097 = vpack.c.b16 %v827, %v825
  %v1098 = vpack.c.b16 %v828, %v826
  %v1099 = vpack.c.b16 %v831, %v829
  %v1100 = vpack.c.b16 %v832, %v830
  %v1101 = vpack.c.b16 %v835, %v833
  %v1102 = vpack.c.b16 %v836, %v834
  %v1103 = vpack.c.b16 %v839, %v837
  %v1104 = vpack.c.b16 %v840, %v838
  %v1105 = vpack.c.b16 %v843, %v841
  %v1106 = vpack.c.b16 %v844, %v842
  %v1107 = vpack.c.b16 %v847, %v845
  %v1108 = vpack.c.b16 %v848, %v846
  %v1109 = vpack.c.b16 %v851, %v849
  %v1110 = vpack.c.b16 %v852, %v850
  %v1111 = vpack.c.b16 %v855, %v853
  %v1112 = vpack.c.b16 %v856, %v854
  %v1113 = vpack.c.b16 %v859, %v857
  %v1114 = vpack.c.b16 %v860, %v858
  %v1115 = vpack.c.b16 %v863, %v861
  %v1116 = vpack.c.b16 %v864, %v862
  %v1117 = vpack.c.b16 %v867, %v865
  %v1118 = vpack.c.b16 %v868, %v866
  %v1119 = vpack.c.b16 %v871, %v869
  %v1120 = vpack.c.b16 %v872, %v870
  %v1121 = vpack.c.b16 %v875, %v873
  %v1122 = vpack.c.b16 %v876, %v874
  %v1123 = vpack.c.b16 %v879, %v877
  %v1124 = vpack.c.b16 %v880, %v878
  %v1125 = vpack.c.b16 %v883, %v881
  %v1126 = vpack.c.b16 %v884, %v882
  %v1127 = vpack.c.b16 %v887, %v885
  %v1128 = vpack.c.b16 %v888, %v886
  %v1129 = vpack.c.b16 %v891, %v889
  %v1130 = vpack.c.b16 %v892, %v890
  %v1131 = vpack.c.b16 %v895, %v893
  %v1132 = vpack.c.b16 %v896, %v894
  %v1133 = vpack.c.b16 %v899, %v897
  %v1134 = vpack.c.b16 %v900, %v898
  %v1135 = vpack.c.b16 %v903, %v901
  %v1136 = vpack.c.b16 %v904, %v902
  %v1137 = vpack.c.b16 %v907, %v905
  %v1138 = vpack.c.b16 %v908, %v906
  %v1139 = vpack.c.b16 %v911, %v909
  %v1140 = vpack.c.b16 %v912, %v910
  %v1141 = vpack.c.b16 %v915, %v913
  %v1142 = vpack.c.b16 %v916, %v914
  %v1143 = vpack.c.b16 %v919, %v917
  %v1144 = vpack.c.b16 %v920, %v918
  %v1145 = vpack.c.b16 %v923, %v921
  %v1146 = vpack.c.b16 %v924, %v922
  %v1147 = vpack.c.b16 %v927, %v925
  %v1148 = vpack.c.b16 %v928, %v926
  %v1149 = vpack.c.b16 %v931, %v929
  %v1150 = vpack.c.b16 %v932, %v930
  %v1151 = vpack.c.b16 %v935, %v933
  %v1152 = vpack.c.b16 %v936, %v934
  %vm1369 = vcmask 523264
  %v1371 = vsel %vm1369, %v275, 0
  %1373 = vmatprep.subr.bf16.mxu0 %v938
  %1374 = vmatpush1.bf16.msra.mxu0 %v937
  %1375 = vmatprep.subr.bf16.mxu0 %v940
  %1376 = vmatpush1.bf16.msra.mxu0 %v939
  %1377 = vmatprep.subr.bf16.mxu0 %v942
  %1378 = vmatpush1.bf16.msra.mxu0 %v941
  %1379 = vmatprep.subr.bf16.mxu0 %v944
  %1380 = vmatpush1.bf16.msra.mxu0 %v943
  %1381 = vmatprep.subr.bf16.mxu0 %v946
  %1382 = vmatpush1.bf16.msra.mxu0 %v945
  %1383 = vmatprep.subr.bf16.mxu0 %v948
  %1384 = vmatpush1.bf16.msra.mxu0 %v947
  %1385 = vmatprep.subr.bf16.mxu0 %v950
  %1386 = vmatpush1.bf16.msra.mxu0 %v949
  %1387 = vmatprep.subr.bf16.mxu0 %v952
  %1388 = vmatpush1.bf16.msra.mxu0 %v951
  %1389 = vmatprep.subr.bf16.mxu0 %v954
  %1390 = vmatpush1.bf16.msra.mxu0 %v953
  %1391 = vmatprep.subr.bf16.mxu0 %v956
  %1392 = vmatpush1.bf16.msra.mxu0 %v955
  %1393 = vmatprep.subr.bf16.mxu0 %v958
  %1394 = vmatpush1.bf16.msra.mxu0 %v957
  %1395 = vmatprep.subr.bf16.mxu0 %v960
  %1396 = vmatpush1.bf16.msra.mxu0 %v959
  %1397 = vmatprep.subr.bf16.mxu0 %v962
  %1398 = vmatpush1.bf16.msra.mxu0 %v961
  %1399 = vmatprep.subr.bf16.mxu0 %v964
  %1400 = vmatpush1.bf16.msra.mxu0 %v963
  %1401 = vmatprep.subr.bf16.mxu0 %v966
  %1402 = vmatpush1.bf16.msra.mxu0 %v965
  %1403 = vmatprep.subr.bf16.mxu0 %v968
  %1404 = vmatpush1.bf16.msra.mxu0 %v967
  %1405 = vmatprep.mubr.bf16.mxu0 %v263
  %1406 = vmatmul.mubr.bf16.gmra.mrb[0].mxu0 %v262
  %v1407 = vpop.f32.mrb[0].mxu0
  %v1408 = vadd.f32 0.0, %v1407
  %v1409 = vpop.f32.mrb[0].mxu0
  %v1410 = vadd.f32 0.0, %v1409
  %v1411 = vpop.f32.mrb[0].mxu0
  %v1412 = vpop.f32.mrb[0].mxu0
  %1413 = vdwg.mxu0
  %1414 = vmatprep.subr.bf16.mxu0 %v970
  %1415 = vmatpush1.bf16.msra.mxu0 %v969
  %1416 = vmatprep.subr.bf16.mxu0 %v972
  %1417 = vmatpush1.bf16.msra.mxu0 %v971
  %1418 = vmatprep.subr.bf16.mxu0 %v974
  %1419 = vmatpush1.bf16.msra.mxu0 %v973
  %1420 = vmatprep.subr.bf16.mxu0 %v976
  %1421 = vmatpush1.bf16.msra.mxu0 %v975
  %1422 = vmatprep.subr.bf16.mxu0 %v978
  %1423 = vmatpush1.bf16.msra.mxu0 %v977
  %1424 = vmatprep.subr.bf16.mxu0 %v980
  %1425 = vmatpush1.bf16.msra.mxu0 %v979
  %1426 = vmatprep.subr.bf16.mxu0 %v982
  %1427 = vmatpush1.bf16.msra.mxu0 %v981
  %1428 = vmatprep.subr.bf16.mxu0 %v984
  %1429 = vmatpush1.bf16.msra.mxu0 %v983
  %1430 = vmatprep.subr.bf16.mxu0 %v986
  %1431 = vmatpush1.bf16.msra.mxu0 %v985
  %1432 = vmatprep.subr.bf16.mxu0 %v988
  %1433 = vmatpush1.bf16.msra.mxu0 %v987
  %1434 = vmatprep.subr.bf16.mxu0 %v990
  %1435 = vmatpush1.bf16.msra.mxu0 %v989
  %1436 = vmatprep.subr.bf16.mxu0 %v992
  %1437 = vmatpush1.bf16.msra.mxu0 %v991
  %1438 = vmatprep.subr.bf16.mxu0 %v994
  %1439 = vmatpush1.bf16.msra.mxu0 %v993
  %1440 = vmatprep.subr.bf16.mxu0 %v996
  %1441 = vmatpush1.bf16.msra.mxu0 %v995
  %1442 = vmatprep.subr.bf16.mxu0 %v998
  %1443 = vmatpush1.bf16.msra.mxu0 %v997
  %1444 = vmatprep.subr.bf16.mxu0 %v1000
  %1445 = vmatpush1.bf16.msra.mxu0 %v999
  %1446 = vmatprep.mubr.bf16.mxu0 %v265
  %1447 = vmatmul.mubr.bf16.gmra.mrb[0].mxu0 %v264
  %v1448 = vpop.f32.mrb[0].mxu0
  %v1449 = vadd.f32 %v1408, %v1448
  %v1450 = vpop.f32.mrb[0].mxu0
  %v1451 = vadd.f32 %v1410, %v1450
  %v1452 = vpop.f32.mrb[0].mxu0
  %v1453 = vpop.f32.mrb[0].mxu0
  %1454 = vdwg.mxu0
  %1455 = vmatprep.subr.bf16.mxu0 %v1002
  %1456 = vmatpush1.bf16.msra.mxu0 %v1001
  %1457 = vmatprep.subr.bf16.mxu0 %v1004
  %1458 = vmatpush1.bf16.msra.mxu0 %v1003
  %1459 = vmatprep.subr.bf16.mxu0 %v1006
  %1460 = vmatpush1.bf16.msra.mxu0 %v1005
  %1461 = vmatprep.subr.bf16.mxu0 %v1008
  %1462 = vmatpush1.bf16.msra.mxu0 %v1007
  %1463 = vmatprep.subr.bf16.mxu0 %v1010
  %1464 = vmatpush1.bf16.msra.mxu0 %v1009
  %1465 = vmatprep.subr.bf16.mxu0 %v1012
  %1466 = vmatpush1.bf16.msra.mxu0 %v1011
  %1467 = vmatprep.subr.bf16.mxu0 %v1014
  %1468 = vmatpush1.bf16.msra.mxu0 %v1013
  %1469 = vmatprep.subr.bf16.mxu0 %v1016
  %1470 = vmatpush1.bf16.msra.mxu0 %v1015
  %1471 = vmatprep.subr.bf16.mxu0 %v1018
  %1472 = vmatpush1.bf16.msra.mxu0 %v1017
  %1473 = vmatprep.subr.bf16.mxu0 %v1020
  %1474 = vmatpush1.bf16.msra.mxu0 %v1019
  %1475 = vmatprep.subr.bf16.mxu0 %v1022
  %1476 = vmatpush1.bf16.msra.mxu0 %v1021
  %1477 = vmatprep.subr.bf16.mxu0 %v1024
  %1478 = vmatpush1.bf16.msra.mxu0 %v1023
  %1479 = vmatprep.subr.bf16.mxu0 %v1026
  %1480 = vmatpush1.bf16.msra.mxu0 %v1025
  %1481 = vmatprep.subr.bf16.mxu0 %v1028
  %1482 = vmatpush1.bf16.msra.mxu0 %v1027
  %1483 = vmatprep.subr.bf16.mxu0 %v1030
  %1484 = vmatpush1.bf16.msra.mxu0 %v1029
  %1485 = vmatprep.subr.bf16.mxu0 %v1032
  %1486 = vmatpush1.bf16.msra.mxu0 %v1031
  %1487 = vmatprep.mubr.bf16.mxu0 %v267
  %1488 = vmatmul.mubr.bf16.gmra.mrb[0].mxu0 %v266
  %v1489 = vpop.f32.mrb[0].mxu0
  %v1490 = vadd.f32 %v1449, %v1489
  %v1491 = vpop.f32.mrb[0].mxu0
  %v1492 = vadd.f32 %v1451, %v1491
  %v1493 = vpop.f32.mrb[0].mxu0
  %v1494 = vpop.f32.mrb[0].mxu0
  %1495 = vdwg.mxu0
  %1496 = vmatprep.subr.bf16.mxu0 %v1034
  %1497 = vmatpush1.bf16.msra.mxu0 %v1033
  %1498 = vmatprep.subr.bf16.mxu0 %v1036
  %1499 = vmatpush1.bf16.msra.mxu0 %v1035
  %1500 = vmatprep.subr.bf16.mxu0 %v1038
  %1501 = vmatpush1.bf16.msra.mxu0 %v1037
  %1502 = vmatprep.subr.bf16.mxu0 %v1040
  %1503 = vmatpush1.bf16.msra.mxu0 %v1039
  %1504 = vmatprep.subr.bf16.mxu0 %v1042
  %1505 = vmatpush1.bf16.msra.mxu0 %v1041
  %1506 = vmatprep.subr.bf16.mxu0 %v1044
  %1507 = vmatpush1.bf16.msra.mxu0 %v1043
  %1508 = vmatprep.subr.bf16.mxu0 %v1046
  %1509 = vmatpush1.bf16.msra.mxu0 %v1045
  %1510 = vmatprep.subr.bf16.mxu0 %v1048
  %1511 = vmatpush1.bf16.msra.mxu0 %v1047
  %1512 = vmatprep.subr.bf16.mxu0 %v1050
  %1513 = vmatpush1.bf16.msra.mxu0 %v1049
  %1514 = vmatprep.subr.bf16.mxu0 %v1052
  %1515 = vmatpush1.bf16.msra.mxu0 %v1051
  %1516 = vmatprep.subr.bf16.mxu0 %v1054
  %1517 = vmatpush1.bf16.msra.mxu0 %v1053
  %1518 = vmatprep.subr.bf16.mxu0 %v1056
  %1519 = vmatpush1.bf16.msra.mxu0 %v1055
  %1520 = vmatprep.subr.bf16.mxu0 %v1058
  %1521 = vmatpush1.bf16.msra.mxu0 %v1057
  %1522 = vmatprep.subr.bf16.mxu0 %v1060
  %1523 = vmatpush1.bf16.msra.mxu0 %v1059
  %1524 = vmatprep.subr.bf16.mxu0 %v1062
  %1525 = vmatpush1.bf16.msra.mxu0 %v1061
  %1526 = vmatprep.subr.bf16.mxu0 %v1064
  %1527 = vmatpush1.bf16.msra.mxu0 %v1063
  %1528 = vmatprep.mubr.bf16.mxu0 %v269
  %1529 = vmatmul.mubr.bf16.gmra.mrb[0].mxu0 %v268
  %v1530 = vpop.f32.mrb[0].mxu0
  %v1531 = vadd.f32 %v1490, %v1530
  %v1532 = vpop.f32.mrb[0].mxu0
  %v1533 = vadd.f32 %v1492, %v1532
  %v1534 = vpop.f32.mrb[0].mxu0
  %v1535 = vpop.f32.mrb[0].mxu0
  %1536 = vdwg.mxu0
  %1537 = vmatprep.subr.bf16.mxu0 %v1066
  %1538 = vmatpush1.bf16.msra.mxu0 %v1065
  %1539 = vmatprep.subr.bf16.mxu0 %v1068
  %1540 = vmatpush1.bf16.msra.mxu0 %v1067
  %1541 = vmatprep.subr.bf16.mxu0 %v1070
  %1542 = vmatpush1.bf16.msra.mxu0 %v1069
  %1543 = vmatprep.subr.bf16.mxu0 %v1072
  %1544 = vmatpush1.bf16.msra.mxu0 %v1071
  %1545 = vmatprep.subr.bf16.mxu0 %v1074
  %1546 = vmatpush1.bf16.msra.mxu0 %v1073
  %1547 = vmatprep.subr.bf16.mxu0 %v1076
  %1548 = vmatpush1.bf16.msra.mxu0 %v1075
  %1549 = vmatprep.subr.bf16.mxu0 %v1078
  %1550 = vmatpush1.bf16.msra.mxu0 %v1077
  %1551 = vmatprep.subr.bf16.mxu0 %v1080
  %1552 = vmatpush1.bf16.msra.mxu0 %v1079
  %1553 = vmatprep.subr.bf16.mxu0 %v1082
  %1554 = vmatpush1.bf16.msra.mxu0 %v1081
  %1555 = vmatprep.subr.bf16.mxu0 %v1084
  %1556 = vmatpush1.bf16.msra.mxu0 %v1083
  %1557 = vmatprep.subr.bf16.mxu0 %v1086
  %1558 = vmatpush1.bf16.msra.mxu0 %v1085
  %1559 = vmatprep.subr.bf16.mxu0 %v1088
  %1560 = vmatpush1.bf16.msra.mxu0 %v1087
  %1561 = vmatprep.subr.bf16.mxu0 %v1090
  %1562 = vmatpush1.bf16.msra.mxu0 %v1089
  %1563 = vmatprep.subr.bf16.mxu0 %v1092
  %1564 = vmatpush1.bf16.msra.mxu0 %v1091
  %1565 = vmatprep.subr.bf16.mxu0 %v1094
  %1566 = vmatpush1.bf16.msra.mxu0 %v1093
  %1567 = vmatprep.subr.bf16.mxu0 %v1096
  %1568 = vmatpush1.bf16.msra.mxu0 %v1095
  %1569 = vmatprep.mubr.bf16.mxu0 %v271
  %1570 = vmatmul.mubr.bf16.gmra.mrb[0].mxu0 %v270
  %v1571 = vpop.f32.mrb[0].mxu0
  %v1572 = vadd.f32 %v1531, %v1571
  %v1573 = vpop.f32.mrb[0].mxu0
  %v1574 = vadd.f32 %v1533, %v1573
  %v1575 = vpop.f32.mrb[0].mxu0
  %v1576 = vpop.f32.mrb[0].mxu0
  %1577 = vdwg.mxu0
  %1578 = vmatprep.subr.bf16.mxu0 %v1098
  %1579 = vmatpush1.bf16.msra.mxu0 %v1097
  %1580 = vmatprep.subr.bf16.mxu0 %v1100
  %1581 = vmatpush1.bf16.msra.mxu0 %v1099
  %1582 = vmatprep.subr.bf16.mxu0 %v1102
  %1583 = vmatpush1.bf16.msra.mxu0 %v1101
  %1584 = vmatprep.subr.bf16.mxu0 %v1104
  %1585 = vmatpush1.bf16.msra.mxu0 %v1103
  %1586 = vmatprep.subr.bf16.mxu0 %v1106
  %1587 = vmatpush1.bf16.msra.mxu0 %v1105
  %1588 = vmatprep.subr.bf16.mxu0 %v1108
  %1589 = vmatpush1.bf16.msra.mxu0 %v1107
  %1590 = vmatprep.subr.bf16.mxu0 %v1110
  %1591 = vmatpush1.bf16.msra.mxu0 %v1109
  %1592 = vmatprep.subr.bf16.mxu0 %v1112
  %1593 = vmatpush1.bf16.msra.mxu0 %v1111
  %1594 = vmatprep.subr.bf16.mxu0 %v1114
  %1595 = vmatpush1.bf16.msra.mxu0 %v1113
  %1596 = vmatprep.subr.bf16.mxu0 %v1116
  %1597 = vmatpush1.bf16.msra.mxu0 %v1115
  %1598 = vmatprep.subr.bf16.mxu0 %v1118
  %1599 = vmatpush1.bf16.msra.mxu0 %v1117
  %1600 = vmatprep.subr.bf16.mxu0 %v1120
  %1601 = vmatpush1.bf16.msra.mxu0 %v1119
  %1602 = vmatprep.subr.bf16.mxu0 %v1122
  %1603 = vmatpush1.bf16.msra.mxu0 %v1121
  %1604 = vmatprep.subr.bf16.mxu0 %v1124
  %1605 = vmatpush1.bf16.msra.mxu0 %v1123
  %1606 = vmatprep.subr.bf16.mxu0 %v1126
  %1607 = vmatpush1.bf16.msra.mxu0 %v1125
  %1608 = vmatprep.subr.bf16.mxu0 %v1128
  %1609 = vmatpush1.bf16.msra.mxu0 %v1127
  %1610 = vmatprep.mubr.bf16.mxu0 %v273
  %1611 = vmatmul.mubr.bf16.gmra.mrb[0].mxu0 %v272
  %v1612 = vpop.f32.mrb[0].mxu0
  %v1613 = vadd.f32 %v1572, %v1612
  %v1614 = vpop.f32.mrb[0].mxu0
  %v1615 = vadd.f32 %v1574, %v1614
  %v1616 = vpop.f32.mrb[0].mxu0
  %v1617 = vpop.f32.mrb[0].mxu0
  %1618 = vdwg.mxu0
  %1619 = vmatprep.subr.bf16.mxu0 %v1130
  %1620 = vmatpush1.bf16.msra.mxu0 %v1129
  %1621 = vmatprep.subr.bf16.mxu0 %v1132
  %1622 = vmatpush1.bf16.msra.mxu0 %v1131
  %1623 = vmatprep.subr.bf16.mxu0 %v1134
  %1624 = vmatpush1.bf16.msra.mxu0 %v1133
  %1625 = vmatprep.subr.bf16.mxu0 %v1136
  %1626 = vmatpush1.bf16.msra.mxu0 %v1135
  %1627 = vmatprep.subr.bf16.mxu0 %v1138
  %1628 = vmatpush1.bf16.msra.mxu0 %v1137
  %1629 = vmatprep.subr.bf16.mxu0 %v1140
  %1630 = vmatpush1.bf16.msra.mxu0 %v1139
  %1631 = vmatprep.subr.bf16.mxu0 %v1142
  %1632 = vmatpush1.bf16.msra.mxu0 %v1141
  %1633 = vmatprep.subr.bf16.mxu0 %v1144
  %1634 = vmatpush1.bf16.msra.mxu0 %v1143
  %1635 = vmatprep.subr.bf16.mxu0 %v1146
  %1636 = vmatpush1.bf16.msra.mxu0 %v1145
  %1637 = vmatprep.subr.bf16.mxu0 %v1148
  %1638 = vmatpush1.bf16.msra.mxu0 %v1147
  %1639 = vmatprep.subr.bf16.mxu0 %v1150
  %1640 = vmatpush1.bf16.msra.mxu0 %v1149
  %1641 = vmatprep.subr.bf16.mxu0 %v1152
  %1642 = vmatpush1.bf16.msra.mxu0 %v1151
  %1643 = vmatprep.subr.bf16.mxu0 0
  %1644 = vmatpush1.bf16.msra.mxu0 0
  %1645 = vmatprep.subr.bf16.mxu0 0
  %1646 = vmatpush1.bf16.msra.mxu0 0
  %1647 = vmatprep.subr.bf16.mxu0 0
  %1648 = vmatpush1.bf16.msra.mxu0 0
  %1649 = vmatprep.subr.bf16.mxu0 0
  %1650 = vmatpush1.bf16.msra.mxu0 0
  %1651 = vmatprep.mubr.bf16.mxu0 %v1371
  %1652 = vmatmul.mubr.bf16.gmra.mrb[0].mxu0 %v274
  %v1653 = vpop.f32.mrb[0].mxu0
  %v1654 = vadd.f32 %v1613, %v1653
  %v1655 = vpop.f32.mrb[0].mxu0
  %v1656 = vadd.f32 %v1615, %v1655
  %v1657 = vpop.f32.mrb[0].mxu0
  %v1658 = vpop.f32.mrb[0].mxu0
  %1659 = vdwg.mxu0
  %v1660 = vrot.slane %v1654, 4
  %v1661 = vadd.f32 %v1654, %v1660
  %v1662 = vrot.slane %v1661, 2
  %v1663 = vadd.f32 %v1661, %v1662
  %v1664 = vrot.slane %v1663, 1
  %v1665 = vadd.f32 %v1663, %v1664
  %v1666 = vrot.slane %v1656, 4
  %v1667 = vadd.f32 %v1656, %v1666
  %v1668 = vrot.slane %v1667, 2
  %v1669 = vadd.f32 %v1667, %v1668
  %v1670 = vrot.slane %v1669, 1
  %v1671 = vadd.f32 %v1669, %v1670
  %v1672 = vmul.f32 %v1665, 0.125
  %v1673 = vmul.f32 %v1671, 0.125
  %v1674 = vmul.f32 %v1654, %v1654
  %v1675 = vmul.f32 %v1656, %v1656
  %v1676 = vrot.slane %v1674, 4
  %v1677 = vadd.f32 %v1674, %v1676
  %v1678 = vrot.slane %v1677, 2
  %v1679 = vadd.f32 %v1677, %v1678
  %v1680 = vrot.slane %v1679, 1
  %v1681 = vadd.f32 %v1679, %v1680
  %v1682 = vrot.slane %v1675, 4
  %v1683 = vadd.f32 %v1675, %v1682
  %v1684 = vrot.slane %v1683, 2
  %v1685 = vadd.f32 %v1683, %v1684
  %v1686 = vrot.slane %v1685, 1
  %v1687 = vadd.f32 %v1685, %v1686
  %v1688 = vmul.f32 %v1681, 0.125
  %v1689 = vmul.f32 %v1687, 0.125
  %v1690 = vmul.f32 %v1672, %v1672
  %v1691 = vmul.f32 %v1673, %v1673
  %v1692 = vsub.f32 %v1688, %v1690
  %v1693 = vsub.f32 %v1689, %v1691
  %v1694 = vmax.f32 %v1692, 0.0
  %v1695 = vmax.f32 %v1693, 0.0
  %v1696 = vld [vmem:[%s2] sm:$0x3]
  %v1697 = vadd.f32 %v1694, 0.001
  %v1698 = vadd.f32 %v1695, 0.001
  %v1699 = vrsqrt.pop %v1697
  %v1700 = vrsqrt.pop %v1698
  %v1703 = vcombine.low %v1699, %v1700
  %v1705 = vunpack.c.l.s4 1966171168
  %v1706 = vunpack.c.0.s8 %v1705
  %v1707 = vlaneseq
  %v1708 = vshrl.u32 %v1707, 7
  %v1709 = vsub.s32 %v1706, %v1708
  %v1710 = vrot.slane %v1703, %v1709
  %v1712 = vunpack.c.l.s4 1966171168
  %v1713 = vunpack.c.0.s8 %v1712
  %v1714 = vlaneseq
  %v1715 = vshrl.u32 %v1714, 7
  %v1716 = vsub.s32 %v1713, %v1715
  %v1717 = vrot.slane %v1710, %v1716
  %v1719 = vmul.f32 %v1696, %v1717
  %v1720 = vld [vmem:[%s3] sm:$0x3]
  %v1722 = vlaneseq
  %v1723 = vshrl.u32 %v1722, 7
  %v1724 = vsub.s32 0, %v1723
  %v1725 = vrot.slane %v1719, %v1724
  %v1726 = vlaneseq
  %v1727 = vshrl.u32 %v1726, 7
  %v1728 = vsub.s32 1, %v1727
  %v1729 = vrot.slane %v1719, %v1728
  %v1732 = vmul.f32 %v1672, %v1725
  %v1733 = vmul.f32 %v1673, %v1729
  %v1736 = vcombine.low %v1732, %v1733
  %v1738 = vunpack.c.l.s4 1966171168
  %v1739 = vunpack.c.0.s8 %v1738
  %v1740 = vlaneseq
  %v1741 = vshrl.u32 %v1740, 7
  %v1742 = vsub.s32 %v1739, %v1741
  %v1743 = vrot.slane %v1736, %v1742
  %v1745 = vunpack.c.l.s4 1966171168
  %v1746 = vunpack.c.0.s8 %v1745
  %v1747 = vlaneseq
  %v1748 = vshrl.u32 %v1747, 7
  %v1749 = vsub.s32 %v1746, %v1748
  %v1750 = vrot.slane %v1743, %v1749
  %v1752 = vsub.f32 %v1720, %v1750
  %v1753 = vmul.f32 %v1654, %v1725
  %v1754 = vmul.f32 %v1656, %v1729
  %v1756 = vlaneseq
  %v1757 = vshrl.u32 %v1756, 7
  %v1758 = vsub.s32 0, %v1757
  %v1759 = vrot.slane %v1752, %v1758
  %v1760 = vlaneseq
  %v1761 = vshrl.u32 %v1760, 7
  %v1762 = vsub.s32 1, %v1761
  %v1763 = vrot.slane %v1752, %v1762
  %v1766 = vadd.f32 %v1753, %v1759
  %v1767 = vadd.f32 %v1754, %v1763
  %v1768 = vmax.f32 %v1766, 0.0
  %v1769 = vmax.f32 %v1767, 0.0
  %v1770 = vpack.c.bf16 %v1768, %v1768
  %v1771 = vpack.c.bf16 %v1769, %v1769
  %v1774 = vunpack.c.l.b16 %v1770
  %v1775 = vunpack.c.l.b16 %v1771
  %v1776 = vpack.c.b16 %v1775, %v1774
  %1778 = vst [vmem:[%s4] sm:$0xff] %v1776
  // Predicated region
  $region18: #{stem_forward.19} parent=0 // pred_check
    _
  $region19: #{stem_forward.19} parent=0 // pred_check_branch
    %1780 = sbr.rel (0) target = $region21
  $region20: #{stem_forward.19} parent=0 // pred_region
    _
  $region21: #{stem_forward.19} parent=0 // pred_fallthru
    _
  // Predicated region
  $region22: #{stem_forward.19} parent=0 // pred_check
    _
  $region23: #{stem_forward.19} parent=0 // pred_check_branch
    %1782 = sbr.rel (0) target = $region25
  $region24: #{stem_forward.19} parent=0 // pred_region
    _
  $region25: #{stem_forward.19} parent=0 // pred_fallthru
    _

</llo_original>
